<compile_context>
chip_gen: v5e
topology: v5e:2x2
jax: 0.10.0
libtpu: 0.0.40
codegen_flags: <defaults>
</compile_context>

<pallas_src>
import jax
import jax.numpy as jnp
from jax.experimental import pallas as pl
from jax.experimental.pallas import tpu as pltpu

# ---- module config (mirrors GraphPooling.__init__ defaults) -----------------
POOL_SIZE = 4
MAX_DIMENSION = 256
GRID_SIZE = MAX_DIMENSION // POOL_SIZE  # 64
ONLY_VERTICES = False
SELF_LOOP = True
# average_positions=False in the reference.

TILE_C = 64      # cluster tile (output sublanes).  Raise to 128/256 at scale
                 # to shrink the work list (num_c_tiles dominates its length).
TILE_N = 512     # vertex rows streamed per work item (256 KiB f32 @ F=128)
NUM_SPLITS = 2   # leading parallel grid axis (v7x megacore); harmless on 1-TC


def _cdiv(a, b):
    return (a + b - 1) // b


# ---- Pallas kernel: scatter-amax of sorted features into cluster tiles ------
def _make_scatter_amax_kernel(tile_c, tile_n, f, w_split, fmin):
    log_n = tile_n.bit_length() - 1
    assert (1 << log_n) == tile_n, "TILE_N must be a power of two"

    def kernel(wc_s, wb_s, first_s, valid_s, idc_ref, idr_ref, mks_ref,
               feat_ref, out_ref):
        """One work item = (cluster tile, vertex block) from the work list.

        wc_s/wb_s/first_s/valid_s : SMEM work-list (scalar prefetch)
        idc_ref : (TILE_N, 1)     int32  sorted cluster ids (sublane layout)
        idr_ref : (1, 1, TILE_N)  int32  sorted cluster ids (lane layout)
        mks_ref : (1, 1, TILE_N)  int32  run-boundary marks (bit0=head, bit1=tail)
        feat_ref: (TILE_N, F)     f32    sorted feature rows of this block
        out_ref : (TILE_C, F)     f32    resident accumulator for this tile
        """
        t = pl.program_id(0)
        p = pl.program_id(1)
        s = t * w_split + p

        @pl.when(first_s[s] != 0)
        def _init():
            out_ref[...] = jnp.full((tile_c, f), fmin, out_ref.dtype)

        @pl.when(valid_s[s] != 0)
        def _accumulate():
            c0 = wc_s[s] * tile_c

            ids_col = idc_ref[...]        # (tile_n, 1)
            ids_row = idr_ref[0]          # (1, tile_n)
            marks = mks_ref[0]            # (1, tile_n)
            work = feat_ref[...]          # (tile_n, f) f32
            # TODO(synk): stream features as bf16 on v6e/v7x (keep f32 math).

            # Segmented max-scan along sorted rows: after log2(TILE_N) steps a
            # run-boundary row holds the max over its whole cluster run.  Rolls
            # land on the XLU slot; compares/selects on the VPU.
            for j in range(log_n):
                k = 1 << j
                r_val = pltpu.roll(work, shift=k, axis=0)
                r_id = pltpu.roll(ids_col, shift=k, axis=0)
                same = r_id == ids_col
                work = jnp.where(same, jnp.maximum(work, r_val), work)

            # Run boundary marks (exactly one head and one tail per run, per
            # block) were precomputed in the wrapper.
            head = (marks & 1) != 0       # (1, tile_n)
            tail = (marks & 2) != 0

            # One-hot selectors (cluster-in-tile x row) -> gather boundary rows
            # with the idle MXU.  Values are split into 3 bf16 parts
            # (v == v1 + v2 + v3 exactly); each selector row has at most one 1,
            # so the matmul sums reproduce the f32 values exactly.
            cs = c0 + jax.lax.broadcasted_iota(jnp.int32, (tile_c, 1), 0)
            match = ids_row == cs                          # (tile_c, tile_n)
            sel_t = (match & tail).astype(jnp.float32)
            sel_h = (match & head).astype(jnp.float32)
            present = jnp.max(sel_h, axis=1, keepdims=True) > 0.5

            v1 = work.astype(jnp.bfloat16)
            r1 = work - v1.astype(jnp.float32)
            v2 = r1.astype(jnp.bfloat16)
            r2 = r1 - v2.astype(jnp.float32)
            v3 = r2.astype(jnp.bfloat16)

            def gather(sel):
                sb = sel.astype(jnp.bfloat16)
                return (jnp.dot(sb, v1, preferred_element_type=jnp.float32)
                        + jnp.dot(sb, v2, preferred_element_type=jnp.float32)
                        + jnp.dot(sb, v3, preferred_element_type=jnp.float32))

            # Taking max over the head- and tail-gathered rows makes the result
            # independent of which run end holds the scanned maximum.
            g = jnp.maximum(gather(sel_t), gather(sel_h))
            g = jnp.where(present, g, fmin)
            out_ref[...] = jnp.maximum(out_ref[...], g)

    return kernel


def pooled_features_pallas(indices, features, c_pad, *, tile_c=TILE_C,
                           tile_n=TILE_N, num_splits=NUM_SPLITS):
    """scatter_reduce(..., reduce='amax', include_self=False) over clusters.

    Rows of the (c_pad, F) result for empty/padded cluster slots hold
    finfo(float32).min; the caller masks them (graph_pooling_forward does).
    """
    n, f = features.shape
    assert c_pad % tile_c == 0
    num_c_tiles = c_pad // tile_c
    n_pad = _cdiv(n, tile_n) * tile_n
    num_n_blocks = n_pad // tile_n
    num_splits = max(1, min(num_splits, num_c_tiles, 2))
    cps = _cdiv(num_c_tiles, num_splits)          # cluster tiles per split
    assert (num_splits - 1) * cps < num_c_tiles   # every split owns >= 1 tile
    w_split = num_n_blocks + cps                  # static per-split work bound
    w_global = num_n_blocks + num_c_tiles         # static global work bound
    fmin = float(jnp.finfo(jnp.float32).min)

    # Sort vertices by cluster id -> each cluster is a contiguous run.
    # TODO(synk): fuse this (N, F) gather into the kernel via a scalar-prefetched
    # 'order' + pl.Element row gather to remove one extra HBM pass.
    order = jnp.argsort(indices)
    sidx = indices[order].astype(jnp.int32)
    sfeat = features[order].astype(jnp.float32)
    if n_pad > n:
        # Pad ids with a value matching no cluster tile; pad features with 0.0
        # (not -inf: padded rows are never selected, and finite values avoid
        # inf/NaN hazards in the bf16 gather matmuls).
        sidx = jnp.concatenate([sidx, jnp.full((n_pad - n,), c_pad, jnp.int32)])
        sfeat = jnp.concatenate([sfeat, jnp.zeros((n_pad - n, f), jnp.float32)])

    # Per-cluster-tile vertex block ranges.
    tile_lo_id = jnp.arange(num_c_tiles, dtype=jnp.int32) * tile_c
    lo = jnp.searchsorted(sidx, tile_lo_id, side="left").astype(jnp.int32)
    hi = jnp.searchsorted(sidx, tile_lo_id + tile_c, side="left").astype(jnp.int32)
    has_rows = hi > lo
    first_blk = lo // tile_n
    last_blk = jnp.maximum(hi - 1, 0) // tile_n
    nb = jnp.where(has_rows, last_blk - first_blk + 1, 0).astype(jnp.int32)
    fb = jnp.where(has_rows, first_blk, 0).astype(jnp.int32)

    # Compacted global work list: one entry per (cluster tile, vertex block).
    incl = jnp.cumsum(nb)
    excl = incl - nb
    total = incl[-1]
    gpos = jnp.arange(w_global, dtype=jnp.int32)
    gtile = jnp.clip(jnp.searchsorted(incl, gpos, side="right"),
                     0, num_c_tiles - 1).astype(jnp.int32)
    gblk = (fb[gtile] + (gpos - excl[gtile])).astype(jnp.int32)
    gfirst = gpos == excl[gtile]

    # Split the work list across the leading (parallel) grid axis at cluster
    # tile boundaries so each TensorCore owns disjoint output tiles.  Padding
    # steps repeat the split's last real (tile, block) pair: valid=0 skips all
    # compute and the repeated block indices skip redundant DMAs.
    split_tile0 = jnp.arange(num_splits, dtype=jnp.int32) * cps
    g_start = excl[split_tile0]
    g_end = jnp.concatenate([g_start[1:], jnp.reshape(total, (1,))])
    has_work = g_end > g_start
    last_pos = jnp.clip(g_end - 1, 0, w_global - 1)
    pad_tile = jnp.where(has_work, gtile[last_pos], split_tile0)
    pad_blk = jnp.where(has_work, gblk[last_pos], 0)

    prow = jnp.arange(w_split, dtype=jnp.int32)[None, :]
    gidx = g_start[:, None] + prow
    in_range = gidx < g_end[:, None]
    gidx_c = jnp.clip(gidx, 0, w_global - 1)
    work_c = jnp.where(in_range, gtile[gidx_c], pad_tile[:, None])
    work_blk = jnp.where(in_range, gblk[gidx_c], pad_blk[:, None])
    work_first = jnp.where(in_range, gfirst[gidx_c],
                           (~has_work)[:, None] & (prow == 0))
    # Flat 1D int32 arrays keep the SMEM footprint O(W) with no 2D padding.
    work_c = jnp.clip(work_c, 0, num_c_tiles - 1).astype(jnp.int32).reshape(-1)
    work_blk = jnp.clip(work_blk, 0, num_n_blocks - 1).astype(jnp.int32).reshape(-1)
    work_first = work_first.astype(jnp.int32).reshape(-1)
    work_valid = in_range.astype(jnp.int32).reshape(-1)

    # Ids in both layouts + per-block run-boundary marks (bit0=head, bit1=tail).
    ids_col = sidx.reshape(n_pad, 1)
    ids_row = sidx.reshape(num_n_blocks, 1, tile_n)
    sid2 = sidx.reshape(num_n_blocks, tile_n)
    neg = jnp.full((num_n_blocks, 1), -1, jnp.int32)
    prev_ids = jnp.concatenate([neg, sid2[:, :-1]], axis=1)
    next_ids = jnp.concatenate([sid2[:, 1:], neg], axis=1)
    marks = ((sid2 != prev_ids).astype(jnp.int32)
             + 2 * (sid2 != next_ids).astype(jnp.int32))
    marks = marks.reshape(num_n_blocks, 1, tile_n)

    kernel = _make_scatter_amax_kernel(tile_c, tile_n, f, w_split, fmin)

    grid_spec = pltpu.PrefetchScalarGridSpec(
        num_scalar_prefetch=4,
        grid=(num_splits, w_split),
        in_specs=[
            pl.BlockSpec((tile_n, 1),
                         lambda t, p, wc, wb, fr, vd: (wb[t * w_split + p], 0)),
            pl.BlockSpec((1, 1, tile_n),
                         lambda t, p, wc, wb, fr, vd: (wb[t * w_split + p], 0, 0)),
            pl.BlockSpec((1, 1, tile_n),
                         lambda t, p, wc, wb, fr, vd: (wb[t * w_split + p], 0, 0)),
            pl.BlockSpec((tile_n, f),
                         lambda t, p, wc, wb, fr, vd: (wb[t * w_split + p], 0)),
        ],
        out_specs=pl.BlockSpec(
            (tile_c, f),
            lambda t, p, wc, wb, fr, vd: (wc[t * w_split + p], 0)),
    )

    out = pl.pallas_call(
        kernel,
        out_shape=jax.ShapeDtypeStruct((c_pad, f), jnp.float32),
        grid_spec=grid_spec,
        compiler_params=pltpu.CompilerParams(
            dimension_semantics=("parallel", "arbitrary"),
            vmem_limit_bytes=8 * 1024 * 1024,   # actual footprint ~3-4 MiB
        ),
    )(work_c, work_blk, work_first, work_valid, ids_col, ids_row, marks, sfeat)
    return out


# ---- forward (glue in plain JAX, hot path in Pallas) -------------------------
def graph_pooling_forward(vertices, features, edges):
    n, _ = vertices.shape
    e = edges.shape[0]
    c_pad = _cdiv(n, TILE_C) * TILE_C  # at most N unique clusters

    # normalized_vertices = vertices // pool_size
    norm = (vertices // POOL_SIZE).astype(jnp.int32)

    # torch.unique(norm, dim=0, return_inverse=True): encode rows as scalar keys
    # (coords are nonnegative and < GRID_SIZE, so key order == lexicographic).
    keys = (norm[:, 0] * GRID_SIZE + norm[:, 1]) * GRID_SIZE + norm[:, 2]
    sentinel = jnp.iinfo(jnp.int32).max
    uniq_keys, inv = jnp.unique(keys, return_inverse=True, size=n,
                                fill_value=sentinel)
    inv = inv.reshape(-1).astype(jnp.int32)
    n_clusters = jnp.sum(uniq_keys != sentinel).astype(jnp.int32)
    valid_c = jnp.arange(n) < n_clusters

    # decode unique grid positions
    uz = uniq_keys % GRID_SIZE
    uy = (uniq_keys // GRID_SIZE) % GRID_SIZE
    ux = uniq_keys // (GRID_SIZE * GRID_SIZE)
    unique_positions = jnp.where(
        valid_c[:, None], jnp.stack([ux, uy, uz], axis=1).astype(jnp.int32), 0)

    # pooled_features: scatter-amax (Pallas kernel); mask padded cluster rows.
    pooled = pooled_features_pallas(inv, features, c_pad)[:n]
    pooled = jnp.where(valid_c[:, None], pooled, jnp.zeros((), pooled.dtype))

    if ONLY_VERTICES:
        return unique_positions, pooled, n_clusters

    # edge remapping: edge_index = indices[edges]; drop self loops; unique rows.
    # Dedup via lexsort + neighbor diff (no int32 key packing -> no overflow).
    edge_index = inv[edges]                                   # (E, 2)
    keep = edge_index[:, 0] != edge_index[:, 1]
    big = jnp.int32(sentinel)
    r0 = jnp.where(keep, edge_index[:, 0], big)
    r1 = jnp.where(keep, edge_index[:, 1], big)
    order_e = jnp.lexsort((r1, r0))
    s0 = r0[order_e]
    s1 = r1[order_e]
    valid = s0 != big
    first = jnp.arange(e) == 0
    diff_prev = first | (s0 != jnp.roll(s0, 1)) | (s1 != jnp.roll(s1, 1))
    is_uniq = valid & diff_prev
    n_uedges = jnp.sum(is_uniq).astype(jnp.int32)

    total = e + n
    dest = jnp.where(is_uniq, jnp.cumsum(is_uniq) - 1, total).astype(jnp.int32)
    e0 = jnp.zeros((total,), jnp.int32).at[dest].set(s0, mode="drop")
    e1 = jnp.zeros((total,), jnp.int32).at[dest].set(s1, mode="drop")

    # append self loops arange(n_clusters)
    sl = jnp.arange(n, dtype=jnp.int32)
    sl_dest = jnp.where(sl < n_clusters, n_uedges + sl, total).astype(jnp.int32)
    e0 = e0.at[sl_dest].set(sl, mode="drop")
    e1 = e1.at[sl_dest].set(sl, mode="drop")

    edge_out = jnp.stack([e0, e1], axis=1)
    n_edges = (n_uedges + (n_clusters if SELF_LOOP else 0)).astype(jnp.int32)
    if not SELF_LOOP:
        edge_out = edge_out[:e]
        n_edges = n_uedges

    return unique_positions, pooled, edge_out, n_clusters, n_edges


if __name__ == "__main__":
    key = jax.random.PRNGKey(0)
    k1, k2, k3 = jax.random.split(key, 3)

    N, F, E = 128, 128, 256
    # restrict coords so that pooling actually merges some vertices
    vertices = jax.random.randint(k1, (N, 3), 0, 32, dtype=jnp.int32)
    features = jax.random.normal(k2, (N, F), dtype=jnp.float32)
    edges = jax.random.randint(k3, (E, 2), 0, N, dtype=jnp.int32)

    up, pooled, edge_index, n_clusters, n_edges = graph_pooling_forward(
        vertices, features, edges)
    jax.block_until_ready((up, pooled, edge_index, n_clusters, n_edges))

    # sanity check of the Pallas scatter-amax against jax segment_max
    norm = (vertices // POOL_SIZE).astype(jnp.int32)
    keys = (norm[:, 0] * GRID_SIZE + norm[:, 1]) * GRID_SIZE + norm[:, 2]
    _, inv = jnp.unique(keys, return_inverse=True, size=N,
                        fill_value=jnp.iinfo(jnp.int32).max)
    ref = jax.ops.segment_max(features, inv.reshape(-1), num_segments=N)
    nc = int(n_clusters)
    assert jnp.allclose(pooled[:nc], ref[:nc], atol=1e-6), "pooled feature mismatch"

    print("KERNEL_OK")
</pallas_src>

<mosaic_0001>
module attributes {stable_mosaic.version = 11 : i64} {
  func.func @kernel(%arg0: i32, %arg1: i32, %arg2: memref<4xi32, #tpu.memory_space<smem>>, %arg3: memref<4xi32, #tpu.memory_space<smem>>, %arg4: memref<4xi32, #tpu.memory_space<smem>>, %arg5: memref<4xi32, #tpu.memory_space<smem>>, %arg6: memref<512x1xi32, #tpu.memory_space<vmem>>, %arg7: memref<1x1x512xi32, #tpu.memory_space<vmem>>, %arg8: memref<1x1x512xi32, #tpu.memory_space<vmem>>, %arg9: memref<512x128xf32, #tpu.memory_space<vmem>>, %arg10: memref<64x128xf32, #tpu.memory_space<vmem>>) attributes {dimension_semantics = [#tpu.dimension_semantics<parallel>, #tpu.dimension_semantics<arbitrary>], iteration_bounds = array<i64: 2, 2>, scalar_prefetch = 4 : i64, scratch_operands = 0 : i64, tpu.core_type = #tpu.core_type<tc>, window_params = [{transform_indices = @transform_0, window_bounds = array<i64: 512, 1>}, {transform_indices = @transform_1, window_bounds = array<i64: 1, 1, 512>}, {transform_indices = @transform_2, window_bounds = array<i64: 1, 1, 512>}, {transform_indices = @transform_3, window_bounds = array<i64: 512, 128>}, {transform_indices = @transform_4, window_bounds = array<i64: 64, 128>}]} {
    %c2_i32 = arith.constant 2 : i32
    %0 = arith.muli %arg0, %c2_i32 : i32
    %1 = arith.addi %0, %arg1 : i32
    %2 = arith.index_cast %1 : i32 to index
    %3 = memref.load %arg4[%2] : memref<4xi32, #tpu.memory_space<smem>>
    %c0_i32 = arith.constant 0 : i32
    %4 = arith.cmpi ne, %3, %c0_i32 : i32
    %5 = arith.extui %4 : i1 to i32
    %c0_i32_0 = arith.constant 0 : i32
    %6 = arith.cmpi ne, %5, %c0_i32_0 : i32
    scf.if %6 {
      %cst = arith.constant -3.40282347E+38 : f32
      %12 = vector.broadcast %cst : f32 to vector<64x128xf32>
      %c0 = arith.constant 0 : index
      %c0_3 = arith.constant 0 : index
      %13 = vector.load %arg10[%c0, %c0_3] : memref<64x128xf32, #tpu.memory_space<vmem>>, vector<64x128xf32>
      tpu.vector_store %arg10[%c0, %c0_3], %12 {strides = array<i32>} : memref<64x128xf32, #tpu.memory_space<vmem>>, vector<64x128xf32>,
    } else {
    }
    %7 = arith.index_cast %1 : i32 to index
    %8 = memref.load %arg5[%7] : memref<4xi32, #tpu.memory_space<smem>>
    %c0_i32_1 = arith.constant 0 : i32
    %9 = arith.cmpi ne, %8, %c0_i32_1 : i32
    %10 = arith.extui %9 : i1 to i32
    %c0_i32_2 = arith.constant 0 : i32
    %11 = arith.cmpi ne, %10, %c0_i32_2 : i32
    scf.if %11 {
      %12 = arith.index_cast %1 : i32 to index
      %13 = memref.load %arg2[%12] : memref<4xi32, #tpu.memory_space<smem>>
      %c64_i32 = arith.constant 64 : i32
      %14 = arith.muli %13, %c64_i32 : i32
      %c0 = arith.constant 0 : index
      %c0_3 = arith.constant 0 : index
      %15 = vector.load %arg6[%c0, %c0_3] : memref<512x1xi32, #tpu.memory_space<vmem>>, vector<512x1xi32>
      %c0_4 = arith.constant 0 : index
      %c0_5 = arith.constant 0 : index
      %c0_6 = arith.constant 0 : index
      %16 = vector.load %arg7[%c0_4, %c0_5, %c0_6] : memref<1x1x512xi32, #tpu.memory_space<vmem>>, vector<1x1x512xi32>
      %17 = vector.shape_cast %16 : vector<1x1x512xi32> to vector<1x512xi32>
      %c0_7 = arith.constant 0 : index
      %c0_8 = arith.constant 0 : index
      %c0_9 = arith.constant 0 : index
      %18 = vector.load %arg8[%c0_7, %c0_8, %c0_9] : memref<1x1x512xi32, #tpu.memory_space<vmem>>, vector<1x1x512xi32>
      %19 = vector.shape_cast %18 : vector<1x1x512xi32> to vector<1x512xi32>
      %c0_10 = arith.constant 0 : index
      %c0_11 = arith.constant 0 : index
      %20 = vector.load %arg9[%c0_10, %c0_11] : memref<512x128xf32, #tpu.memory_space<vmem>>, vector<512x128xf32>
      %c1_i32 = arith.constant 1 : i32
      %21 = tpu.dynamic_rotate %20 by %c1_i32 dim 0 : vector<512x128xf32>, i32 -> vector<512x128xf32>
      %c1_i32_12 = arith.constant 1 : i32
      %22 = tpu.dynamic_rotate %15 by %c1_i32_12 dim 0 : vector<512x1xi32>, i32 -> vector<512x1xi32>
      %23 = arith.cmpi eq, %22, %15 : vector<512x1xi32>
      %24 = arith.maximumf %20, %21 : vector<512x128xf32>
      %25 = vector.shape_cast %23 : vector<512x1xi1> to vector<512x1xi1>
      %26 = vector.broadcast %25 : vector<512x1xi1> to vector<512x128xi1>
      %27 = arith.select %26, %24, %20 : vector<512x128xi1>, vector<512x128xf32>
      %c2_i32_13 = arith.constant 2 : i32
      %28 = tpu.dynamic_rotate %27 by %c2_i32_13 dim 0 : vector<512x128xf32>, i32 -> vector<512x128xf32>
      %c2_i32_14 = arith.constant 2 : i32
      %29 = tpu.dynamic_rotate %15 by %c2_i32_14 dim 0 : vector<512x1xi32>, i32 -> vector<512x1xi32>
      %30 = arith.cmpi eq, %29, %15 : vector<512x1xi32>
      %31 = arith.maximumf %27, %28 : vector<512x128xf32>
      %32 = vector.shape_cast %30 : vector<512x1xi1> to vector<512x1xi1>
      %33 = vector.broadcast %32 : vector<512x1xi1> to vector<512x128xi1>
      %34 = arith.select %33, %31, %27 : vector<512x128xi1>, vector<512x128xf32>
      %c4_i32 = arith.constant 4 : i32
      %35 = tpu.dynamic_rotate %34 by %c4_i32 dim 0 : vector<512x128xf32>, i32 -> vector<512x128xf32>
      %c4_i32_15 = arith.constant 4 : i32
      %36 = tpu.dynamic_rotate %15 by %c4_i32_15 dim 0 : vector<512x1xi32>, i32 -> vector<512x1xi32>
      %37 = arith.cmpi eq, %36, %15 : vector<512x1xi32>
      %38 = arith.maximumf %34, %35 : vector<512x128xf32>
      %39 = vector.shape_cast %37 : vector<512x1xi1> to vector<512x1xi1>
      %40 = vector.broadcast %39 : vector<512x1xi1> to vector<512x128xi1>
      %41 = arith.select %40, %38, %34 : vector<512x128xi1>, vector<512x128xf32>
      %c8_i32 = arith.constant 8 : i32
      %42 = tpu.dynamic_rotate %41 by %c8_i32 dim 0 : vector<512x128xf32>, i32 -> vector<512x128xf32>
      %c8_i32_16 = arith.constant 8 : i32
      %43 = tpu.dynamic_rotate %15 by %c8_i32_16 dim 0 : vector<512x1xi32>, i32 -> vector<512x1xi32>
      %44 = arith.cmpi eq, %43, %15 : vector<512x1xi32>
      %45 = arith.maximumf %41, %42 : vector<512x128xf32>
      %46 = vector.shape_cast %44 : vector<512x1xi1> to vector<512x1xi1>
      %47 = vector.broadcast %46 : vector<512x1xi1> to vector<512x128xi1>
      %48 = arith.select %47, %45, %41 : vector<512x128xi1>, vector<512x128xf32>
      %c16_i32 = arith.constant 16 : i32
      %49 = tpu.dynamic_rotate %48 by %c16_i32 dim 0 : vector<512x128xf32>, i32 -> vector<512x128xf32>
      %c16_i32_17 = arith.constant 16 : i32
      %50 = tpu.dynamic_rotate %15 by %c16_i32_17 dim 0 : vector<512x1xi32>, i32 -> vector<512x1xi32>
      %51 = arith.cmpi eq, %50, %15 : vector<512x1xi32>
      %52 = arith.maximumf %48, %49 : vector<512x128xf32>
      %53 = vector.shape_cast %51 : vector<512x1xi1> to vector<512x1xi1>
      %54 = vector.broadcast %53 : vector<512x1xi1> to vector<512x128xi1>
      %55 = arith.select %54, %52, %48 : vector<512x128xi1>, vector<512x128xf32>
      %c32_i32 = arith.constant 32 : i32
      %56 = tpu.dynamic_rotate %55 by %c32_i32 dim 0 : vector<512x128xf32>, i32 -> vector<512x128xf32>
      %c32_i32_18 = arith.constant 32 : i32
      %57 = tpu.dynamic_rotate %15 by %c32_i32_18 dim 0 : vector<512x1xi32>, i32 -> vector<512x1xi32>
      %58 = arith.cmpi eq, %57, %15 : vector<512x1xi32>
      %59 = arith.maximumf %55, %56 : vector<512x128xf32>
      %60 = vector.shape_cast %58 : vector<512x1xi1> to vector<512x1xi1>
      %61 = vector.broadcast %60 : vector<512x1xi1> to vector<512x128xi1>
      %62 = arith.select %61, %59, %55 : vector<512x128xi1>, vector<512x128xf32>
      %c64_i32_19 = arith.constant 64 : i32
      %63 = tpu.dynamic_rotate %62 by %c64_i32_19 dim 0 : vector<512x128xf32>, i32 -> vector<512x128xf32>
      %c64_i32_20 = arith.constant 64 : i32
      %64 = tpu.dynamic_rotate %15 by %c64_i32_20 dim 0 : vector<512x1xi32>, i32 -> vector<512x1xi32>
      %65 = arith.cmpi eq, %64, %15 : vector<512x1xi32>
      %66 = arith.maximumf %62, %63 : vector<512x128xf32>
      %67 = vector.shape_cast %65 : vector<512x1xi1> to vector<512x1xi1>
      %68 = vector.broadcast %67 : vector<512x1xi1> to vector<512x128xi1>
      %69 = arith.select %68, %66, %62 : vector<512x128xi1>, vector<512x128xf32>
      %c128_i32 = arith.constant 128 : i32
      %70 = tpu.dynamic_rotate %69 by %c128_i32 dim 0 : vector<512x128xf32>, i32 -> vector<512x128xf32>
      %c128_i32_21 = arith.constant 128 : i32
      %71 = tpu.dynamic_rotate %15 by %c128_i32_21 dim 0 : vector<512x1xi32>, i32 -> vector<512x1xi32>
      %72 = arith.cmpi eq, %71, %15 : vector<512x1xi32>
      %73 = arith.maximumf %69, %70 : vector<512x128xf32>
      %74 = vector.shape_cast %72 : vector<512x1xi1> to vector<512x1xi1>
      %75 = vector.broadcast %74 : vector<512x1xi1> to vector<512x128xi1>
      %76 = arith.select %75, %73, %69 : vector<512x128xi1>, vector<512x128xf32>
      %c256_i32 = arith.constant 256 : i32
      %77 = tpu.dynamic_rotate %76 by %c256_i32 dim 0 : vector<512x128xf32>, i32 -> vector<512x128xf32>
      %c256_i32_22 = arith.constant 256 : i32
      %78 = tpu.dynamic_rotate %15 by %c256_i32_22 dim 0 : vector<512x1xi32>, i32 -> vector<512x1xi32>
      %79 = arith.cmpi eq, %78, %15 : vector<512x1xi32>
      %80 = arith.maximumf %76, %77 : vector<512x128xf32>
      %81 = vector.shape_cast %79 : vector<512x1xi1> to vector<512x1xi1>
      %82 = vector.broadcast %81 : vector<512x1xi1> to vector<512x128xi1>
      %83 = arith.select %82, %80, %76 : vector<512x128xi1>, vector<512x128xf32>
      %c1_i32_23 = arith.constant 1 : i32
      %84 = vector.broadcast %c1_i32_23 : i32 to vector<1x512xi32>
      %85 = arith.andi %19, %84 : vector<1x512xi32>
      %c0_i32_24 = arith.constant 0 : i32
      %86 = vector.broadcast %c0_i32_24 : i32 to vector<1x512xi32>
      %87 = arith.cmpi ne, %85, %86 : vector<1x512xi32>
      %c2_i32_25 = arith.constant 2 : i32
      %88 = vector.broadcast %c2_i32_25 : i32 to vector<1x512xi32>
      %89 = arith.andi %19, %88 : vector<1x512xi32>
      %c0_i32_26 = arith.constant 0 : i32
      %90 = vector.broadcast %c0_i32_26 : i32 to vector<1x512xi32>
      %91 = arith.cmpi ne, %89, %90 : vector<1x512xi32>
      %92 = tpu.iota {dimensions = array<i32: 0>} : vector<64x1xi32>
      %93 = vector.broadcast %14 : i32 to vector<64x1xi32>
      %94 = arith.addi %93, %92 : vector<64x1xi32>
      %95 = vector.broadcast %17 : vector<1x512xi32> to vector<64x512xi32>
      %96 = vector.broadcast %94 : vector<64x1xi32> to vector<64x512xi32>
      %97 = arith.cmpi eq, %95, %96 : vector<64x512xi32>
      %98 = vector.broadcast %91 : vector<1x512xi1> to vector<64x512xi1>
      %99 = arith.andi %97, %98 : vector<64x512xi1>
      %100 = arith.extui %99 : vector<64x512xi1> to vector<64x512xi32>
      %101 = arith.sitofp %100 : vector<64x512xi32> to vector<64x512xf32>
      %102 = vector.broadcast %87 : vector<1x512xi1> to vector<64x512xi1>
      %103 = arith.andi %97, %102 : vector<64x512xi1>
      %104 = arith.extui %103 : vector<64x512xi1> to vector<64x512xi32>
      %105 = arith.sitofp %104 : vector<64x512xi32> to vector<64x512xf32>
      %cst = arith.constant dense<0xFF800000> : vector<64xf32>
      %106 = vector.multi_reduction <maximumf>, %105, %cst [1] : vector<64x512xf32> to vector<64xf32>
      %107 = vector.shape_cast %106 : vector<64xf32> to vector<64x1xf32>
      %cst_27 = arith.constant 5.000000e-01 : f32
      %108 = vector.broadcast %cst_27 : f32 to vector<64x1xf32>
      %109 = arith.cmpf ogt, %107, %108 : vector<64x1xf32>
      %110 = arith.truncf %83 : vector<512x128xf32> to vector<512x128xbf16>
      %111 = arith.extf %110 : vector<512x128xbf16> to vector<512x128xf32>
      %112 = arith.subf %83, %111 : vector<512x128xf32>
      %113 = arith.truncf %112 : vector<512x128xf32> to vector<512x128xbf16>
      %114 = arith.extf %113 : vector<512x128xbf16> to vector<512x128xf32>
      %115 = arith.subf %112, %114 : vector<512x128xf32>
      %116 = arith.truncf %115 : vector<512x128xf32> to vector<512x128xbf16>
      %117 = arith.truncf %101 : vector<64x512xf32> to vector<64x512xbf16>
      %cst_28 = arith.constant dense<0.000000e+00> : vector<64x128xf32>
      %118 = tpu.matmul %117, %110, %cst_28 {dimension_numbers = #tpu.dot_dimension_numbers<[1], [0], [0], [1], [0, 0, 1, 1], [], []>} : vector<64x512xbf16>, vector<512x128xbf16>, vector<64x128xf32> -> vector<64x128xf32>
      %cst_29 = arith.constant dense<0.000000e+00> : vector<64x128xf32>
      %119 = tpu.matmul %117, %113, %cst_29 {dimension_numbers = #tpu.dot_dimension_numbers<[1], [0], [0], [1], [0, 0, 1, 1], [], []>} : vector<64x512xbf16>, vector<512x128xbf16>, vector<64x128xf32> -> vector<64x128xf32>
      %120 = arith.addf %118, %119 : vector<64x128xf32>
      %cst_30 = arith.constant dense<0.000000e+00> : vector<64x128xf32>
      %121 = tpu.matmul %117, %116, %cst_30 {dimension_numbers = #tpu.dot_dimension_numbers<[1], [0], [0], [1], [0, 0, 1, 1], [], []>} : vector<64x512xbf16>, vector<512x128xbf16>, vector<64x128xf32> -> vector<64x128xf32>
      %122 = arith.addf %120, %121 : vector<64x128xf32>
      %123 = arith.truncf %105 : vector<64x512xf32> to vector<64x512xbf16>
      %cst_31 = arith.constant dense<0.000000e+00> : vector<64x128xf32>
      %124 = tpu.matmul %123, %110, %cst_31 {dimension_numbers = #tpu.dot_dimension_numbers<[1], [0], [0], [1], [0, 0, 1, 1], [], []>} : vector<64x512xbf16>, vector<512x128xbf16>, vector<64x128xf32> -> vector<64x128xf32>
      %cst_32 = arith.constant dense<0.000000e+00> : vector<64x128xf32>
      %125 = tpu.matmul %123, %113, %cst_32 {dimension_numbers = #tpu.dot_dimension_numbers<[1], [0], [0], [1], [0, 0, 1, 1], [], []>} : vector<64x512xbf16>, vector<512x128xbf16>, vector<64x128xf32> -> vector<64x128xf32>
      %126 = arith.addf %124, %125 : vector<64x128xf32>
      %cst_33 = arith.constant dense<0.000000e+00> : vector<64x128xf32>
      %127 = tpu.matmul %123, %116, %cst_33 {dimension_numbers = #tpu.dot_dimension_numbers<[1], [0], [0], [1], [0, 0, 1, 1], [], []>} : vector<64x512xbf16>, vector<512x128xbf16>, vector<64x128xf32> -> vector<64x128xf32>
      %128 = arith.addf %126, %127 : vector<64x128xf32>
      %129 = arith.maximumf %122, %128 : vector<64x128xf32>
      %cst_34 = arith.constant -3.40282347E+38 : f32
      %130 = vector.shape_cast %109 : vector<64x1xi1> to vector<64x1xi1>
      %131 = vector.broadcast %130 : vector<64x1xi1> to vector<64x128xi1>
      %132 = vector.broadcast %cst_34 : f32 to vector<64x128xf32>
      %133 = arith.select %131, %129, %132 : vector<64x128xi1>, vector<64x128xf32>
      %c0_35 = arith.constant 0 : index
      %c0_36 = arith.constant 0 : index
      %134 = vector.load %arg10[%c0_35, %c0_36] : memref<64x128xf32, #tpu.memory_space<vmem>>, vector<64x128xf32>
      %135 = arith.maximumf %134, %133 : vector<64x128xf32>
      %c0_37 = arith.constant 0 : index
      %c0_38 = arith.constant 0 : index
      %136 = vector.load %arg10[%c0_37, %c0_38] : memref<64x128xf32, #tpu.memory_space<vmem>>, vector<64x128xf32>
      tpu.vector_store %arg10[%c0_37, %c0_38], %135 {strides = array<i32>} : memref<64x128xf32, #tpu.memory_space<vmem>>, vector<64x128xf32>,
    } else {
    }
    return
  }
  func.func @transform_0(%arg0: i32, %arg1: i32, %arg2: memref<4xi32, #tpu.memory_space<smem>>, %arg3: memref<4xi32, #tpu.memory_space<smem>>, %arg4: memref<4xi32, #tpu.memory_space<smem>>, %arg5: memref<4xi32, #tpu.memory_space<smem>>) -> (i32, i32) {
    %c2_i32 = arith.constant 2 : i32
    %0 = arith.muli %arg0, %c2_i32 : i32
    %1 = arith.addi %0, %arg1 : i32
    %2 = arith.index_cast %1 : i32 to index
    %3 = memref.load %arg3[%2] : memref<4xi32, #tpu.memory_space<smem>>
    %c0_i32 = arith.constant 0 : i32
    %c0_i32_0 = arith.constant 0 : i32
    return %3, %c0_i32 : i32, i32
  }
  func.func @transform_1(%arg0: i32, %arg1: i32, %arg2: memref<4xi32, #tpu.memory_space<smem>>, %arg3: memref<4xi32, #tpu.memory_space<smem>>, %arg4: memref<4xi32, #tpu.memory_space<smem>>, %arg5: memref<4xi32, #tpu.memory_space<smem>>) -> (i32, i32, i32) {
    %c2_i32 = arith.constant 2 : i32
    %0 = arith.muli %arg0, %c2_i32 : i32
    %1 = arith.addi %0, %arg1 : i32
    %2 = arith.index_cast %1 : i32 to index
    %3 = memref.load %arg3[%2] : memref<4xi32, #tpu.memory_space<smem>>
    %c0_i32 = arith.constant 0 : i32
    %c0_i32_0 = arith.constant 0 : i32
    %c0_i32_1 = arith.constant 0 : i32
    return %3, %c0_i32, %c0_i32_0 : i32, i32, i32
  }
  func.func @transform_2(%arg0: i32, %arg1: i32, %arg2: memref<4xi32, #tpu.memory_space<smem>>, %arg3: memref<4xi32, #tpu.memory_space<smem>>, %arg4: memref<4xi32, #tpu.memory_space<smem>>, %arg5: memref<4xi32, #tpu.memory_space<smem>>) -> (i32, i32, i32) {
    %c2_i32 = arith.constant 2 : i32
    %0 = arith.muli %arg0, %c2_i32 : i32
    %1 = arith.addi %0, %arg1 : i32
    %2 = arith.index_cast %1 : i32 to index
    %3 = memref.load %arg3[%2] : memref<4xi32, #tpu.memory_space<smem>>
    %c0_i32 = arith.constant 0 : i32
    %c0_i32_0 = arith.constant 0 : i32
    %c0_i32_1 = arith.constant 0 : i32
    return %3, %c0_i32, %c0_i32_0 : i32, i32, i32
  }
  func.func @transform_3(%arg0: i32, %arg1: i32, %arg2: memref<4xi32, #tpu.memory_space<smem>>, %arg3: memref<4xi32, #tpu.memory_space<smem>>, %arg4: memref<4xi32, #tpu.memory_space<smem>>, %arg5: memref<4xi32, #tpu.memory_space<smem>>) -> (i32, i32) {
    %c2_i32 = arith.constant 2 : i32
    %0 = arith.muli %arg0, %c2_i32 : i32
    %1 = arith.addi %0, %arg1 : i32
    %2 = arith.index_cast %1 : i32 to index
    %3 = memref.load %arg3[%2] : memref<4xi32, #tpu.memory_space<smem>>
    %c0_i32 = arith.constant 0 : i32
    %c0_i32_0 = arith.constant 0 : i32
    return %3, %c0_i32 : i32, i32
  }
  func.func @transform_4(%arg0: i32, %arg1: i32, %arg2: memref<4xi32, #tpu.memory_space<smem>>, %arg3: memref<4xi32, #tpu.memory_space<smem>>, %arg4: memref<4xi32, #tpu.memory_space<smem>>, %arg5: memref<4xi32, #tpu.memory_space<smem>>) -> (i32, i32) {
    %c2_i32 = arith.constant 2 : i32
    %0 = arith.muli %arg0, %c2_i32 : i32
    %1 = arith.addi %0, %arg1 : i32
    %2 = arith.index_cast %1 : i32 to index
    %3 = memref.load %arg2[%2] : memref<4xi32, #tpu.memory_space<smem>>
    %c0_i32 = arith.constant 0 : i32
    %c0_i32_0 = arith.constant 0 : i32
    return %3, %c0_i32 : i32, i32
  }
}

</mosaic_0001>

<llo_original>
// kernel: tpu_custom_call.1
$region0: #{tpu_custom_call.1}
  #allocation0 [shape = 'u32[]', space=smem, size = 0x4, offset = 0x4, fixed_abs, tag = 'smem constant byte address 0x4 - core index']
  #allocation1 [shape = 'u32[72,128]{1,0:T(1,128)}', space=vmem, size = 0x9000, scoped, tag = 'internal scratch']
  #allocation2 [shape = 's32[1]{0}', space=sflag, size = 0x4, scoped, tag = 'scoped memory for tpu_custom_call.1']
  #allocation3 [shape = 'u8[512]{0}', space=smem, size = 0x200, scoped, tag = 'prefetched SMEM operand 0']
  #allocation4 [shape = 'u8[512]{0}', space=smem, size = 0x200, scoped, tag = 'prefetched SMEM operand 1']
  #allocation5 [shape = 'u8[512]{0}', space=smem, size = 0x200, scoped, tag = 'prefetched SMEM operand 2']
  #allocation6 [shape = 'u8[512]{0}', space=smem, size = 0x200, scoped, tag = 'prefetched SMEM operand 3']
  %s0 = inlined_call_operand.vmem [shape: s32[4], index: 0, kind: input, shape index: {}]
  %s1 = inlined_call_operand.vmem [shape: s32[4], index: 1, kind: input, shape index: {}]
  %s2 = inlined_call_operand.hbm [shape: s32[4], index: 2, kind: input, shape index: {}]
  %s3 = inlined_call_operand.hbm [shape: s32[4], index: 3, kind: input, shape index: {}]
  %s4 = inlined_call_operand.vmem [shape: s32[512,1], index: 4, kind: input, shape index: {}]
  %s5 = inlined_call_operand.vmem [shape: s32[1,1,512], index: 5, kind: input, shape index: {}]
  %s6 = inlined_call_operand.vmem [shape: s32[1,1,512], index: 6, kind: input, shape index: {}]
  %s7 = inlined_call_operand.vmem [shape: f32[512,128], index: 7, kind: input, shape index: {}]
  %s8 = inlined_call_operand.hbm [shape: f32[128,128], index: 8, kind: output, shape index: {}]
  %s9 = sld [smem:[#allocation0]]
  $region57: #{tpu_custom_call.1} parent=0
    _
  %s11 = ssub.s32 1, %s9
  %s12 = scalar_select 0, %s11, %s9
  %s14 = sshll.u32 %s0, 4
  %s15 = int_to_ptr.vmem [resolvable:$true] %s14
  %17 = dma.vmem_to_smem %s15, 16, [#allocation3], [#allocation2]
  %s19 = sshll.u32 %s1, 4
  %s20 = int_to_ptr.vmem [resolvable:$true] %s19
  %22 = dma.vmem_to_smem %s20, 16, [#allocation4], [#allocation2]
  %s24 = sshll.u32 %s2, 4
  %s25 = int_to_ptr.hbm [resolvable:$true] %s24
  %27 = dma.hbm_to_smem %s25, 16, [#allocation5], [#allocation2]
  %s29 = sshll.u32 %s3, 4
  %s30 = int_to_ptr.hbm [resolvable:$true] %s29
  %32 = dma.hbm_to_smem %s30, 16, [#allocation6], [#allocation2]
  %34 = dma.done [#allocation2], 64
  %35 = sfence
  $region1: #{tpu_custom_call.1} parent=0
    #allocation7 [shape = 'u8[65536]{0}', space=vmem, size = 0x10000, scoped, tag = 'output window, operand 0']
    #allocation8 [shape = 's32[2]{0}', space=sflag, size = 0x8, scoped, tag = 'scoped memory for tpu_custom_call.1']
    %36 = vsyncpa [#allocation8], 0
    %s37 = scalar_lea.sflag [#allocation8], 1
    %38 = vsyncpa %s37, 0
    loop: start=0, step=1, limit=6
    $region2: #{tpu_custom_call.1} parent=1 // loop_pre_header
      _
    $region3: #{tpu_custom_call.1} parent=1 // loop_header
      %s40 = sphi 0, %s44
      %p41 = scmp.ge.s32.totalorder %s40, 6
      %s47 = sphi 0, %s59
      %s48 = sphi 0, %s55
      %s49 = sphi 0, %s47
      %s50 = sphi 0, %s48
      %s51 = sphi 0, %s49
      %s52 = sphi 0, %s50
      %s68 = sphi 0, %s70
      %s71 = sphi 0, %s68
      %s72 = sphi 0, %s71
      %s88 = sphi 0, %s72
      %s100 = sphi 0, %s102
      %s103 = sphi 0, %s100
      %s104 = sphi 0, %s103
      %s120 = sphi 0, %s104
      %s132 = sphi 0, %s134
      %s135 = sphi 0, %s132
      %s136 = sphi 0, %s135
      %s152 = sphi 0, %s136
      %s164 = sphi 0, %s166
      %s167 = sphi 0, %s164
      %s168 = sphi 0, %s167
      %s184 = sphi 0, %s168
      %s196 = sphi 0, %s198
      %s199 = sphi 0, %s196
      %s200 = sphi 0, %s199
      %s216 = sphi 0, %s200
    $region4: #{tpu_custom_call.1} parent=1 // loop_header_branch
      %43 = sbr.rel (%p41) target = $region8
    $region5: #{tpu_custom_call.1} parent=1 // loop_body
      %s45 = ssub.s32 %s40, 1
      %s46 = ssub.s32 %s40, 2
      %s53 = sadd.s32 1, %s48
      %p54 = scmp.ge.s32.totalorder %s53, 2
      %s55 = scalar_select %p54, 0, %s53
      %s56 = sadd.s32 1, %s47
      %s57 = scalar_select %p54, %s56, %s47
      %p58 = scmp.ge.s32.totalorder %s57, 2
      %s59 = scalar_select %p58, 0, %s57
      %s60 = smul.u32 %s47, 2
      %s61 = sadd.s32 %s60, %s48
      %s62 = sld [smem:[#allocation4 + %s61]]
      %s63 = smul.u32 %s59, 2
      %s64 = sadd.s32 %s63, %s55
      %s65 = sld [smem:[#allocation4 + %s64]]
      %s66 = ssub.s32 %s62, %s65
      %p67 = scmp.eq.s32.totalorder %s66, 0
      %s69 = sadd.s32 %s68, 1
      %s70 = scalar_select %p67, %s68, %s69
      %p73 = pneg %p67
      %p74 = scmp.eq.s32.totalorder %s40, 3
      %p75 = por %p73, %p74
      %p76 = scmp.ne.s32.totalorder %s68, %s71
      %p77 = scmp.eq.s32.totalorder %s40, 0
      %p78 = por %p76, %p77
      %p79 = scmp.ne.s32.totalorder %s68, %s71
      %p80 = scmp.eq.s32.totalorder %s45, 3
      %p81 = por %p79, %p80
      %p82 = scmp.ne.s32.totalorder %s71, %s72
      %p83 = scmp.eq.s32.totalorder %s45, 0
      %p84 = por %p82, %p83
      %p85 = scmp.ne.s32.totalorder %s71, %s72
      %p86 = scmp.eq.s32.totalorder %s46, 3
      %p87 = por %p85, %p86
      %p89 = scmp.ne.s32.totalorder %s72, %s88
      %p90 = scmp.eq.s32.totalorder %s46, 0
      %p91 = por %p89, %p90
      %s92 = smul.u32 %s47, 2
      %s93 = sadd.s32 %s92, %s48
      %s94 = sld [smem:[#allocation4 + %s93]]
      %s95 = smul.u32 %s59, 2
      %s96 = sadd.s32 %s95, %s55
      %s97 = sld [smem:[#allocation4 + %s96]]
      %s98 = ssub.s32 %s94, %s97
      %p99 = scmp.eq.s32.totalorder %s98, 0
      %s101 = sadd.s32 %s100, 1
      %s102 = scalar_select %p99, %s100, %s101
      %p105 = pneg %p99
      %p106 = scmp.eq.s32.totalorder %s40, 3
      %p107 = por %p105, %p106
      %p108 = scmp.ne.s32.totalorder %s100, %s103
      %p109 = scmp.eq.s32.totalorder %s40, 0
      %p110 = por %p108, %p109
      %p111 = scmp.ne.s32.totalorder %s100, %s103
      %p112 = scmp.eq.s32.totalorder %s45, 3
      %p113 = por %p111, %p112
      %p114 = scmp.ne.s32.totalorder %s103, %s104
      %p115 = scmp.eq.s32.totalorder %s45, 0
      %p116 = por %p114, %p115
      %p117 = scmp.ne.s32.totalorder %s103, %s104
      %p118 = scmp.eq.s32.totalorder %s46, 3
      %p119 = por %p117, %p118
      %p121 = scmp.ne.s32.totalorder %s104, %s120
      %p122 = scmp.eq.s32.totalorder %s46, 0
      %p123 = por %p121, %p122
      %s124 = smul.u32 %s47, 2
      %s125 = sadd.s32 %s124, %s48
      %s126 = sld [smem:[#allocation4 + %s125]]
      %s127 = smul.u32 %s59, 2
      %s128 = sadd.s32 %s127, %s55
      %s129 = sld [smem:[#allocation4 + %s128]]
      %s130 = ssub.s32 %s126, %s129
      %p131 = scmp.eq.s32.totalorder %s130, 0
      %s133 = sadd.s32 %s132, 1
      %s134 = scalar_select %p131, %s132, %s133
      %p137 = pneg %p131
      %p138 = scmp.eq.s32.totalorder %s40, 3
      %p139 = por %p137, %p138
      %p140 = scmp.ne.s32.totalorder %s132, %s135
      %p141 = scmp.eq.s32.totalorder %s40, 0
      %p142 = por %p140, %p141
      %p143 = scmp.ne.s32.totalorder %s132, %s135
      %p144 = scmp.eq.s32.totalorder %s45, 3
      %p145 = por %p143, %p144
      %p146 = scmp.ne.s32.totalorder %s135, %s136
      %p147 = scmp.eq.s32.totalorder %s45, 0
      %p148 = por %p146, %p147
      %p149 = scmp.ne.s32.totalorder %s135, %s136
      %p150 = scmp.eq.s32.totalorder %s46, 3
      %p151 = por %p149, %p150
      %p153 = scmp.ne.s32.totalorder %s136, %s152
      %p154 = scmp.eq.s32.totalorder %s46, 0
      %p155 = por %p153, %p154
      %s156 = smul.u32 %s47, 2
      %s157 = sadd.s32 %s156, %s48
      %s158 = sld [smem:[#allocation4 + %s157]]
      %s159 = smul.u32 %s59, 2
      %s160 = sadd.s32 %s159, %s55
      %s161 = sld [smem:[#allocation4 + %s160]]
      %s162 = ssub.s32 %s158, %s161
      %p163 = scmp.eq.s32.totalorder %s162, 0
      %s165 = sadd.s32 %s164, 1
      %s166 = scalar_select %p163, %s164, %s165
      %p169 = pneg %p163
      %p170 = scmp.eq.s32.totalorder %s40, 3
      %p171 = por %p169, %p170
      %p172 = scmp.ne.s32.totalorder %s164, %s167
      %p173 = scmp.eq.s32.totalorder %s40, 0
      %p174 = por %p172, %p173
      %p175 = scmp.ne.s32.totalorder %s164, %s167
      %p176 = scmp.eq.s32.totalorder %s45, 3
      %p177 = por %p175, %p176
      %p178 = scmp.ne.s32.totalorder %s167, %s168
      %p179 = scmp.eq.s32.totalorder %s45, 0
      %p180 = por %p178, %p179
      %p181 = scmp.ne.s32.totalorder %s167, %s168
      %p182 = scmp.eq.s32.totalorder %s46, 3
      %p183 = por %p181, %p182
      %p185 = scmp.ne.s32.totalorder %s168, %s184
      %p186 = scmp.eq.s32.totalorder %s46, 0
      %p187 = por %p185, %p186
      %s188 = smul.u32 %s47, 2
      %s189 = sadd.s32 %s188, %s48
      %s190 = sld [smem:[#allocation3 + %s189]]
      %s191 = smul.u32 %s59, 2
      %s192 = sadd.s32 %s191, %s55
      %s193 = sld [smem:[#allocation3 + %s192]]
      %s194 = ssub.s32 %s190, %s193
      %p195 = scmp.eq.s32.totalorder %s194, 0
      %s197 = sadd.s32 %s196, 1
      %s198 = scalar_select %p195, %s196, %s197
      %p201 = pneg %p195
      %p202 = scmp.eq.s32.totalorder %s40, 3
      %p203 = por %p201, %p202
      %p204 = scmp.ne.s32.totalorder %s196, %s199
      %p205 = scmp.eq.s32.totalorder %s40, 0
      %p206 = por %p204, %p205
      %p207 = scmp.ne.s32.totalorder %s196, %s199
      %p208 = scmp.eq.s32.totalorder %s45, 3
      %p209 = por %p207, %p208
      %p210 = scmp.ne.s32.totalorder %s199, %s200
      %p211 = scmp.eq.s32.totalorder %s45, 0
      %p212 = por %p210, %p211
      %p213 = scmp.ne.s32.totalorder %s199, %s200
      %p214 = scmp.eq.s32.totalorder %s46, 3
      %p215 = por %p213, %p214
      %p217 = scmp.ne.s32.totalorder %s200, %s216
      %p218 = scmp.eq.s32.totalorder %s46, 0
      %p219 = por %p217, %p218
      %p220 = scmp.le.s32.totalorder 1, %s40
      %p221 = scmp.lt.s32.totalorder %s40, 5
      %p222 = pnand %p220, %p221
      %p223 = pneg %p222
      // Predicated region
      $region9: #{tpu_custom_call.1} parent=5 // pred_check
        _
      $region10: #{tpu_custom_call.1} parent=5 // pred_check_branch
        %225 = sbr.rel (%p222) target = $region12
      $region11: #{tpu_custom_call.1} parent=5 // pred_region
        %s226 = ssub.s32 %s40, 1
      $region12: #{tpu_custom_call.1} parent=5 // pred_fallthru
        _
      %p227 = scmp.lt.s32.totalorder %s40, 4
      // Predicated region
      $region13: #{tpu_custom_call.1} parent=5 // pred_check
        %p228 = pneg %p227
      $region14: #{tpu_custom_call.1} parent=5 // pred_check_branch
        %230 = sbr.rel (%p228) target = $region16
      $region15: #{tpu_custom_call.1} parent=5 // pred_region
        // Predicated region
        $region17: #{tpu_custom_call.1} parent=15 // pred_check
          %p231 = pneg %p78
        $region18: #{tpu_custom_call.1} parent=15 // pred_check_branch
          %233 = sbr.rel (%p231) target = $region20
        $region19: #{tpu_custom_call.1} parent=15 // pred_region
          %s234 = smul.u32 %s47, 2
          %s235 = sadd.s32 %s234, %s48
          %s236 = sld [smem:[#allocation4 + %s235]]
          %s237 = smul.u32 64, %s236
          %p238 = scmp.lt.s32.totalorder %s237, 63
          %s239 = scalar_select %p238, %s237, 63
          %s240 = smul.addr %s239, 8
          %s241 = scalar_lea.vmem %s4, %s240
          %s242 = smul.u32 %s47, 2
          %s243 = sadd.s32 %s242, %s48
          %s244 = sld [smem:[#allocation4 + %s243]]
          %s245 = smul.u32 64, %s244
        $region20: #{tpu_custom_call.1} parent=15 // pred_fallthru
          _
        // Predicated region
        $region21: #{tpu_custom_call.1} parent=15 // pred_check
          %p246 = pneg %p110
        $region22: #{tpu_custom_call.1} parent=15 // pred_check_branch
          %248 = sbr.rel (%p246) target = $region24
        $region23: #{tpu_custom_call.1} parent=15 // pred_region
          %s249 = smul.u32 %s47, 2
          %s250 = sadd.s32 %s249, %s48
          %s251 = sld [smem:[#allocation4 + %s250]]
          %p252 = scmp.lt.s32.totalorder %s251, 0
          %s253 = scalar_select %p252, %s251, 0
          %s254 = smul.addr %s253, 4
          %s255 = scalar_lea.vmem %s5, %s254
          %s256 = smul.u32 %s47, 2
          %s257 = sadd.s32 %s256, %s48
          %s258 = sld [smem:[#allocation4 + %s257]]
        $region24: #{tpu_custom_call.1} parent=15 // pred_fallthru
          _
        // Predicated region
        $region25: #{tpu_custom_call.1} parent=15 // pred_check
          %p259 = pneg %p142
        $region26: #{tpu_custom_call.1} parent=15 // pred_check_branch
          %261 = sbr.rel (%p259) target = $region28
        $region27: #{tpu_custom_call.1} parent=15 // pred_region
          %s262 = smul.u32 %s47, 2
          %s263 = sadd.s32 %s262, %s48
          %s264 = sld [smem:[#allocation4 + %s263]]
          %p265 = scmp.lt.s32.totalorder %s264, 0
          %s266 = scalar_select %p265, %s264, 0
          %s267 = smul.addr %s266, 4
          %s268 = scalar_lea.vmem %s6, %s267
          %s269 = smul.u32 %s47, 2
          %s270 = sadd.s32 %s269, %s48
          %s271 = sld [smem:[#allocation4 + %s270]]
        $region28: #{tpu_custom_call.1} parent=15 // pred_fallthru
          _
        // Predicated region
        $region29: #{tpu_custom_call.1} parent=15 // pred_check
          %p272 = pneg %p174
        $region30: #{tpu_custom_call.1} parent=15 // pred_check_branch
          %274 = sbr.rel (%p272) target = $region32
        $region31: #{tpu_custom_call.1} parent=15 // pred_region
          %s275 = smul.u32 %s47, 2
          %s276 = sadd.s32 %s275, %s48
          %s277 = sld [smem:[#allocation4 + %s276]]
          %s278 = smul.u32 64, %s277
          %p279 = scmp.lt.s32.totalorder %s278, 63
          %s280 = scalar_select %p279, %s278, 63
          %s281 = smul.addr %s280, 8
          %s282 = scalar_lea.vmem %s7, %s281
          %s283 = smul.u32 %s47, 2
          %s284 = sadd.s32 %s283, %s48
          %s285 = sld [smem:[#allocation4 + %s284]]
          %s286 = smul.u32 64, %s285
        $region32: #{tpu_custom_call.1} parent=15 // pred_fallthru
          _
      $region16: #{tpu_custom_call.1} parent=5 // pred_fallthru
        _
      %p287 = scmp.le.s32.totalorder 1, %s40
      %p288 = scmp.lt.s32.totalorder %s40, 5
      %p289 = pnand %p287, %p288
      %p290 = pneg %p289
      // Predicated region
      $region33: #{tpu_custom_call.1} parent=5 // pred_check
        _
      $region34: #{tpu_custom_call.1} parent=5 // pred_check_branch
        %292 = sbr.rel (%p289) target = $region36
      $region35: #{tpu_custom_call.1} parent=5 // pred_region
        %s293 = ssub.s32 %s40, 1
        %s294 = smul.u32 %s49, 2
        %s295 = sadd.s32 %s294, %s50
        %s296 = sld [smem:[#allocation4 + %s295]]
        %s297 = smul.u32 64, %s296
        %p298 = scmp.lt.s32.totalorder %s297, 63
        %s299 = scalar_select %p298, %s297, 63
        %s300 = smul.addr %s299, 8
        %s301 = scalar_lea.vmem %s4, %s300
        %p302 = pneg %p84
        %p303 = pneg %p81
        %s304 = smul.u32 %s49, 2
        %s305 = sadd.s32 %s304, %s50
        %s306 = sld [smem:[#allocation4 + %s305]]
        %p307 = scmp.lt.s32.totalorder %s306, 0
        %s308 = scalar_select %p307, %s306, 0
        %s309 = smul.addr %s308, 4
        %s310 = scalar_lea.vmem %s5, %s309
        %p311 = pneg %p116
        %p312 = pneg %p113
        %s313 = smul.u32 %s49, 2
        %s314 = sadd.s32 %s313, %s50
        %s315 = sld [smem:[#allocation4 + %s314]]
        %p316 = scmp.lt.s32.totalorder %s315, 0
        %s317 = scalar_select %p316, %s315, 0
        %s318 = smul.addr %s317, 4
        %s319 = scalar_lea.vmem %s6, %s318
        %p320 = pneg %p148
        %p321 = pneg %p145
        %s322 = smul.u32 %s49, 2
        %s323 = sadd.s32 %s322, %s50
        %s324 = sld [smem:[#allocation4 + %s323]]
        %s325 = smul.u32 64, %s324
        %p326 = scmp.lt.s32.totalorder %s325, 63
        %s327 = scalar_select %p326, %s325, 63
        %s328 = smul.addr %s327, 8
        %s329 = scalar_lea.vmem %s7, %s328
        %p330 = pneg %p180
        %p331 = pneg %p177
        %p332 = pneg %p212
        %p333 = pneg %p209
        %s334 = sand.u32 %s199, 1
        %s335 = scalar_lea.sflag [#allocation8], %s334
        %s336 = sand.u32 %s199, 1
        %s337 = smul.addr %s336, 64
        %s338 = scalar_lea.vmem [#allocation7], %s337
        %s339 = smul.u32 %s49, 2
        %s340 = sadd.s32 %s339, %s50
        %s341 = sld [smem:[#allocation4 + %s340]]
        %s342 = smul.u32 64, %s341
        %p343 = scmp.lt.s32.totalorder %s342, 63
        %s344 = scalar_select %p343, %s342, 63
        %s345 = smul.addr %s344, 8
        %s346 = scalar_lea.vmem %s4, %s345
        %s347 = smul.u32 %s49, 2
        %s348 = sadd.s32 %s347, %s50
        %s349 = sld [smem:[#allocation4 + %s348]]
        %s350 = smul.u32 64, %s349
        %s351 = smul.u32 %s49, 2
        %s352 = sadd.s32 %s351, %s50
        %s353 = sld [smem:[#allocation4 + %s352]]
        %p354 = scmp.lt.s32.totalorder %s353, 0
        %s355 = scalar_select %p354, %s353, 0
        %s356 = smul.addr %s355, 4
        %s357 = scalar_lea.vmem %s5, %s356
        %s358 = smul.u32 %s49, 2
        %s359 = sadd.s32 %s358, %s50
        %s360 = sld [smem:[#allocation4 + %s359]]
        %s361 = smul.u32 %s49, 2
        %s362 = sadd.s32 %s361, %s50
        %s363 = sld [smem:[#allocation4 + %s362]]
        %p364 = scmp.lt.s32.totalorder %s363, 0
        %s365 = scalar_select %p364, %s363, 0
        %s366 = smul.addr %s365, 4
        %s367 = scalar_lea.vmem %s6, %s366
        %s368 = smul.u32 %s49, 2
        %s369 = sadd.s32 %s368, %s50
        %s370 = sld [smem:[#allocation4 + %s369]]
        %s371 = smul.u32 %s49, 2
        %s372 = sadd.s32 %s371, %s50
        %s373 = sld [smem:[#allocation4 + %s372]]
        %s374 = smul.u32 64, %s373
        %p375 = scmp.lt.s32.totalorder %s374, 63
        %s376 = scalar_select %p375, %s374, 63
        %s377 = smul.addr %s376, 8
        %s378 = scalar_lea.vmem %s7, %s377
        %s379 = smul.u32 %s49, 2
        %s380 = sadd.s32 %s379, %s50
        %s381 = sld [smem:[#allocation4 + %s380]]
        %s382 = smul.u32 64, %s381
        %s383 = smul.u32 %s49, 2
        %s384 = sadd.s32 %s383, %s50
        %s385 = sld [smem:[#allocation3 + %s384]]
        %s386 = smul.u32 8, %s385
        %s387 = smul.u32 %s49, 2
        %s388 = sadd.s32 %s387, %s50
        %s389 = sld [smem:[#allocation5 + %s388]]
        %p390 = scmp.ne.s32.totalorder %s389, 0
        // Predicated region
        $region37: #{tpu_custom_call.1} parent=35 // pred_check
          %p391 = pneg %p390
        $region38: #{tpu_custom_call.1} parent=35 // pred_check_branch
          %393 = sbr.rel (%p391) target = $region40
        $region39: #{tpu_custom_call.1} parent=35 // pred_region
          %394 = vst [vmem:[%s338] sm:$0xff] -3.4028235e+38
          %395 = vst [vmem:[%s338 + $0x8] sm:$0xff] -3.4028235e+38
          %396 = vst [vmem:[%s338 + $0x10] sm:$0xff] -3.4028235e+38
          %397 = vst [vmem:[%s338 + $0x18] sm:$0xff] -3.4028235e+38
          %398 = vst [vmem:[%s338 + $0x20] sm:$0xff] -3.4028235e+38
          %399 = vst [vmem:[%s338 + $0x28] sm:$0xff] -3.4028235e+38
          %400 = vst [vmem:[%s338 + $0x30] sm:$0xff] -3.4028235e+38
          %401 = vst [vmem:[%s338 + $0x38] sm:$0xff] -3.4028235e+38
        $region40: #{tpu_custom_call.1} parent=35 // pred_fallthru
          _
        %s402 = sld [smem:[#allocation6 + %s388]]
        %p403 = scmp.ne.s32.totalorder %s402, 0
        // Predicated region
        $region41: #{tpu_custom_call.1} parent=35 // pred_check
          %p404 = pneg %p403
        $region42: #{tpu_custom_call.1} parent=35 // pred_check_branch
          %406 = sbr.rel (%p404) target = $region44
        $region43: #{tpu_custom_call.1} parent=35 // pred_region
          %s407 = sld [smem:[#allocation3 + %s388]]
          %s408 = smul.u32 %s407, 64
          %v409 = vld [vmem:[%s346] sm:$0xff]
          %v410 = vld [vmem:[%s346 + $0x8] sm:$0xff]
          %v411 = vld [vmem:[%s346 + $0x10] sm:$0xff]
          %v412 = vld [vmem:[%s346 + $0x18] sm:$0xff]
          %v413 = vld [vmem:[%s346 + $0x20] sm:$0xff]
          %v414 = vld [vmem:[%s346 + $0x28] sm:$0xff]
          %v415 = vld [vmem:[%s346 + $0x30] sm:$0xff]
          %v416 = vld [vmem:[%s346 + $0x38] sm:$0xff]
          %v417 = vld [vmem:[%s346 + $0x40] sm:$0xff]
          %v418 = vld [vmem:[%s346 + $0x48] sm:$0xff]
          %v419 = vld [vmem:[%s346 + $0x50] sm:$0xff]
          %v420 = vld [vmem:[%s346 + $0x58] sm:$0xff]
          %v421 = vld [vmem:[%s346 + $0x60] sm:$0xff]
          %v422 = vld [vmem:[%s346 + $0x68] sm:$0xff]
          %v423 = vld [vmem:[%s346 + $0x70] sm:$0xff]
          %v424 = vld [vmem:[%s346 + $0x78] sm:$0xff]
          %v425 = vld [vmem:[%s346 + $0x80] sm:$0xff]
          %v426 = vld [vmem:[%s346 + $0x88] sm:$0xff]
          %v427 = vld [vmem:[%s346 + $0x90] sm:$0xff]
          %v428 = vld [vmem:[%s346 + $0x98] sm:$0xff]
          %v429 = vld [vmem:[%s346 + $0xa0] sm:$0xff]
          %v430 = vld [vmem:[%s346 + $0xa8] sm:$0xff]
          %v431 = vld [vmem:[%s346 + $0xb0] sm:$0xff]
          %v432 = vld [vmem:[%s346 + $0xb8] sm:$0xff]
          %v433 = vld [vmem:[%s346 + $0xc0] sm:$0xff]
          %v434 = vld [vmem:[%s346 + $0xc8] sm:$0xff]
          %v435 = vld [vmem:[%s346 + $0xd0] sm:$0xff]
          %v436 = vld [vmem:[%s346 + $0xd8] sm:$0xff]
          %v437 = vld [vmem:[%s346 + $0xe0] sm:$0xff]
          %v438 = vld [vmem:[%s346 + $0xe8] sm:$0xff]
          %v439 = vld [vmem:[%s346 + $0xf0] sm:$0xff]
          %v440 = vld [vmem:[%s346 + $0xf8] sm:$0xff]
          %v441 = vld [vmem:[%s346 + $0x100] sm:$0xff]
          %v442 = vld [vmem:[%s346 + $0x108] sm:$0xff]
          %v443 = vld [vmem:[%s346 + $0x110] sm:$0xff]
          %v444 = vld [vmem:[%s346 + $0x118] sm:$0xff]
          %v445 = vld [vmem:[%s346 + $0x120] sm:$0xff]
          %v446 = vld [vmem:[%s346 + $0x128] sm:$0xff]
          %v447 = vld [vmem:[%s346 + $0x130] sm:$0xff]
          %v448 = vld [vmem:[%s346 + $0x138] sm:$0xff]
          %v449 = vld [vmem:[%s346 + $0x140] sm:$0xff]
          %v450 = vld [vmem:[%s346 + $0x148] sm:$0xff]
          %v451 = vld [vmem:[%s346 + $0x150] sm:$0xff]
          %v452 = vld [vmem:[%s346 + $0x158] sm:$0xff]
          %v453 = vld [vmem:[%s346 + $0x160] sm:$0xff]
          %v454 = vld [vmem:[%s346 + $0x168] sm:$0xff]
          %v455 = vld [vmem:[%s346 + $0x170] sm:$0xff]
          %v456 = vld [vmem:[%s346 + $0x178] sm:$0xff]
          %v457 = vld [vmem:[%s346 + $0x180] sm:$0xff]
          %v458 = vld [vmem:[%s346 + $0x188] sm:$0xff]
          %v459 = vld [vmem:[%s346 + $0x190] sm:$0xff]
          %v460 = vld [vmem:[%s346 + $0x198] sm:$0xff]
          %v461 = vld [vmem:[%s346 + $0x1a0] sm:$0xff]
          %v462 = vld [vmem:[%s346 + $0x1a8] sm:$0xff]
          %v463 = vld [vmem:[%s346 + $0x1b0] sm:$0xff]
          %v464 = vld [vmem:[%s346 + $0x1b8] sm:$0xff]
          %v465 = vld [vmem:[%s346 + $0x1c0] sm:$0xff]
          %v466 = vld [vmem:[%s346 + $0x1c8] sm:$0xff]
          %v467 = vld [vmem:[%s346 + $0x1d0] sm:$0xff]
          %v468 = vld [vmem:[%s346 + $0x1d8] sm:$0xff]
          %v469 = vld [vmem:[%s346 + $0x1e0] sm:$0xff]
          %v470 = vld [vmem:[%s346 + $0x1e8] sm:$0xff]
          %v471 = vld [vmem:[%s346 + $0x1f0] sm:$0xff]
          %v472 = vld [vmem:[%s346 + $0x1f8] sm:$0xff]
          %v473 = vld [vmem:[%s357] sm:$0xf]
          %v474 = vld [vmem:[%s367] sm:$0xf]
          %v475 = vld [vmem:[%s378] sm:$0xff]
          %v476 = vld [vmem:[%s378 + $0x8] sm:$0xff]
          %v477 = vld [vmem:[%s378 + $0x10] sm:$0xff]
          %v478 = vld [vmem:[%s378 + $0x18] sm:$0xff]
          %v479 = vld [vmem:[%s378 + $0x20] sm:$0xff]
          %v480 = vld [vmem:[%s378 + $0x28] sm:$0xff]
          %v481 = vld [vmem:[%s378 + $0x30] sm:$0xff]
          %v482 = vld [vmem:[%s378 + $0x38] sm:$0xff]
          %v483 = vld [vmem:[%s378 + $0x40] sm:$0xff]
          %v484 = vld [vmem:[%s378 + $0x48] sm:$0xff]
          %v485 = vld [vmem:[%s378 + $0x50] sm:$0xff]
          %v486 = vld [vmem:[%s378 + $0x58] sm:$0xff]
          %v487 = vld [vmem:[%s378 + $0x60] sm:$0xff]
          %v488 = vld [vmem:[%s378 + $0x68] sm:$0xff]
          %v489 = vld [vmem:[%s378 + $0x70] sm:$0xff]
          %v490 = vld [vmem:[%s378 + $0x78] sm:$0xff]
          %v491 = vld [vmem:[%s378 + $0x80] sm:$0xff]
          %v492 = vld [vmem:[%s378 + $0x88] sm:$0xff]
          %v493 = vld [vmem:[%s378 + $0x90] sm:$0xff]
          %v494 = vld [vmem:[%s378 + $0x98] sm:$0xff]
          %v495 = vld [vmem:[%s378 + $0xa0] sm:$0xff]
          %v496 = vld [vmem:[%s378 + $0xa8] sm:$0xff]
          %v497 = vld [vmem:[%s378 + $0xb0] sm:$0xff]
          %v498 = vld [vmem:[%s378 + $0xb8] sm:$0xff]
          %v499 = vld [vmem:[%s378 + $0xc0] sm:$0xff]
          %v500 = vld [vmem:[%s378 + $0xc8] sm:$0xff]
          %v501 = vld [vmem:[%s378 + $0xd0] sm:$0xff]
          %v502 = vld [vmem:[%s378 + $0xd8] sm:$0xff]
          %v503 = vld [vmem:[%s378 + $0xe0] sm:$0xff]
          %v504 = vld [vmem:[%s378 + $0xe8] sm:$0xff]
          %v505 = vld [vmem:[%s378 + $0xf0] sm:$0xff]
          %v506 = vld [vmem:[%s378 + $0xf8] sm:$0xff]
          %v507 = vld [vmem:[%s378 + $0x100] sm:$0xff]
          %v508 = vld [vmem:[%s378 + $0x108] sm:$0xff]
          %v509 = vld [vmem:[%s378 + $0x110] sm:$0xff]
          %v510 = vld [vmem:[%s378 + $0x118] sm:$0xff]
          %v511 = vld [vmem:[%s378 + $0x120] sm:$0xff]
          %v512 = vld [vmem:[%s378 + $0x128] sm:$0xff]
          %v513 = vld [vmem:[%s378 + $0x130] sm:$0xff]
          %v514 = vld [vmem:[%s378 + $0x138] sm:$0xff]
          %v515 = vld [vmem:[%s378 + $0x140] sm:$0xff]
          %v516 = vld [vmem:[%s378 + $0x148] sm:$0xff]
          %v517 = vld [vmem:[%s378 + $0x150] sm:$0xff]
          %v518 = vld [vmem:[%s378 + $0x158] sm:$0xff]
          %v519 = vld [vmem:[%s378 + $0x160] sm:$0xff]
          %v520 = vld [vmem:[%s378 + $0x168] sm:$0xff]
          %v521 = vld [vmem:[%s378 + $0x170] sm:$0xff]
          %v522 = vld [vmem:[%s378 + $0x178] sm:$0xff]
          %v523 = vld [vmem:[%s378 + $0x180] sm:$0xff]
          %v524 = vld [vmem:[%s378 + $0x188] sm:$0xff]
          %v525 = vld [vmem:[%s378 + $0x190] sm:$0xff]
          %v526 = vld [vmem:[%s378 + $0x198] sm:$0xff]
          %v527 = vld [vmem:[%s378 + $0x1a0] sm:$0xff]
          %v528 = vld [vmem:[%s378 + $0x1a8] sm:$0xff]
          %v529 = vld [vmem:[%s378 + $0x1b0] sm:$0xff]
          %v530 = vld [vmem:[%s378 + $0x1b8] sm:$0xff]
          %v531 = vld [vmem:[%s378 + $0x1c0] sm:$0xff]
          %v532 = vld [vmem:[%s378 + $0x1c8] sm:$0xff]
          %v533 = vld [vmem:[%s378 + $0x1d0] sm:$0xff]
          %v534 = vld [vmem:[%s378 + $0x1d8] sm:$0xff]
          %v535 = vld [vmem:[%s378 + $0x1e0] sm:$0xff]
          %v536 = vld [vmem:[%s378 + $0x1e8] sm:$0xff]
          %v537 = vld [vmem:[%s378 + $0x1f0] sm:$0xff]
          %v538 = vld [vmem:[%s378 + $0x1f8] sm:$0xff]
          %v539 = vrot.slane %v475, 7
          %v540 = vrot.slane %v476, 7
          %v541 = vrot.slane %v477, 7
          %v542 = vrot.slane %v478, 7
          %v543 = vrot.slane %v479, 7
          %v544 = vrot.slane %v480, 7
          %v545 = vrot.slane %v481, 7
          %v546 = vrot.slane %v482, 7
          %v547 = vrot.slane %v483, 7
          %v548 = vrot.slane %v484, 7
          %v549 = vrot.slane %v485, 7
          %v550 = vrot.slane %v486, 7
          %v551 = vrot.slane %v487, 7
          %v552 = vrot.slane %v488, 7
          %v553 = vrot.slane %v489, 7
          %v554 = vrot.slane %v490, 7
          %v555 = vrot.slane %v491, 7
          %v556 = vrot.slane %v492, 7
          %v557 = vrot.slane %v493, 7
          %v558 = vrot.slane %v494, 7
          %v559 = vrot.slane %v495, 7
          %v560 = vrot.slane %v496, 7
          %v561 = vrot.slane %v497, 7
          %v562 = vrot.slane %v498, 7
          %v563 = vrot.slane %v499, 7
          %v564 = vrot.slane %v500, 7
          %v565 = vrot.slane %v501, 7
          %v566 = vrot.slane %v502, 7
          %v567 = vrot.slane %v503, 7
          %v568 = vrot.slane %v504, 7
          %v569 = vrot.slane %v505, 7
          %v570 = vrot.slane %v506, 7
          %v571 = vrot.slane %v507, 7
          %v572 = vrot.slane %v508, 7
          %v573 = vrot.slane %v509, 7
          %v574 = vrot.slane %v510, 7
          %v575 = vrot.slane %v511, 7
          %v576 = vrot.slane %v512, 7
          %v577 = vrot.slane %v513, 7
          %v578 = vrot.slane %v514, 7
          %v579 = vrot.slane %v515, 7
          %v580 = vrot.slane %v516, 7
          %v581 = vrot.slane %v517, 7
          %v582 = vrot.slane %v518, 7
          %v583 = vrot.slane %v519, 7
          %v584 = vrot.slane %v520, 7
          %v585 = vrot.slane %v521, 7
          %v586 = vrot.slane %v522, 7
          %v587 = vrot.slane %v523, 7
          %v588 = vrot.slane %v524, 7
          %v589 = vrot.slane %v525, 7
          %v590 = vrot.slane %v526, 7
          %v591 = vrot.slane %v527, 7
          %v592 = vrot.slane %v528, 7
          %v593 = vrot.slane %v529, 7
          %v594 = vrot.slane %v530, 7
          %v595 = vrot.slane %v531, 7
          %v596 = vrot.slane %v532, 7
          %v597 = vrot.slane %v533, 7
          %v598 = vrot.slane %v534, 7
          %v599 = vrot.slane %v535, 7
          %v600 = vrot.slane %v536, 7
          %v601 = vrot.slane %v537, 7
          %v602 = vrot.slane %v538, 7
          %v603 = vlaneseq
          %v604 = vshrl.u32 %v603, 7
          %vm605 = vcmp.lt.s32.totalorder %v604, 1
          %v606 = vsel %vm605, %v601, %v602
          %v607 = vsel %vm605, %v600, %v601
          %v608 = vsel %vm605, %v599, %v600
          %v609 = vsel %vm605, %v598, %v599
          %v610 = vsel %vm605, %v597, %v598
          %v611 = vsel %vm605, %v596, %v597
          %v612 = vsel %vm605, %v595, %v596
          %v613 = vsel %vm605, %v594, %v595
          %v614 = vsel %vm605, %v593, %v594
          %v615 = vsel %vm605, %v592, %v593
          %v616 = vsel %vm605, %v591, %v592
          %v617 = vsel %vm605, %v590, %v591
          %v618 = vsel %vm605, %v589, %v590
          %v619 = vsel %vm605, %v588, %v589
          %v620 = vsel %vm605, %v587, %v588
          %v621 = vsel %vm605, %v586, %v587
          %v622 = vsel %vm605, %v585, %v586
          %v623 = vsel %vm605, %v584, %v585
          %v624 = vsel %vm605, %v583, %v584
          %v625 = vsel %vm605, %v582, %v583
          %v626 = vsel %vm605, %v581, %v582
          %v627 = vsel %vm605, %v580, %v581
          %v628 = vsel %vm605, %v579, %v580
          %v629 = vsel %vm605, %v578, %v579
          %v630 = vsel %vm605, %v577, %v578
          %v631 = vsel %vm605, %v576, %v577
          %v632 = vsel %vm605, %v575, %v576
          %v633 = vsel %vm605, %v574, %v575
          %v634 = vsel %vm605, %v573, %v574
          %v635 = vsel %vm605, %v572, %v573
          %v636 = vsel %vm605, %v571, %v572
          %v637 = vsel %vm605, %v570, %v571
          %v638 = vsel %vm605, %v569, %v570
          %v639 = vsel %vm605, %v568, %v569
          %v640 = vsel %vm605, %v567, %v568
          %v641 = vsel %vm605, %v566, %v567
          %v642 = vsel %vm605, %v565, %v566
          %v643 = vsel %vm605, %v564, %v565
          %v644 = vsel %vm605, %v563, %v564
          %v645 = vsel %vm605, %v562, %v563
          %v646 = vsel %vm605, %v561, %v562
          %v647 = vsel %vm605, %v560, %v561
          %v648 = vsel %vm605, %v559, %v560
          %v649 = vsel %vm605, %v558, %v559
          %v650 = vsel %vm605, %v557, %v558
          %v651 = vsel %vm605, %v556, %v557
          %v652 = vsel %vm605, %v555, %v556
          %v653 = vsel %vm605, %v554, %v555
          %v654 = vsel %vm605, %v553, %v554
          %v655 = vsel %vm605, %v552, %v553
          %v656 = vsel %vm605, %v551, %v552
          %v657 = vsel %vm605, %v550, %v551
          %v658 = vsel %vm605, %v549, %v550
          %v659 = vsel %vm605, %v548, %v549
          %v660 = vsel %vm605, %v547, %v548
          %v661 = vsel %vm605, %v546, %v547
          %v662 = vsel %vm605, %v545, %v546
          %v663 = vsel %vm605, %v544, %v545
          %v664 = vsel %vm605, %v543, %v544
          %v665 = vsel %vm605, %v542, %v543
          %v666 = vsel %vm605, %v541, %v542
          %v667 = vsel %vm605, %v540, %v541
          %v668 = vsel %vm605, %v539, %v540
          %v669 = vsel %vm605, %v602, %v539
          %v670 = vrot.slane %v409, 7
          %v671 = vrot.slane %v410, 7
          %v672 = vrot.slane %v411, 7
          %v673 = vrot.slane %v412, 7
          %v674 = vrot.slane %v413, 7
          %v675 = vrot.slane %v414, 7
          %v676 = vrot.slane %v415, 7
          %v677 = vrot.slane %v416, 7
          %v678 = vrot.slane %v417, 7
          %v679 = vrot.slane %v418, 7
          %v680 = vrot.slane %v419, 7
          %v681 = vrot.slane %v420, 7
          %v682 = vrot.slane %v421, 7
          %v683 = vrot.slane %v422, 7
          %v684 = vrot.slane %v423, 7
          %v685 = vrot.slane %v424, 7
          %v686 = vrot.slane %v425, 7
          %v687 = vrot.slane %v426, 7
          %v688 = vrot.slane %v427, 7
          %v689 = vrot.slane %v428, 7
          %v690 = vrot.slane %v429, 7
          %v691 = vrot.slane %v430, 7
          %v692 = vrot.slane %v431, 7
          %v693 = vrot.slane %v432, 7
          %v694 = vrot.slane %v433, 7
          %v695 = vrot.slane %v434, 7
          %v696 = vrot.slane %v435, 7
          %v697 = vrot.slane %v436, 7
          %v698 = vrot.slane %v437, 7
          %v699 = vrot.slane %v438, 7
          %v700 = vrot.slane %v439, 7
          %v701 = vrot.slane %v440, 7
          %v702 = vrot.slane %v441, 7
          %v703 = vrot.slane %v442, 7
          %v704 = vrot.slane %v443, 7
          %v705 = vrot.slane %v444, 7
          %v706 = vrot.slane %v445, 7
          %v707 = vrot.slane %v446, 7
          %v708 = vrot.slane %v447, 7
          %v709 = vrot.slane %v448, 7
          %v710 = vrot.slane %v449, 7
          %v711 = vrot.slane %v450, 7
          %v712 = vrot.slane %v451, 7
          %v713 = vrot.slane %v452, 7
          %v714 = vrot.slane %v453, 7
          %v715 = vrot.slane %v454, 7
          %v716 = vrot.slane %v455, 7
          %v717 = vrot.slane %v456, 7
          %v718 = vrot.slane %v457, 7
          %v719 = vrot.slane %v458, 7
          %v720 = vrot.slane %v459, 7
          %v721 = vrot.slane %v460, 7
          %v722 = vrot.slane %v461, 7
          %v723 = vrot.slane %v462, 7
          %v724 = vrot.slane %v463, 7
          %v725 = vrot.slane %v464, 7
          %v726 = vrot.slane %v465, 7
          %v727 = vrot.slane %v466, 7
          %v728 = vrot.slane %v467, 7
          %v729 = vrot.slane %v468, 7
          %v730 = vrot.slane %v469, 7
          %v731 = vrot.slane %v470, 7
          %v732 = vrot.slane %v471, 7
          %v733 = vrot.slane %v472, 7
          %v734 = vsel %vm605, %v732, %v733
          %v735 = vsel %vm605, %v731, %v732
          %v736 = vsel %vm605, %v730, %v731
          %v737 = vsel %vm605, %v729, %v730
          %v738 = vsel %vm605, %v728, %v729
          %v739 = vsel %vm605, %v727, %v728
          %v740 = vsel %vm605, %v726, %v727
          %v741 = vsel %vm605, %v725, %v726
          %v742 = vsel %vm605, %v724, %v725
          %v743 = vsel %vm605, %v723, %v724
          %v744 = vsel %vm605, %v722, %v723
          %v745 = vsel %vm605, %v721, %v722
          %v746 = vsel %vm605, %v720, %v721
          %v747 = vsel %vm605, %v719, %v720
          %v748 = vsel %vm605, %v718, %v719
          %v749 = vsel %vm605, %v717, %v718
          %v750 = vsel %vm605, %v716, %v717
          %v751 = vsel %vm605, %v715, %v716
          %v752 = vsel %vm605, %v714, %v715
          %v753 = vsel %vm605, %v713, %v714
          %v754 = vsel %vm605, %v712, %v713
          %v755 = vsel %vm605, %v711, %v712
          %v756 = vsel %vm605, %v710, %v711
          %v757 = vsel %vm605, %v709, %v710
          %v758 = vsel %vm605, %v708, %v709
          %v759 = vsel %vm605, %v707, %v708
          %v760 = vsel %vm605, %v706, %v707
          %v761 = vsel %vm605, %v705, %v706
          %v762 = vsel %vm605, %v704, %v705
          %v763 = vsel %vm605, %v703, %v704
          %v764 = vsel %vm605, %v702, %v703
          %v765 = vsel %vm605, %v701, %v702
          %v766 = vsel %vm605, %v700, %v701
          %v767 = vsel %vm605, %v699, %v700
          %v768 = vsel %vm605, %v698, %v699
          %v769 = vsel %vm605, %v697, %v698
          %v770 = vsel %vm605, %v696, %v697
          %v771 = vsel %vm605, %v695, %v696
          %v772 = vsel %vm605, %v694, %v695
          %v773 = vsel %vm605, %v693, %v694
          %v774 = vsel %vm605, %v692, %v693
          %v775 = vsel %vm605, %v691, %v692
          %v776 = vsel %vm605, %v690, %v691
          %v777 = vsel %vm605, %v689, %v690
          %v778 = vsel %vm605, %v688, %v689
          %v779 = vsel %vm605, %v687, %v688
          %v780 = vsel %vm605, %v686, %v687
          %v781 = vsel %vm605, %v685, %v686
          %v782 = vsel %vm605, %v684, %v685
          %v783 = vsel %vm605, %v683, %v684
          %v784 = vsel %vm605, %v682, %v683
          %v785 = vsel %vm605, %v681, %v682
          %v786 = vsel %vm605, %v680, %v681
          %v787 = vsel %vm605, %v679, %v680
          %v788 = vsel %vm605, %v678, %v679
          %v789 = vsel %vm605, %v677, %v678
          %v790 = vsel %vm605, %v676, %v677
          %v791 = vsel %vm605, %v675, %v676
          %v792 = vsel %vm605, %v674, %v675
          %v793 = vsel %vm605, %v673, %v674
          %v794 = vsel %vm605, %v672, %v673
          %v795 = vsel %vm605, %v671, %v672
          %v796 = vsel %vm605, %v670, %v671
          %v797 = vsel %vm605, %v733, %v670
          %vm798 = vcmp.eq.s32.totalorder %v797, %v409
          %vm799 = vcmp.eq.s32.totalorder %v796, %v410
          %vm800 = vcmp.eq.s32.totalorder %v795, %v411
          %vm801 = vcmp.eq.s32.totalorder %v794, %v412
          %vm802 = vcmp.eq.s32.totalorder %v793, %v413
          %vm803 = vcmp.eq.s32.totalorder %v792, %v414
          %vm804 = vcmp.eq.s32.totalorder %v791, %v415
          %vm805 = vcmp.eq.s32.totalorder %v790, %v416
          %vm806 = vcmp.eq.s32.totalorder %v789, %v417
          %vm807 = vcmp.eq.s32.totalorder %v788, %v418
          %vm808 = vcmp.eq.s32.totalorder %v787, %v419
          %vm809 = vcmp.eq.s32.totalorder %v786, %v420
          %vm810 = vcmp.eq.s32.totalorder %v785, %v421
          %vm811 = vcmp.eq.s32.totalorder %v784, %v422
          %vm812 = vcmp.eq.s32.totalorder %v783, %v423
          %vm813 = vcmp.eq.s32.totalorder %v782, %v424
          %vm814 = vcmp.eq.s32.totalorder %v781, %v425
          %vm815 = vcmp.eq.s32.totalorder %v780, %v426
          %vm816 = vcmp.eq.s32.totalorder %v779, %v427
          %vm817 = vcmp.eq.s32.totalorder %v778, %v428
          %vm818 = vcmp.eq.s32.totalorder %v777, %v429
          %vm819 = vcmp.eq.s32.totalorder %v776, %v430
          %vm820 = vcmp.eq.s32.totalorder %v775, %v431
          %vm821 = vcmp.eq.s32.totalorder %v774, %v432
          %vm822 = vcmp.eq.s32.totalorder %v773, %v433
          %vm823 = vcmp.eq.s32.totalorder %v772, %v434
          %vm824 = vcmp.eq.s32.totalorder %v771, %v435
          %vm825 = vcmp.eq.s32.totalorder %v770, %v436
          %vm826 = vcmp.eq.s32.totalorder %v769, %v437
          %vm827 = vcmp.eq.s32.totalorder %v768, %v438
          %vm828 = vcmp.eq.s32.totalorder %v767, %v439
          %vm829 = vcmp.eq.s32.totalorder %v766, %v440
          %vm830 = vcmp.eq.s32.totalorder %v765, %v441
          %vm831 = vcmp.eq.s32.totalorder %v764, %v442
          %vm832 = vcmp.eq.s32.totalorder %v763, %v443
          %vm833 = vcmp.eq.s32.totalorder %v762, %v444
          %vm834 = vcmp.eq.s32.totalorder %v761, %v445
          %vm835 = vcmp.eq.s32.totalorder %v760, %v446
          %vm836 = vcmp.eq.s32.totalorder %v759, %v447
          %vm837 = vcmp.eq.s32.totalorder %v758, %v448
          %vm838 = vcmp.eq.s32.totalorder %v757, %v449
          %vm839 = vcmp.eq.s32.totalorder %v756, %v450
          %vm840 = vcmp.eq.s32.totalorder %v755, %v451
          %vm841 = vcmp.eq.s32.totalorder %v754, %v452
          %vm842 = vcmp.eq.s32.totalorder %v753, %v453
          %vm843 = vcmp.eq.s32.totalorder %v752, %v454
          %vm844 = vcmp.eq.s32.totalorder %v751, %v455
          %vm845 = vcmp.eq.s32.totalorder %v750, %v456
          %vm846 = vcmp.eq.s32.totalorder %v749, %v457
          %vm847 = vcmp.eq.s32.totalorder %v748, %v458
          %vm848 = vcmp.eq.s32.totalorder %v747, %v459
          %vm849 = vcmp.eq.s32.totalorder %v746, %v460
          %vm850 = vcmp.eq.s32.totalorder %v745, %v461
          %vm851 = vcmp.eq.s32.totalorder %v744, %v462
          %vm852 = vcmp.eq.s32.totalorder %v743, %v463
          %vm853 = vcmp.eq.s32.totalorder %v742, %v464
          %vm854 = vcmp.eq.s32.totalorder %v741, %v465
          %vm855 = vcmp.eq.s32.totalorder %v740, %v466
          %vm856 = vcmp.eq.s32.totalorder %v739, %v467
          %vm857 = vcmp.eq.s32.totalorder %v738, %v468
          %vm858 = vcmp.eq.s32.totalorder %v737, %v469
          %vm859 = vcmp.eq.s32.totalorder %v736, %v470
          %vm860 = vcmp.eq.s32.totalorder %v735, %v471
          %vm861 = vcmp.eq.s32.totalorder %v734, %v472
          %v862 = vmax.f32 %v475, %v669
          %v863 = vmax.f32 %v476, %v668
          %v864 = vmax.f32 %v477, %v667
          %v865 = vmax.f32 %v478, %v666
          %v866 = vmax.f32 %v479, %v665
          %v867 = vmax.f32 %v480, %v664
          %v868 = vmax.f32 %v481, %v663
          %v869 = vmax.f32 %v482, %v662
          %v870 = vmax.f32 %v483, %v661
          %v871 = vmax.f32 %v484, %v660
          %v872 = vmax.f32 %v485, %v659
          %v873 = vmax.f32 %v486, %v658
          %v874 = vmax.f32 %v487, %v657
          %v875 = vmax.f32 %v488, %v656
          %v876 = vmax.f32 %v489, %v655
          %v877 = vmax.f32 %v490, %v654
          %v878 = vmax.f32 %v491, %v653
          %v879 = vmax.f32 %v492, %v652
          %v880 = vmax.f32 %v493, %v651
          %v881 = vmax.f32 %v494, %v650
          %v882 = vmax.f32 %v495, %v649
          %v883 = vmax.f32 %v496, %v648
          %v884 = vmax.f32 %v497, %v647
          %v885 = vmax.f32 %v498, %v646
          %v886 = vmax.f32 %v499, %v645
          %v887 = vmax.f32 %v500, %v644
          %v888 = vmax.f32 %v501, %v643
          %v889 = vmax.f32 %v502, %v642
          %v890 = vmax.f32 %v503, %v641
          %v891 = vmax.f32 %v504, %v640
          %v892 = vmax.f32 %v505, %v639
          %v893 = vmax.f32 %v506, %v638
          %v894 = vmax.f32 %v507, %v637
          %v895 = vmax.f32 %v508, %v636
          %v896 = vmax.f32 %v509, %v635
          %v897 = vmax.f32 %v510, %v634
          %v898 = vmax.f32 %v511, %v633
          %v899 = vmax.f32 %v512, %v632
          %v900 = vmax.f32 %v513, %v631
          %v901 = vmax.f32 %v514, %v630
          %v902 = vmax.f32 %v515, %v629
          %v903 = vmax.f32 %v516, %v628
          %v904 = vmax.f32 %v517, %v627
          %v905 = vmax.f32 %v518, %v626
          %v906 = vmax.f32 %v519, %v625
          %v907 = vmax.f32 %v520, %v624
          %v908 = vmax.f32 %v521, %v623
          %v909 = vmax.f32 %v522, %v622
          %v910 = vmax.f32 %v523, %v621
          %v911 = vmax.f32 %v524, %v620
          %v912 = vmax.f32 %v525, %v619
          %v913 = vmax.f32 %v526, %v618
          %v914 = vmax.f32 %v527, %v617
          %v915 = vmax.f32 %v528, %v616
          %v916 = vmax.f32 %v529, %v615
          %v917 = vmax.f32 %v530, %v614
          %v918 = vmax.f32 %v531, %v613
          %v919 = vmax.f32 %v532, %v612
          %v920 = vmax.f32 %v533, %v611
          %v921 = vmax.f32 %v534, %v610
          %v922 = vmax.f32 %v535, %v609
          %v923 = vmax.f32 %v536, %v608
          %v924 = vmax.f32 %v537, %v607
          %v925 = vmax.f32 %v538, %v606
          %v926 = vsel %vm798, 1, 0
          %v927 = vsel %vm799, 1, 0
          %v928 = vsel %vm800, 1, 0
          %v929 = vsel %vm801, 1, 0
          %v930 = vsel %vm802, 1, 0
          %v931 = vsel %vm803, 1, 0
          %v932 = vsel %vm804, 1, 0
          %v933 = vsel %vm805, 1, 0
          %v934 = vsel %vm806, 1, 0
          %v935 = vsel %vm807, 1, 0
          %v936 = vsel %vm808, 1, 0
          %v937 = vsel %vm809, 1, 0
          %v938 = vsel %vm810, 1, 0
          %v939 = vsel %vm811, 1, 0
          %v940 = vsel %vm812, 1, 0
          %v941 = vsel %vm813, 1, 0
          %v942 = vsel %vm814, 1, 0
          %v943 = vsel %vm815, 1, 0
          %v944 = vsel %vm816, 1, 0
          %v945 = vsel %vm817, 1, 0
          %v946 = vsel %vm818, 1, 0
          %v947 = vsel %vm819, 1, 0
          %v948 = vsel %vm820, 1, 0
          %v949 = vsel %vm821, 1, 0
          %v950 = vsel %vm822, 1, 0
          %v951 = vsel %vm823, 1, 0
          %v952 = vsel %vm824, 1, 0
          %v953 = vsel %vm825, 1, 0
          %v954 = vsel %vm826, 1, 0
          %v955 = vsel %vm827, 1, 0
          %v956 = vsel %vm828, 1, 0
          %v957 = vsel %vm829, 1, 0
          %v958 = vsel %vm830, 1, 0
          %v959 = vsel %vm831, 1, 0
          %v960 = vsel %vm832, 1, 0
          %v961 = vsel %vm833, 1, 0
          %v962 = vsel %vm834, 1, 0
          %v963 = vsel %vm835, 1, 0
          %v964 = vsel %vm836, 1, 0
          %v965 = vsel %vm837, 1, 0
          %v966 = vsel %vm838, 1, 0
          %v967 = vsel %vm839, 1, 0
          %v968 = vsel %vm840, 1, 0
          %v969 = vsel %vm841, 1, 0
          %v970 = vsel %vm842, 1, 0
          %v971 = vsel %vm843, 1, 0
          %v972 = vsel %vm844, 1, 0
          %v973 = vsel %vm845, 1, 0
          %v974 = vsel %vm846, 1, 0
          %v975 = vsel %vm847, 1, 0
          %v976 = vsel %vm848, 1, 0
          %v977 = vsel %vm849, 1, 0
          %v978 = vsel %vm850, 1, 0
          %v979 = vsel %vm851, 1, 0
          %v980 = vsel %vm852, 1, 0
          %v981 = vsel %vm853, 1, 0
          %v982 = vsel %vm854, 1, 0
          %v983 = vsel %vm855, 1, 0
          %v984 = vsel %vm856, 1, 0
          %v985 = vsel %vm857, 1, 0
          %v986 = vsel %vm858, 1, 0
          %v987 = vsel %vm859, 1, 0
          %v988 = vsel %vm860, 1, 0
          %v989 = vsel %vm861, 1, 0
          %990 = vset.pattern.permute.xlu0 0
          %991 = vperm.xlu0 %990, %v926
          %v992 = vpop.permute.xlu0 %991
          %993 = vset.pattern.permute.xlu0 0
          %994 = vperm.xlu0 %993, %v927
          %v995 = vpop.permute.xlu0 %994
          %996 = vset.pattern.permute.xlu0 0
          %997 = vperm.xlu0 %996, %v928
          %v998 = vpop.permute.xlu0 %997
          %999 = vset.pattern.permute.xlu0 0
          %1000 = vperm.xlu0 %999, %v929
          %v1001 = vpop.permute.xlu0 %1000
          %1002 = vset.pattern.permute.xlu0 0
          %1003 = vperm.xlu0 %1002, %v930
          %v1004 = vpop.permute.xlu0 %1003
          %1005 = vset.pattern.permute.xlu0 0
          %1006 = vperm.xlu0 %1005, %v931
          %v1007 = vpop.permute.xlu0 %1006
          %1008 = vset.pattern.permute.xlu0 0
          %1009 = vperm.xlu0 %1008, %v932
          %v1010 = vpop.permute.xlu0 %1009
          %1011 = vset.pattern.permute.xlu0 0
          %1012 = vperm.xlu0 %1011, %v933
          %v1013 = vpop.permute.xlu0 %1012
          %1014 = vset.pattern.permute.xlu0 0
          %1015 = vperm.xlu0 %1014, %v934
          %v1016 = vpop.permute.xlu0 %1015
          %1017 = vset.pattern.permute.xlu0 0
          %1018 = vperm.xlu0 %1017, %v935
          %v1019 = vpop.permute.xlu0 %1018
          %1020 = vset.pattern.permute.xlu0 0
          %1021 = vperm.xlu0 %1020, %v936
          %v1022 = vpop.permute.xlu0 %1021
          %1023 = vset.pattern.permute.xlu0 0
          %1024 = vperm.xlu0 %1023, %v937
          %v1025 = vpop.permute.xlu0 %1024
          %1026 = vset.pattern.permute.xlu0 0
          %1027 = vperm.xlu0 %1026, %v938
          %v1028 = vpop.permute.xlu0 %1027
          %1029 = vset.pattern.permute.xlu0 0
          %1030 = vperm.xlu0 %1029, %v939
          %v1031 = vpop.permute.xlu0 %1030
          %1032 = vset.pattern.permute.xlu0 0
          %1033 = vperm.xlu0 %1032, %v940
          %v1034 = vpop.permute.xlu0 %1033
          %1035 = vset.pattern.permute.xlu0 0
          %1036 = vperm.xlu0 %1035, %v941
          %v1037 = vpop.permute.xlu0 %1036
          %1038 = vset.pattern.permute.xlu0 0
          %1039 = vperm.xlu0 %1038, %v942
          %v1040 = vpop.permute.xlu0 %1039
          %1041 = vset.pattern.permute.xlu0 0
          %1042 = vperm.xlu0 %1041, %v943
          %v1043 = vpop.permute.xlu0 %1042
          %1044 = vset.pattern.permute.xlu0 0
          %1045 = vperm.xlu0 %1044, %v944
          %v1046 = vpop.permute.xlu0 %1045
          %1047 = vset.pattern.permute.xlu0 0
          %1048 = vperm.xlu0 %1047, %v945
          %v1049 = vpop.permute.xlu0 %1048
          %1050 = vset.pattern.permute.xlu0 0
          %1051 = vperm.xlu0 %1050, %v946
          %v1052 = vpop.permute.xlu0 %1051
          %1053 = vset.pattern.permute.xlu0 0
          %1054 = vperm.xlu0 %1053, %v947
          %v1055 = vpop.permute.xlu0 %1054
          %1056 = vset.pattern.permute.xlu0 0
          %1057 = vperm.xlu0 %1056, %v948
          %v1058 = vpop.permute.xlu0 %1057
          %1059 = vset.pattern.permute.xlu0 0
          %1060 = vperm.xlu0 %1059, %v949
          %v1061 = vpop.permute.xlu0 %1060
          %1062 = vset.pattern.permute.xlu0 0
          %1063 = vperm.xlu0 %1062, %v950
          %v1064 = vpop.permute.xlu0 %1063
          %1065 = vset.pattern.permute.xlu0 0
          %1066 = vperm.xlu0 %1065, %v951
          %v1067 = vpop.permute.xlu0 %1066
          %1068 = vset.pattern.permute.xlu0 0
          %1069 = vperm.xlu0 %1068, %v952
          %v1070 = vpop.permute.xlu0 %1069
          %1071 = vset.pattern.permute.xlu0 0
          %1072 = vperm.xlu0 %1071, %v953
          %v1073 = vpop.permute.xlu0 %1072
          %1074 = vset.pattern.permute.xlu0 0
          %1075 = vperm.xlu0 %1074, %v954
          %v1076 = vpop.permute.xlu0 %1075
          %1077 = vset.pattern.permute.xlu0 0
          %1078 = vperm.xlu0 %1077, %v955
          %v1079 = vpop.permute.xlu0 %1078
          %1080 = vset.pattern.permute.xlu0 0
          %1081 = vperm.xlu0 %1080, %v956
          %v1082 = vpop.permute.xlu0 %1081
          %1083 = vset.pattern.permute.xlu0 0
          %1084 = vperm.xlu0 %1083, %v957
          %v1085 = vpop.permute.xlu0 %1084
          %1086 = vset.pattern.permute.xlu0 0
          %1087 = vperm.xlu0 %1086, %v958
          %v1088 = vpop.permute.xlu0 %1087
          %1089 = vset.pattern.permute.xlu0 0
          %1090 = vperm.xlu0 %1089, %v959
          %v1091 = vpop.permute.xlu0 %1090
          %1092 = vset.pattern.permute.xlu0 0
          %1093 = vperm.xlu0 %1092, %v960
          %v1094 = vpop.permute.xlu0 %1093
          %1095 = vset.pattern.permute.xlu0 0
          %1096 = vperm.xlu0 %1095, %v961
          %v1097 = vpop.permute.xlu0 %1096
          %1098 = vset.pattern.permute.xlu0 0
          %1099 = vperm.xlu0 %1098, %v962
          %v1100 = vpop.permute.xlu0 %1099
          %1101 = vset.pattern.permute.xlu0 0
          %1102 = vperm.xlu0 %1101, %v963
          %v1103 = vpop.permute.xlu0 %1102
          %1104 = vset.pattern.permute.xlu0 0
          %1105 = vperm.xlu0 %1104, %v964
          %v1106 = vpop.permute.xlu0 %1105
          %1107 = vset.pattern.permute.xlu0 0
          %1108 = vperm.xlu0 %1107, %v965
          %v1109 = vpop.permute.xlu0 %1108
          %1110 = vset.pattern.permute.xlu0 0
          %1111 = vperm.xlu0 %1110, %v966
          %v1112 = vpop.permute.xlu0 %1111
          %1113 = vset.pattern.permute.xlu0 0
          %1114 = vperm.xlu0 %1113, %v967
          %v1115 = vpop.permute.xlu0 %1114
          %1116 = vset.pattern.permute.xlu0 0
          %1117 = vperm.xlu0 %1116, %v968
          %v1118 = vpop.permute.xlu0 %1117
          %1119 = vset.pattern.permute.xlu0 0
          %1120 = vperm.xlu0 %1119, %v969
          %v1121 = vpop.permute.xlu0 %1120
          %1122 = vset.pattern.permute.xlu0 0
          %1123 = vperm.xlu0 %1122, %v970
          %v1124 = vpop.permute.xlu0 %1123
          %1125 = vset.pattern.permute.xlu0 0
          %1126 = vperm.xlu0 %1125, %v971
          %v1127 = vpop.permute.xlu0 %1126
          %1128 = vset.pattern.permute.xlu0 0
          %1129 = vperm.xlu0 %1128, %v972
          %v1130 = vpop.permute.xlu0 %1129
          %1131 = vset.pattern.permute.xlu0 0
          %1132 = vperm.xlu0 %1131, %v973
          %v1133 = vpop.permute.xlu0 %1132
          %1134 = vset.pattern.permute.xlu0 0
          %1135 = vperm.xlu0 %1134, %v974
          %v1136 = vpop.permute.xlu0 %1135
          %1137 = vset.pattern.permute.xlu0 0
          %1138 = vperm.xlu0 %1137, %v975
          %v1139 = vpop.permute.xlu0 %1138
          %1140 = vset.pattern.permute.xlu0 0
          %1141 = vperm.xlu0 %1140, %v976
          %v1142 = vpop.permute.xlu0 %1141
          %1143 = vset.pattern.permute.xlu0 0
          %1144 = vperm.xlu0 %1143, %v977
          %v1145 = vpop.permute.xlu0 %1144
          %1146 = vset.pattern.permute.xlu0 0
          %1147 = vperm.xlu0 %1146, %v978
          %v1148 = vpop.permute.xlu0 %1147
          %1149 = vset.pattern.permute.xlu0 0
          %1150 = vperm.xlu0 %1149, %v979
          %v1151 = vpop.permute.xlu0 %1150
          %1152 = vset.pattern.permute.xlu0 0
          %1153 = vperm.xlu0 %1152, %v980
          %v1154 = vpop.permute.xlu0 %1153
          %1155 = vset.pattern.permute.xlu0 0
          %1156 = vperm.xlu0 %1155, %v981
          %v1157 = vpop.permute.xlu0 %1156
          %1158 = vset.pattern.permute.xlu0 0
          %1159 = vperm.xlu0 %1158, %v982
          %v1160 = vpop.permute.xlu0 %1159
          %1161 = vset.pattern.permute.xlu0 0
          %1162 = vperm.xlu0 %1161, %v983
          %v1163 = vpop.permute.xlu0 %1162
          %1164 = vset.pattern.permute.xlu0 0
          %1165 = vperm.xlu0 %1164, %v984
          %v1166 = vpop.permute.xlu0 %1165
          %1167 = vset.pattern.permute.xlu0 0
          %1168 = vperm.xlu0 %1167, %v985
          %v1169 = vpop.permute.xlu0 %1168
          %1170 = vset.pattern.permute.xlu0 0
          %1171 = vperm.xlu0 %1170, %v986
          %v1172 = vpop.permute.xlu0 %1171
          %1173 = vset.pattern.permute.xlu0 0
          %1174 = vperm.xlu0 %1173, %v987
          %v1175 = vpop.permute.xlu0 %1174
          %1176 = vset.pattern.permute.xlu0 0
          %1177 = vperm.xlu0 %1176, %v988
          %v1178 = vpop.permute.xlu0 %1177
          %1179 = vset.pattern.permute.xlu0 0
          %1180 = vperm.xlu0 %1179, %v989
          %v1181 = vpop.permute.xlu0 %1180
          %vm1182 = vcmp.eq.s32.totalorder %v992, 1
          %vm1183 = vcmp.eq.s32.totalorder %v995, 1
          %vm1184 = vcmp.eq.s32.totalorder %v998, 1
          %vm1185 = vcmp.eq.s32.totalorder %v1001, 1
          %vm1186 = vcmp.eq.s32.totalorder %v1004, 1
          %vm1187 = vcmp.eq.s32.totalorder %v1007, 1
          %vm1188 = vcmp.eq.s32.totalorder %v1010, 1
          %vm1189 = vcmp.eq.s32.totalorder %v1013, 1
          %vm1190 = vcmp.eq.s32.totalorder %v1016, 1
          %vm1191 = vcmp.eq.s32.totalorder %v1019, 1
          %vm1192 = vcmp.eq.s32.totalorder %v1022, 1
          %vm1193 = vcmp.eq.s32.totalorder %v1025, 1
          %vm1194 = vcmp.eq.s32.totalorder %v1028, 1
          %vm1195 = vcmp.eq.s32.totalorder %v1031, 1
          %vm1196 = vcmp.eq.s32.totalorder %v1034, 1
          %vm1197 = vcmp.eq.s32.totalorder %v1037, 1
          %vm1198 = vcmp.eq.s32.totalorder %v1040, 1
          %vm1199 = vcmp.eq.s32.totalorder %v1043, 1
          %vm1200 = vcmp.eq.s32.totalorder %v1046, 1
          %vm1201 = vcmp.eq.s32.totalorder %v1049, 1
          %vm1202 = vcmp.eq.s32.totalorder %v1052, 1
          %vm1203 = vcmp.eq.s32.totalorder %v1055, 1
          %vm1204 = vcmp.eq.s32.totalorder %v1058, 1
          %vm1205 = vcmp.eq.s32.totalorder %v1061, 1
          %vm1206 = vcmp.eq.s32.totalorder %v1064, 1
          %vm1207 = vcmp.eq.s32.totalorder %v1067, 1
          %vm1208 = vcmp.eq.s32.totalorder %v1070, 1
          %vm1209 = vcmp.eq.s32.totalorder %v1073, 1
          %vm1210 = vcmp.eq.s32.totalorder %v1076, 1
          %vm1211 = vcmp.eq.s32.totalorder %v1079, 1
          %vm1212 = vcmp.eq.s32.totalorder %v1082, 1
          %vm1213 = vcmp.eq.s32.totalorder %v1085, 1
          %vm1214 = vcmp.eq.s32.totalorder %v1088, 1
          %vm1215 = vcmp.eq.s32.totalorder %v1091, 1
          %vm1216 = vcmp.eq.s32.totalorder %v1094, 1
          %vm1217 = vcmp.eq.s32.totalorder %v1097, 1
          %vm1218 = vcmp.eq.s32.totalorder %v1100, 1
          %vm1219 = vcmp.eq.s32.totalorder %v1103, 1
          %vm1220 = vcmp.eq.s32.totalorder %v1106, 1
          %vm1221 = vcmp.eq.s32.totalorder %v1109, 1
          %vm1222 = vcmp.eq.s32.totalorder %v1112, 1
          %vm1223 = vcmp.eq.s32.totalorder %v1115, 1
          %vm1224 = vcmp.eq.s32.totalorder %v1118, 1
          %vm1225 = vcmp.eq.s32.totalorder %v1121, 1
          %vm1226 = vcmp.eq.s32.totalorder %v1124, 1
          %vm1227 = vcmp.eq.s32.totalorder %v1127, 1
          %vm1228 = vcmp.eq.s32.totalorder %v1130, 1
          %vm1229 = vcmp.eq.s32.totalorder %v1133, 1
          %vm1230 = vcmp.eq.s32.totalorder %v1136, 1
          %vm1231 = vcmp.eq.s32.totalorder %v1139, 1
          %vm1232 = vcmp.eq.s32.totalorder %v1142, 1
          %vm1233 = vcmp.eq.s32.totalorder %v1145, 1
          %vm1234 = vcmp.eq.s32.totalorder %v1148, 1
          %vm1235 = vcmp.eq.s32.totalorder %v1151, 1
          %vm1236 = vcmp.eq.s32.totalorder %v1154, 1
          %vm1237 = vcmp.eq.s32.totalorder %v1157, 1
          %vm1238 = vcmp.eq.s32.totalorder %v1160, 1
          %vm1239 = vcmp.eq.s32.totalorder %v1163, 1
          %vm1240 = vcmp.eq.s32.totalorder %v1166, 1
          %vm1241 = vcmp.eq.s32.totalorder %v1169, 1
          %vm1242 = vcmp.eq.s32.totalorder %v1172, 1
          %vm1243 = vcmp.eq.s32.totalorder %v1175, 1
          %vm1244 = vcmp.eq.s32.totalorder %v1178, 1
          %vm1245 = vcmp.eq.s32.totalorder %v1181, 1
          %v1246 = vsel %vm1182, %v862, %v475
          %v1247 = vsel %vm1183, %v863, %v476
          %v1248 = vsel %vm1184, %v864, %v477
          %v1249 = vsel %vm1185, %v865, %v478
          %v1250 = vsel %vm1186, %v866, %v479
          %v1251 = vsel %vm1187, %v867, %v480
          %v1252 = vsel %vm1188, %v868, %v481
          %v1253 = vsel %vm1189, %v869, %v482
          %v1254 = vsel %vm1190, %v870, %v483
          %v1255 = vsel %vm1191, %v871, %v484
          %v1256 = vsel %vm1192, %v872, %v485
          %v1257 = vsel %vm1193, %v873, %v486
          %v1258 = vsel %vm1194, %v874, %v487
          %v1259 = vsel %vm1195, %v875, %v488
          %v1260 = vsel %vm1196, %v876, %v489
          %v1261 = vsel %vm1197, %v877, %v490
          %v1262 = vsel %vm1198, %v878, %v491
          %v1263 = vsel %vm1199, %v879, %v492
          %v1264 = vsel %vm1200, %v880, %v493
          %v1265 = vsel %vm1201, %v881, %v494
          %v1266 = vsel %vm1202, %v882, %v495
          %v1267 = vsel %vm1203, %v883, %v496
          %v1268 = vsel %vm1204, %v884, %v497
          %v1269 = vsel %vm1205, %v885, %v498
          %v1270 = vsel %vm1206, %v886, %v499
          %v1271 = vsel %vm1207, %v887, %v500
          %v1272 = vsel %vm1208, %v888, %v501
          %v1273 = vsel %vm1209, %v889, %v502
          %v1274 = vsel %vm1210, %v890, %v503
          %v1275 = vsel %vm1211, %v891, %v504
          %v1276 = vsel %vm1212, %v892, %v505
          %v1277 = vsel %vm1213, %v893, %v506
          %v1278 = vsel %vm1214, %v894, %v507
          %v1279 = vsel %vm1215, %v895, %v508
          %v1280 = vsel %vm1216, %v896, %v509
          %v1281 = vsel %vm1217, %v897, %v510
          %v1282 = vsel %vm1218, %v898, %v511
          %v1283 = vsel %vm1219, %v899, %v512
          %v1284 = vsel %vm1220, %v900, %v513
          %v1285 = vsel %vm1221, %v901, %v514
          %v1286 = vsel %vm1222, %v902, %v515
          %v1287 = vsel %vm1223, %v903, %v516
          %v1288 = vsel %vm1224, %v904, %v517
          %v1289 = vsel %vm1225, %v905, %v518
          %v1290 = vsel %vm1226, %v906, %v519
          %v1291 = vsel %vm1227, %v907, %v520
          %v1292 = vsel %vm1228, %v908, %v521
          %v1293 = vsel %vm1229, %v909, %v522
          %v1294 = vsel %vm1230, %v910, %v523
          %v1295 = vsel %vm1231, %v911, %v524
          %v1296 = vsel %vm1232, %v912, %v525
          %v1297 = vsel %vm1233, %v913, %v526
          %v1298 = vsel %vm1234, %v914, %v527
          %v1299 = vsel %vm1235, %v915, %v528
          %v1300 = vsel %vm1236, %v916, %v529
          %v1301 = vsel %vm1237, %v917, %v530
          %v1302 = vsel %vm1238, %v918, %v531
          %v1303 = vsel %vm1239, %v919, %v532
          %v1304 = vsel %vm1240, %v920, %v533
          %v1305 = vsel %vm1241, %v921, %v534
          %v1306 = vsel %vm1242, %v922, %v535
          %v1307 = vsel %vm1243, %v923, %v536
          %v1308 = vsel %vm1244, %v924, %v537
          %v1309 = vsel %vm1245, %v925, %v538
          %v1310 = vrot.slane %v1246, 6
          %v1311 = vrot.slane %v1247, 6
          %v1312 = vrot.slane %v1248, 6
          %v1313 = vrot.slane %v1249, 6
          %v1314 = vrot.slane %v1250, 6
          %v1315 = vrot.slane %v1251, 6
          %v1316 = vrot.slane %v1252, 6
          %v1317 = vrot.slane %v1253, 6
          %v1318 = vrot.slane %v1254, 6
          %v1319 = vrot.slane %v1255, 6
          %v1320 = vrot.slane %v1256, 6
          %v1321 = vrot.slane %v1257, 6
          %v1322 = vrot.slane %v1258, 6
          %v1323 = vrot.slane %v1259, 6
          %v1324 = vrot.slane %v1260, 6
          %v1325 = vrot.slane %v1261, 6
          %v1326 = vrot.slane %v1262, 6
          %v1327 = vrot.slane %v1263, 6
          %v1328 = vrot.slane %v1264, 6
          %v1329 = vrot.slane %v1265, 6
          %v1330 = vrot.slane %v1266, 6
          %v1331 = vrot.slane %v1267, 6
          %v1332 = vrot.slane %v1268, 6
          %v1333 = vrot.slane %v1269, 6
          %v1334 = vrot.slane %v1270, 6
          %v1335 = vrot.slane %v1271, 6
          %v1336 = vrot.slane %v1272, 6
          %v1337 = vrot.slane %v1273, 6
          %v1338 = vrot.slane %v1274, 6
          %v1339 = vrot.slane %v1275, 6
          %v1340 = vrot.slane %v1276, 6
          %v1341 = vrot.slane %v1277, 6
          %v1342 = vrot.slane %v1278, 6
          %v1343 = vrot.slane %v1279, 6
          %v1344 = vrot.slane %v1280, 6
          %v1345 = vrot.slane %v1281, 6
          %v1346 = vrot.slane %v1282, 6
          %v1347 = vrot.slane %v1283, 6
          %v1348 = vrot.slane %v1284, 6
          %v1349 = vrot.slane %v1285, 6
          %v1350 = vrot.slane %v1286, 6
          %v1351 = vrot.slane %v1287, 6
          %v1352 = vrot.slane %v1288, 6
          %v1353 = vrot.slane %v1289, 6
          %v1354 = vrot.slane %v1290, 6
          %v1355 = vrot.slane %v1291, 6
          %v1356 = vrot.slane %v1292, 6
          %v1357 = vrot.slane %v1293, 6
          %v1358 = vrot.slane %v1294, 6
          %v1359 = vrot.slane %v1295, 6
          %v1360 = vrot.slane %v1296, 6
          %v1361 = vrot.slane %v1297, 6
          %v1362 = vrot.slane %v1298, 6
          %v1363 = vrot.slane %v1299, 6
          %v1364 = vrot.slane %v1300, 6
          %v1365 = vrot.slane %v1301, 6
          %v1366 = vrot.slane %v1302, 6
          %v1367 = vrot.slane %v1303, 6
          %v1368 = vrot.slane %v1304, 6
          %v1369 = vrot.slane %v1305, 6
          %v1370 = vrot.slane %v1306, 6
          %v1371 = vrot.slane %v1307, 6
          %v1372 = vrot.slane %v1308, 6
          %v1373 = vrot.slane %v1309, 6
          %vm1374 = vcmp.lt.s32.totalorder %v604, 2
          %v1375 = vsel %vm1374, %v1372, %v1373
          %v1376 = vsel %vm1374, %v1371, %v1372
          %v1377 = vsel %vm1374, %v1370, %v1371
          %v1378 = vsel %vm1374, %v1369, %v1370
          %v1379 = vsel %vm1374, %v1368, %v1369
          %v1380 = vsel %vm1374, %v1367, %v1368
          %v1381 = vsel %vm1374, %v1366, %v1367
          %v1382 = vsel %vm1374, %v1365, %v1366
          %v1383 = vsel %vm1374, %v1364, %v1365
          %v1384 = vsel %vm1374, %v1363, %v1364
          %v1385 = vsel %vm1374, %v1362, %v1363
          %v1386 = vsel %vm1374, %v1361, %v1362
          %v1387 = vsel %vm1374, %v1360, %v1361
          %v1388 = vsel %vm1374, %v1359, %v1360
          %v1389 = vsel %vm1374, %v1358, %v1359
          %v1390 = vsel %vm1374, %v1357, %v1358
          %v1391 = vsel %vm1374, %v1356, %v1357
          %v1392 = vsel %vm1374, %v1355, %v1356
          %v1393 = vsel %vm1374, %v1354, %v1355
          %v1394 = vsel %vm1374, %v1353, %v1354
          %v1395 = vsel %vm1374, %v1352, %v1353
          %v1396 = vsel %vm1374, %v1351, %v1352
          %v1397 = vsel %vm1374, %v1350, %v1351
          %v1398 = vsel %vm1374, %v1349, %v1350
          %v1399 = vsel %vm1374, %v1348, %v1349
          %v1400 = vsel %vm1374, %v1347, %v1348
          %v1401 = vsel %vm1374, %v1346, %v1347
          %v1402 = vsel %vm1374, %v1345, %v1346
          %v1403 = vsel %vm1374, %v1344, %v1345
          %v1404 = vsel %vm1374, %v1343, %v1344
          %v1405 = vsel %vm1374, %v1342, %v1343
          %v1406 = vsel %vm1374, %v1341, %v1342
          %v1407 = vsel %vm1374, %v1340, %v1341
          %v1408 = vsel %vm1374, %v1339, %v1340
          %v1409 = vsel %vm1374, %v1338, %v1339
          %v1410 = vsel %vm1374, %v1337, %v1338
          %v1411 = vsel %vm1374, %v1336, %v1337
          %v1412 = vsel %vm1374, %v1335, %v1336
          %v1413 = vsel %vm1374, %v1334, %v1335
          %v1414 = vsel %vm1374, %v1333, %v1334
          %v1415 = vsel %vm1374, %v1332, %v1333
          %v1416 = vsel %vm1374, %v1331, %v1332
          %v1417 = vsel %vm1374, %v1330, %v1331
          %v1418 = vsel %vm1374, %v1329, %v1330
          %v1419 = vsel %vm1374, %v1328, %v1329
          %v1420 = vsel %vm1374, %v1327, %v1328
          %v1421 = vsel %vm1374, %v1326, %v1327
          %v1422 = vsel %vm1374, %v1325, %v1326
          %v1423 = vsel %vm1374, %v1324, %v1325
          %v1424 = vsel %vm1374, %v1323, %v1324
          %v1425 = vsel %vm1374, %v1322, %v1323
          %v1426 = vsel %vm1374, %v1321, %v1322
          %v1427 = vsel %vm1374, %v1320, %v1321
          %v1428 = vsel %vm1374, %v1319, %v1320
          %v1429 = vsel %vm1374, %v1318, %v1319
          %v1430 = vsel %vm1374, %v1317, %v1318
          %v1431 = vsel %vm1374, %v1316, %v1317
          %v1432 = vsel %vm1374, %v1315, %v1316
          %v1433 = vsel %vm1374, %v1314, %v1315
          %v1434 = vsel %vm1374, %v1313, %v1314
          %v1435 = vsel %vm1374, %v1312, %v1313
          %v1436 = vsel %vm1374, %v1311, %v1312
          %v1437 = vsel %vm1374, %v1310, %v1311
          %v1438 = vsel %vm1374, %v1373, %v1310
          %v1439 = vrot.slane %v409, 6
          %v1440 = vrot.slane %v410, 6
          %v1441 = vrot.slane %v411, 6
          %v1442 = vrot.slane %v412, 6
          %v1443 = vrot.slane %v413, 6
          %v1444 = vrot.slane %v414, 6
          %v1445 = vrot.slane %v415, 6
          %v1446 = vrot.slane %v416, 6
          %v1447 = vrot.slane %v417, 6
          %v1448 = vrot.slane %v418, 6
          %v1449 = vrot.slane %v419, 6
          %v1450 = vrot.slane %v420, 6
          %v1451 = vrot.slane %v421, 6
          %v1452 = vrot.slane %v422, 6
          %v1453 = vrot.slane %v423, 6
          %v1454 = vrot.slane %v424, 6
          %v1455 = vrot.slane %v425, 6
          %v1456 = vrot.slane %v426, 6
          %v1457 = vrot.slane %v427, 6
          %v1458 = vrot.slane %v428, 6
          %v1459 = vrot.slane %v429, 6
          %v1460 = vrot.slane %v430, 6
          %v1461 = vrot.slane %v431, 6
          %v1462 = vrot.slane %v432, 6
          %v1463 = vrot.slane %v433, 6
          %v1464 = vrot.slane %v434, 6
          %v1465 = vrot.slane %v435, 6
          %v1466 = vrot.slane %v436, 6
          %v1467 = vrot.slane %v437, 6
          %v1468 = vrot.slane %v438, 6
          %v1469 = vrot.slane %v439, 6
          %v1470 = vrot.slane %v440, 6
          %v1471 = vrot.slane %v441, 6
          %v1472 = vrot.slane %v442, 6
          %v1473 = vrot.slane %v443, 6
          %v1474 = vrot.slane %v444, 6
          %v1475 = vrot.slane %v445, 6
          %v1476 = vrot.slane %v446, 6
          %v1477 = vrot.slane %v447, 6
          %v1478 = vrot.slane %v448, 6
          %v1479 = vrot.slane %v449, 6
          %v1480 = vrot.slane %v450, 6
          %v1481 = vrot.slane %v451, 6
          %v1482 = vrot.slane %v452, 6
          %v1483 = vrot.slane %v453, 6
          %v1484 = vrot.slane %v454, 6
          %v1485 = vrot.slane %v455, 6
          %v1486 = vrot.slane %v456, 6
          %v1487 = vrot.slane %v457, 6
          %v1488 = vrot.slane %v458, 6
          %v1489 = vrot.slane %v459, 6
          %v1490 = vrot.slane %v460, 6
          %v1491 = vrot.slane %v461, 6
          %v1492 = vrot.slane %v462, 6
          %v1493 = vrot.slane %v463, 6
          %v1494 = vrot.slane %v464, 6
          %v1495 = vrot.slane %v465, 6
          %v1496 = vrot.slane %v466, 6
          %v1497 = vrot.slane %v467, 6
          %v1498 = vrot.slane %v468, 6
          %v1499 = vrot.slane %v469, 6
          %v1500 = vrot.slane %v470, 6
          %v1501 = vrot.slane %v471, 6
          %v1502 = vrot.slane %v472, 6
          %v1503 = vsel %vm1374, %v1501, %v1502
          %v1504 = vsel %vm1374, %v1500, %v1501
          %v1505 = vsel %vm1374, %v1499, %v1500
          %v1506 = vsel %vm1374, %v1498, %v1499
          %v1507 = vsel %vm1374, %v1497, %v1498
          %v1508 = vsel %vm1374, %v1496, %v1497
          %v1509 = vsel %vm1374, %v1495, %v1496
          %v1510 = vsel %vm1374, %v1494, %v1495
          %v1511 = vsel %vm1374, %v1493, %v1494
          %v1512 = vsel %vm1374, %v1492, %v1493
          %v1513 = vsel %vm1374, %v1491, %v1492
          %v1514 = vsel %vm1374, %v1490, %v1491
          %v1515 = vsel %vm1374, %v1489, %v1490
          %v1516 = vsel %vm1374, %v1488, %v1489
          %v1517 = vsel %vm1374, %v1487, %v1488
          %v1518 = vsel %vm1374, %v1486, %v1487
          %v1519 = vsel %vm1374, %v1485, %v1486
          %v1520 = vsel %vm1374, %v1484, %v1485
          %v1521 = vsel %vm1374, %v1483, %v1484
          %v1522 = vsel %vm1374, %v1482, %v1483
          %v1523 = vsel %vm1374, %v1481, %v1482
          %v1524 = vsel %vm1374, %v1480, %v1481
          %v1525 = vsel %vm1374, %v1479, %v1480
          %v1526 = vsel %vm1374, %v1478, %v1479
          %v1527 = vsel %vm1374, %v1477, %v1478
          %v1528 = vsel %vm1374, %v1476, %v1477
          %v1529 = vsel %vm1374, %v1475, %v1476
          %v1530 = vsel %vm1374, %v1474, %v1475
          %v1531 = vsel %vm1374, %v1473, %v1474
          %v1532 = vsel %vm1374, %v1472, %v1473
          %v1533 = vsel %vm1374, %v1471, %v1472
          %v1534 = vsel %vm1374, %v1470, %v1471
          %v1535 = vsel %vm1374, %v1469, %v1470
          %v1536 = vsel %vm1374, %v1468, %v1469
          %v1537 = vsel %vm1374, %v1467, %v1468
          %v1538 = vsel %vm1374, %v1466, %v1467
          %v1539 = vsel %vm1374, %v1465, %v1466
          %v1540 = vsel %vm1374, %v1464, %v1465
          %v1541 = vsel %vm1374, %v1463, %v1464
          %v1542 = vsel %vm1374, %v1462, %v1463
          %v1543 = vsel %vm1374, %v1461, %v1462
          %v1544 = vsel %vm1374, %v1460, %v1461
          %v1545 = vsel %vm1374, %v1459, %v1460
          %v1546 = vsel %vm1374, %v1458, %v1459
          %v1547 = vsel %vm1374, %v1457, %v1458
          %v1548 = vsel %vm1374, %v1456, %v1457
          %v1549 = vsel %vm1374, %v1455, %v1456
          %v1550 = vsel %vm1374, %v1454, %v1455
          %v1551 = vsel %vm1374, %v1453, %v1454
          %v1552 = vsel %vm1374, %v1452, %v1453
          %v1553 = vsel %vm1374, %v1451, %v1452
          %v1554 = vsel %vm1374, %v1450, %v1451
          %v1555 = vsel %vm1374, %v1449, %v1450
          %v1556 = vsel %vm1374, %v1448, %v1449
          %v1557 = vsel %vm1374, %v1447, %v1448
          %v1558 = vsel %vm1374, %v1446, %v1447
          %v1559 = vsel %vm1374, %v1445, %v1446
          %v1560 = vsel %vm1374, %v1444, %v1445
          %v1561 = vsel %vm1374, %v1443, %v1444
          %v1562 = vsel %vm1374, %v1442, %v1443
          %v1563 = vsel %vm1374, %v1441, %v1442
          %v1564 = vsel %vm1374, %v1440, %v1441
          %v1565 = vsel %vm1374, %v1439, %v1440
          %v1566 = vsel %vm1374, %v1502, %v1439
          %vm1567 = vcmp.eq.s32.totalorder %v1566, %v409
          %vm1568 = vcmp.eq.s32.totalorder %v1565, %v410
          %vm1569 = vcmp.eq.s32.totalorder %v1564, %v411
          %vm1570 = vcmp.eq.s32.totalorder %v1563, %v412
          %vm1571 = vcmp.eq.s32.totalorder %v1562, %v413
          %vm1572 = vcmp.eq.s32.totalorder %v1561, %v414
          %vm1573 = vcmp.eq.s32.totalorder %v1560, %v415
          %vm1574 = vcmp.eq.s32.totalorder %v1559, %v416
          %vm1575 = vcmp.eq.s32.totalorder %v1558, %v417
          %vm1576 = vcmp.eq.s32.totalorder %v1557, %v418
          %vm1577 = vcmp.eq.s32.totalorder %v1556, %v419
          %vm1578 = vcmp.eq.s32.totalorder %v1555, %v420
          %vm1579 = vcmp.eq.s32.totalorder %v1554, %v421
          %vm1580 = vcmp.eq.s32.totalorder %v1553, %v422
          %vm1581 = vcmp.eq.s32.totalorder %v1552, %v423
          %vm1582 = vcmp.eq.s32.totalorder %v1551, %v424
          %vm1583 = vcmp.eq.s32.totalorder %v1550, %v425
          %vm1584 = vcmp.eq.s32.totalorder %v1549, %v426
          %vm1585 = vcmp.eq.s32.totalorder %v1548, %v427
          %vm1586 = vcmp.eq.s32.totalorder %v1547, %v428
          %vm1587 = vcmp.eq.s32.totalorder %v1546, %v429
          %vm1588 = vcmp.eq.s32.totalorder %v1545, %v430
          %vm1589 = vcmp.eq.s32.totalorder %v1544, %v431
          %vm1590 = vcmp.eq.s32.totalorder %v1543, %v432
          %vm1591 = vcmp.eq.s32.totalorder %v1542, %v433
          %vm1592 = vcmp.eq.s32.totalorder %v1541, %v434
          %vm1593 = vcmp.eq.s32.totalorder %v1540, %v435
          %vm1594 = vcmp.eq.s32.totalorder %v1539, %v436
          %vm1595 = vcmp.eq.s32.totalorder %v1538, %v437
          %vm1596 = vcmp.eq.s32.totalorder %v1537, %v438
          %vm1597 = vcmp.eq.s32.totalorder %v1536, %v439
          %vm1598 = vcmp.eq.s32.totalorder %v1535, %v440
          %vm1599 = vcmp.eq.s32.totalorder %v1534, %v441
          %vm1600 = vcmp.eq.s32.totalorder %v1533, %v442
          %vm1601 = vcmp.eq.s32.totalorder %v1532, %v443
          %vm1602 = vcmp.eq.s32.totalorder %v1531, %v444
          %vm1603 = vcmp.eq.s32.totalorder %v1530, %v445
          %vm1604 = vcmp.eq.s32.totalorder %v1529, %v446
          %vm1605 = vcmp.eq.s32.totalorder %v1528, %v447
          %vm1606 = vcmp.eq.s32.totalorder %v1527, %v448
          %vm1607 = vcmp.eq.s32.totalorder %v1526, %v449
          %vm1608 = vcmp.eq.s32.totalorder %v1525, %v450
          %vm1609 = vcmp.eq.s32.totalorder %v1524, %v451
          %vm1610 = vcmp.eq.s32.totalorder %v1523, %v452
          %vm1611 = vcmp.eq.s32.totalorder %v1522, %v453
          %vm1612 = vcmp.eq.s32.totalorder %v1521, %v454
          %vm1613 = vcmp.eq.s32.totalorder %v1520, %v455
          %vm1614 = vcmp.eq.s32.totalorder %v1519, %v456
          %vm1615 = vcmp.eq.s32.totalorder %v1518, %v457
          %vm1616 = vcmp.eq.s32.totalorder %v1517, %v458
          %vm1617 = vcmp.eq.s32.totalorder %v1516, %v459
          %vm1618 = vcmp.eq.s32.totalorder %v1515, %v460
          %vm1619 = vcmp.eq.s32.totalorder %v1514, %v461
          %vm1620 = vcmp.eq.s32.totalorder %v1513, %v462
          %vm1621 = vcmp.eq.s32.totalorder %v1512, %v463
          %vm1622 = vcmp.eq.s32.totalorder %v1511, %v464
          %vm1623 = vcmp.eq.s32.totalorder %v1510, %v465
          %vm1624 = vcmp.eq.s32.totalorder %v1509, %v466
          %vm1625 = vcmp.eq.s32.totalorder %v1508, %v467
          %vm1626 = vcmp.eq.s32.totalorder %v1507, %v468
          %vm1627 = vcmp.eq.s32.totalorder %v1506, %v469
          %vm1628 = vcmp.eq.s32.totalorder %v1505, %v470
          %vm1629 = vcmp.eq.s32.totalorder %v1504, %v471
          %vm1630 = vcmp.eq.s32.totalorder %v1503, %v472
          %v1631 = vmax.f32 %v1246, %v1438
          %v1632 = vmax.f32 %v1247, %v1437
          %v1633 = vmax.f32 %v1248, %v1436
          %v1634 = vmax.f32 %v1249, %v1435
          %v1635 = vmax.f32 %v1250, %v1434
          %v1636 = vmax.f32 %v1251, %v1433
          %v1637 = vmax.f32 %v1252, %v1432
          %v1638 = vmax.f32 %v1253, %v1431
          %v1639 = vmax.f32 %v1254, %v1430
          %v1640 = vmax.f32 %v1255, %v1429
          %v1641 = vmax.f32 %v1256, %v1428
          %v1642 = vmax.f32 %v1257, %v1427
          %v1643 = vmax.f32 %v1258, %v1426
          %v1644 = vmax.f32 %v1259, %v1425
          %v1645 = vmax.f32 %v1260, %v1424
          %v1646 = vmax.f32 %v1261, %v1423
          %v1647 = vmax.f32 %v1262, %v1422
          %v1648 = vmax.f32 %v1263, %v1421
          %v1649 = vmax.f32 %v1264, %v1420
          %v1650 = vmax.f32 %v1265, %v1419
          %v1651 = vmax.f32 %v1266, %v1418
          %v1652 = vmax.f32 %v1267, %v1417
          %v1653 = vmax.f32 %v1268, %v1416
          %v1654 = vmax.f32 %v1269, %v1415
          %v1655 = vmax.f32 %v1270, %v1414
          %v1656 = vmax.f32 %v1271, %v1413
          %v1657 = vmax.f32 %v1272, %v1412
          %v1658 = vmax.f32 %v1273, %v1411
          %v1659 = vmax.f32 %v1274, %v1410
          %v1660 = vmax.f32 %v1275, %v1409
          %v1661 = vmax.f32 %v1276, %v1408
          %v1662 = vmax.f32 %v1277, %v1407
          %v1663 = vmax.f32 %v1278, %v1406
          %v1664 = vmax.f32 %v1279, %v1405
          %v1665 = vmax.f32 %v1280, %v1404
          %v1666 = vmax.f32 %v1281, %v1403
          %v1667 = vmax.f32 %v1282, %v1402
          %v1668 = vmax.f32 %v1283, %v1401
          %v1669 = vmax.f32 %v1284, %v1400
          %v1670 = vmax.f32 %v1285, %v1399
          %v1671 = vmax.f32 %v1286, %v1398
          %v1672 = vmax.f32 %v1287, %v1397
          %v1673 = vmax.f32 %v1288, %v1396
          %v1674 = vmax.f32 %v1289, %v1395
          %v1675 = vmax.f32 %v1290, %v1394
          %v1676 = vmax.f32 %v1291, %v1393
          %v1677 = vmax.f32 %v1292, %v1392
          %v1678 = vmax.f32 %v1293, %v1391
          %v1679 = vmax.f32 %v1294, %v1390
          %v1680 = vmax.f32 %v1295, %v1389
          %v1681 = vmax.f32 %v1296, %v1388
          %v1682 = vmax.f32 %v1297, %v1387
          %v1683 = vmax.f32 %v1298, %v1386
          %v1684 = vmax.f32 %v1299, %v1385
          %v1685 = vmax.f32 %v1300, %v1384
          %v1686 = vmax.f32 %v1301, %v1383
          %v1687 = vmax.f32 %v1302, %v1382
          %v1688 = vmax.f32 %v1303, %v1381
          %v1689 = vmax.f32 %v1304, %v1380
          %v1690 = vmax.f32 %v1305, %v1379
          %v1691 = vmax.f32 %v1306, %v1378
          %v1692 = vmax.f32 %v1307, %v1377
          %v1693 = vmax.f32 %v1308, %v1376
          %v1694 = vmax.f32 %v1309, %v1375
          %v1695 = vsel %vm1567, 1, 0
          %v1696 = vsel %vm1568, 1, 0
          %v1697 = vsel %vm1569, 1, 0
          %v1698 = vsel %vm1570, 1, 0
          %v1699 = vsel %vm1571, 1, 0
          %v1700 = vsel %vm1572, 1, 0
          %v1701 = vsel %vm1573, 1, 0
          %v1702 = vsel %vm1574, 1, 0
          %v1703 = vsel %vm1575, 1, 0
          %v1704 = vsel %vm1576, 1, 0
          %v1705 = vsel %vm1577, 1, 0
          %v1706 = vsel %vm1578, 1, 0
          %v1707 = vsel %vm1579, 1, 0
          %v1708 = vsel %vm1580, 1, 0
          %v1709 = vsel %vm1581, 1, 0
          %v1710 = vsel %vm1582, 1, 0
          %v1711 = vsel %vm1583, 1, 0
          %v1712 = vsel %vm1584, 1, 0
          %v1713 = vsel %vm1585, 1, 0
          %v1714 = vsel %vm1586, 1, 0
          %v1715 = vsel %vm1587, 1, 0
          %v1716 = vsel %vm1588, 1, 0
          %v1717 = vsel %vm1589, 1, 0
          %v1718 = vsel %vm1590, 1, 0
          %v1719 = vsel %vm1591, 1, 0
          %v1720 = vsel %vm1592, 1, 0
          %v1721 = vsel %vm1593, 1, 0
          %v1722 = vsel %vm1594, 1, 0
          %v1723 = vsel %vm1595, 1, 0
          %v1724 = vsel %vm1596, 1, 0
          %v1725 = vsel %vm1597, 1, 0
          %v1726 = vsel %vm1598, 1, 0
          %v1727 = vsel %vm1599, 1, 0
          %v1728 = vsel %vm1600, 1, 0
          %v1729 = vsel %vm1601, 1, 0
          %v1730 = vsel %vm1602, 1, 0
          %v1731 = vsel %vm1603, 1, 0
          %v1732 = vsel %vm1604, 1, 0
          %v1733 = vsel %vm1605, 1, 0
          %v1734 = vsel %vm1606, 1, 0
          %v1735 = vsel %vm1607, 1, 0
          %v1736 = vsel %vm1608, 1, 0
          %v1737 = vsel %vm1609, 1, 0
          %v1738 = vsel %vm1610, 1, 0
          %v1739 = vsel %vm1611, 1, 0
          %v1740 = vsel %vm1612, 1, 0
          %v1741 = vsel %vm1613, 1, 0
          %v1742 = vsel %vm1614, 1, 0
          %v1743 = vsel %vm1615, 1, 0
          %v1744 = vsel %vm1616, 1, 0
          %v1745 = vsel %vm1617, 1, 0
          %v1746 = vsel %vm1618, 1, 0
          %v1747 = vsel %vm1619, 1, 0
          %v1748 = vsel %vm1620, 1, 0
          %v1749 = vsel %vm1621, 1, 0
          %v1750 = vsel %vm1622, 1, 0
          %v1751 = vsel %vm1623, 1, 0
          %v1752 = vsel %vm1624, 1, 0
          %v1753 = vsel %vm1625, 1, 0
          %v1754 = vsel %vm1626, 1, 0
          %v1755 = vsel %vm1627, 1, 0
          %v1756 = vsel %vm1628, 1, 0
          %v1757 = vsel %vm1629, 1, 0
          %v1758 = vsel %vm1630, 1, 0
          %1759 = vset.pattern.permute.xlu0 0
          %1760 = vperm.xlu0 %1759, %v1695
          %v1761 = vpop.permute.xlu0 %1760
          %1762 = vset.pattern.permute.xlu0 0
          %1763 = vperm.xlu0 %1762, %v1696
          %v1764 = vpop.permute.xlu0 %1763
          %1765 = vset.pattern.permute.xlu0 0
          %1766 = vperm.xlu0 %1765, %v1697
          %v1767 = vpop.permute.xlu0 %1766
          %1768 = vset.pattern.permute.xlu0 0
          %1769 = vperm.xlu0 %1768, %v1698
          %v1770 = vpop.permute.xlu0 %1769
          %1771 = vset.pattern.permute.xlu0 0
          %1772 = vperm.xlu0 %1771, %v1699
          %v1773 = vpop.permute.xlu0 %1772
          %1774 = vset.pattern.permute.xlu0 0
          %1775 = vperm.xlu0 %1774, %v1700
          %v1776 = vpop.permute.xlu0 %1775
          %1777 = vset.pattern.permute.xlu0 0
          %1778 = vperm.xlu0 %1777, %v1701
          %v1779 = vpop.permute.xlu0 %1778
          %1780 = vset.pattern.permute.xlu0 0
          %1781 = vperm.xlu0 %1780, %v1702
          %v1782 = vpop.permute.xlu0 %1781
          %1783 = vset.pattern.permute.xlu0 0
          %1784 = vperm.xlu0 %1783, %v1703
          %v1785 = vpop.permute.xlu0 %1784
          %1786 = vset.pattern.permute.xlu0 0
          %1787 = vperm.xlu0 %1786, %v1704
          %v1788 = vpop.permute.xlu0 %1787
          %1789 = vset.pattern.permute.xlu0 0
          %1790 = vperm.xlu0 %1789, %v1705
          %v1791 = vpop.permute.xlu0 %1790
          %1792 = vset.pattern.permute.xlu0 0
          %1793 = vperm.xlu0 %1792, %v1706
          %v1794 = vpop.permute.xlu0 %1793
          %1795 = vset.pattern.permute.xlu0 0
          %1796 = vperm.xlu0 %1795, %v1707
          %v1797 = vpop.permute.xlu0 %1796
          %1798 = vset.pattern.permute.xlu0 0
          %1799 = vperm.xlu0 %1798, %v1708
          %v1800 = vpop.permute.xlu0 %1799
          %1801 = vset.pattern.permute.xlu0 0
          %1802 = vperm.xlu0 %1801, %v1709
          %v1803 = vpop.permute.xlu0 %1802
          %1804 = vset.pattern.permute.xlu0 0
          %1805 = vperm.xlu0 %1804, %v1710
          %v1806 = vpop.permute.xlu0 %1805
          %1807 = vset.pattern.permute.xlu0 0
          %1808 = vperm.xlu0 %1807, %v1711
          %v1809 = vpop.permute.xlu0 %1808
          %1810 = vset.pattern.permute.xlu0 0
          %1811 = vperm.xlu0 %1810, %v1712
          %v1812 = vpop.permute.xlu0 %1811
          %1813 = vset.pattern.permute.xlu0 0
          %1814 = vperm.xlu0 %1813, %v1713
          %v1815 = vpop.permute.xlu0 %1814
          %1816 = vset.pattern.permute.xlu0 0
          %1817 = vperm.xlu0 %1816, %v1714
          %v1818 = vpop.permute.xlu0 %1817
          %1819 = vset.pattern.permute.xlu0 0
          %1820 = vperm.xlu0 %1819, %v1715
          %v1821 = vpop.permute.xlu0 %1820
          %1822 = vset.pattern.permute.xlu0 0
          %1823 = vperm.xlu0 %1822, %v1716
          %v1824 = vpop.permute.xlu0 %1823
          %1825 = vset.pattern.permute.xlu0 0
          %1826 = vperm.xlu0 %1825, %v1717
          %v1827 = vpop.permute.xlu0 %1826
          %1828 = vset.pattern.permute.xlu0 0
          %1829 = vperm.xlu0 %1828, %v1718
          %v1830 = vpop.permute.xlu0 %1829
          %1831 = vset.pattern.permute.xlu0 0
          %1832 = vperm.xlu0 %1831, %v1719
          %v1833 = vpop.permute.xlu0 %1832
          %1834 = vset.pattern.permute.xlu0 0
          %1835 = vperm.xlu0 %1834, %v1720
          %v1836 = vpop.permute.xlu0 %1835
          %1837 = vset.pattern.permute.xlu0 0
          %1838 = vperm.xlu0 %1837, %v1721
          %v1839 = vpop.permute.xlu0 %1838
          %1840 = vset.pattern.permute.xlu0 0
          %1841 = vperm.xlu0 %1840, %v1722
          %v1842 = vpop.permute.xlu0 %1841
          %1843 = vset.pattern.permute.xlu0 0
          %1844 = vperm.xlu0 %1843, %v1723
          %v1845 = vpop.permute.xlu0 %1844
          %1846 = vset.pattern.permute.xlu0 0
          %1847 = vperm.xlu0 %1846, %v1724
          %v1848 = vpop.permute.xlu0 %1847
          %1849 = vset.pattern.permute.xlu0 0
          %1850 = vperm.xlu0 %1849, %v1725
          %v1851 = vpop.permute.xlu0 %1850
          %1852 = vset.pattern.permute.xlu0 0
          %1853 = vperm.xlu0 %1852, %v1726
          %v1854 = vpop.permute.xlu0 %1853
          %1855 = vset.pattern.permute.xlu0 0
          %1856 = vperm.xlu0 %1855, %v1727
          %v1857 = vpop.permute.xlu0 %1856
          %1858 = vset.pattern.permute.xlu0 0
          %1859 = vperm.xlu0 %1858, %v1728
          %v1860 = vpop.permute.xlu0 %1859
          %1861 = vset.pattern.permute.xlu0 0
          %1862 = vperm.xlu0 %1861, %v1729
          %v1863 = vpop.permute.xlu0 %1862
          %1864 = vset.pattern.permute.xlu0 0
          %1865 = vperm.xlu0 %1864, %v1730
          %v1866 = vpop.permute.xlu0 %1865
          %1867 = vset.pattern.permute.xlu0 0
          %1868 = vperm.xlu0 %1867, %v1731
          %v1869 = vpop.permute.xlu0 %1868
          %1870 = vset.pattern.permute.xlu0 0
          %1871 = vperm.xlu0 %1870, %v1732
          %v1872 = vpop.permute.xlu0 %1871
          %1873 = vset.pattern.permute.xlu0 0
          %1874 = vperm.xlu0 %1873, %v1733
          %v1875 = vpop.permute.xlu0 %1874
          %1876 = vset.pattern.permute.xlu0 0
          %1877 = vperm.xlu0 %1876, %v1734
          %v1878 = vpop.permute.xlu0 %1877
          %1879 = vset.pattern.permute.xlu0 0
          %1880 = vperm.xlu0 %1879, %v1735
          %v1881 = vpop.permute.xlu0 %1880
          %1882 = vset.pattern.permute.xlu0 0
          %1883 = vperm.xlu0 %1882, %v1736
          %v1884 = vpop.permute.xlu0 %1883
          %1885 = vset.pattern.permute.xlu0 0
          %1886 = vperm.xlu0 %1885, %v1737
          %v1887 = vpop.permute.xlu0 %1886
          %1888 = vset.pattern.permute.xlu0 0
          %1889 = vperm.xlu0 %1888, %v1738
          %v1890 = vpop.permute.xlu0 %1889
          %1891 = vset.pattern.permute.xlu0 0
          %1892 = vperm.xlu0 %1891, %v1739
          %v1893 = vpop.permute.xlu0 %1892
          %1894 = vset.pattern.permute.xlu0 0
          %1895 = vperm.xlu0 %1894, %v1740
          %v1896 = vpop.permute.xlu0 %1895
          %1897 = vset.pattern.permute.xlu0 0
          %1898 = vperm.xlu0 %1897, %v1741
          %v1899 = vpop.permute.xlu0 %1898
          %1900 = vset.pattern.permute.xlu0 0
          %1901 = vperm.xlu0 %1900, %v1742
          %v1902 = vpop.permute.xlu0 %1901
          %1903 = vset.pattern.permute.xlu0 0
          %1904 = vperm.xlu0 %1903, %v1743
          %v1905 = vpop.permute.xlu0 %1904
          %1906 = vset.pattern.permute.xlu0 0
          %1907 = vperm.xlu0 %1906, %v1744
          %v1908 = vpop.permute.xlu0 %1907
          %1909 = vset.pattern.permute.xlu0 0
          %1910 = vperm.xlu0 %1909, %v1745
          %v1911 = vpop.permute.xlu0 %1910
          %1912 = vset.pattern.permute.xlu0 0
          %1913 = vperm.xlu0 %1912, %v1746
          %v1914 = vpop.permute.xlu0 %1913
          %1915 = vset.pattern.permute.xlu0 0
          %1916 = vperm.xlu0 %1915, %v1747
          %v1917 = vpop.permute.xlu0 %1916
          %1918 = vset.pattern.permute.xlu0 0
          %1919 = vperm.xlu0 %1918, %v1748
          %v1920 = vpop.permute.xlu0 %1919
          %1921 = vset.pattern.permute.xlu0 0
          %1922 = vperm.xlu0 %1921, %v1749
          %v1923 = vpop.permute.xlu0 %1922
          %1924 = vset.pattern.permute.xlu0 0
          %1925 = vperm.xlu0 %1924, %v1750
          %v1926 = vpop.permute.xlu0 %1925
          %1927 = vset.pattern.permute.xlu0 0
          %1928 = vperm.xlu0 %1927, %v1751
          %v1929 = vpop.permute.xlu0 %1928
          %1930 = vset.pattern.permute.xlu0 0
          %1931 = vperm.xlu0 %1930, %v1752
          %v1932 = vpop.permute.xlu0 %1931
          %1933 = vset.pattern.permute.xlu0 0
          %1934 = vperm.xlu0 %1933, %v1753
          %v1935 = vpop.permute.xlu0 %1934
          %1936 = vset.pattern.permute.xlu0 0
          %1937 = vperm.xlu0 %1936, %v1754
          %v1938 = vpop.permute.xlu0 %1937
          %1939 = vset.pattern.permute.xlu0 0
          %1940 = vperm.xlu0 %1939, %v1755
          %v1941 = vpop.permute.xlu0 %1940
          %1942 = vset.pattern.permute.xlu0 0
          %1943 = vperm.xlu0 %1942, %v1756
          %v1944 = vpop.permute.xlu0 %1943
          %1945 = vset.pattern.permute.xlu0 0
          %1946 = vperm.xlu0 %1945, %v1757
          %v1947 = vpop.permute.xlu0 %1946
          %1948 = vset.pattern.permute.xlu0 0
          %1949 = vperm.xlu0 %1948, %v1758
          %v1950 = vpop.permute.xlu0 %1949
          %vm1951 = vcmp.eq.s32.totalorder %v1761, 1
          %vm1952 = vcmp.eq.s32.totalorder %v1764, 1
          %vm1953 = vcmp.eq.s32.totalorder %v1767, 1
          %vm1954 = vcmp.eq.s32.totalorder %v1770, 1
          %vm1955 = vcmp.eq.s32.totalorder %v1773, 1
          %vm1956 = vcmp.eq.s32.totalorder %v1776, 1
          %vm1957 = vcmp.eq.s32.totalorder %v1779, 1
          %vm1958 = vcmp.eq.s32.totalorder %v1782, 1
          %vm1959 = vcmp.eq.s32.totalorder %v1785, 1
          %vm1960 = vcmp.eq.s32.totalorder %v1788, 1
          %vm1961 = vcmp.eq.s32.totalorder %v1791, 1
          %vm1962 = vcmp.eq.s32.totalorder %v1794, 1
          %vm1963 = vcmp.eq.s32.totalorder %v1797, 1
          %vm1964 = vcmp.eq.s32.totalorder %v1800, 1
          %vm1965 = vcmp.eq.s32.totalorder %v1803, 1
          %vm1966 = vcmp.eq.s32.totalorder %v1806, 1
          %vm1967 = vcmp.eq.s32.totalorder %v1809, 1
          %vm1968 = vcmp.eq.s32.totalorder %v1812, 1
          %vm1969 = vcmp.eq.s32.totalorder %v1815, 1
          %vm1970 = vcmp.eq.s32.totalorder %v1818, 1
          %vm1971 = vcmp.eq.s32.totalorder %v1821, 1
          %vm1972 = vcmp.eq.s32.totalorder %v1824, 1
          %vm1973 = vcmp.eq.s32.totalorder %v1827, 1
          %vm1974 = vcmp.eq.s32.totalorder %v1830, 1
          %vm1975 = vcmp.eq.s32.totalorder %v1833, 1
          %vm1976 = vcmp.eq.s32.totalorder %v1836, 1
          %vm1977 = vcmp.eq.s32.totalorder %v1839, 1
          %vm1978 = vcmp.eq.s32.totalorder %v1842, 1
          %vm1979 = vcmp.eq.s32.totalorder %v1845, 1
          %vm1980 = vcmp.eq.s32.totalorder %v1848, 1
          %vm1981 = vcmp.eq.s32.totalorder %v1851, 1
          %vm1982 = vcmp.eq.s32.totalorder %v1854, 1
          %vm1983 = vcmp.eq.s32.totalorder %v1857, 1
          %vm1984 = vcmp.eq.s32.totalorder %v1860, 1
          %vm1985 = vcmp.eq.s32.totalorder %v1863, 1
          %vm1986 = vcmp.eq.s32.totalorder %v1866, 1
          %vm1987 = vcmp.eq.s32.totalorder %v1869, 1
          %vm1988 = vcmp.eq.s32.totalorder %v1872, 1
          %vm1989 = vcmp.eq.s32.totalorder %v1875, 1
          %vm1990 = vcmp.eq.s32.totalorder %v1878, 1
          %vm1991 = vcmp.eq.s32.totalorder %v1881, 1
          %vm1992 = vcmp.eq.s32.totalorder %v1884, 1
          %vm1993 = vcmp.eq.s32.totalorder %v1887, 1
          %vm1994 = vcmp.eq.s32.totalorder %v1890, 1
          %vm1995 = vcmp.eq.s32.totalorder %v1893, 1
          %vm1996 = vcmp.eq.s32.totalorder %v1896, 1
          %vm1997 = vcmp.eq.s32.totalorder %v1899, 1
          %vm1998 = vcmp.eq.s32.totalorder %v1902, 1
          %vm1999 = vcmp.eq.s32.totalorder %v1905, 1
          %vm2000 = vcmp.eq.s32.totalorder %v1908, 1
          %vm2001 = vcmp.eq.s32.totalorder %v1911, 1
          %vm2002 = vcmp.eq.s32.totalorder %v1914, 1
          %vm2003 = vcmp.eq.s32.totalorder %v1917, 1
          %vm2004 = vcmp.eq.s32.totalorder %v1920, 1
          %vm2005 = vcmp.eq.s32.totalorder %v1923, 1
          %vm2006 = vcmp.eq.s32.totalorder %v1926, 1
          %vm2007 = vcmp.eq.s32.totalorder %v1929, 1
          %vm2008 = vcmp.eq.s32.totalorder %v1932, 1
          %vm2009 = vcmp.eq.s32.totalorder %v1935, 1
          %vm2010 = vcmp.eq.s32.totalorder %v1938, 1
          %vm2011 = vcmp.eq.s32.totalorder %v1941, 1
          %vm2012 = vcmp.eq.s32.totalorder %v1944, 1
          %vm2013 = vcmp.eq.s32.totalorder %v1947, 1
          %vm2014 = vcmp.eq.s32.totalorder %v1950, 1
          %v2015 = vsel %vm1951, %v1631, %v1246
          %v2016 = vsel %vm1952, %v1632, %v1247
          %v2017 = vsel %vm1953, %v1633, %v1248
          %v2018 = vsel %vm1954, %v1634, %v1249
          %v2019 = vsel %vm1955, %v1635, %v1250
          %v2020 = vsel %vm1956, %v1636, %v1251
          %v2021 = vsel %vm1957, %v1637, %v1252
          %v2022 = vsel %vm1958, %v1638, %v1253
          %v2023 = vsel %vm1959, %v1639, %v1254
          %v2024 = vsel %vm1960, %v1640, %v1255
          %v2025 = vsel %vm1961, %v1641, %v1256
          %v2026 = vsel %vm1962, %v1642, %v1257
          %v2027 = vsel %vm1963, %v1643, %v1258
          %v2028 = vsel %vm1964, %v1644, %v1259
          %v2029 = vsel %vm1965, %v1645, %v1260
          %v2030 = vsel %vm1966, %v1646, %v1261
          %v2031 = vsel %vm1967, %v1647, %v1262
          %v2032 = vsel %vm1968, %v1648, %v1263
          %v2033 = vsel %vm1969, %v1649, %v1264
          %v2034 = vsel %vm1970, %v1650, %v1265
          %v2035 = vsel %vm1971, %v1651, %v1266
          %v2036 = vsel %vm1972, %v1652, %v1267
          %v2037 = vsel %vm1973, %v1653, %v1268
          %v2038 = vsel %vm1974, %v1654, %v1269
          %v2039 = vsel %vm1975, %v1655, %v1270
          %v2040 = vsel %vm1976, %v1656, %v1271
          %v2041 = vsel %vm1977, %v1657, %v1272
          %v2042 = vsel %vm1978, %v1658, %v1273
          %v2043 = vsel %vm1979, %v1659, %v1274
          %v2044 = vsel %vm1980, %v1660, %v1275
          %v2045 = vsel %vm1981, %v1661, %v1276
          %v2046 = vsel %vm1982, %v1662, %v1277
          %v2047 = vsel %vm1983, %v1663, %v1278
          %v2048 = vsel %vm1984, %v1664, %v1279
          %v2049 = vsel %vm1985, %v1665, %v1280
          %v2050 = vsel %vm1986, %v1666, %v1281
          %v2051 = vsel %vm1987, %v1667, %v1282
          %v2052 = vsel %vm1988, %v1668, %v1283
          %v2053 = vsel %vm1989, %v1669, %v1284
          %v2054 = vsel %vm1990, %v1670, %v1285
          %v2055 = vsel %vm1991, %v1671, %v1286
          %v2056 = vsel %vm1992, %v1672, %v1287
          %v2057 = vsel %vm1993, %v1673, %v1288
          %v2058 = vsel %vm1994, %v1674, %v1289
          %v2059 = vsel %vm1995, %v1675, %v1290
          %v2060 = vsel %vm1996, %v1676, %v1291
          %v2061 = vsel %vm1997, %v1677, %v1292
          %v2062 = vsel %vm1998, %v1678, %v1293
          %v2063 = vsel %vm1999, %v1679, %v1294
          %v2064 = vsel %vm2000, %v1680, %v1295
          %v2065 = vsel %vm2001, %v1681, %v1296
          %v2066 = vsel %vm2002, %v1682, %v1297
          %v2067 = vsel %vm2003, %v1683, %v1298
          %v2068 = vsel %vm2004, %v1684, %v1299
          %v2069 = vsel %vm2005, %v1685, %v1300
          %v2070 = vsel %vm2006, %v1686, %v1301
          %v2071 = vsel %vm2007, %v1687, %v1302
          %v2072 = vsel %vm2008, %v1688, %v1303
          %v2073 = vsel %vm2009, %v1689, %v1304
          %v2074 = vsel %vm2010, %v1690, %v1305
          %v2075 = vsel %vm2011, %v1691, %v1306
          %v2076 = vsel %vm2012, %v1692, %v1307
          %v2077 = vsel %vm2013, %v1693, %v1308
          %v2078 = vsel %vm2014, %v1694, %v1309
          %v2079 = vrot.slane %v2015, 4
          %v2080 = vrot.slane %v2016, 4
          %v2081 = vrot.slane %v2017, 4
          %v2082 = vrot.slane %v2018, 4
          %v2083 = vrot.slane %v2019, 4
          %v2084 = vrot.slane %v2020, 4
          %v2085 = vrot.slane %v2021, 4
          %v2086 = vrot.slane %v2022, 4
          %v2087 = vrot.slane %v2023, 4
          %v2088 = vrot.slane %v2024, 4
          %v2089 = vrot.slane %v2025, 4
          %v2090 = vrot.slane %v2026, 4
          %v2091 = vrot.slane %v2027, 4
          %v2092 = vrot.slane %v2028, 4
          %v2093 = vrot.slane %v2029, 4
          %v2094 = vrot.slane %v2030, 4
          %v2095 = vrot.slane %v2031, 4
          %v2096 = vrot.slane %v2032, 4
          %v2097 = vrot.slane %v2033, 4
          %v2098 = vrot.slane %v2034, 4
          %v2099 = vrot.slane %v2035, 4
          %v2100 = vrot.slane %v2036, 4
          %v2101 = vrot.slane %v2037, 4
          %v2102 = vrot.slane %v2038, 4
          %v2103 = vrot.slane %v2039, 4
          %v2104 = vrot.slane %v2040, 4
          %v2105 = vrot.slane %v2041, 4
          %v2106 = vrot.slane %v2042, 4
          %v2107 = vrot.slane %v2043, 4
          %v2108 = vrot.slane %v2044, 4
          %v2109 = vrot.slane %v2045, 4
          %v2110 = vrot.slane %v2046, 4
          %v2111 = vrot.slane %v2047, 4
          %v2112 = vrot.slane %v2048, 4
          %v2113 = vrot.slane %v2049, 4
          %v2114 = vrot.slane %v2050, 4
          %v2115 = vrot.slane %v2051, 4
          %v2116 = vrot.slane %v2052, 4
          %v2117 = vrot.slane %v2053, 4
          %v2118 = vrot.slane %v2054, 4
          %v2119 = vrot.slane %v2055, 4
          %v2120 = vrot.slane %v2056, 4
          %v2121 = vrot.slane %v2057, 4
          %v2122 = vrot.slane %v2058, 4
          %v2123 = vrot.slane %v2059, 4
          %v2124 = vrot.slane %v2060, 4
          %v2125 = vrot.slane %v2061, 4
          %v2126 = vrot.slane %v2062, 4
          %v2127 = vrot.slane %v2063, 4
          %v2128 = vrot.slane %v2064, 4
          %v2129 = vrot.slane %v2065, 4
          %v2130 = vrot.slane %v2066, 4
          %v2131 = vrot.slane %v2067, 4
          %v2132 = vrot.slane %v2068, 4
          %v2133 = vrot.slane %v2069, 4
          %v2134 = vrot.slane %v2070, 4
          %v2135 = vrot.slane %v2071, 4
          %v2136 = vrot.slane %v2072, 4
          %v2137 = vrot.slane %v2073, 4
          %v2138 = vrot.slane %v2074, 4
          %v2139 = vrot.slane %v2075, 4
          %v2140 = vrot.slane %v2076, 4
          %v2141 = vrot.slane %v2077, 4
          %v2142 = vrot.slane %v2078, 4
          %vm2143 = vcmp.lt.s32.totalorder %v604, 4
          %v2144 = vsel %vm2143, %v2141, %v2142
          %v2145 = vsel %vm2143, %v2140, %v2141
          %v2146 = vsel %vm2143, %v2139, %v2140
          %v2147 = vsel %vm2143, %v2138, %v2139
          %v2148 = vsel %vm2143, %v2137, %v2138
          %v2149 = vsel %vm2143, %v2136, %v2137
          %v2150 = vsel %vm2143, %v2135, %v2136
          %v2151 = vsel %vm2143, %v2134, %v2135
          %v2152 = vsel %vm2143, %v2133, %v2134
          %v2153 = vsel %vm2143, %v2132, %v2133
          %v2154 = vsel %vm2143, %v2131, %v2132
          %v2155 = vsel %vm2143, %v2130, %v2131
          %v2156 = vsel %vm2143, %v2129, %v2130
          %v2157 = vsel %vm2143, %v2128, %v2129
          %v2158 = vsel %vm2143, %v2127, %v2128
          %v2159 = vsel %vm2143, %v2126, %v2127
          %v2160 = vsel %vm2143, %v2125, %v2126
          %v2161 = vsel %vm2143, %v2124, %v2125
          %v2162 = vsel %vm2143, %v2123, %v2124
          %v2163 = vsel %vm2143, %v2122, %v2123
          %v2164 = vsel %vm2143, %v2121, %v2122
          %v2165 = vsel %vm2143, %v2120, %v2121
          %v2166 = vsel %vm2143, %v2119, %v2120
          %v2167 = vsel %vm2143, %v2118, %v2119
          %v2168 = vsel %vm2143, %v2117, %v2118
          %v2169 = vsel %vm2143, %v2116, %v2117
          %v2170 = vsel %vm2143, %v2115, %v2116
          %v2171 = vsel %vm2143, %v2114, %v2115
          %v2172 = vsel %vm2143, %v2113, %v2114
          %v2173 = vsel %vm2143, %v2112, %v2113
          %v2174 = vsel %vm2143, %v2111, %v2112
          %v2175 = vsel %vm2143, %v2110, %v2111
          %v2176 = vsel %vm2143, %v2109, %v2110
          %v2177 = vsel %vm2143, %v2108, %v2109
          %v2178 = vsel %vm2143, %v2107, %v2108
          %v2179 = vsel %vm2143, %v2106, %v2107
          %v2180 = vsel %vm2143, %v2105, %v2106
          %v2181 = vsel %vm2143, %v2104, %v2105
          %v2182 = vsel %vm2143, %v2103, %v2104
          %v2183 = vsel %vm2143, %v2102, %v2103
          %v2184 = vsel %vm2143, %v2101, %v2102
          %v2185 = vsel %vm2143, %v2100, %v2101
          %v2186 = vsel %vm2143, %v2099, %v2100
          %v2187 = vsel %vm2143, %v2098, %v2099
          %v2188 = vsel %vm2143, %v2097, %v2098
          %v2189 = vsel %vm2143, %v2096, %v2097
          %v2190 = vsel %vm2143, %v2095, %v2096
          %v2191 = vsel %vm2143, %v2094, %v2095
          %v2192 = vsel %vm2143, %v2093, %v2094
          %v2193 = vsel %vm2143, %v2092, %v2093
          %v2194 = vsel %vm2143, %v2091, %v2092
          %v2195 = vsel %vm2143, %v2090, %v2091
          %v2196 = vsel %vm2143, %v2089, %v2090
          %v2197 = vsel %vm2143, %v2088, %v2089
          %v2198 = vsel %vm2143, %v2087, %v2088
          %v2199 = vsel %vm2143, %v2086, %v2087
          %v2200 = vsel %vm2143, %v2085, %v2086
          %v2201 = vsel %vm2143, %v2084, %v2085
          %v2202 = vsel %vm2143, %v2083, %v2084
          %v2203 = vsel %vm2143, %v2082, %v2083
          %v2204 = vsel %vm2143, %v2081, %v2082
          %v2205 = vsel %vm2143, %v2080, %v2081
          %v2206 = vsel %vm2143, %v2079, %v2080
          %v2207 = vsel %vm2143, %v2142, %v2079
          %v2208 = vrot.slane %v409, 4
          %v2209 = vrot.slane %v410, 4
          %v2210 = vrot.slane %v411, 4
          %v2211 = vrot.slane %v412, 4
          %v2212 = vrot.slane %v413, 4
          %v2213 = vrot.slane %v414, 4
          %v2214 = vrot.slane %v415, 4
          %v2215 = vrot.slane %v416, 4
          %v2216 = vrot.slane %v417, 4
          %v2217 = vrot.slane %v418, 4
          %v2218 = vrot.slane %v419, 4
          %v2219 = vrot.slane %v420, 4
          %v2220 = vrot.slane %v421, 4
          %v2221 = vrot.slane %v422, 4
          %v2222 = vrot.slane %v423, 4
          %v2223 = vrot.slane %v424, 4
          %v2224 = vrot.slane %v425, 4
          %v2225 = vrot.slane %v426, 4
          %v2226 = vrot.slane %v427, 4
          %v2227 = vrot.slane %v428, 4
          %v2228 = vrot.slane %v429, 4
          %v2229 = vrot.slane %v430, 4
          %v2230 = vrot.slane %v431, 4
          %v2231 = vrot.slane %v432, 4
          %v2232 = vrot.slane %v433, 4
          %v2233 = vrot.slane %v434, 4
          %v2234 = vrot.slane %v435, 4
          %v2235 = vrot.slane %v436, 4
          %v2236 = vrot.slane %v437, 4
          %v2237 = vrot.slane %v438, 4
          %v2238 = vrot.slane %v439, 4
          %v2239 = vrot.slane %v440, 4
          %v2240 = vrot.slane %v441, 4
          %v2241 = vrot.slane %v442, 4
          %v2242 = vrot.slane %v443, 4
          %v2243 = vrot.slane %v444, 4
          %v2244 = vrot.slane %v445, 4
          %v2245 = vrot.slane %v446, 4
          %v2246 = vrot.slane %v447, 4
          %v2247 = vrot.slane %v448, 4
          %v2248 = vrot.slane %v449, 4
          %v2249 = vrot.slane %v450, 4
          %v2250 = vrot.slane %v451, 4
          %v2251 = vrot.slane %v452, 4
          %v2252 = vrot.slane %v453, 4
          %v2253 = vrot.slane %v454, 4
          %v2254 = vrot.slane %v455, 4
          %v2255 = vrot.slane %v456, 4
          %v2256 = vrot.slane %v457, 4
          %v2257 = vrot.slane %v458, 4
          %v2258 = vrot.slane %v459, 4
          %v2259 = vrot.slane %v460, 4
          %v2260 = vrot.slane %v461, 4
          %v2261 = vrot.slane %v462, 4
          %v2262 = vrot.slane %v463, 4
          %v2263 = vrot.slane %v464, 4
          %v2264 = vrot.slane %v465, 4
          %v2265 = vrot.slane %v466, 4
          %v2266 = vrot.slane %v467, 4
          %v2267 = vrot.slane %v468, 4
          %v2268 = vrot.slane %v469, 4
          %v2269 = vrot.slane %v470, 4
          %v2270 = vrot.slane %v471, 4
          %v2271 = vrot.slane %v472, 4
          %v2272 = vsel %vm2143, %v2270, %v2271
          %v2273 = vsel %vm2143, %v2269, %v2270
          %v2274 = vsel %vm2143, %v2268, %v2269
          %v2275 = vsel %vm2143, %v2267, %v2268
          %v2276 = vsel %vm2143, %v2266, %v2267
          %v2277 = vsel %vm2143, %v2265, %v2266
          %v2278 = vsel %vm2143, %v2264, %v2265
          %v2279 = vsel %vm2143, %v2263, %v2264
          %v2280 = vsel %vm2143, %v2262, %v2263
          %v2281 = vsel %vm2143, %v2261, %v2262
          %v2282 = vsel %vm2143, %v2260, %v2261
          %v2283 = vsel %vm2143, %v2259, %v2260
          %v2284 = vsel %vm2143, %v2258, %v2259
          %v2285 = vsel %vm2143, %v2257, %v2258
          %v2286 = vsel %vm2143, %v2256, %v2257
          %v2287 = vsel %vm2143, %v2255, %v2256
          %v2288 = vsel %vm2143, %v2254, %v2255
          %v2289 = vsel %vm2143, %v2253, %v2254
          %v2290 = vsel %vm2143, %v2252, %v2253
          %v2291 = vsel %vm2143, %v2251, %v2252
          %v2292 = vsel %vm2143, %v2250, %v2251
          %v2293 = vsel %vm2143, %v2249, %v2250
          %v2294 = vsel %vm2143, %v2248, %v2249
          %v2295 = vsel %vm2143, %v2247, %v2248
          %v2296 = vsel %vm2143, %v2246, %v2247
          %v2297 = vsel %vm2143, %v2245, %v2246
          %v2298 = vsel %vm2143, %v2244, %v2245
          %v2299 = vsel %vm2143, %v2243, %v2244
          %v2300 = vsel %vm2143, %v2242, %v2243
          %v2301 = vsel %vm2143, %v2241, %v2242
          %v2302 = vsel %vm2143, %v2240, %v2241
          %v2303 = vsel %vm2143, %v2239, %v2240
          %v2304 = vsel %vm2143, %v2238, %v2239
          %v2305 = vsel %vm2143, %v2237, %v2238
          %v2306 = vsel %vm2143, %v2236, %v2237
          %v2307 = vsel %vm2143, %v2235, %v2236
          %v2308 = vsel %vm2143, %v2234, %v2235
          %v2309 = vsel %vm2143, %v2233, %v2234
          %v2310 = vsel %vm2143, %v2232, %v2233
          %v2311 = vsel %vm2143, %v2231, %v2232
          %v2312 = vsel %vm2143, %v2230, %v2231
          %v2313 = vsel %vm2143, %v2229, %v2230
          %v2314 = vsel %vm2143, %v2228, %v2229
          %v2315 = vsel %vm2143, %v2227, %v2228
          %v2316 = vsel %vm2143, %v2226, %v2227
          %v2317 = vsel %vm2143, %v2225, %v2226
          %v2318 = vsel %vm2143, %v2224, %v2225
          %v2319 = vsel %vm2143, %v2223, %v2224
          %v2320 = vsel %vm2143, %v2222, %v2223
          %v2321 = vsel %vm2143, %v2221, %v2222
          %v2322 = vsel %vm2143, %v2220, %v2221
          %v2323 = vsel %vm2143, %v2219, %v2220
          %v2324 = vsel %vm2143, %v2218, %v2219
          %v2325 = vsel %vm2143, %v2217, %v2218
          %v2326 = vsel %vm2143, %v2216, %v2217
          %v2327 = vsel %vm2143, %v2215, %v2216
          %v2328 = vsel %vm2143, %v2214, %v2215
          %v2329 = vsel %vm2143, %v2213, %v2214
          %v2330 = vsel %vm2143, %v2212, %v2213
          %v2331 = vsel %vm2143, %v2211, %v2212
          %v2332 = vsel %vm2143, %v2210, %v2211
          %v2333 = vsel %vm2143, %v2209, %v2210
          %v2334 = vsel %vm2143, %v2208, %v2209
          %v2335 = vsel %vm2143, %v2271, %v2208
          %vm2336 = vcmp.eq.s32.totalorder %v2335, %v409
          %vm2337 = vcmp.eq.s32.totalorder %v2334, %v410
          %vm2338 = vcmp.eq.s32.totalorder %v2333, %v411
          %vm2339 = vcmp.eq.s32.totalorder %v2332, %v412
          %vm2340 = vcmp.eq.s32.totalorder %v2331, %v413
          %vm2341 = vcmp.eq.s32.totalorder %v2330, %v414
          %vm2342 = vcmp.eq.s32.totalorder %v2329, %v415
          %vm2343 = vcmp.eq.s32.totalorder %v2328, %v416
          %vm2344 = vcmp.eq.s32.totalorder %v2327, %v417
          %vm2345 = vcmp.eq.s32.totalorder %v2326, %v418
          %vm2346 = vcmp.eq.s32.totalorder %v2325, %v419
          %vm2347 = vcmp.eq.s32.totalorder %v2324, %v420
          %vm2348 = vcmp.eq.s32.totalorder %v2323, %v421
          %vm2349 = vcmp.eq.s32.totalorder %v2322, %v422
          %vm2350 = vcmp.eq.s32.totalorder %v2321, %v423
          %vm2351 = vcmp.eq.s32.totalorder %v2320, %v424
          %vm2352 = vcmp.eq.s32.totalorder %v2319, %v425
          %vm2353 = vcmp.eq.s32.totalorder %v2318, %v426
          %vm2354 = vcmp.eq.s32.totalorder %v2317, %v427
          %vm2355 = vcmp.eq.s32.totalorder %v2316, %v428
          %vm2356 = vcmp.eq.s32.totalorder %v2315, %v429
          %vm2357 = vcmp.eq.s32.totalorder %v2314, %v430
          %vm2358 = vcmp.eq.s32.totalorder %v2313, %v431
          %vm2359 = vcmp.eq.s32.totalorder %v2312, %v432
          %vm2360 = vcmp.eq.s32.totalorder %v2311, %v433
          %vm2361 = vcmp.eq.s32.totalorder %v2310, %v434
          %vm2362 = vcmp.eq.s32.totalorder %v2309, %v435
          %vm2363 = vcmp.eq.s32.totalorder %v2308, %v436
          %vm2364 = vcmp.eq.s32.totalorder %v2307, %v437
          %vm2365 = vcmp.eq.s32.totalorder %v2306, %v438
          %vm2366 = vcmp.eq.s32.totalorder %v2305, %v439
          %vm2367 = vcmp.eq.s32.totalorder %v2304, %v440
          %vm2368 = vcmp.eq.s32.totalorder %v2303, %v441
          %vm2369 = vcmp.eq.s32.totalorder %v2302, %v442
          %vm2370 = vcmp.eq.s32.totalorder %v2301, %v443
          %vm2371 = vcmp.eq.s32.totalorder %v2300, %v444
          %vm2372 = vcmp.eq.s32.totalorder %v2299, %v445
          %vm2373 = vcmp.eq.s32.totalorder %v2298, %v446
          %vm2374 = vcmp.eq.s32.totalorder %v2297, %v447
          %vm2375 = vcmp.eq.s32.totalorder %v2296, %v448
          %vm2376 = vcmp.eq.s32.totalorder %v2295, %v449
          %vm2377 = vcmp.eq.s32.totalorder %v2294, %v450
          %vm2378 = vcmp.eq.s32.totalorder %v2293, %v451
          %vm2379 = vcmp.eq.s32.totalorder %v2292, %v452
          %vm2380 = vcmp.eq.s32.totalorder %v2291, %v453
          %vm2381 = vcmp.eq.s32.totalorder %v2290, %v454
          %vm2382 = vcmp.eq.s32.totalorder %v2289, %v455
          %vm2383 = vcmp.eq.s32.totalorder %v2288, %v456
          %vm2384 = vcmp.eq.s32.totalorder %v2287, %v457
          %vm2385 = vcmp.eq.s32.totalorder %v2286, %v458
          %vm2386 = vcmp.eq.s32.totalorder %v2285, %v459
          %vm2387 = vcmp.eq.s32.totalorder %v2284, %v460
          %vm2388 = vcmp.eq.s32.totalorder %v2283, %v461
          %vm2389 = vcmp.eq.s32.totalorder %v2282, %v462
          %vm2390 = vcmp.eq.s32.totalorder %v2281, %v463
          %vm2391 = vcmp.eq.s32.totalorder %v2280, %v464
          %vm2392 = vcmp.eq.s32.totalorder %v2279, %v465
          %vm2393 = vcmp.eq.s32.totalorder %v2278, %v466
          %vm2394 = vcmp.eq.s32.totalorder %v2277, %v467
          %vm2395 = vcmp.eq.s32.totalorder %v2276, %v468
          %vm2396 = vcmp.eq.s32.totalorder %v2275, %v469
          %vm2397 = vcmp.eq.s32.totalorder %v2274, %v470
          %vm2398 = vcmp.eq.s32.totalorder %v2273, %v471
          %vm2399 = vcmp.eq.s32.totalorder %v2272, %v472
          %v2400 = vmax.f32 %v2015, %v2207
          %v2401 = vmax.f32 %v2016, %v2206
          %v2402 = vmax.f32 %v2017, %v2205
          %v2403 = vmax.f32 %v2018, %v2204
          %v2404 = vmax.f32 %v2019, %v2203
          %v2405 = vmax.f32 %v2020, %v2202
          %v2406 = vmax.f32 %v2021, %v2201
          %v2407 = vmax.f32 %v2022, %v2200
          %v2408 = vmax.f32 %v2023, %v2199
          %v2409 = vmax.f32 %v2024, %v2198
          %v2410 = vmax.f32 %v2025, %v2197
          %v2411 = vmax.f32 %v2026, %v2196
          %v2412 = vmax.f32 %v2027, %v2195
          %v2413 = vmax.f32 %v2028, %v2194
          %v2414 = vmax.f32 %v2029, %v2193
          %v2415 = vmax.f32 %v2030, %v2192
          %v2416 = vmax.f32 %v2031, %v2191
          %v2417 = vmax.f32 %v2032, %v2190
          %v2418 = vmax.f32 %v2033, %v2189
          %v2419 = vmax.f32 %v2034, %v2188
          %v2420 = vmax.f32 %v2035, %v2187
          %v2421 = vmax.f32 %v2036, %v2186
          %v2422 = vmax.f32 %v2037, %v2185
          %v2423 = vmax.f32 %v2038, %v2184
          %v2424 = vmax.f32 %v2039, %v2183
          %v2425 = vmax.f32 %v2040, %v2182
          %v2426 = vmax.f32 %v2041, %v2181
          %v2427 = vmax.f32 %v2042, %v2180
          %v2428 = vmax.f32 %v2043, %v2179
          %v2429 = vmax.f32 %v2044, %v2178
          %v2430 = vmax.f32 %v2045, %v2177
          %v2431 = vmax.f32 %v2046, %v2176
          %v2432 = vmax.f32 %v2047, %v2175
          %v2433 = vmax.f32 %v2048, %v2174
          %v2434 = vmax.f32 %v2049, %v2173
          %v2435 = vmax.f32 %v2050, %v2172
          %v2436 = vmax.f32 %v2051, %v2171
          %v2437 = vmax.f32 %v2052, %v2170
          %v2438 = vmax.f32 %v2053, %v2169
          %v2439 = vmax.f32 %v2054, %v2168
          %v2440 = vmax.f32 %v2055, %v2167
          %v2441 = vmax.f32 %v2056, %v2166
          %v2442 = vmax.f32 %v2057, %v2165
          %v2443 = vmax.f32 %v2058, %v2164
          %v2444 = vmax.f32 %v2059, %v2163
          %v2445 = vmax.f32 %v2060, %v2162
          %v2446 = vmax.f32 %v2061, %v2161
          %v2447 = vmax.f32 %v2062, %v2160
          %v2448 = vmax.f32 %v2063, %v2159
          %v2449 = vmax.f32 %v2064, %v2158
          %v2450 = vmax.f32 %v2065, %v2157
          %v2451 = vmax.f32 %v2066, %v2156
          %v2452 = vmax.f32 %v2067, %v2155
          %v2453 = vmax.f32 %v2068, %v2154
          %v2454 = vmax.f32 %v2069, %v2153
          %v2455 = vmax.f32 %v2070, %v2152
          %v2456 = vmax.f32 %v2071, %v2151
          %v2457 = vmax.f32 %v2072, %v2150
          %v2458 = vmax.f32 %v2073, %v2149
          %v2459 = vmax.f32 %v2074, %v2148
          %v2460 = vmax.f32 %v2075, %v2147
          %v2461 = vmax.f32 %v2076, %v2146
          %v2462 = vmax.f32 %v2077, %v2145
          %v2463 = vmax.f32 %v2078, %v2144
          %v2464 = vsel %vm2336, 1, 0
          %v2465 = vsel %vm2337, 1, 0
          %v2466 = vsel %vm2338, 1, 0
          %v2467 = vsel %vm2339, 1, 0
          %v2468 = vsel %vm2340, 1, 0
          %v2469 = vsel %vm2341, 1, 0
          %v2470 = vsel %vm2342, 1, 0
          %v2471 = vsel %vm2343, 1, 0
          %v2472 = vsel %vm2344, 1, 0
          %v2473 = vsel %vm2345, 1, 0
          %v2474 = vsel %vm2346, 1, 0
          %v2475 = vsel %vm2347, 1, 0
          %v2476 = vsel %vm2348, 1, 0
          %v2477 = vsel %vm2349, 1, 0
          %v2478 = vsel %vm2350, 1, 0
          %v2479 = vsel %vm2351, 1, 0
          %v2480 = vsel %vm2352, 1, 0
          %v2481 = vsel %vm2353, 1, 0
          %v2482 = vsel %vm2354, 1, 0
          %v2483 = vsel %vm2355, 1, 0
          %v2484 = vsel %vm2356, 1, 0
          %v2485 = vsel %vm2357, 1, 0
          %v2486 = vsel %vm2358, 1, 0
          %v2487 = vsel %vm2359, 1, 0
          %v2488 = vsel %vm2360, 1, 0
          %v2489 = vsel %vm2361, 1, 0
          %v2490 = vsel %vm2362, 1, 0
          %v2491 = vsel %vm2363, 1, 0
          %v2492 = vsel %vm2364, 1, 0
          %v2493 = vsel %vm2365, 1, 0
          %v2494 = vsel %vm2366, 1, 0
          %v2495 = vsel %vm2367, 1, 0
          %v2496 = vsel %vm2368, 1, 0
          %v2497 = vsel %vm2369, 1, 0
          %v2498 = vsel %vm2370, 1, 0
          %v2499 = vsel %vm2371, 1, 0
          %v2500 = vsel %vm2372, 1, 0
          %v2501 = vsel %vm2373, 1, 0
          %v2502 = vsel %vm2374, 1, 0
          %v2503 = vsel %vm2375, 1, 0
          %v2504 = vsel %vm2376, 1, 0
          %v2505 = vsel %vm2377, 1, 0
          %v2506 = vsel %vm2378, 1, 0
          %v2507 = vsel %vm2379, 1, 0
          %v2508 = vsel %vm2380, 1, 0
          %v2509 = vsel %vm2381, 1, 0
          %v2510 = vsel %vm2382, 1, 0
          %v2511 = vsel %vm2383, 1, 0
          %v2512 = vsel %vm2384, 1, 0
          %v2513 = vsel %vm2385, 1, 0
          %v2514 = vsel %vm2386, 1, 0
          %v2515 = vsel %vm2387, 1, 0
          %v2516 = vsel %vm2388, 1, 0
          %v2517 = vsel %vm2389, 1, 0
          %v2518 = vsel %vm2390, 1, 0
          %v2519 = vsel %vm2391, 1, 0
          %v2520 = vsel %vm2392, 1, 0
          %v2521 = vsel %vm2393, 1, 0
          %v2522 = vsel %vm2394, 1, 0
          %v2523 = vsel %vm2395, 1, 0
          %v2524 = vsel %vm2396, 1, 0
          %v2525 = vsel %vm2397, 1, 0
          %v2526 = vsel %vm2398, 1, 0
          %v2527 = vsel %vm2399, 1, 0
          %2528 = vset.pattern.permute.xlu0 0
          %2529 = vperm.xlu0 %2528, %v2464
          %v2530 = vpop.permute.xlu0 %2529
          %2531 = vset.pattern.permute.xlu0 0
          %2532 = vperm.xlu0 %2531, %v2465
          %v2533 = vpop.permute.xlu0 %2532
          %2534 = vset.pattern.permute.xlu0 0
          %2535 = vperm.xlu0 %2534, %v2466
          %v2536 = vpop.permute.xlu0 %2535
          %2537 = vset.pattern.permute.xlu0 0
          %2538 = vperm.xlu0 %2537, %v2467
          %v2539 = vpop.permute.xlu0 %2538
          %2540 = vset.pattern.permute.xlu0 0
          %2541 = vperm.xlu0 %2540, %v2468
          %v2542 = vpop.permute.xlu0 %2541
          %2543 = vset.pattern.permute.xlu0 0
          %2544 = vperm.xlu0 %2543, %v2469
          %v2545 = vpop.permute.xlu0 %2544
          %2546 = vset.pattern.permute.xlu0 0
          %2547 = vperm.xlu0 %2546, %v2470
          %v2548 = vpop.permute.xlu0 %2547
          %2549 = vset.pattern.permute.xlu0 0
          %2550 = vperm.xlu0 %2549, %v2471
          %v2551 = vpop.permute.xlu0 %2550
          %2552 = vset.pattern.permute.xlu0 0
          %2553 = vperm.xlu0 %2552, %v2472
          %v2554 = vpop.permute.xlu0 %2553
          %2555 = vset.pattern.permute.xlu0 0
          %2556 = vperm.xlu0 %2555, %v2473
          %v2557 = vpop.permute.xlu0 %2556
          %2558 = vset.pattern.permute.xlu0 0
          %2559 = vperm.xlu0 %2558, %v2474
          %v2560 = vpop.permute.xlu0 %2559
          %2561 = vset.pattern.permute.xlu0 0
          %2562 = vperm.xlu0 %2561, %v2475
          %v2563 = vpop.permute.xlu0 %2562
          %2564 = vset.pattern.permute.xlu0 0
          %2565 = vperm.xlu0 %2564, %v2476
          %v2566 = vpop.permute.xlu0 %2565
          %2567 = vset.pattern.permute.xlu0 0
          %2568 = vperm.xlu0 %2567, %v2477
          %v2569 = vpop.permute.xlu0 %2568
          %2570 = vset.pattern.permute.xlu0 0
          %2571 = vperm.xlu0 %2570, %v2478
          %v2572 = vpop.permute.xlu0 %2571
          %2573 = vset.pattern.permute.xlu0 0
          %2574 = vperm.xlu0 %2573, %v2479
          %v2575 = vpop.permute.xlu0 %2574
          %2576 = vset.pattern.permute.xlu0 0
          %2577 = vperm.xlu0 %2576, %v2480
          %v2578 = vpop.permute.xlu0 %2577
          %2579 = vset.pattern.permute.xlu0 0
          %2580 = vperm.xlu0 %2579, %v2481
          %v2581 = vpop.permute.xlu0 %2580
          %2582 = vset.pattern.permute.xlu0 0
          %2583 = vperm.xlu0 %2582, %v2482
          %v2584 = vpop.permute.xlu0 %2583
          %2585 = vset.pattern.permute.xlu0 0
          %2586 = vperm.xlu0 %2585, %v2483
          %v2587 = vpop.permute.xlu0 %2586
          %2588 = vset.pattern.permute.xlu0 0
          %2589 = vperm.xlu0 %2588, %v2484
          %v2590 = vpop.permute.xlu0 %2589
          %2591 = vset.pattern.permute.xlu0 0
          %2592 = vperm.xlu0 %2591, %v2485
          %v2593 = vpop.permute.xlu0 %2592
          %2594 = vset.pattern.permute.xlu0 0
          %2595 = vperm.xlu0 %2594, %v2486
          %v2596 = vpop.permute.xlu0 %2595
          %2597 = vset.pattern.permute.xlu0 0
          %2598 = vperm.xlu0 %2597, %v2487
          %v2599 = vpop.permute.xlu0 %2598
          %2600 = vset.pattern.permute.xlu0 0
          %2601 = vperm.xlu0 %2600, %v2488
          %v2602 = vpop.permute.xlu0 %2601
          %2603 = vset.pattern.permute.xlu0 0
          %2604 = vperm.xlu0 %2603, %v2489
          %v2605 = vpop.permute.xlu0 %2604
          %2606 = vset.pattern.permute.xlu0 0
          %2607 = vperm.xlu0 %2606, %v2490
          %v2608 = vpop.permute.xlu0 %2607
          %2609 = vset.pattern.permute.xlu0 0
          %2610 = vperm.xlu0 %2609, %v2491
          %v2611 = vpop.permute.xlu0 %2610
          %2612 = vset.pattern.permute.xlu0 0
          %2613 = vperm.xlu0 %2612, %v2492
          %v2614 = vpop.permute.xlu0 %2613
          %2615 = vset.pattern.permute.xlu0 0
          %2616 = vperm.xlu0 %2615, %v2493
          %v2617 = vpop.permute.xlu0 %2616
          %2618 = vset.pattern.permute.xlu0 0
          %2619 = vperm.xlu0 %2618, %v2494
          %v2620 = vpop.permute.xlu0 %2619
          %2621 = vset.pattern.permute.xlu0 0
          %2622 = vperm.xlu0 %2621, %v2495
          %v2623 = vpop.permute.xlu0 %2622
          %2624 = vset.pattern.permute.xlu0 0
          %2625 = vperm.xlu0 %2624, %v2496
          %v2626 = vpop.permute.xlu0 %2625
          %2627 = vset.pattern.permute.xlu0 0
          %2628 = vperm.xlu0 %2627, %v2497
          %v2629 = vpop.permute.xlu0 %2628
          %2630 = vset.pattern.permute.xlu0 0
          %2631 = vperm.xlu0 %2630, %v2498
          %v2632 = vpop.permute.xlu0 %2631
          %2633 = vset.pattern.permute.xlu0 0
          %2634 = vperm.xlu0 %2633, %v2499
          %v2635 = vpop.permute.xlu0 %2634
          %2636 = vset.pattern.permute.xlu0 0
          %2637 = vperm.xlu0 %2636, %v2500
          %v2638 = vpop.permute.xlu0 %2637
          %2639 = vset.pattern.permute.xlu0 0
          %2640 = vperm.xlu0 %2639, %v2501
          %v2641 = vpop.permute.xlu0 %2640
          %2642 = vset.pattern.permute.xlu0 0
          %2643 = vperm.xlu0 %2642, %v2502
          %v2644 = vpop.permute.xlu0 %2643
          %2645 = vset.pattern.permute.xlu0 0
          %2646 = vperm.xlu0 %2645, %v2503
          %v2647 = vpop.permute.xlu0 %2646
          %2648 = vset.pattern.permute.xlu0 0
          %2649 = vperm.xlu0 %2648, %v2504
          %v2650 = vpop.permute.xlu0 %2649
          %2651 = vset.pattern.permute.xlu0 0
          %2652 = vperm.xlu0 %2651, %v2505
          %v2653 = vpop.permute.xlu0 %2652
          %2654 = vset.pattern.permute.xlu0 0
          %2655 = vperm.xlu0 %2654, %v2506
          %v2656 = vpop.permute.xlu0 %2655
          %2657 = vset.pattern.permute.xlu0 0
          %2658 = vperm.xlu0 %2657, %v2507
          %v2659 = vpop.permute.xlu0 %2658
          %2660 = vset.pattern.permute.xlu0 0
          %2661 = vperm.xlu0 %2660, %v2508
          %v2662 = vpop.permute.xlu0 %2661
          %2663 = vset.pattern.permute.xlu0 0
          %2664 = vperm.xlu0 %2663, %v2509
          %v2665 = vpop.permute.xlu0 %2664
          %2666 = vset.pattern.permute.xlu0 0
          %2667 = vperm.xlu0 %2666, %v2510
          %v2668 = vpop.permute.xlu0 %2667
          %2669 = vset.pattern.permute.xlu0 0
          %2670 = vperm.xlu0 %2669, %v2511
          %v2671 = vpop.permute.xlu0 %2670
          %2672 = vset.pattern.permute.xlu0 0
          %2673 = vperm.xlu0 %2672, %v2512
          %v2674 = vpop.permute.xlu0 %2673
          %2675 = vset.pattern.permute.xlu0 0
          %2676 = vperm.xlu0 %2675, %v2513
          %v2677 = vpop.permute.xlu0 %2676
          %2678 = vset.pattern.permute.xlu0 0
          %2679 = vperm.xlu0 %2678, %v2514
          %v2680 = vpop.permute.xlu0 %2679
          %2681 = vset.pattern.permute.xlu0 0
          %2682 = vperm.xlu0 %2681, %v2515
          %v2683 = vpop.permute.xlu0 %2682
          %2684 = vset.pattern.permute.xlu0 0
          %2685 = vperm.xlu0 %2684, %v2516
          %v2686 = vpop.permute.xlu0 %2685
          %2687 = vset.pattern.permute.xlu0 0
          %2688 = vperm.xlu0 %2687, %v2517
          %v2689 = vpop.permute.xlu0 %2688
          %2690 = vset.pattern.permute.xlu0 0
          %2691 = vperm.xlu0 %2690, %v2518
          %v2692 = vpop.permute.xlu0 %2691
          %2693 = vset.pattern.permute.xlu0 0
          %2694 = vperm.xlu0 %2693, %v2519
          %v2695 = vpop.permute.xlu0 %2694
          %2696 = vset.pattern.permute.xlu0 0
          %2697 = vperm.xlu0 %2696, %v2520
          %v2698 = vpop.permute.xlu0 %2697
          %2699 = vset.pattern.permute.xlu0 0
          %2700 = vperm.xlu0 %2699, %v2521
          %v2701 = vpop.permute.xlu0 %2700
          %2702 = vset.pattern.permute.xlu0 0
          %2703 = vperm.xlu0 %2702, %v2522
          %v2704 = vpop.permute.xlu0 %2703
          %2705 = vset.pattern.permute.xlu0 0
          %2706 = vperm.xlu0 %2705, %v2523
          %v2707 = vpop.permute.xlu0 %2706
          %2708 = vset.pattern.permute.xlu0 0
          %2709 = vperm.xlu0 %2708, %v2524
          %v2710 = vpop.permute.xlu0 %2709
          %2711 = vset.pattern.permute.xlu0 0
          %2712 = vperm.xlu0 %2711, %v2525
          %v2713 = vpop.permute.xlu0 %2712
          %2714 = vset.pattern.permute.xlu0 0
          %2715 = vperm.xlu0 %2714, %v2526
          %v2716 = vpop.permute.xlu0 %2715
          %2717 = vset.pattern.permute.xlu0 0
          %2718 = vperm.xlu0 %2717, %v2527
          %v2719 = vpop.permute.xlu0 %2718
          %vm2720 = vcmp.eq.s32.totalorder %v2530, 1
          %vm2721 = vcmp.eq.s32.totalorder %v2533, 1
          %vm2722 = vcmp.eq.s32.totalorder %v2536, 1
          %vm2723 = vcmp.eq.s32.totalorder %v2539, 1
          %vm2724 = vcmp.eq.s32.totalorder %v2542, 1
          %vm2725 = vcmp.eq.s32.totalorder %v2545, 1
          %vm2726 = vcmp.eq.s32.totalorder %v2548, 1
          %vm2727 = vcmp.eq.s32.totalorder %v2551, 1
          %vm2728 = vcmp.eq.s32.totalorder %v2554, 1
          %vm2729 = vcmp.eq.s32.totalorder %v2557, 1
          %vm2730 = vcmp.eq.s32.totalorder %v2560, 1
          %vm2731 = vcmp.eq.s32.totalorder %v2563, 1
          %vm2732 = vcmp.eq.s32.totalorder %v2566, 1
          %vm2733 = vcmp.eq.s32.totalorder %v2569, 1
          %vm2734 = vcmp.eq.s32.totalorder %v2572, 1
          %vm2735 = vcmp.eq.s32.totalorder %v2575, 1
          %vm2736 = vcmp.eq.s32.totalorder %v2578, 1
          %vm2737 = vcmp.eq.s32.totalorder %v2581, 1
          %vm2738 = vcmp.eq.s32.totalorder %v2584, 1
          %vm2739 = vcmp.eq.s32.totalorder %v2587, 1
          %vm2740 = vcmp.eq.s32.totalorder %v2590, 1
          %vm2741 = vcmp.eq.s32.totalorder %v2593, 1
          %vm2742 = vcmp.eq.s32.totalorder %v2596, 1
          %vm2743 = vcmp.eq.s32.totalorder %v2599, 1
          %vm2744 = vcmp.eq.s32.totalorder %v2602, 1
          %vm2745 = vcmp.eq.s32.totalorder %v2605, 1
          %vm2746 = vcmp.eq.s32.totalorder %v2608, 1
          %vm2747 = vcmp.eq.s32.totalorder %v2611, 1
          %vm2748 = vcmp.eq.s32.totalorder %v2614, 1
          %vm2749 = vcmp.eq.s32.totalorder %v2617, 1
          %vm2750 = vcmp.eq.s32.totalorder %v2620, 1
          %vm2751 = vcmp.eq.s32.totalorder %v2623, 1
          %vm2752 = vcmp.eq.s32.totalorder %v2626, 1
          %vm2753 = vcmp.eq.s32.totalorder %v2629, 1
          %vm2754 = vcmp.eq.s32.totalorder %v2632, 1
          %vm2755 = vcmp.eq.s32.totalorder %v2635, 1
          %vm2756 = vcmp.eq.s32.totalorder %v2638, 1
          %vm2757 = vcmp.eq.s32.totalorder %v2641, 1
          %vm2758 = vcmp.eq.s32.totalorder %v2644, 1
          %vm2759 = vcmp.eq.s32.totalorder %v2647, 1
          %vm2760 = vcmp.eq.s32.totalorder %v2650, 1
          %vm2761 = vcmp.eq.s32.totalorder %v2653, 1
          %vm2762 = vcmp.eq.s32.totalorder %v2656, 1
          %vm2763 = vcmp.eq.s32.totalorder %v2659, 1
          %vm2764 = vcmp.eq.s32.totalorder %v2662, 1
          %vm2765 = vcmp.eq.s32.totalorder %v2665, 1
          %vm2766 = vcmp.eq.s32.totalorder %v2668, 1
          %vm2767 = vcmp.eq.s32.totalorder %v2671, 1
          %vm2768 = vcmp.eq.s32.totalorder %v2674, 1
          %vm2769 = vcmp.eq.s32.totalorder %v2677, 1
          %vm2770 = vcmp.eq.s32.totalorder %v2680, 1
          %vm2771 = vcmp.eq.s32.totalorder %v2683, 1
          %vm2772 = vcmp.eq.s32.totalorder %v2686, 1
          %vm2773 = vcmp.eq.s32.totalorder %v2689, 1
          %vm2774 = vcmp.eq.s32.totalorder %v2692, 1
          %vm2775 = vcmp.eq.s32.totalorder %v2695, 1
          %vm2776 = vcmp.eq.s32.totalorder %v2698, 1
          %vm2777 = vcmp.eq.s32.totalorder %v2701, 1
          %vm2778 = vcmp.eq.s32.totalorder %v2704, 1
          %vm2779 = vcmp.eq.s32.totalorder %v2707, 1
          %vm2780 = vcmp.eq.s32.totalorder %v2710, 1
          %vm2781 = vcmp.eq.s32.totalorder %v2713, 1
          %vm2782 = vcmp.eq.s32.totalorder %v2716, 1
          %vm2783 = vcmp.eq.s32.totalorder %v2719, 1
          %v2784 = vsel %vm2720, %v2400, %v2015
          %v2785 = vsel %vm2721, %v2401, %v2016
          %v2786 = vsel %vm2722, %v2402, %v2017
          %v2787 = vsel %vm2723, %v2403, %v2018
          %v2788 = vsel %vm2724, %v2404, %v2019
          %v2789 = vsel %vm2725, %v2405, %v2020
          %v2790 = vsel %vm2726, %v2406, %v2021
          %v2791 = vsel %vm2727, %v2407, %v2022
          %v2792 = vsel %vm2728, %v2408, %v2023
          %v2793 = vsel %vm2729, %v2409, %v2024
          %v2794 = vsel %vm2730, %v2410, %v2025
          %v2795 = vsel %vm2731, %v2411, %v2026
          %v2796 = vsel %vm2732, %v2412, %v2027
          %v2797 = vsel %vm2733, %v2413, %v2028
          %v2798 = vsel %vm2734, %v2414, %v2029
          %v2799 = vsel %vm2735, %v2415, %v2030
          %v2800 = vsel %vm2736, %v2416, %v2031
          %v2801 = vsel %vm2737, %v2417, %v2032
          %v2802 = vsel %vm2738, %v2418, %v2033
          %v2803 = vsel %vm2739, %v2419, %v2034
          %v2804 = vsel %vm2740, %v2420, %v2035
          %v2805 = vsel %vm2741, %v2421, %v2036
          %v2806 = vsel %vm2742, %v2422, %v2037
          %v2807 = vsel %vm2743, %v2423, %v2038
          %v2808 = vsel %vm2744, %v2424, %v2039
          %v2809 = vsel %vm2745, %v2425, %v2040
          %v2810 = vsel %vm2746, %v2426, %v2041
          %v2811 = vsel %vm2747, %v2427, %v2042
          %v2812 = vsel %vm2748, %v2428, %v2043
          %v2813 = vsel %vm2749, %v2429, %v2044
          %v2814 = vsel %vm2750, %v2430, %v2045
          %v2815 = vsel %vm2751, %v2431, %v2046
          %v2816 = vsel %vm2752, %v2432, %v2047
          %v2817 = vsel %vm2753, %v2433, %v2048
          %v2818 = vsel %vm2754, %v2434, %v2049
          %v2819 = vsel %vm2755, %v2435, %v2050
          %v2820 = vsel %vm2756, %v2436, %v2051
          %v2821 = vsel %vm2757, %v2437, %v2052
          %v2822 = vsel %vm2758, %v2438, %v2053
          %v2823 = vsel %vm2759, %v2439, %v2054
          %v2824 = vsel %vm2760, %v2440, %v2055
          %v2825 = vsel %vm2761, %v2441, %v2056
          %v2826 = vsel %vm2762, %v2442, %v2057
          %v2827 = vsel %vm2763, %v2443, %v2058
          %v2828 = vsel %vm2764, %v2444, %v2059
          %v2829 = vsel %vm2765, %v2445, %v2060
          %v2830 = vsel %vm2766, %v2446, %v2061
          %v2831 = vsel %vm2767, %v2447, %v2062
          %v2832 = vsel %vm2768, %v2448, %v2063
          %v2833 = vsel %vm2769, %v2449, %v2064
          %v2834 = vsel %vm2770, %v2450, %v2065
          %v2835 = vsel %vm2771, %v2451, %v2066
          %v2836 = vsel %vm2772, %v2452, %v2067
          %v2837 = vsel %vm2773, %v2453, %v2068
          %v2838 = vsel %vm2774, %v2454, %v2069
          %v2839 = vsel %vm2775, %v2455, %v2070
          %v2840 = vsel %vm2776, %v2456, %v2071
          %v2841 = vsel %vm2777, %v2457, %v2072
          %v2842 = vsel %vm2778, %v2458, %v2073
          %v2843 = vsel %vm2779, %v2459, %v2074
          %v2844 = vsel %vm2780, %v2460, %v2075
          %v2845 = vsel %vm2781, %v2461, %v2076
          %v2846 = vsel %vm2782, %v2462, %v2077
          %v2847 = vsel %vm2783, %v2463, %v2078
          %vm2848 = vcmp.eq.s32.totalorder %v472, %v409
          %vm2849 = vcmp.eq.s32.totalorder %v409, %v410
          %vm2850 = vcmp.eq.s32.totalorder %v410, %v411
          %vm2851 = vcmp.eq.s32.totalorder %v411, %v412
          %vm2852 = vcmp.eq.s32.totalorder %v412, %v413
          %vm2853 = vcmp.eq.s32.totalorder %v413, %v414
          %vm2854 = vcmp.eq.s32.totalorder %v414, %v415
          %vm2855 = vcmp.eq.s32.totalorder %v415, %v416
          %vm2856 = vcmp.eq.s32.totalorder %v416, %v417
          %vm2857 = vcmp.eq.s32.totalorder %v417, %v418
          %vm2858 = vcmp.eq.s32.totalorder %v418, %v419
          %vm2859 = vcmp.eq.s32.totalorder %v419, %v420
          %vm2860 = vcmp.eq.s32.totalorder %v420, %v421
          %vm2861 = vcmp.eq.s32.totalorder %v421, %v422
          %vm2862 = vcmp.eq.s32.totalorder %v422, %v423
          %vm2863 = vcmp.eq.s32.totalorder %v423, %v424
          %vm2864 = vcmp.eq.s32.totalorder %v424, %v425
          %vm2865 = vcmp.eq.s32.totalorder %v425, %v426
          %vm2866 = vcmp.eq.s32.totalorder %v426, %v427
          %vm2867 = vcmp.eq.s32.totalorder %v427, %v428
          %vm2868 = vcmp.eq.s32.totalorder %v428, %v429
          %vm2869 = vcmp.eq.s32.totalorder %v429, %v430
          %vm2870 = vcmp.eq.s32.totalorder %v430, %v431
          %vm2871 = vcmp.eq.s32.totalorder %v431, %v432
          %vm2872 = vcmp.eq.s32.totalorder %v432, %v433
          %vm2873 = vcmp.eq.s32.totalorder %v433, %v434
          %vm2874 = vcmp.eq.s32.totalorder %v434, %v435
          %vm2875 = vcmp.eq.s32.totalorder %v435, %v436
          %vm2876 = vcmp.eq.s32.totalorder %v436, %v437
          %vm2877 = vcmp.eq.s32.totalorder %v437, %v438
          %vm2878 = vcmp.eq.s32.totalorder %v438, %v439
          %vm2879 = vcmp.eq.s32.totalorder %v439, %v440
          %vm2880 = vcmp.eq.s32.totalorder %v440, %v441
          %vm2881 = vcmp.eq.s32.totalorder %v441, %v442
          %vm2882 = vcmp.eq.s32.totalorder %v442, %v443
          %vm2883 = vcmp.eq.s32.totalorder %v443, %v444
          %vm2884 = vcmp.eq.s32.totalorder %v444, %v445
          %vm2885 = vcmp.eq.s32.totalorder %v445, %v446
          %vm2886 = vcmp.eq.s32.totalorder %v446, %v447
          %vm2887 = vcmp.eq.s32.totalorder %v447, %v448
          %vm2888 = vcmp.eq.s32.totalorder %v448, %v449
          %vm2889 = vcmp.eq.s32.totalorder %v449, %v450
          %vm2890 = vcmp.eq.s32.totalorder %v450, %v451
          %vm2891 = vcmp.eq.s32.totalorder %v451, %v452
          %vm2892 = vcmp.eq.s32.totalorder %v452, %v453
          %vm2893 = vcmp.eq.s32.totalorder %v453, %v454
          %vm2894 = vcmp.eq.s32.totalorder %v454, %v455
          %vm2895 = vcmp.eq.s32.totalorder %v455, %v456
          %vm2896 = vcmp.eq.s32.totalorder %v456, %v457
          %vm2897 = vcmp.eq.s32.totalorder %v457, %v458
          %vm2898 = vcmp.eq.s32.totalorder %v458, %v459
          %vm2899 = vcmp.eq.s32.totalorder %v459, %v460
          %vm2900 = vcmp.eq.s32.totalorder %v460, %v461
          %vm2901 = vcmp.eq.s32.totalorder %v461, %v462
          %vm2902 = vcmp.eq.s32.totalorder %v462, %v463
          %vm2903 = vcmp.eq.s32.totalorder %v463, %v464
          %vm2904 = vcmp.eq.s32.totalorder %v464, %v465
          %vm2905 = vcmp.eq.s32.totalorder %v465, %v466
          %vm2906 = vcmp.eq.s32.totalorder %v466, %v467
          %vm2907 = vcmp.eq.s32.totalorder %v467, %v468
          %vm2908 = vcmp.eq.s32.totalorder %v468, %v469
          %vm2909 = vcmp.eq.s32.totalorder %v469, %v470
          %vm2910 = vcmp.eq.s32.totalorder %v470, %v471
          %vm2911 = vcmp.eq.s32.totalorder %v471, %v472
          %v2912 = vmax.f32 %v2784, %v2847
          %v2913 = vmax.f32 %v2785, %v2784
          %v2914 = vmax.f32 %v2786, %v2785
          %v2915 = vmax.f32 %v2787, %v2786
          %v2916 = vmax.f32 %v2788, %v2787
          %v2917 = vmax.f32 %v2789, %v2788
          %v2918 = vmax.f32 %v2790, %v2789
          %v2919 = vmax.f32 %v2791, %v2790
          %v2920 = vmax.f32 %v2792, %v2791
          %v2921 = vmax.f32 %v2793, %v2792
          %v2922 = vmax.f32 %v2794, %v2793
          %v2923 = vmax.f32 %v2795, %v2794
          %v2924 = vmax.f32 %v2796, %v2795
          %v2925 = vmax.f32 %v2797, %v2796
          %v2926 = vmax.f32 %v2798, %v2797
          %v2927 = vmax.f32 %v2799, %v2798
          %v2928 = vmax.f32 %v2800, %v2799
          %v2929 = vmax.f32 %v2801, %v2800
          %v2930 = vmax.f32 %v2802, %v2801
          %v2931 = vmax.f32 %v2803, %v2802
          %v2932 = vmax.f32 %v2804, %v2803
          %v2933 = vmax.f32 %v2805, %v2804
          %v2934 = vmax.f32 %v2806, %v2805
          %v2935 = vmax.f32 %v2807, %v2806
          %v2936 = vmax.f32 %v2808, %v2807
          %v2937 = vmax.f32 %v2809, %v2808
          %v2938 = vmax.f32 %v2810, %v2809
          %v2939 = vmax.f32 %v2811, %v2810
          %v2940 = vmax.f32 %v2812, %v2811
          %v2941 = vmax.f32 %v2813, %v2812
          %v2942 = vmax.f32 %v2814, %v2813
          %v2943 = vmax.f32 %v2815, %v2814
          %v2944 = vmax.f32 %v2816, %v2815
          %v2945 = vmax.f32 %v2817, %v2816
          %v2946 = vmax.f32 %v2818, %v2817
          %v2947 = vmax.f32 %v2819, %v2818
          %v2948 = vmax.f32 %v2820, %v2819
          %v2949 = vmax.f32 %v2821, %v2820
          %v2950 = vmax.f32 %v2822, %v2821
          %v2951 = vmax.f32 %v2823, %v2822
          %v2952 = vmax.f32 %v2824, %v2823
          %v2953 = vmax.f32 %v2825, %v2824
          %v2954 = vmax.f32 %v2826, %v2825
          %v2955 = vmax.f32 %v2827, %v2826
          %v2956 = vmax.f32 %v2828, %v2827
          %v2957 = vmax.f32 %v2829, %v2828
          %v2958 = vmax.f32 %v2830, %v2829
          %v2959 = vmax.f32 %v2831, %v2830
          %v2960 = vmax.f32 %v2832, %v2831
          %v2961 = vmax.f32 %v2833, %v2832
          %v2962 = vmax.f32 %v2834, %v2833
          %v2963 = vmax.f32 %v2835, %v2834
          %v2964 = vmax.f32 %v2836, %v2835
          %v2965 = vmax.f32 %v2837, %v2836
          %v2966 = vmax.f32 %v2838, %v2837
          %v2967 = vmax.f32 %v2839, %v2838
          %v2968 = vmax.f32 %v2840, %v2839
          %v2969 = vmax.f32 %v2841, %v2840
          %v2970 = vmax.f32 %v2842, %v2841
          %v2971 = vmax.f32 %v2843, %v2842
          %v2972 = vmax.f32 %v2844, %v2843
          %v2973 = vmax.f32 %v2845, %v2844
          %v2974 = vmax.f32 %v2846, %v2845
          %v2975 = vmax.f32 %v2847, %v2846
          %v2976 = vsel %vm2848, 1, 0
          %v2977 = vsel %vm2849, 1, 0
          %v2978 = vsel %vm2850, 1, 0
          %v2979 = vsel %vm2851, 1, 0
          %v2980 = vsel %vm2852, 1, 0
          %v2981 = vsel %vm2853, 1, 0
          %v2982 = vsel %vm2854, 1, 0
          %v2983 = vsel %vm2855, 1, 0
          %v2984 = vsel %vm2856, 1, 0
          %v2985 = vsel %vm2857, 1, 0
          %v2986 = vsel %vm2858, 1, 0
          %v2987 = vsel %vm2859, 1, 0
          %v2988 = vsel %vm2860, 1, 0
          %v2989 = vsel %vm2861, 1, 0
          %v2990 = vsel %vm2862, 1, 0
          %v2991 = vsel %vm2863, 1, 0
          %v2992 = vsel %vm2864, 1, 0
          %v2993 = vsel %vm2865, 1, 0
          %v2994 = vsel %vm2866, 1, 0
          %v2995 = vsel %vm2867, 1, 0
          %v2996 = vsel %vm2868, 1, 0
          %v2997 = vsel %vm2869, 1, 0
          %v2998 = vsel %vm2870, 1, 0
          %v2999 = vsel %vm2871, 1, 0
          %v3000 = vsel %vm2872, 1, 0
          %v3001 = vsel %vm2873, 1, 0
          %v3002 = vsel %vm2874, 1, 0
          %v3003 = vsel %vm2875, 1, 0
          %v3004 = vsel %vm2876, 1, 0
          %v3005 = vsel %vm2877, 1, 0
          %v3006 = vsel %vm2878, 1, 0
          %v3007 = vsel %vm2879, 1, 0
          %v3008 = vsel %vm2880, 1, 0
          %v3009 = vsel %vm2881, 1, 0
          %v3010 = vsel %vm2882, 1, 0
          %v3011 = vsel %vm2883, 1, 0
          %v3012 = vsel %vm2884, 1, 0
          %v3013 = vsel %vm2885, 1, 0
          %v3014 = vsel %vm2886, 1, 0
          %v3015 = vsel %vm2887, 1, 0
          %v3016 = vsel %vm2888, 1, 0
          %v3017 = vsel %vm2889, 1, 0
          %v3018 = vsel %vm2890, 1, 0
          %v3019 = vsel %vm2891, 1, 0
          %v3020 = vsel %vm2892, 1, 0
          %v3021 = vsel %vm2893, 1, 0
          %v3022 = vsel %vm2894, 1, 0
          %v3023 = vsel %vm2895, 1, 0
          %v3024 = vsel %vm2896, 1, 0
          %v3025 = vsel %vm2897, 1, 0
          %v3026 = vsel %vm2898, 1, 0
          %v3027 = vsel %vm2899, 1, 0
          %v3028 = vsel %vm2900, 1, 0
          %v3029 = vsel %vm2901, 1, 0
          %v3030 = vsel %vm2902, 1, 0
          %v3031 = vsel %vm2903, 1, 0
          %v3032 = vsel %vm2904, 1, 0
          %v3033 = vsel %vm2905, 1, 0
          %v3034 = vsel %vm2906, 1, 0
          %v3035 = vsel %vm2907, 1, 0
          %v3036 = vsel %vm2908, 1, 0
          %v3037 = vsel %vm2909, 1, 0
          %v3038 = vsel %vm2910, 1, 0
          %v3039 = vsel %vm2911, 1, 0
          %3040 = vset.pattern.permute.xlu0 0
          %3041 = vperm.xlu0 %3040, %v2976
          %v3042 = vpop.permute.xlu0 %3041
          %3043 = vset.pattern.permute.xlu0 0
          %3044 = vperm.xlu0 %3043, %v2977
          %v3045 = vpop.permute.xlu0 %3044
          %3046 = vset.pattern.permute.xlu0 0
          %3047 = vperm.xlu0 %3046, %v2978
          %v3048 = vpop.permute.xlu0 %3047
          %3049 = vset.pattern.permute.xlu0 0
          %3050 = vperm.xlu0 %3049, %v2979
          %v3051 = vpop.permute.xlu0 %3050
          %3052 = vset.pattern.permute.xlu0 0
          %3053 = vperm.xlu0 %3052, %v2980
          %v3054 = vpop.permute.xlu0 %3053
          %3055 = vset.pattern.permute.xlu0 0
          %3056 = vperm.xlu0 %3055, %v2981
          %v3057 = vpop.permute.xlu0 %3056
          %3058 = vset.pattern.permute.xlu0 0
          %3059 = vperm.xlu0 %3058, %v2982
          %v3060 = vpop.permute.xlu0 %3059
          %3061 = vset.pattern.permute.xlu0 0
          %3062 = vperm.xlu0 %3061, %v2983
          %v3063 = vpop.permute.xlu0 %3062
          %3064 = vset.pattern.permute.xlu0 0
          %3065 = vperm.xlu0 %3064, %v2984
          %v3066 = vpop.permute.xlu0 %3065
          %3067 = vset.pattern.permute.xlu0 0
          %3068 = vperm.xlu0 %3067, %v2985
          %v3069 = vpop.permute.xlu0 %3068
          %3070 = vset.pattern.permute.xlu0 0
          %3071 = vperm.xlu0 %3070, %v2986
          %v3072 = vpop.permute.xlu0 %3071
          %3073 = vset.pattern.permute.xlu0 0
          %3074 = vperm.xlu0 %3073, %v2987
          %v3075 = vpop.permute.xlu0 %3074
          %3076 = vset.pattern.permute.xlu0 0
          %3077 = vperm.xlu0 %3076, %v2988
          %v3078 = vpop.permute.xlu0 %3077
          %3079 = vset.pattern.permute.xlu0 0
          %3080 = vperm.xlu0 %3079, %v2989
          %v3081 = vpop.permute.xlu0 %3080
          %3082 = vset.pattern.permute.xlu0 0
          %3083 = vperm.xlu0 %3082, %v2990
          %v3084 = vpop.permute.xlu0 %3083
          %3085 = vset.pattern.permute.xlu0 0
          %3086 = vperm.xlu0 %3085, %v2991
          %v3087 = vpop.permute.xlu0 %3086
          %3088 = vset.pattern.permute.xlu0 0
          %3089 = vperm.xlu0 %3088, %v2992
          %v3090 = vpop.permute.xlu0 %3089
          %3091 = vset.pattern.permute.xlu0 0
          %3092 = vperm.xlu0 %3091, %v2993
          %v3093 = vpop.permute.xlu0 %3092
          %3094 = vset.pattern.permute.xlu0 0
          %3095 = vperm.xlu0 %3094, %v2994
          %v3096 = vpop.permute.xlu0 %3095
          %3097 = vset.pattern.permute.xlu0 0
          %3098 = vperm.xlu0 %3097, %v2995
          %v3099 = vpop.permute.xlu0 %3098
          %3100 = vset.pattern.permute.xlu0 0
          %3101 = vperm.xlu0 %3100, %v2996
          %v3102 = vpop.permute.xlu0 %3101
          %3103 = vset.pattern.permute.xlu0 0
          %3104 = vperm.xlu0 %3103, %v2997
          %v3105 = vpop.permute.xlu0 %3104
          %3106 = vset.pattern.permute.xlu0 0
          %3107 = vperm.xlu0 %3106, %v2998
          %v3108 = vpop.permute.xlu0 %3107
          %3109 = vset.pattern.permute.xlu0 0
          %3110 = vperm.xlu0 %3109, %v2999
          %v3111 = vpop.permute.xlu0 %3110
          %3112 = vset.pattern.permute.xlu0 0
          %3113 = vperm.xlu0 %3112, %v3000
          %v3114 = vpop.permute.xlu0 %3113
          %3115 = vset.pattern.permute.xlu0 0
          %3116 = vperm.xlu0 %3115, %v3001
          %v3117 = vpop.permute.xlu0 %3116
          %3118 = vset.pattern.permute.xlu0 0
          %3119 = vperm.xlu0 %3118, %v3002
          %v3120 = vpop.permute.xlu0 %3119
          %3121 = vset.pattern.permute.xlu0 0
          %3122 = vperm.xlu0 %3121, %v3003
          %v3123 = vpop.permute.xlu0 %3122
          %3124 = vset.pattern.permute.xlu0 0
          %3125 = vperm.xlu0 %3124, %v3004
          %v3126 = vpop.permute.xlu0 %3125
          %3127 = vset.pattern.permute.xlu0 0
          %3128 = vperm.xlu0 %3127, %v3005
          %v3129 = vpop.permute.xlu0 %3128
          %3130 = vset.pattern.permute.xlu0 0
          %3131 = vperm.xlu0 %3130, %v3006
          %v3132 = vpop.permute.xlu0 %3131
          %3133 = vset.pattern.permute.xlu0 0
          %3134 = vperm.xlu0 %3133, %v3007
          %v3135 = vpop.permute.xlu0 %3134
          %3136 = vset.pattern.permute.xlu0 0
          %3137 = vperm.xlu0 %3136, %v3008
          %v3138 = vpop.permute.xlu0 %3137
          %3139 = vset.pattern.permute.xlu0 0
          %3140 = vperm.xlu0 %3139, %v3009
          %v3141 = vpop.permute.xlu0 %3140
          %3142 = vset.pattern.permute.xlu0 0
          %3143 = vperm.xlu0 %3142, %v3010
          %v3144 = vpop.permute.xlu0 %3143
          %3145 = vset.pattern.permute.xlu0 0
          %3146 = vperm.xlu0 %3145, %v3011
          %v3147 = vpop.permute.xlu0 %3146
          %3148 = vset.pattern.permute.xlu0 0
          %3149 = vperm.xlu0 %3148, %v3012
          %v3150 = vpop.permute.xlu0 %3149
          %3151 = vset.pattern.permute.xlu0 0
          %3152 = vperm.xlu0 %3151, %v3013
          %v3153 = vpop.permute.xlu0 %3152
          %3154 = vset.pattern.permute.xlu0 0
          %3155 = vperm.xlu0 %3154, %v3014
          %v3156 = vpop.permute.xlu0 %3155
          %3157 = vset.pattern.permute.xlu0 0
          %3158 = vperm.xlu0 %3157, %v3015
          %v3159 = vpop.permute.xlu0 %3158
          %3160 = vset.pattern.permute.xlu0 0
          %3161 = vperm.xlu0 %3160, %v3016
          %v3162 = vpop.permute.xlu0 %3161
          %3163 = vset.pattern.permute.xlu0 0
          %3164 = vperm.xlu0 %3163, %v3017
          %v3165 = vpop.permute.xlu0 %3164
          %3166 = vset.pattern.permute.xlu0 0
          %3167 = vperm.xlu0 %3166, %v3018
          %v3168 = vpop.permute.xlu0 %3167
          %3169 = vset.pattern.permute.xlu0 0
          %3170 = vperm.xlu0 %3169, %v3019
          %v3171 = vpop.permute.xlu0 %3170
          %3172 = vset.pattern.permute.xlu0 0
          %3173 = vperm.xlu0 %3172, %v3020
          %v3174 = vpop.permute.xlu0 %3173
          %3175 = vset.pattern.permute.xlu0 0
          %3176 = vperm.xlu0 %3175, %v3021
          %v3177 = vpop.permute.xlu0 %3176
          %3178 = vset.pattern.permute.xlu0 0
          %3179 = vperm.xlu0 %3178, %v3022
          %v3180 = vpop.permute.xlu0 %3179
          %3181 = vset.pattern.permute.xlu0 0
          %3182 = vperm.xlu0 %3181, %v3023
          %v3183 = vpop.permute.xlu0 %3182
          %3184 = vset.pattern.permute.xlu0 0
          %3185 = vperm.xlu0 %3184, %v3024
          %v3186 = vpop.permute.xlu0 %3185
          %3187 = vset.pattern.permute.xlu0 0
          %3188 = vperm.xlu0 %3187, %v3025
          %v3189 = vpop.permute.xlu0 %3188
          %3190 = vset.pattern.permute.xlu0 0
          %3191 = vperm.xlu0 %3190, %v3026
          %v3192 = vpop.permute.xlu0 %3191
          %3193 = vset.pattern.permute.xlu0 0
          %3194 = vperm.xlu0 %3193, %v3027
          %v3195 = vpop.permute.xlu0 %3194
          %3196 = vset.pattern.permute.xlu0 0
          %3197 = vperm.xlu0 %3196, %v3028
          %v3198 = vpop.permute.xlu0 %3197
          %3199 = vset.pattern.permute.xlu0 0
          %3200 = vperm.xlu0 %3199, %v3029
          %v3201 = vpop.permute.xlu0 %3200
          %3202 = vset.pattern.permute.xlu0 0
          %3203 = vperm.xlu0 %3202, %v3030
          %v3204 = vpop.permute.xlu0 %3203
          %3205 = vset.pattern.permute.xlu0 0
          %3206 = vperm.xlu0 %3205, %v3031
          %v3207 = vpop.permute.xlu0 %3206
          %3208 = vset.pattern.permute.xlu0 0
          %3209 = vperm.xlu0 %3208, %v3032
          %v3210 = vpop.permute.xlu0 %3209
          %3211 = vset.pattern.permute.xlu0 0
          %3212 = vperm.xlu0 %3211, %v3033
          %v3213 = vpop.permute.xlu0 %3212
          %3214 = vset.pattern.permute.xlu0 0
          %3215 = vperm.xlu0 %3214, %v3034
          %v3216 = vpop.permute.xlu0 %3215
          %3217 = vset.pattern.permute.xlu0 0
          %3218 = vperm.xlu0 %3217, %v3035
          %v3219 = vpop.permute.xlu0 %3218
          %3220 = vset.pattern.permute.xlu0 0
          %3221 = vperm.xlu0 %3220, %v3036
          %v3222 = vpop.permute.xlu0 %3221
          %3223 = vset.pattern.permute.xlu0 0
          %3224 = vperm.xlu0 %3223, %v3037
          %v3225 = vpop.permute.xlu0 %3224
          %3226 = vset.pattern.permute.xlu0 0
          %3227 = vperm.xlu0 %3226, %v3038
          %v3228 = vpop.permute.xlu0 %3227
          %3229 = vset.pattern.permute.xlu0 0
          %3230 = vperm.xlu0 %3229, %v3039
          %v3231 = vpop.permute.xlu0 %3230
          %vm3232 = vcmp.eq.s32.totalorder %v3042, 1
          %vm3233 = vcmp.eq.s32.totalorder %v3045, 1
          %vm3234 = vcmp.eq.s32.totalorder %v3048, 1
          %vm3235 = vcmp.eq.s32.totalorder %v3051, 1
          %vm3236 = vcmp.eq.s32.totalorder %v3054, 1
          %vm3237 = vcmp.eq.s32.totalorder %v3057, 1
          %vm3238 = vcmp.eq.s32.totalorder %v3060, 1
          %vm3239 = vcmp.eq.s32.totalorder %v3063, 1
          %vm3240 = vcmp.eq.s32.totalorder %v3066, 1
          %vm3241 = vcmp.eq.s32.totalorder %v3069, 1
          %vm3242 = vcmp.eq.s32.totalorder %v3072, 1
          %vm3243 = vcmp.eq.s32.totalorder %v3075, 1
          %vm3244 = vcmp.eq.s32.totalorder %v3078, 1
          %vm3245 = vcmp.eq.s32.totalorder %v3081, 1
          %vm3246 = vcmp.eq.s32.totalorder %v3084, 1
          %vm3247 = vcmp.eq.s32.totalorder %v3087, 1
          %vm3248 = vcmp.eq.s32.totalorder %v3090, 1
          %vm3249 = vcmp.eq.s32.totalorder %v3093, 1
          %vm3250 = vcmp.eq.s32.totalorder %v3096, 1
          %vm3251 = vcmp.eq.s32.totalorder %v3099, 1
          %vm3252 = vcmp.eq.s32.totalorder %v3102, 1
          %vm3253 = vcmp.eq.s32.totalorder %v3105, 1
          %vm3254 = vcmp.eq.s32.totalorder %v3108, 1
          %vm3255 = vcmp.eq.s32.totalorder %v3111, 1
          %vm3256 = vcmp.eq.s32.totalorder %v3114, 1
          %vm3257 = vcmp.eq.s32.totalorder %v3117, 1
          %vm3258 = vcmp.eq.s32.totalorder %v3120, 1
          %vm3259 = vcmp.eq.s32.totalorder %v3123, 1
          %vm3260 = vcmp.eq.s32.totalorder %v3126, 1
          %vm3261 = vcmp.eq.s32.totalorder %v3129, 1
          %vm3262 = vcmp.eq.s32.totalorder %v3132, 1
          %vm3263 = vcmp.eq.s32.totalorder %v3135, 1
          %vm3264 = vcmp.eq.s32.totalorder %v3138, 1
          %vm3265 = vcmp.eq.s32.totalorder %v3141, 1
          %vm3266 = vcmp.eq.s32.totalorder %v3144, 1
          %vm3267 = vcmp.eq.s32.totalorder %v3147, 1
          %vm3268 = vcmp.eq.s32.totalorder %v3150, 1
          %vm3269 = vcmp.eq.s32.totalorder %v3153, 1
          %vm3270 = vcmp.eq.s32.totalorder %v3156, 1
          %vm3271 = vcmp.eq.s32.totalorder %v3159, 1
          %vm3272 = vcmp.eq.s32.totalorder %v3162, 1
          %vm3273 = vcmp.eq.s32.totalorder %v3165, 1
          %vm3274 = vcmp.eq.s32.totalorder %v3168, 1
          %vm3275 = vcmp.eq.s32.totalorder %v3171, 1
          %vm3276 = vcmp.eq.s32.totalorder %v3174, 1
          %vm3277 = vcmp.eq.s32.totalorder %v3177, 1
          %vm3278 = vcmp.eq.s32.totalorder %v3180, 1
          %vm3279 = vcmp.eq.s32.totalorder %v3183, 1
          %vm3280 = vcmp.eq.s32.totalorder %v3186, 1
          %vm3281 = vcmp.eq.s32.totalorder %v3189, 1
          %vm3282 = vcmp.eq.s32.totalorder %v3192, 1
          %vm3283 = vcmp.eq.s32.totalorder %v3195, 1
          %vm3284 = vcmp.eq.s32.totalorder %v3198, 1
          %vm3285 = vcmp.eq.s32.totalorder %v3201, 1
          %vm3286 = vcmp.eq.s32.totalorder %v3204, 1
          %vm3287 = vcmp.eq.s32.totalorder %v3207, 1
          %vm3288 = vcmp.eq.s32.totalorder %v3210, 1
          %vm3289 = vcmp.eq.s32.totalorder %v3213, 1
          %vm3290 = vcmp.eq.s32.totalorder %v3216, 1
          %vm3291 = vcmp.eq.s32.totalorder %v3219, 1
          %vm3292 = vcmp.eq.s32.totalorder %v3222, 1
          %vm3293 = vcmp.eq.s32.totalorder %v3225, 1
          %vm3294 = vcmp.eq.s32.totalorder %v3228, 1
          %vm3295 = vcmp.eq.s32.totalorder %v3231, 1
          %v3296 = vsel %vm3232, %v2912, %v2784
          %v3297 = vsel %vm3233, %v2913, %v2785
          %v3298 = vsel %vm3234, %v2914, %v2786
          %v3299 = vsel %vm3235, %v2915, %v2787
          %v3300 = vsel %vm3236, %v2916, %v2788
          %v3301 = vsel %vm3237, %v2917, %v2789
          %v3302 = vsel %vm3238, %v2918, %v2790
          %v3303 = vsel %vm3239, %v2919, %v2791
          %v3304 = vsel %vm3240, %v2920, %v2792
          %v3305 = vsel %vm3241, %v2921, %v2793
          %v3306 = vsel %vm3242, %v2922, %v2794
          %v3307 = vsel %vm3243, %v2923, %v2795
          %v3308 = vsel %vm3244, %v2924, %v2796
          %v3309 = vsel %vm3245, %v2925, %v2797
          %v3310 = vsel %vm3246, %v2926, %v2798
          %v3311 = vsel %vm3247, %v2927, %v2799
          %v3312 = vsel %vm3248, %v2928, %v2800
          %v3313 = vsel %vm3249, %v2929, %v2801
          %v3314 = vsel %vm3250, %v2930, %v2802
          %v3315 = vsel %vm3251, %v2931, %v2803
          %v3316 = vsel %vm3252, %v2932, %v2804
          %v3317 = vsel %vm3253, %v2933, %v2805
          %v3318 = vsel %vm3254, %v2934, %v2806
          %v3319 = vsel %vm3255, %v2935, %v2807
          %v3320 = vsel %vm3256, %v2936, %v2808
          %v3321 = vsel %vm3257, %v2937, %v2809
          %v3322 = vsel %vm3258, %v2938, %v2810
          %v3323 = vsel %vm3259, %v2939, %v2811
          %v3324 = vsel %vm3260, %v2940, %v2812
          %v3325 = vsel %vm3261, %v2941, %v2813
          %v3326 = vsel %vm3262, %v2942, %v2814
          %v3327 = vsel %vm3263, %v2943, %v2815
          %v3328 = vsel %vm3264, %v2944, %v2816
          %v3329 = vsel %vm3265, %v2945, %v2817
          %v3330 = vsel %vm3266, %v2946, %v2818
          %v3331 = vsel %vm3267, %v2947, %v2819
          %v3332 = vsel %vm3268, %v2948, %v2820
          %v3333 = vsel %vm3269, %v2949, %v2821
          %v3334 = vsel %vm3270, %v2950, %v2822
          %v3335 = vsel %vm3271, %v2951, %v2823
          %v3336 = vsel %vm3272, %v2952, %v2824
          %v3337 = vsel %vm3273, %v2953, %v2825
          %v3338 = vsel %vm3274, %v2954, %v2826
          %v3339 = vsel %vm3275, %v2955, %v2827
          %v3340 = vsel %vm3276, %v2956, %v2828
          %v3341 = vsel %vm3277, %v2957, %v2829
          %v3342 = vsel %vm3278, %v2958, %v2830
          %v3343 = vsel %vm3279, %v2959, %v2831
          %v3344 = vsel %vm3280, %v2960, %v2832
          %v3345 = vsel %vm3281, %v2961, %v2833
          %v3346 = vsel %vm3282, %v2962, %v2834
          %v3347 = vsel %vm3283, %v2963, %v2835
          %v3348 = vsel %vm3284, %v2964, %v2836
          %v3349 = vsel %vm3285, %v2965, %v2837
          %v3350 = vsel %vm3286, %v2966, %v2838
          %v3351 = vsel %vm3287, %v2967, %v2839
          %v3352 = vsel %vm3288, %v2968, %v2840
          %v3353 = vsel %vm3289, %v2969, %v2841
          %v3354 = vsel %vm3290, %v2970, %v2842
          %v3355 = vsel %vm3291, %v2971, %v2843
          %v3356 = vsel %vm3292, %v2972, %v2844
          %v3357 = vsel %vm3293, %v2973, %v2845
          %v3358 = vsel %vm3294, %v2974, %v2846
          %v3359 = vsel %vm3295, %v2975, %v2847
          %vm3360 = vcmp.eq.s32.totalorder %v471, %v409
          %vm3361 = vcmp.eq.s32.totalorder %v472, %v410
          %vm3362 = vcmp.eq.s32.totalorder %v409, %v411
          %vm3363 = vcmp.eq.s32.totalorder %v410, %v412
          %vm3364 = vcmp.eq.s32.totalorder %v411, %v413
          %vm3365 = vcmp.eq.s32.totalorder %v412, %v414
          %vm3366 = vcmp.eq.s32.totalorder %v413, %v415
          %vm3367 = vcmp.eq.s32.totalorder %v414, %v416
          %vm3368 = vcmp.eq.s32.totalorder %v415, %v417
          %vm3369 = vcmp.eq.s32.totalorder %v416, %v418
          %vm3370 = vcmp.eq.s32.totalorder %v417, %v419
          %vm3371 = vcmp.eq.s32.totalorder %v418, %v420
          %vm3372 = vcmp.eq.s32.totalorder %v419, %v421
          %vm3373 = vcmp.eq.s32.totalorder %v420, %v422
          %vm3374 = vcmp.eq.s32.totalorder %v421, %v423
          %vm3375 = vcmp.eq.s32.totalorder %v422, %v424
          %vm3376 = vcmp.eq.s32.totalorder %v423, %v425
          %vm3377 = vcmp.eq.s32.totalorder %v424, %v426
          %vm3378 = vcmp.eq.s32.totalorder %v425, %v427
          %vm3379 = vcmp.eq.s32.totalorder %v426, %v428
          %vm3380 = vcmp.eq.s32.totalorder %v427, %v429
          %vm3381 = vcmp.eq.s32.totalorder %v428, %v430
          %vm3382 = vcmp.eq.s32.totalorder %v429, %v431
          %vm3383 = vcmp.eq.s32.totalorder %v430, %v432
          %vm3384 = vcmp.eq.s32.totalorder %v431, %v433
          %vm3385 = vcmp.eq.s32.totalorder %v432, %v434
          %vm3386 = vcmp.eq.s32.totalorder %v433, %v435
          %vm3387 = vcmp.eq.s32.totalorder %v434, %v436
          %vm3388 = vcmp.eq.s32.totalorder %v435, %v437
          %vm3389 = vcmp.eq.s32.totalorder %v436, %v438
          %vm3390 = vcmp.eq.s32.totalorder %v437, %v439
          %vm3391 = vcmp.eq.s32.totalorder %v438, %v440
          %vm3392 = vcmp.eq.s32.totalorder %v439, %v441
          %vm3393 = vcmp.eq.s32.totalorder %v440, %v442
          %vm3394 = vcmp.eq.s32.totalorder %v441, %v443
          %vm3395 = vcmp.eq.s32.totalorder %v442, %v444
          %vm3396 = vcmp.eq.s32.totalorder %v443, %v445
          %vm3397 = vcmp.eq.s32.totalorder %v444, %v446
          %vm3398 = vcmp.eq.s32.totalorder %v445, %v447
          %vm3399 = vcmp.eq.s32.totalorder %v446, %v448
          %vm3400 = vcmp.eq.s32.totalorder %v447, %v449
          %vm3401 = vcmp.eq.s32.totalorder %v448, %v450
          %vm3402 = vcmp.eq.s32.totalorder %v449, %v451
          %vm3403 = vcmp.eq.s32.totalorder %v450, %v452
          %vm3404 = vcmp.eq.s32.totalorder %v451, %v453
          %vm3405 = vcmp.eq.s32.totalorder %v452, %v454
          %vm3406 = vcmp.eq.s32.totalorder %v453, %v455
          %vm3407 = vcmp.eq.s32.totalorder %v454, %v456
          %vm3408 = vcmp.eq.s32.totalorder %v455, %v457
          %vm3409 = vcmp.eq.s32.totalorder %v456, %v458
          %vm3410 = vcmp.eq.s32.totalorder %v457, %v459
          %vm3411 = vcmp.eq.s32.totalorder %v458, %v460
          %vm3412 = vcmp.eq.s32.totalorder %v459, %v461
          %vm3413 = vcmp.eq.s32.totalorder %v460, %v462
          %vm3414 = vcmp.eq.s32.totalorder %v461, %v463
          %vm3415 = vcmp.eq.s32.totalorder %v462, %v464
          %vm3416 = vcmp.eq.s32.totalorder %v463, %v465
          %vm3417 = vcmp.eq.s32.totalorder %v464, %v466
          %vm3418 = vcmp.eq.s32.totalorder %v465, %v467
          %vm3419 = vcmp.eq.s32.totalorder %v466, %v468
          %vm3420 = vcmp.eq.s32.totalorder %v467, %v469
          %vm3421 = vcmp.eq.s32.totalorder %v468, %v470
          %vm3422 = vcmp.eq.s32.totalorder %v469, %v471
          %vm3423 = vcmp.eq.s32.totalorder %v470, %v472
          %v3424 = vmax.f32 %v3296, %v3358
          %v3425 = vmax.f32 %v3297, %v3359
          %v3426 = vmax.f32 %v3298, %v3296
          %v3427 = vmax.f32 %v3299, %v3297
          %v3428 = vmax.f32 %v3300, %v3298
          %v3429 = vmax.f32 %v3301, %v3299
          %v3430 = vmax.f32 %v3302, %v3300
          %v3431 = vmax.f32 %v3303, %v3301
          %v3432 = vmax.f32 %v3304, %v3302
          %v3433 = vmax.f32 %v3305, %v3303
          %v3434 = vmax.f32 %v3306, %v3304
          %v3435 = vmax.f32 %v3307, %v3305
          %v3436 = vmax.f32 %v3308, %v3306
          %v3437 = vmax.f32 %v3309, %v3307
          %v3438 = vmax.f32 %v3310, %v3308
          %v3439 = vmax.f32 %v3311, %v3309
          %v3440 = vmax.f32 %v3312, %v3310
          %v3441 = vmax.f32 %v3313, %v3311
          %v3442 = vmax.f32 %v3314, %v3312
          %v3443 = vmax.f32 %v3315, %v3313
          %v3444 = vmax.f32 %v3316, %v3314
          %v3445 = vmax.f32 %v3317, %v3315
          %v3446 = vmax.f32 %v3318, %v3316
          %v3447 = vmax.f32 %v3319, %v3317
          %v3448 = vmax.f32 %v3320, %v3318
          %v3449 = vmax.f32 %v3321, %v3319
          %v3450 = vmax.f32 %v3322, %v3320
          %v3451 = vmax.f32 %v3323, %v3321
          %v3452 = vmax.f32 %v3324, %v3322
          %v3453 = vmax.f32 %v3325, %v3323
          %v3454 = vmax.f32 %v3326, %v3324
          %v3455 = vmax.f32 %v3327, %v3325
          %v3456 = vmax.f32 %v3328, %v3326
          %v3457 = vmax.f32 %v3329, %v3327
          %v3458 = vmax.f32 %v3330, %v3328
          %v3459 = vmax.f32 %v3331, %v3329
          %v3460 = vmax.f32 %v3332, %v3330
          %v3461 = vmax.f32 %v3333, %v3331
          %v3462 = vmax.f32 %v3334, %v3332
          %v3463 = vmax.f32 %v3335, %v3333
          %v3464 = vmax.f32 %v3336, %v3334
          %v3465 = vmax.f32 %v3337, %v3335
          %v3466 = vmax.f32 %v3338, %v3336
          %v3467 = vmax.f32 %v3339, %v3337
          %v3468 = vmax.f32 %v3340, %v3338
          %v3469 = vmax.f32 %v3341, %v3339
          %v3470 = vmax.f32 %v3342, %v3340
          %v3471 = vmax.f32 %v3343, %v3341
          %v3472 = vmax.f32 %v3344, %v3342
          %v3473 = vmax.f32 %v3345, %v3343
          %v3474 = vmax.f32 %v3346, %v3344
          %v3475 = vmax.f32 %v3347, %v3345
          %v3476 = vmax.f32 %v3348, %v3346
          %v3477 = vmax.f32 %v3349, %v3347
          %v3478 = vmax.f32 %v3350, %v3348
          %v3479 = vmax.f32 %v3351, %v3349
          %v3480 = vmax.f32 %v3352, %v3350
          %v3481 = vmax.f32 %v3353, %v3351
          %v3482 = vmax.f32 %v3354, %v3352
          %v3483 = vmax.f32 %v3355, %v3353
          %v3484 = vmax.f32 %v3356, %v3354
          %v3485 = vmax.f32 %v3357, %v3355
          %v3486 = vmax.f32 %v3358, %v3356
          %v3487 = vmax.f32 %v3359, %v3357
          %v3488 = vsel %vm3360, 1, 0
          %v3489 = vsel %vm3361, 1, 0
          %v3490 = vsel %vm3362, 1, 0
          %v3491 = vsel %vm3363, 1, 0
          %v3492 = vsel %vm3364, 1, 0
          %v3493 = vsel %vm3365, 1, 0
          %v3494 = vsel %vm3366, 1, 0
          %v3495 = vsel %vm3367, 1, 0
          %v3496 = vsel %vm3368, 1, 0
          %v3497 = vsel %vm3369, 1, 0
          %v3498 = vsel %vm3370, 1, 0
          %v3499 = vsel %vm3371, 1, 0
          %v3500 = vsel %vm3372, 1, 0
          %v3501 = vsel %vm3373, 1, 0
          %v3502 = vsel %vm3374, 1, 0
          %v3503 = vsel %vm3375, 1, 0
          %v3504 = vsel %vm3376, 1, 0
          %v3505 = vsel %vm3377, 1, 0
          %v3506 = vsel %vm3378, 1, 0
          %v3507 = vsel %vm3379, 1, 0
          %v3508 = vsel %vm3380, 1, 0
          %v3509 = vsel %vm3381, 1, 0
          %v3510 = vsel %vm3382, 1, 0
          %v3511 = vsel %vm3383, 1, 0
          %v3512 = vsel %vm3384, 1, 0
          %v3513 = vsel %vm3385, 1, 0
          %v3514 = vsel %vm3386, 1, 0
          %v3515 = vsel %vm3387, 1, 0
          %v3516 = vsel %vm3388, 1, 0
          %v3517 = vsel %vm3389, 1, 0
          %v3518 = vsel %vm3390, 1, 0
          %v3519 = vsel %vm3391, 1, 0
          %v3520 = vsel %vm3392, 1, 0
          %v3521 = vsel %vm3393, 1, 0
          %v3522 = vsel %vm3394, 1, 0
          %v3523 = vsel %vm3395, 1, 0
          %v3524 = vsel %vm3396, 1, 0
          %v3525 = vsel %vm3397, 1, 0
          %v3526 = vsel %vm3398, 1, 0
          %v3527 = vsel %vm3399, 1, 0
          %v3528 = vsel %vm3400, 1, 0
          %v3529 = vsel %vm3401, 1, 0
          %v3530 = vsel %vm3402, 1, 0
          %v3531 = vsel %vm3403, 1, 0
          %v3532 = vsel %vm3404, 1, 0
          %v3533 = vsel %vm3405, 1, 0
          %v3534 = vsel %vm3406, 1, 0
          %v3535 = vsel %vm3407, 1, 0
          %v3536 = vsel %vm3408, 1, 0
          %v3537 = vsel %vm3409, 1, 0
          %v3538 = vsel %vm3410, 1, 0
          %v3539 = vsel %vm3411, 1, 0
          %v3540 = vsel %vm3412, 1, 0
          %v3541 = vsel %vm3413, 1, 0
          %v3542 = vsel %vm3414, 1, 0
          %v3543 = vsel %vm3415, 1, 0
          %v3544 = vsel %vm3416, 1, 0
          %v3545 = vsel %vm3417, 1, 0
          %v3546 = vsel %vm3418, 1, 0
          %v3547 = vsel %vm3419, 1, 0
          %v3548 = vsel %vm3420, 1, 0
          %v3549 = vsel %vm3421, 1, 0
          %v3550 = vsel %vm3422, 1, 0
          %v3551 = vsel %vm3423, 1, 0
          %3552 = vset.pattern.permute.xlu0 0
          %3553 = vperm.xlu0 %3552, %v3488
          %v3554 = vpop.permute.xlu0 %3553
          %3555 = vset.pattern.permute.xlu0 0
          %3556 = vperm.xlu0 %3555, %v3489
          %v3557 = vpop.permute.xlu0 %3556
          %3558 = vset.pattern.permute.xlu0 0
          %3559 = vperm.xlu0 %3558, %v3490
          %v3560 = vpop.permute.xlu0 %3559
          %3561 = vset.pattern.permute.xlu0 0
          %3562 = vperm.xlu0 %3561, %v3491
          %v3563 = vpop.permute.xlu0 %3562
          %3564 = vset.pattern.permute.xlu0 0
          %3565 = vperm.xlu0 %3564, %v3492
          %v3566 = vpop.permute.xlu0 %3565
          %3567 = vset.pattern.permute.xlu0 0
          %3568 = vperm.xlu0 %3567, %v3493
          %v3569 = vpop.permute.xlu0 %3568
          %3570 = vset.pattern.permute.xlu0 0
          %3571 = vperm.xlu0 %3570, %v3494
          %v3572 = vpop.permute.xlu0 %3571
          %3573 = vset.pattern.permute.xlu0 0
          %3574 = vperm.xlu0 %3573, %v3495
          %v3575 = vpop.permute.xlu0 %3574
          %3576 = vset.pattern.permute.xlu0 0
          %3577 = vperm.xlu0 %3576, %v3496
          %v3578 = vpop.permute.xlu0 %3577
          %3579 = vset.pattern.permute.xlu0 0
          %3580 = vperm.xlu0 %3579, %v3497
          %v3581 = vpop.permute.xlu0 %3580
          %3582 = vset.pattern.permute.xlu0 0
          %3583 = vperm.xlu0 %3582, %v3498
          %v3584 = vpop.permute.xlu0 %3583
          %3585 = vset.pattern.permute.xlu0 0
          %3586 = vperm.xlu0 %3585, %v3499
          %v3587 = vpop.permute.xlu0 %3586
          %3588 = vset.pattern.permute.xlu0 0
          %3589 = vperm.xlu0 %3588, %v3500
          %v3590 = vpop.permute.xlu0 %3589
          %3591 = vset.pattern.permute.xlu0 0
          %3592 = vperm.xlu0 %3591, %v3501
          %v3593 = vpop.permute.xlu0 %3592
          %3594 = vset.pattern.permute.xlu0 0
          %3595 = vperm.xlu0 %3594, %v3502
          %v3596 = vpop.permute.xlu0 %3595
          %3597 = vset.pattern.permute.xlu0 0
          %3598 = vperm.xlu0 %3597, %v3503
          %v3599 = vpop.permute.xlu0 %3598
          %3600 = vset.pattern.permute.xlu0 0
          %3601 = vperm.xlu0 %3600, %v3504
          %v3602 = vpop.permute.xlu0 %3601
          %3603 = vset.pattern.permute.xlu0 0
          %3604 = vperm.xlu0 %3603, %v3505
          %v3605 = vpop.permute.xlu0 %3604
          %3606 = vset.pattern.permute.xlu0 0
          %3607 = vperm.xlu0 %3606, %v3506
          %v3608 = vpop.permute.xlu0 %3607
          %3609 = vset.pattern.permute.xlu0 0
          %3610 = vperm.xlu0 %3609, %v3507
          %v3611 = vpop.permute.xlu0 %3610
          %3612 = vset.pattern.permute.xlu0 0
          %3613 = vperm.xlu0 %3612, %v3508
          %v3614 = vpop.permute.xlu0 %3613
          %3615 = vset.pattern.permute.xlu0 0
          %3616 = vperm.xlu0 %3615, %v3509
          %v3617 = vpop.permute.xlu0 %3616
          %3618 = vset.pattern.permute.xlu0 0
          %3619 = vperm.xlu0 %3618, %v3510
          %v3620 = vpop.permute.xlu0 %3619
          %3621 = vset.pattern.permute.xlu0 0
          %3622 = vperm.xlu0 %3621, %v3511
          %v3623 = vpop.permute.xlu0 %3622
          %3624 = vset.pattern.permute.xlu0 0
          %3625 = vperm.xlu0 %3624, %v3512
          %v3626 = vpop.permute.xlu0 %3625
          %3627 = vset.pattern.permute.xlu0 0
          %3628 = vperm.xlu0 %3627, %v3513
          %v3629 = vpop.permute.xlu0 %3628
          %3630 = vset.pattern.permute.xlu0 0
          %3631 = vperm.xlu0 %3630, %v3514
          %v3632 = vpop.permute.xlu0 %3631
          %3633 = vset.pattern.permute.xlu0 0
          %3634 = vperm.xlu0 %3633, %v3515
          %v3635 = vpop.permute.xlu0 %3634
          %3636 = vset.pattern.permute.xlu0 0
          %3637 = vperm.xlu0 %3636, %v3516
          %v3638 = vpop.permute.xlu0 %3637
          %3639 = vset.pattern.permute.xlu0 0
          %3640 = vperm.xlu0 %3639, %v3517
          %v3641 = vpop.permute.xlu0 %3640
          %3642 = vset.pattern.permute.xlu0 0
          %3643 = vperm.xlu0 %3642, %v3518
          %v3644 = vpop.permute.xlu0 %3643
          %3645 = vset.pattern.permute.xlu0 0
          %3646 = vperm.xlu0 %3645, %v3519
          %v3647 = vpop.permute.xlu0 %3646
          %3648 = vset.pattern.permute.xlu0 0
          %3649 = vperm.xlu0 %3648, %v3520
          %v3650 = vpop.permute.xlu0 %3649
          %3651 = vset.pattern.permute.xlu0 0
          %3652 = vperm.xlu0 %3651, %v3521
          %v3653 = vpop.permute.xlu0 %3652
          %3654 = vset.pattern.permute.xlu0 0
          %3655 = vperm.xlu0 %3654, %v3522
          %v3656 = vpop.permute.xlu0 %3655
          %3657 = vset.pattern.permute.xlu0 0
          %3658 = vperm.xlu0 %3657, %v3523
          %v3659 = vpop.permute.xlu0 %3658
          %3660 = vset.pattern.permute.xlu0 0
          %3661 = vperm.xlu0 %3660, %v3524
          %v3662 = vpop.permute.xlu0 %3661
          %3663 = vset.pattern.permute.xlu0 0
          %3664 = vperm.xlu0 %3663, %v3525
          %v3665 = vpop.permute.xlu0 %3664
          %3666 = vset.pattern.permute.xlu0 0
          %3667 = vperm.xlu0 %3666, %v3526
          %v3668 = vpop.permute.xlu0 %3667
          %3669 = vset.pattern.permute.xlu0 0
          %3670 = vperm.xlu0 %3669, %v3527
          %v3671 = vpop.permute.xlu0 %3670
          %3672 = vset.pattern.permute.xlu0 0
          %3673 = vperm.xlu0 %3672, %v3528
          %v3674 = vpop.permute.xlu0 %3673
          %3675 = vset.pattern.permute.xlu0 0
          %3676 = vperm.xlu0 %3675, %v3529
          %v3677 = vpop.permute.xlu0 %3676
          %3678 = vset.pattern.permute.xlu0 0
          %3679 = vperm.xlu0 %3678, %v3530
          %v3680 = vpop.permute.xlu0 %3679
          %3681 = vset.pattern.permute.xlu0 0
          %3682 = vperm.xlu0 %3681, %v3531
          %v3683 = vpop.permute.xlu0 %3682
          %3684 = vset.pattern.permute.xlu0 0
          %3685 = vperm.xlu0 %3684, %v3532
          %v3686 = vpop.permute.xlu0 %3685
          %3687 = vset.pattern.permute.xlu0 0
          %3688 = vperm.xlu0 %3687, %v3533
          %v3689 = vpop.permute.xlu0 %3688
          %3690 = vset.pattern.permute.xlu0 0
          %3691 = vperm.xlu0 %3690, %v3534
          %v3692 = vpop.permute.xlu0 %3691
          %3693 = vset.pattern.permute.xlu0 0
          %3694 = vperm.xlu0 %3693, %v3535
          %v3695 = vpop.permute.xlu0 %3694
          %3696 = vset.pattern.permute.xlu0 0
          %3697 = vperm.xlu0 %3696, %v3536
          %v3698 = vpop.permute.xlu0 %3697
          %3699 = vset.pattern.permute.xlu0 0
          %3700 = vperm.xlu0 %3699, %v3537
          %v3701 = vpop.permute.xlu0 %3700
          %3702 = vset.pattern.permute.xlu0 0
          %3703 = vperm.xlu0 %3702, %v3538
          %v3704 = vpop.permute.xlu0 %3703
          %3705 = vset.pattern.permute.xlu0 0
          %3706 = vperm.xlu0 %3705, %v3539
          %v3707 = vpop.permute.xlu0 %3706
          %3708 = vset.pattern.permute.xlu0 0
          %3709 = vperm.xlu0 %3708, %v3540
          %v3710 = vpop.permute.xlu0 %3709
          %3711 = vset.pattern.permute.xlu0 0
          %3712 = vperm.xlu0 %3711, %v3541
          %v3713 = vpop.permute.xlu0 %3712
          %3714 = vset.pattern.permute.xlu0 0
          %3715 = vperm.xlu0 %3714, %v3542
          %v3716 = vpop.permute.xlu0 %3715
          %3717 = vset.pattern.permute.xlu0 0
          %3718 = vperm.xlu0 %3717, %v3543
          %v3719 = vpop.permute.xlu0 %3718
          %3720 = vset.pattern.permute.xlu0 0
          %3721 = vperm.xlu0 %3720, %v3544
          %v3722 = vpop.permute.xlu0 %3721
          %3723 = vset.pattern.permute.xlu0 0
          %3724 = vperm.xlu0 %3723, %v3545
          %v3725 = vpop.permute.xlu0 %3724
          %3726 = vset.pattern.permute.xlu0 0
          %3727 = vperm.xlu0 %3726, %v3546
          %v3728 = vpop.permute.xlu0 %3727
          %3729 = vset.pattern.permute.xlu0 0
          %3730 = vperm.xlu0 %3729, %v3547
          %v3731 = vpop.permute.xlu0 %3730
          %3732 = vset.pattern.permute.xlu0 0
          %3733 = vperm.xlu0 %3732, %v3548
          %v3734 = vpop.permute.xlu0 %3733
          %3735 = vset.pattern.permute.xlu0 0
          %3736 = vperm.xlu0 %3735, %v3549
          %v3737 = vpop.permute.xlu0 %3736
          %3738 = vset.pattern.permute.xlu0 0
          %3739 = vperm.xlu0 %3738, %v3550
          %v3740 = vpop.permute.xlu0 %3739
          %3741 = vset.pattern.permute.xlu0 0
          %3742 = vperm.xlu0 %3741, %v3551
          %v3743 = vpop.permute.xlu0 %3742
          %vm3744 = vcmp.eq.s32.totalorder %v3554, 1
          %vm3745 = vcmp.eq.s32.totalorder %v3557, 1
          %vm3746 = vcmp.eq.s32.totalorder %v3560, 1
          %vm3747 = vcmp.eq.s32.totalorder %v3563, 1
          %vm3748 = vcmp.eq.s32.totalorder %v3566, 1
          %vm3749 = vcmp.eq.s32.totalorder %v3569, 1
          %vm3750 = vcmp.eq.s32.totalorder %v3572, 1
          %vm3751 = vcmp.eq.s32.totalorder %v3575, 1
          %vm3752 = vcmp.eq.s32.totalorder %v3578, 1
          %vm3753 = vcmp.eq.s32.totalorder %v3581, 1
          %vm3754 = vcmp.eq.s32.totalorder %v3584, 1
          %vm3755 = vcmp.eq.s32.totalorder %v3587, 1
          %vm3756 = vcmp.eq.s32.totalorder %v3590, 1
          %vm3757 = vcmp.eq.s32.totalorder %v3593, 1
          %vm3758 = vcmp.eq.s32.totalorder %v3596, 1
          %vm3759 = vcmp.eq.s32.totalorder %v3599, 1
          %vm3760 = vcmp.eq.s32.totalorder %v3602, 1
          %vm3761 = vcmp.eq.s32.totalorder %v3605, 1
          %vm3762 = vcmp.eq.s32.totalorder %v3608, 1
          %vm3763 = vcmp.eq.s32.totalorder %v3611, 1
          %vm3764 = vcmp.eq.s32.totalorder %v3614, 1
          %vm3765 = vcmp.eq.s32.totalorder %v3617, 1
          %vm3766 = vcmp.eq.s32.totalorder %v3620, 1
          %vm3767 = vcmp.eq.s32.totalorder %v3623, 1
          %vm3768 = vcmp.eq.s32.totalorder %v3626, 1
          %vm3769 = vcmp.eq.s32.totalorder %v3629, 1
          %vm3770 = vcmp.eq.s32.totalorder %v3632, 1
          %vm3771 = vcmp.eq.s32.totalorder %v3635, 1
          %vm3772 = vcmp.eq.s32.totalorder %v3638, 1
          %vm3773 = vcmp.eq.s32.totalorder %v3641, 1
          %vm3774 = vcmp.eq.s32.totalorder %v3644, 1
          %vm3775 = vcmp.eq.s32.totalorder %v3647, 1
          %vm3776 = vcmp.eq.s32.totalorder %v3650, 1
          %vm3777 = vcmp.eq.s32.totalorder %v3653, 1
          %vm3778 = vcmp.eq.s32.totalorder %v3656, 1
          %vm3779 = vcmp.eq.s32.totalorder %v3659, 1
          %vm3780 = vcmp.eq.s32.totalorder %v3662, 1
          %vm3781 = vcmp.eq.s32.totalorder %v3665, 1
          %vm3782 = vcmp.eq.s32.totalorder %v3668, 1
          %vm3783 = vcmp.eq.s32.totalorder %v3671, 1
          %vm3784 = vcmp.eq.s32.totalorder %v3674, 1
          %vm3785 = vcmp.eq.s32.totalorder %v3677, 1
          %vm3786 = vcmp.eq.s32.totalorder %v3680, 1
          %vm3787 = vcmp.eq.s32.totalorder %v3683, 1
          %vm3788 = vcmp.eq.s32.totalorder %v3686, 1
          %vm3789 = vcmp.eq.s32.totalorder %v3689, 1
          %vm3790 = vcmp.eq.s32.totalorder %v3692, 1
          %vm3791 = vcmp.eq.s32.totalorder %v3695, 1
          %vm3792 = vcmp.eq.s32.totalorder %v3698, 1
          %vm3793 = vcmp.eq.s32.totalorder %v3701, 1
          %vm3794 = vcmp.eq.s32.totalorder %v3704, 1
          %vm3795 = vcmp.eq.s32.totalorder %v3707, 1
          %vm3796 = vcmp.eq.s32.totalorder %v3710, 1
          %vm3797 = vcmp.eq.s32.totalorder %v3713, 1
          %vm3798 = vcmp.eq.s32.totalorder %v3716, 1
          %vm3799 = vcmp.eq.s32.totalorder %v3719, 1
          %vm3800 = vcmp.eq.s32.totalorder %v3722, 1
          %vm3801 = vcmp.eq.s32.totalorder %v3725, 1
          %vm3802 = vcmp.eq.s32.totalorder %v3728, 1
          %vm3803 = vcmp.eq.s32.totalorder %v3731, 1
          %vm3804 = vcmp.eq.s32.totalorder %v3734, 1
          %vm3805 = vcmp.eq.s32.totalorder %v3737, 1
          %vm3806 = vcmp.eq.s32.totalorder %v3740, 1
          %vm3807 = vcmp.eq.s32.totalorder %v3743, 1
          %v3808 = vsel %vm3744, %v3424, %v3296
          %v3809 = vsel %vm3745, %v3425, %v3297
          %v3810 = vsel %vm3746, %v3426, %v3298
          %v3811 = vsel %vm3747, %v3427, %v3299
          %v3812 = vsel %vm3748, %v3428, %v3300
          %v3813 = vsel %vm3749, %v3429, %v3301
          %v3814 = vsel %vm3750, %v3430, %v3302
          %v3815 = vsel %vm3751, %v3431, %v3303
          %v3816 = vsel %vm3752, %v3432, %v3304
          %v3817 = vsel %vm3753, %v3433, %v3305
          %v3818 = vsel %vm3754, %v3434, %v3306
          %v3819 = vsel %vm3755, %v3435, %v3307
          %v3820 = vsel %vm3756, %v3436, %v3308
          %v3821 = vsel %vm3757, %v3437, %v3309
          %v3822 = vsel %vm3758, %v3438, %v3310
          %v3823 = vsel %vm3759, %v3439, %v3311
          %v3824 = vsel %vm3760, %v3440, %v3312
          %v3825 = vsel %vm3761, %v3441, %v3313
          %v3826 = vsel %vm3762, %v3442, %v3314
          %v3827 = vsel %vm3763, %v3443, %v3315
          %v3828 = vsel %vm3764, %v3444, %v3316
          %v3829 = vsel %vm3765, %v3445, %v3317
          %v3830 = vsel %vm3766, %v3446, %v3318
          %v3831 = vsel %vm3767, %v3447, %v3319
          %v3832 = vsel %vm3768, %v3448, %v3320
          %v3833 = vsel %vm3769, %v3449, %v3321
          %v3834 = vsel %vm3770, %v3450, %v3322
          %v3835 = vsel %vm3771, %v3451, %v3323
          %v3836 = vsel %vm3772, %v3452, %v3324
          %v3837 = vsel %vm3773, %v3453, %v3325
          %v3838 = vsel %vm3774, %v3454, %v3326
          %v3839 = vsel %vm3775, %v3455, %v3327
          %v3840 = vsel %vm3776, %v3456, %v3328
          %v3841 = vsel %vm3777, %v3457, %v3329
          %v3842 = vsel %vm3778, %v3458, %v3330
          %v3843 = vsel %vm3779, %v3459, %v3331
          %v3844 = vsel %vm3780, %v3460, %v3332
          %v3845 = vsel %vm3781, %v3461, %v3333
          %v3846 = vsel %vm3782, %v3462, %v3334
          %v3847 = vsel %vm3783, %v3463, %v3335
          %v3848 = vsel %vm3784, %v3464, %v3336
          %v3849 = vsel %vm3785, %v3465, %v3337
          %v3850 = vsel %vm3786, %v3466, %v3338
          %v3851 = vsel %vm3787, %v3467, %v3339
          %v3852 = vsel %vm3788, %v3468, %v3340
          %v3853 = vsel %vm3789, %v3469, %v3341
          %v3854 = vsel %vm3790, %v3470, %v3342
          %v3855 = vsel %vm3791, %v3471, %v3343
          %v3856 = vsel %vm3792, %v3472, %v3344
          %v3857 = vsel %vm3793, %v3473, %v3345
          %v3858 = vsel %vm3794, %v3474, %v3346
          %v3859 = vsel %vm3795, %v3475, %v3347
          %v3860 = vsel %vm3796, %v3476, %v3348
          %v3861 = vsel %vm3797, %v3477, %v3349
          %v3862 = vsel %vm3798, %v3478, %v3350
          %v3863 = vsel %vm3799, %v3479, %v3351
          %v3864 = vsel %vm3800, %v3480, %v3352
          %v3865 = vsel %vm3801, %v3481, %v3353
          %v3866 = vsel %vm3802, %v3482, %v3354
          %v3867 = vsel %vm3803, %v3483, %v3355
          %v3868 = vsel %vm3804, %v3484, %v3356
          %v3869 = vsel %vm3805, %v3485, %v3357
          %v3870 = vsel %vm3806, %v3486, %v3358
          %v3871 = vsel %vm3807, %v3487, %v3359
          %vm3872 = vcmp.eq.s32.totalorder %v469, %v409
          %vm3873 = vcmp.eq.s32.totalorder %v470, %v410
          %vm3874 = vcmp.eq.s32.totalorder %v471, %v411
          %vm3875 = vcmp.eq.s32.totalorder %v472, %v412
          %vm3876 = vcmp.eq.s32.totalorder %v409, %v413
          %vm3877 = vcmp.eq.s32.totalorder %v410, %v414
          %vm3878 = vcmp.eq.s32.totalorder %v411, %v415
          %vm3879 = vcmp.eq.s32.totalorder %v412, %v416
          %vm3880 = vcmp.eq.s32.totalorder %v413, %v417
          %vm3881 = vcmp.eq.s32.totalorder %v414, %v418
          %vm3882 = vcmp.eq.s32.totalorder %v415, %v419
          %vm3883 = vcmp.eq.s32.totalorder %v416, %v420
          %vm3884 = vcmp.eq.s32.totalorder %v417, %v421
          %vm3885 = vcmp.eq.s32.totalorder %v418, %v422
          %vm3886 = vcmp.eq.s32.totalorder %v419, %v423
          %vm3887 = vcmp.eq.s32.totalorder %v420, %v424
          %vm3888 = vcmp.eq.s32.totalorder %v421, %v425
          %vm3889 = vcmp.eq.s32.totalorder %v422, %v426
          %vm3890 = vcmp.eq.s32.totalorder %v423, %v427
          %vm3891 = vcmp.eq.s32.totalorder %v424, %v428
          %vm3892 = vcmp.eq.s32.totalorder %v425, %v429
          %vm3893 = vcmp.eq.s32.totalorder %v426, %v430
          %vm3894 = vcmp.eq.s32.totalorder %v427, %v431
          %vm3895 = vcmp.eq.s32.totalorder %v428, %v432
          %vm3896 = vcmp.eq.s32.totalorder %v429, %v433
          %vm3897 = vcmp.eq.s32.totalorder %v430, %v434
          %vm3898 = vcmp.eq.s32.totalorder %v431, %v435
          %vm3899 = vcmp.eq.s32.totalorder %v432, %v436
          %vm3900 = vcmp.eq.s32.totalorder %v433, %v437
          %vm3901 = vcmp.eq.s32.totalorder %v434, %v438
          %vm3902 = vcmp.eq.s32.totalorder %v435, %v439
          %vm3903 = vcmp.eq.s32.totalorder %v436, %v440
          %vm3904 = vcmp.eq.s32.totalorder %v437, %v441
          %vm3905 = vcmp.eq.s32.totalorder %v438, %v442
          %vm3906 = vcmp.eq.s32.totalorder %v439, %v443
          %vm3907 = vcmp.eq.s32.totalorder %v440, %v444
          %vm3908 = vcmp.eq.s32.totalorder %v441, %v445
          %vm3909 = vcmp.eq.s32.totalorder %v442, %v446
          %vm3910 = vcmp.eq.s32.totalorder %v443, %v447
          %vm3911 = vcmp.eq.s32.totalorder %v444, %v448
          %vm3912 = vcmp.eq.s32.totalorder %v445, %v449
          %vm3913 = vcmp.eq.s32.totalorder %v446, %v450
          %vm3914 = vcmp.eq.s32.totalorder %v447, %v451
          %vm3915 = vcmp.eq.s32.totalorder %v448, %v452
          %vm3916 = vcmp.eq.s32.totalorder %v449, %v453
          %vm3917 = vcmp.eq.s32.totalorder %v450, %v454
          %vm3918 = vcmp.eq.s32.totalorder %v451, %v455
          %vm3919 = vcmp.eq.s32.totalorder %v452, %v456
          %vm3920 = vcmp.eq.s32.totalorder %v453, %v457
          %vm3921 = vcmp.eq.s32.totalorder %v454, %v458
          %vm3922 = vcmp.eq.s32.totalorder %v455, %v459
          %vm3923 = vcmp.eq.s32.totalorder %v456, %v460
          %vm3924 = vcmp.eq.s32.totalorder %v457, %v461
          %vm3925 = vcmp.eq.s32.totalorder %v458, %v462
          %vm3926 = vcmp.eq.s32.totalorder %v459, %v463
          %vm3927 = vcmp.eq.s32.totalorder %v460, %v464
          %vm3928 = vcmp.eq.s32.totalorder %v461, %v465
          %vm3929 = vcmp.eq.s32.totalorder %v462, %v466
          %vm3930 = vcmp.eq.s32.totalorder %v463, %v467
          %vm3931 = vcmp.eq.s32.totalorder %v464, %v468
          %vm3932 = vcmp.eq.s32.totalorder %v465, %v469
          %vm3933 = vcmp.eq.s32.totalorder %v466, %v470
          %vm3934 = vcmp.eq.s32.totalorder %v467, %v471
          %vm3935 = vcmp.eq.s32.totalorder %v468, %v472
          %v3936 = vmax.f32 %v3808, %v3868
          %v3937 = vmax.f32 %v3809, %v3869
          %v3938 = vmax.f32 %v3810, %v3870
          %v3939 = vmax.f32 %v3811, %v3871
          %v3940 = vmax.f32 %v3812, %v3808
          %v3941 = vmax.f32 %v3813, %v3809
          %v3942 = vmax.f32 %v3814, %v3810
          %v3943 = vmax.f32 %v3815, %v3811
          %v3944 = vmax.f32 %v3816, %v3812
          %v3945 = vmax.f32 %v3817, %v3813
          %v3946 = vmax.f32 %v3818, %v3814
          %v3947 = vmax.f32 %v3819, %v3815
          %v3948 = vmax.f32 %v3820, %v3816
          %v3949 = vmax.f32 %v3821, %v3817
          %v3950 = vmax.f32 %v3822, %v3818
          %v3951 = vmax.f32 %v3823, %v3819
          %v3952 = vmax.f32 %v3824, %v3820
          %v3953 = vmax.f32 %v3825, %v3821
          %v3954 = vmax.f32 %v3826, %v3822
          %v3955 = vmax.f32 %v3827, %v3823
          %v3956 = vmax.f32 %v3828, %v3824
          %v3957 = vmax.f32 %v3829, %v3825
          %v3958 = vmax.f32 %v3830, %v3826
          %v3959 = vmax.f32 %v3831, %v3827
          %v3960 = vmax.f32 %v3832, %v3828
          %v3961 = vmax.f32 %v3833, %v3829
          %v3962 = vmax.f32 %v3834, %v3830
          %v3963 = vmax.f32 %v3835, %v3831
          %v3964 = vmax.f32 %v3836, %v3832
          %v3965 = vmax.f32 %v3837, %v3833
          %v3966 = vmax.f32 %v3838, %v3834
          %v3967 = vmax.f32 %v3839, %v3835
          %v3968 = vmax.f32 %v3840, %v3836
          %v3969 = vmax.f32 %v3841, %v3837
          %v3970 = vmax.f32 %v3842, %v3838
          %v3971 = vmax.f32 %v3843, %v3839
          %v3972 = vmax.f32 %v3844, %v3840
          %v3973 = vmax.f32 %v3845, %v3841
          %v3974 = vmax.f32 %v3846, %v3842
          %v3975 = vmax.f32 %v3847, %v3843
          %v3976 = vmax.f32 %v3848, %v3844
          %v3977 = vmax.f32 %v3849, %v3845
          %v3978 = vmax.f32 %v3850, %v3846
          %v3979 = vmax.f32 %v3851, %v3847
          %v3980 = vmax.f32 %v3852, %v3848
          %v3981 = vmax.f32 %v3853, %v3849
          %v3982 = vmax.f32 %v3854, %v3850
          %v3983 = vmax.f32 %v3855, %v3851
          %v3984 = vmax.f32 %v3856, %v3852
          %v3985 = vmax.f32 %v3857, %v3853
          %v3986 = vmax.f32 %v3858, %v3854
          %v3987 = vmax.f32 %v3859, %v3855
          %v3988 = vmax.f32 %v3860, %v3856
          %v3989 = vmax.f32 %v3861, %v3857
          %v3990 = vmax.f32 %v3862, %v3858
          %v3991 = vmax.f32 %v3863, %v3859
          %v3992 = vmax.f32 %v3864, %v3860
          %v3993 = vmax.f32 %v3865, %v3861
          %v3994 = vmax.f32 %v3866, %v3862
          %v3995 = vmax.f32 %v3867, %v3863
          %v3996 = vmax.f32 %v3868, %v3864
          %v3997 = vmax.f32 %v3869, %v3865
          %v3998 = vmax.f32 %v3870, %v3866
          %v3999 = vmax.f32 %v3871, %v3867
          %v4000 = vsel %vm3872, 1, 0
          %v4001 = vsel %vm3873, 1, 0
          %v4002 = vsel %vm3874, 1, 0
          %v4003 = vsel %vm3875, 1, 0
          %v4004 = vsel %vm3876, 1, 0
          %v4005 = vsel %vm3877, 1, 0
          %v4006 = vsel %vm3878, 1, 0
          %v4007 = vsel %vm3879, 1, 0
          %v4008 = vsel %vm3880, 1, 0
          %v4009 = vsel %vm3881, 1, 0
          %v4010 = vsel %vm3882, 1, 0
          %v4011 = vsel %vm3883, 1, 0
          %v4012 = vsel %vm3884, 1, 0
          %v4013 = vsel %vm3885, 1, 0
          %v4014 = vsel %vm3886, 1, 0
          %v4015 = vsel %vm3887, 1, 0
          %v4016 = vsel %vm3888, 1, 0
          %v4017 = vsel %vm3889, 1, 0
          %v4018 = vsel %vm3890, 1, 0
          %v4019 = vsel %vm3891, 1, 0
          %v4020 = vsel %vm3892, 1, 0
          %v4021 = vsel %vm3893, 1, 0
          %v4022 = vsel %vm3894, 1, 0
          %v4023 = vsel %vm3895, 1, 0
          %v4024 = vsel %vm3896, 1, 0
          %v4025 = vsel %vm3897, 1, 0
          %v4026 = vsel %vm3898, 1, 0
          %v4027 = vsel %vm3899, 1, 0
          %v4028 = vsel %vm3900, 1, 0
          %v4029 = vsel %vm3901, 1, 0
          %v4030 = vsel %vm3902, 1, 0
          %v4031 = vsel %vm3903, 1, 0
          %v4032 = vsel %vm3904, 1, 0
          %v4033 = vsel %vm3905, 1, 0
          %v4034 = vsel %vm3906, 1, 0
          %v4035 = vsel %vm3907, 1, 0
          %v4036 = vsel %vm3908, 1, 0
          %v4037 = vsel %vm3909, 1, 0
          %v4038 = vsel %vm3910, 1, 0
          %v4039 = vsel %vm3911, 1, 0
          %v4040 = vsel %vm3912, 1, 0
          %v4041 = vsel %vm3913, 1, 0
          %v4042 = vsel %vm3914, 1, 0
          %v4043 = vsel %vm3915, 1, 0
          %v4044 = vsel %vm3916, 1, 0
          %v4045 = vsel %vm3917, 1, 0
          %v4046 = vsel %vm3918, 1, 0
          %v4047 = vsel %vm3919, 1, 0
          %v4048 = vsel %vm3920, 1, 0
          %v4049 = vsel %vm3921, 1, 0
          %v4050 = vsel %vm3922, 1, 0
          %v4051 = vsel %vm3923, 1, 0
          %v4052 = vsel %vm3924, 1, 0
          %v4053 = vsel %vm3925, 1, 0
          %v4054 = vsel %vm3926, 1, 0
          %v4055 = vsel %vm3927, 1, 0
          %v4056 = vsel %vm3928, 1, 0
          %v4057 = vsel %vm3929, 1, 0
          %v4058 = vsel %vm3930, 1, 0
          %v4059 = vsel %vm3931, 1, 0
          %v4060 = vsel %vm3932, 1, 0
          %v4061 = vsel %vm3933, 1, 0
          %v4062 = vsel %vm3934, 1, 0
          %v4063 = vsel %vm3935, 1, 0
          %4064 = vset.pattern.permute.xlu0 0
          %4065 = vperm.xlu0 %4064, %v4000
          %v4066 = vpop.permute.xlu0 %4065
          %4067 = vset.pattern.permute.xlu0 0
          %4068 = vperm.xlu0 %4067, %v4001
          %v4069 = vpop.permute.xlu0 %4068
          %4070 = vset.pattern.permute.xlu0 0
          %4071 = vperm.xlu0 %4070, %v4002
          %v4072 = vpop.permute.xlu0 %4071
          %4073 = vset.pattern.permute.xlu0 0
          %4074 = vperm.xlu0 %4073, %v4003
          %v4075 = vpop.permute.xlu0 %4074
          %4076 = vset.pattern.permute.xlu0 0
          %4077 = vperm.xlu0 %4076, %v4004
          %v4078 = vpop.permute.xlu0 %4077
          %4079 = vset.pattern.permute.xlu0 0
          %4080 = vperm.xlu0 %4079, %v4005
          %v4081 = vpop.permute.xlu0 %4080
          %4082 = vset.pattern.permute.xlu0 0
          %4083 = vperm.xlu0 %4082, %v4006
          %v4084 = vpop.permute.xlu0 %4083
          %4085 = vset.pattern.permute.xlu0 0
          %4086 = vperm.xlu0 %4085, %v4007
          %v4087 = vpop.permute.xlu0 %4086
          %4088 = vset.pattern.permute.xlu0 0
          %4089 = vperm.xlu0 %4088, %v4008
          %v4090 = vpop.permute.xlu0 %4089
          %4091 = vset.pattern.permute.xlu0 0
          %4092 = vperm.xlu0 %4091, %v4009
          %v4093 = vpop.permute.xlu0 %4092
          %4094 = vset.pattern.permute.xlu0 0
          %4095 = vperm.xlu0 %4094, %v4010
          %v4096 = vpop.permute.xlu0 %4095
          %4097 = vset.pattern.permute.xlu0 0
          %4098 = vperm.xlu0 %4097, %v4011
          %v4099 = vpop.permute.xlu0 %4098
          %4100 = vset.pattern.permute.xlu0 0
          %4101 = vperm.xlu0 %4100, %v4012
          %v4102 = vpop.permute.xlu0 %4101
          %4103 = vset.pattern.permute.xlu0 0
          %4104 = vperm.xlu0 %4103, %v4013
          %v4105 = vpop.permute.xlu0 %4104
          %4106 = vset.pattern.permute.xlu0 0
          %4107 = vperm.xlu0 %4106, %v4014
          %v4108 = vpop.permute.xlu0 %4107
          %4109 = vset.pattern.permute.xlu0 0
          %4110 = vperm.xlu0 %4109, %v4015
          %v4111 = vpop.permute.xlu0 %4110
          %4112 = vset.pattern.permute.xlu0 0
          %4113 = vperm.xlu0 %4112, %v4016
          %v4114 = vpop.permute.xlu0 %4113
          %4115 = vset.pattern.permute.xlu0 0
          %4116 = vperm.xlu0 %4115, %v4017
          %v4117 = vpop.permute.xlu0 %4116
          %4118 = vset.pattern.permute.xlu0 0
          %4119 = vperm.xlu0 %4118, %v4018
          %v4120 = vpop.permute.xlu0 %4119
          %4121 = vset.pattern.permute.xlu0 0
          %4122 = vperm.xlu0 %4121, %v4019
          %v4123 = vpop.permute.xlu0 %4122
          %4124 = vset.pattern.permute.xlu0 0
          %4125 = vperm.xlu0 %4124, %v4020
          %v4126 = vpop.permute.xlu0 %4125
          %4127 = vset.pattern.permute.xlu0 0
          %4128 = vperm.xlu0 %4127, %v4021
          %v4129 = vpop.permute.xlu0 %4128
          %4130 = vset.pattern.permute.xlu0 0
          %4131 = vperm.xlu0 %4130, %v4022
          %v4132 = vpop.permute.xlu0 %4131
          %4133 = vset.pattern.permute.xlu0 0
          %4134 = vperm.xlu0 %4133, %v4023
          %v4135 = vpop.permute.xlu0 %4134
          %4136 = vset.pattern.permute.xlu0 0
          %4137 = vperm.xlu0 %4136, %v4024
          %v4138 = vpop.permute.xlu0 %4137
          %4139 = vset.pattern.permute.xlu0 0
          %4140 = vperm.xlu0 %4139, %v4025
          %v4141 = vpop.permute.xlu0 %4140
          %4142 = vset.pattern.permute.xlu0 0
          %4143 = vperm.xlu0 %4142, %v4026
          %v4144 = vpop.permute.xlu0 %4143
          %4145 = vset.pattern.permute.xlu0 0
          %4146 = vperm.xlu0 %4145, %v4027
          %v4147 = vpop.permute.xlu0 %4146
          %4148 = vset.pattern.permute.xlu0 0
          %4149 = vperm.xlu0 %4148, %v4028
          %v4150 = vpop.permute.xlu0 %4149
          %4151 = vset.pattern.permute.xlu0 0
          %4152 = vperm.xlu0 %4151, %v4029
          %v4153 = vpop.permute.xlu0 %4152
          %4154 = vset.pattern.permute.xlu0 0
          %4155 = vperm.xlu0 %4154, %v4030
          %v4156 = vpop.permute.xlu0 %4155
          %4157 = vset.pattern.permute.xlu0 0
          %4158 = vperm.xlu0 %4157, %v4031
          %v4159 = vpop.permute.xlu0 %4158
          %4160 = vset.pattern.permute.xlu0 0
          %4161 = vperm.xlu0 %4160, %v4032
          %v4162 = vpop.permute.xlu0 %4161
          %4163 = vset.pattern.permute.xlu0 0
          %4164 = vperm.xlu0 %4163, %v4033
          %v4165 = vpop.permute.xlu0 %4164
          %4166 = vset.pattern.permute.xlu0 0
          %4167 = vperm.xlu0 %4166, %v4034
          %v4168 = vpop.permute.xlu0 %4167
          %4169 = vset.pattern.permute.xlu0 0
          %4170 = vperm.xlu0 %4169, %v4035
          %v4171 = vpop.permute.xlu0 %4170
          %4172 = vset.pattern.permute.xlu0 0
          %4173 = vperm.xlu0 %4172, %v4036
          %v4174 = vpop.permute.xlu0 %4173
          %4175 = vset.pattern.permute.xlu0 0
          %4176 = vperm.xlu0 %4175, %v4037
          %v4177 = vpop.permute.xlu0 %4176
          %4178 = vset.pattern.permute.xlu0 0
          %4179 = vperm.xlu0 %4178, %v4038
          %v4180 = vpop.permute.xlu0 %4179
          %4181 = vset.pattern.permute.xlu0 0
          %4182 = vperm.xlu0 %4181, %v4039
          %v4183 = vpop.permute.xlu0 %4182
          %4184 = vset.pattern.permute.xlu0 0
          %4185 = vperm.xlu0 %4184, %v4040
          %v4186 = vpop.permute.xlu0 %4185
          %4187 = vset.pattern.permute.xlu0 0
          %4188 = vperm.xlu0 %4187, %v4041
          %v4189 = vpop.permute.xlu0 %4188
          %4190 = vset.pattern.permute.xlu0 0
          %4191 = vperm.xlu0 %4190, %v4042
          %v4192 = vpop.permute.xlu0 %4191
          %4193 = vset.pattern.permute.xlu0 0
          %4194 = vperm.xlu0 %4193, %v4043
          %v4195 = vpop.permute.xlu0 %4194
          %4196 = vset.pattern.permute.xlu0 0
          %4197 = vperm.xlu0 %4196, %v4044
          %v4198 = vpop.permute.xlu0 %4197
          %4199 = vset.pattern.permute.xlu0 0
          %4200 = vperm.xlu0 %4199, %v4045
          %v4201 = vpop.permute.xlu0 %4200
          %4202 = vset.pattern.permute.xlu0 0
          %4203 = vperm.xlu0 %4202, %v4046
          %v4204 = vpop.permute.xlu0 %4203
          %4205 = vset.pattern.permute.xlu0 0
          %4206 = vperm.xlu0 %4205, %v4047
          %v4207 = vpop.permute.xlu0 %4206
          %4208 = vset.pattern.permute.xlu0 0
          %4209 = vperm.xlu0 %4208, %v4048
          %v4210 = vpop.permute.xlu0 %4209
          %4211 = vset.pattern.permute.xlu0 0
          %4212 = vperm.xlu0 %4211, %v4049
          %v4213 = vpop.permute.xlu0 %4212
          %4214 = vset.pattern.permute.xlu0 0
          %4215 = vperm.xlu0 %4214, %v4050
          %v4216 = vpop.permute.xlu0 %4215
          %4217 = vset.pattern.permute.xlu0 0
          %4218 = vperm.xlu0 %4217, %v4051
          %v4219 = vpop.permute.xlu0 %4218
          %4220 = vset.pattern.permute.xlu0 0
          %4221 = vperm.xlu0 %4220, %v4052
          %v4222 = vpop.permute.xlu0 %4221
          %4223 = vset.pattern.permute.xlu0 0
          %4224 = vperm.xlu0 %4223, %v4053
          %v4225 = vpop.permute.xlu0 %4224
          %4226 = vset.pattern.permute.xlu0 0
          %4227 = vperm.xlu0 %4226, %v4054
          %v4228 = vpop.permute.xlu0 %4227
          %4229 = vset.pattern.permute.xlu0 0
          %4230 = vperm.xlu0 %4229, %v4055
          %v4231 = vpop.permute.xlu0 %4230
          %4232 = vset.pattern.permute.xlu0 0
          %4233 = vperm.xlu0 %4232, %v4056
          %v4234 = vpop.permute.xlu0 %4233
          %4235 = vset.pattern.permute.xlu0 0
          %4236 = vperm.xlu0 %4235, %v4057
          %v4237 = vpop.permute.xlu0 %4236
          %4238 = vset.pattern.permute.xlu0 0
          %4239 = vperm.xlu0 %4238, %v4058
          %v4240 = vpop.permute.xlu0 %4239
          %4241 = vset.pattern.permute.xlu0 0
          %4242 = vperm.xlu0 %4241, %v4059
          %v4243 = vpop.permute.xlu0 %4242
          %4244 = vset.pattern.permute.xlu0 0
          %4245 = vperm.xlu0 %4244, %v4060
          %v4246 = vpop.permute.xlu0 %4245
          %4247 = vset.pattern.permute.xlu0 0
          %4248 = vperm.xlu0 %4247, %v4061
          %v4249 = vpop.permute.xlu0 %4248
          %4250 = vset.pattern.permute.xlu0 0
          %4251 = vperm.xlu0 %4250, %v4062
          %v4252 = vpop.permute.xlu0 %4251
          %4253 = vset.pattern.permute.xlu0 0
          %4254 = vperm.xlu0 %4253, %v4063
          %v4255 = vpop.permute.xlu0 %4254
          %vm4256 = vcmp.eq.s32.totalorder %v4066, 1
          %vm4257 = vcmp.eq.s32.totalorder %v4069, 1
          %vm4258 = vcmp.eq.s32.totalorder %v4072, 1
          %vm4259 = vcmp.eq.s32.totalorder %v4075, 1
          %vm4260 = vcmp.eq.s32.totalorder %v4078, 1
          %vm4261 = vcmp.eq.s32.totalorder %v4081, 1
          %vm4262 = vcmp.eq.s32.totalorder %v4084, 1
          %vm4263 = vcmp.eq.s32.totalorder %v4087, 1
          %vm4264 = vcmp.eq.s32.totalorder %v4090, 1
          %vm4265 = vcmp.eq.s32.totalorder %v4093, 1
          %vm4266 = vcmp.eq.s32.totalorder %v4096, 1
          %vm4267 = vcmp.eq.s32.totalorder %v4099, 1
          %vm4268 = vcmp.eq.s32.totalorder %v4102, 1
          %vm4269 = vcmp.eq.s32.totalorder %v4105, 1
          %vm4270 = vcmp.eq.s32.totalorder %v4108, 1
          %vm4271 = vcmp.eq.s32.totalorder %v4111, 1
          %vm4272 = vcmp.eq.s32.totalorder %v4114, 1
          %vm4273 = vcmp.eq.s32.totalorder %v4117, 1
          %vm4274 = vcmp.eq.s32.totalorder %v4120, 1
          %vm4275 = vcmp.eq.s32.totalorder %v4123, 1
          %vm4276 = vcmp.eq.s32.totalorder %v4126, 1
          %vm4277 = vcmp.eq.s32.totalorder %v4129, 1
          %vm4278 = vcmp.eq.s32.totalorder %v4132, 1
          %vm4279 = vcmp.eq.s32.totalorder %v4135, 1
          %vm4280 = vcmp.eq.s32.totalorder %v4138, 1
          %vm4281 = vcmp.eq.s32.totalorder %v4141, 1
          %vm4282 = vcmp.eq.s32.totalorder %v4144, 1
          %vm4283 = vcmp.eq.s32.totalorder %v4147, 1
          %vm4284 = vcmp.eq.s32.totalorder %v4150, 1
          %vm4285 = vcmp.eq.s32.totalorder %v4153, 1
          %vm4286 = vcmp.eq.s32.totalorder %v4156, 1
          %vm4287 = vcmp.eq.s32.totalorder %v4159, 1
          %vm4288 = vcmp.eq.s32.totalorder %v4162, 1
          %vm4289 = vcmp.eq.s32.totalorder %v4165, 1
          %vm4290 = vcmp.eq.s32.totalorder %v4168, 1
          %vm4291 = vcmp.eq.s32.totalorder %v4171, 1
          %vm4292 = vcmp.eq.s32.totalorder %v4174, 1
          %vm4293 = vcmp.eq.s32.totalorder %v4177, 1
          %vm4294 = vcmp.eq.s32.totalorder %v4180, 1
          %vm4295 = vcmp.eq.s32.totalorder %v4183, 1
          %vm4296 = vcmp.eq.s32.totalorder %v4186, 1
          %vm4297 = vcmp.eq.s32.totalorder %v4189, 1
          %vm4298 = vcmp.eq.s32.totalorder %v4192, 1
          %vm4299 = vcmp.eq.s32.totalorder %v4195, 1
          %vm4300 = vcmp.eq.s32.totalorder %v4198, 1
          %vm4301 = vcmp.eq.s32.totalorder %v4201, 1
          %vm4302 = vcmp.eq.s32.totalorder %v4204, 1
          %vm4303 = vcmp.eq.s32.totalorder %v4207, 1
          %vm4304 = vcmp.eq.s32.totalorder %v4210, 1
          %vm4305 = vcmp.eq.s32.totalorder %v4213, 1
          %vm4306 = vcmp.eq.s32.totalorder %v4216, 1
          %vm4307 = vcmp.eq.s32.totalorder %v4219, 1
          %vm4308 = vcmp.eq.s32.totalorder %v4222, 1
          %vm4309 = vcmp.eq.s32.totalorder %v4225, 1
          %vm4310 = vcmp.eq.s32.totalorder %v4228, 1
          %vm4311 = vcmp.eq.s32.totalorder %v4231, 1
          %vm4312 = vcmp.eq.s32.totalorder %v4234, 1
          %vm4313 = vcmp.eq.s32.totalorder %v4237, 1
          %vm4314 = vcmp.eq.s32.totalorder %v4240, 1
          %vm4315 = vcmp.eq.s32.totalorder %v4243, 1
          %vm4316 = vcmp.eq.s32.totalorder %v4246, 1
          %vm4317 = vcmp.eq.s32.totalorder %v4249, 1
          %vm4318 = vcmp.eq.s32.totalorder %v4252, 1
          %vm4319 = vcmp.eq.s32.totalorder %v4255, 1
          %v4320 = vsel %vm4256, %v3936, %v3808
          %v4321 = vsel %vm4257, %v3937, %v3809
          %v4322 = vsel %vm4258, %v3938, %v3810
          %v4323 = vsel %vm4259, %v3939, %v3811
          %v4324 = vsel %vm4260, %v3940, %v3812
          %v4325 = vsel %vm4261, %v3941, %v3813
          %v4326 = vsel %vm4262, %v3942, %v3814
          %v4327 = vsel %vm4263, %v3943, %v3815
          %v4328 = vsel %vm4264, %v3944, %v3816
          %v4329 = vsel %vm4265, %v3945, %v3817
          %v4330 = vsel %vm4266, %v3946, %v3818
          %v4331 = vsel %vm4267, %v3947, %v3819
          %v4332 = vsel %vm4268, %v3948, %v3820
          %v4333 = vsel %vm4269, %v3949, %v3821
          %v4334 = vsel %vm4270, %v3950, %v3822
          %v4335 = vsel %vm4271, %v3951, %v3823
          %v4336 = vsel %vm4272, %v3952, %v3824
          %v4337 = vsel %vm4273, %v3953, %v3825
          %v4338 = vsel %vm4274, %v3954, %v3826
          %v4339 = vsel %vm4275, %v3955, %v3827
          %v4340 = vsel %vm4276, %v3956, %v3828
          %v4341 = vsel %vm4277, %v3957, %v3829
          %v4342 = vsel %vm4278, %v3958, %v3830
          %v4343 = vsel %vm4279, %v3959, %v3831
          %v4344 = vsel %vm4280, %v3960, %v3832
          %v4345 = vsel %vm4281, %v3961, %v3833
          %v4346 = vsel %vm4282, %v3962, %v3834
          %v4347 = vsel %vm4283, %v3963, %v3835
          %v4348 = vsel %vm4284, %v3964, %v3836
          %v4349 = vsel %vm4285, %v3965, %v3837
          %v4350 = vsel %vm4286, %v3966, %v3838
          %v4351 = vsel %vm4287, %v3967, %v3839
          %v4352 = vsel %vm4288, %v3968, %v3840
          %v4353 = vsel %vm4289, %v3969, %v3841
          %v4354 = vsel %vm4290, %v3970, %v3842
          %v4355 = vsel %vm4291, %v3971, %v3843
          %v4356 = vsel %vm4292, %v3972, %v3844
          %v4357 = vsel %vm4293, %v3973, %v3845
          %v4358 = vsel %vm4294, %v3974, %v3846
          %v4359 = vsel %vm4295, %v3975, %v3847
          %v4360 = vsel %vm4296, %v3976, %v3848
          %v4361 = vsel %vm4297, %v3977, %v3849
          %v4362 = vsel %vm4298, %v3978, %v3850
          %v4363 = vsel %vm4299, %v3979, %v3851
          %v4364 = vsel %vm4300, %v3980, %v3852
          %v4365 = vsel %vm4301, %v3981, %v3853
          %v4366 = vsel %vm4302, %v3982, %v3854
          %v4367 = vsel %vm4303, %v3983, %v3855
          %v4368 = vsel %vm4304, %v3984, %v3856
          %v4369 = vsel %vm4305, %v3985, %v3857
          %v4370 = vsel %vm4306, %v3986, %v3858
          %v4371 = vsel %vm4307, %v3987, %v3859
          %v4372 = vsel %vm4308, %v3988, %v3860
          %v4373 = vsel %vm4309, %v3989, %v3861
          %v4374 = vsel %vm4310, %v3990, %v3862
          %v4375 = vsel %vm4311, %v3991, %v3863
          %v4376 = vsel %vm4312, %v3992, %v3864
          %v4377 = vsel %vm4313, %v3993, %v3865
          %v4378 = vsel %vm4314, %v3994, %v3866
          %v4379 = vsel %vm4315, %v3995, %v3867
          %v4380 = vsel %vm4316, %v3996, %v3868
          %v4381 = vsel %vm4317, %v3997, %v3869
          %v4382 = vsel %vm4318, %v3998, %v3870
          %v4383 = vsel %vm4319, %v3999, %v3871
          %vm4384 = vcmp.eq.s32.totalorder %v465, %v409
          %vm4385 = vcmp.eq.s32.totalorder %v466, %v410
          %vm4386 = vcmp.eq.s32.totalorder %v467, %v411
          %vm4387 = vcmp.eq.s32.totalorder %v468, %v412
          %vm4388 = vcmp.eq.s32.totalorder %v469, %v413
          %vm4389 = vcmp.eq.s32.totalorder %v470, %v414
          %vm4390 = vcmp.eq.s32.totalorder %v471, %v415
          %vm4391 = vcmp.eq.s32.totalorder %v472, %v416
          %vm4392 = vcmp.eq.s32.totalorder %v409, %v417
          %vm4393 = vcmp.eq.s32.totalorder %v410, %v418
          %vm4394 = vcmp.eq.s32.totalorder %v411, %v419
          %vm4395 = vcmp.eq.s32.totalorder %v412, %v420
          %vm4396 = vcmp.eq.s32.totalorder %v413, %v421
          %vm4397 = vcmp.eq.s32.totalorder %v414, %v422
          %vm4398 = vcmp.eq.s32.totalorder %v415, %v423
          %vm4399 = vcmp.eq.s32.totalorder %v416, %v424
          %vm4400 = vcmp.eq.s32.totalorder %v417, %v425
          %vm4401 = vcmp.eq.s32.totalorder %v418, %v426
          %vm4402 = vcmp.eq.s32.totalorder %v419, %v427
          %vm4403 = vcmp.eq.s32.totalorder %v420, %v428
          %vm4404 = vcmp.eq.s32.totalorder %v421, %v429
          %vm4405 = vcmp.eq.s32.totalorder %v422, %v430
          %vm4406 = vcmp.eq.s32.totalorder %v423, %v431
          %vm4407 = vcmp.eq.s32.totalorder %v424, %v432
          %vm4408 = vcmp.eq.s32.totalorder %v425, %v433
          %vm4409 = vcmp.eq.s32.totalorder %v426, %v434
          %vm4410 = vcmp.eq.s32.totalorder %v427, %v435
          %vm4411 = vcmp.eq.s32.totalorder %v428, %v436
          %vm4412 = vcmp.eq.s32.totalorder %v429, %v437
          %vm4413 = vcmp.eq.s32.totalorder %v430, %v438
          %vm4414 = vcmp.eq.s32.totalorder %v431, %v439
          %vm4415 = vcmp.eq.s32.totalorder %v432, %v440
          %vm4416 = vcmp.eq.s32.totalorder %v433, %v441
          %vm4417 = vcmp.eq.s32.totalorder %v434, %v442
          %vm4418 = vcmp.eq.s32.totalorder %v435, %v443
          %vm4419 = vcmp.eq.s32.totalorder %v436, %v444
          %vm4420 = vcmp.eq.s32.totalorder %v437, %v445
          %vm4421 = vcmp.eq.s32.totalorder %v438, %v446
          %vm4422 = vcmp.eq.s32.totalorder %v439, %v447
          %vm4423 = vcmp.eq.s32.totalorder %v440, %v448
          %vm4424 = vcmp.eq.s32.totalorder %v441, %v449
          %vm4425 = vcmp.eq.s32.totalorder %v442, %v450
          %vm4426 = vcmp.eq.s32.totalorder %v443, %v451
          %vm4427 = vcmp.eq.s32.totalorder %v444, %v452
          %vm4428 = vcmp.eq.s32.totalorder %v445, %v453
          %vm4429 = vcmp.eq.s32.totalorder %v446, %v454
          %vm4430 = vcmp.eq.s32.totalorder %v447, %v455
          %vm4431 = vcmp.eq.s32.totalorder %v448, %v456
          %vm4432 = vcmp.eq.s32.totalorder %v449, %v457
          %vm4433 = vcmp.eq.s32.totalorder %v450, %v458
          %vm4434 = vcmp.eq.s32.totalorder %v451, %v459
          %vm4435 = vcmp.eq.s32.totalorder %v452, %v460
          %vm4436 = vcmp.eq.s32.totalorder %v453, %v461
          %vm4437 = vcmp.eq.s32.totalorder %v454, %v462
          %vm4438 = vcmp.eq.s32.totalorder %v455, %v463
          %vm4439 = vcmp.eq.s32.totalorder %v456, %v464
          %vm4440 = vcmp.eq.s32.totalorder %v457, %v465
          %vm4441 = vcmp.eq.s32.totalorder %v458, %v466
          %vm4442 = vcmp.eq.s32.totalorder %v459, %v467
          %vm4443 = vcmp.eq.s32.totalorder %v460, %v468
          %vm4444 = vcmp.eq.s32.totalorder %v461, %v469
          %vm4445 = vcmp.eq.s32.totalorder %v462, %v470
          %vm4446 = vcmp.eq.s32.totalorder %v463, %v471
          %vm4447 = vcmp.eq.s32.totalorder %v464, %v472
          %v4448 = vmax.f32 %v4320, %v4376
          %v4449 = vmax.f32 %v4321, %v4377
          %v4450 = vmax.f32 %v4322, %v4378
          %v4451 = vmax.f32 %v4323, %v4379
          %v4452 = vmax.f32 %v4324, %v4380
          %v4453 = vmax.f32 %v4325, %v4381
          %v4454 = vmax.f32 %v4326, %v4382
          %v4455 = vmax.f32 %v4327, %v4383
          %v4456 = vmax.f32 %v4328, %v4320
          %v4457 = vmax.f32 %v4329, %v4321
          %v4458 = vmax.f32 %v4330, %v4322
          %v4459 = vmax.f32 %v4331, %v4323
          %v4460 = vmax.f32 %v4332, %v4324
          %v4461 = vmax.f32 %v4333, %v4325
          %v4462 = vmax.f32 %v4334, %v4326
          %v4463 = vmax.f32 %v4335, %v4327
          %v4464 = vmax.f32 %v4336, %v4328
          %v4465 = vmax.f32 %v4337, %v4329
          %v4466 = vmax.f32 %v4338, %v4330
          %v4467 = vmax.f32 %v4339, %v4331
          %v4468 = vmax.f32 %v4340, %v4332
          %v4469 = vmax.f32 %v4341, %v4333
          %v4470 = vmax.f32 %v4342, %v4334
          %v4471 = vmax.f32 %v4343, %v4335
          %v4472 = vmax.f32 %v4344, %v4336
          %v4473 = vmax.f32 %v4345, %v4337
          %v4474 = vmax.f32 %v4346, %v4338
          %v4475 = vmax.f32 %v4347, %v4339
          %v4476 = vmax.f32 %v4348, %v4340
          %v4477 = vmax.f32 %v4349, %v4341
          %v4478 = vmax.f32 %v4350, %v4342
          %v4479 = vmax.f32 %v4351, %v4343
          %v4480 = vmax.f32 %v4352, %v4344
          %v4481 = vmax.f32 %v4353, %v4345
          %v4482 = vmax.f32 %v4354, %v4346
          %v4483 = vmax.f32 %v4355, %v4347
          %v4484 = vmax.f32 %v4356, %v4348
          %v4485 = vmax.f32 %v4357, %v4349
          %v4486 = vmax.f32 %v4358, %v4350
          %v4487 = vmax.f32 %v4359, %v4351
          %v4488 = vmax.f32 %v4360, %v4352
          %v4489 = vmax.f32 %v4361, %v4353
          %v4490 = vmax.f32 %v4362, %v4354
          %v4491 = vmax.f32 %v4363, %v4355
          %v4492 = vmax.f32 %v4364, %v4356
          %v4493 = vmax.f32 %v4365, %v4357
          %v4494 = vmax.f32 %v4366, %v4358
          %v4495 = vmax.f32 %v4367, %v4359
          %v4496 = vmax.f32 %v4368, %v4360
          %v4497 = vmax.f32 %v4369, %v4361
          %v4498 = vmax.f32 %v4370, %v4362
          %v4499 = vmax.f32 %v4371, %v4363
          %v4500 = vmax.f32 %v4372, %v4364
          %v4501 = vmax.f32 %v4373, %v4365
          %v4502 = vmax.f32 %v4374, %v4366
          %v4503 = vmax.f32 %v4375, %v4367
          %v4504 = vmax.f32 %v4376, %v4368
          %v4505 = vmax.f32 %v4377, %v4369
          %v4506 = vmax.f32 %v4378, %v4370
          %v4507 = vmax.f32 %v4379, %v4371
          %v4508 = vmax.f32 %v4380, %v4372
          %v4509 = vmax.f32 %v4381, %v4373
          %v4510 = vmax.f32 %v4382, %v4374
          %v4511 = vmax.f32 %v4383, %v4375
          %v4512 = vsel %vm4384, 1, 0
          %v4513 = vsel %vm4385, 1, 0
          %v4514 = vsel %vm4386, 1, 0
          %v4515 = vsel %vm4387, 1, 0
          %v4516 = vsel %vm4388, 1, 0
          %v4517 = vsel %vm4389, 1, 0
          %v4518 = vsel %vm4390, 1, 0
          %v4519 = vsel %vm4391, 1, 0
          %v4520 = vsel %vm4392, 1, 0
          %v4521 = vsel %vm4393, 1, 0
          %v4522 = vsel %vm4394, 1, 0
          %v4523 = vsel %vm4395, 1, 0
          %v4524 = vsel %vm4396, 1, 0
          %v4525 = vsel %vm4397, 1, 0
          %v4526 = vsel %vm4398, 1, 0
          %v4527 = vsel %vm4399, 1, 0
          %v4528 = vsel %vm4400, 1, 0
          %v4529 = vsel %vm4401, 1, 0
          %v4530 = vsel %vm4402, 1, 0
          %v4531 = vsel %vm4403, 1, 0
          %v4532 = vsel %vm4404, 1, 0
          %v4533 = vsel %vm4405, 1, 0
          %v4534 = vsel %vm4406, 1, 0
          %v4535 = vsel %vm4407, 1, 0
          %v4536 = vsel %vm4408, 1, 0
          %v4537 = vsel %vm4409, 1, 0
          %v4538 = vsel %vm4410, 1, 0
          %v4539 = vsel %vm4411, 1, 0
          %v4540 = vsel %vm4412, 1, 0
          %v4541 = vsel %vm4413, 1, 0
          %v4542 = vsel %vm4414, 1, 0
          %v4543 = vsel %vm4415, 1, 0
          %v4544 = vsel %vm4416, 1, 0
          %v4545 = vsel %vm4417, 1, 0
          %v4546 = vsel %vm4418, 1, 0
          %v4547 = vsel %vm4419, 1, 0
          %v4548 = vsel %vm4420, 1, 0
          %v4549 = vsel %vm4421, 1, 0
          %v4550 = vsel %vm4422, 1, 0
          %v4551 = vsel %vm4423, 1, 0
          %v4552 = vsel %vm4424, 1, 0
          %v4553 = vsel %vm4425, 1, 0
          %v4554 = vsel %vm4426, 1, 0
          %v4555 = vsel %vm4427, 1, 0
          %v4556 = vsel %vm4428, 1, 0
          %v4557 = vsel %vm4429, 1, 0
          %v4558 = vsel %vm4430, 1, 0
          %v4559 = vsel %vm4431, 1, 0
          %v4560 = vsel %vm4432, 1, 0
          %v4561 = vsel %vm4433, 1, 0
          %v4562 = vsel %vm4434, 1, 0
          %v4563 = vsel %vm4435, 1, 0
          %v4564 = vsel %vm4436, 1, 0
          %v4565 = vsel %vm4437, 1, 0
          %v4566 = vsel %vm4438, 1, 0
          %v4567 = vsel %vm4439, 1, 0
          %v4568 = vsel %vm4440, 1, 0
          %v4569 = vsel %vm4441, 1, 0
          %v4570 = vsel %vm4442, 1, 0
          %v4571 = vsel %vm4443, 1, 0
          %v4572 = vsel %vm4444, 1, 0
          %v4573 = vsel %vm4445, 1, 0
          %v4574 = vsel %vm4446, 1, 0
          %v4575 = vsel %vm4447, 1, 0
          %4576 = vset.pattern.permute.xlu0 0
          %4577 = vperm.xlu0 %4576, %v4512
          %v4578 = vpop.permute.xlu0 %4577
          %4579 = vset.pattern.permute.xlu0 0
          %4580 = vperm.xlu0 %4579, %v4513
          %v4581 = vpop.permute.xlu0 %4580
          %4582 = vset.pattern.permute.xlu0 0
          %4583 = vperm.xlu0 %4582, %v4514
          %v4584 = vpop.permute.xlu0 %4583
          %4585 = vset.pattern.permute.xlu0 0
          %4586 = vperm.xlu0 %4585, %v4515
          %v4587 = vpop.permute.xlu0 %4586
          %4588 = vset.pattern.permute.xlu0 0
          %4589 = vperm.xlu0 %4588, %v4516
          %v4590 = vpop.permute.xlu0 %4589
          %4591 = vset.pattern.permute.xlu0 0
          %4592 = vperm.xlu0 %4591, %v4517
          %v4593 = vpop.permute.xlu0 %4592
          %4594 = vset.pattern.permute.xlu0 0
          %4595 = vperm.xlu0 %4594, %v4518
          %v4596 = vpop.permute.xlu0 %4595
          %4597 = vset.pattern.permute.xlu0 0
          %4598 = vperm.xlu0 %4597, %v4519
          %v4599 = vpop.permute.xlu0 %4598
          %4600 = vset.pattern.permute.xlu0 0
          %4601 = vperm.xlu0 %4600, %v4520
          %v4602 = vpop.permute.xlu0 %4601
          %4603 = vset.pattern.permute.xlu0 0
          %4604 = vperm.xlu0 %4603, %v4521
          %v4605 = vpop.permute.xlu0 %4604
          %4606 = vset.pattern.permute.xlu0 0
          %4607 = vperm.xlu0 %4606, %v4522
          %v4608 = vpop.permute.xlu0 %4607
          %4609 = vset.pattern.permute.xlu0 0
          %4610 = vperm.xlu0 %4609, %v4523
          %v4611 = vpop.permute.xlu0 %4610
          %4612 = vset.pattern.permute.xlu0 0
          %4613 = vperm.xlu0 %4612, %v4524
          %v4614 = vpop.permute.xlu0 %4613
          %4615 = vset.pattern.permute.xlu0 0
          %4616 = vperm.xlu0 %4615, %v4525
          %v4617 = vpop.permute.xlu0 %4616
          %4618 = vset.pattern.permute.xlu0 0
          %4619 = vperm.xlu0 %4618, %v4526
          %v4620 = vpop.permute.xlu0 %4619
          %4621 = vset.pattern.permute.xlu0 0
          %4622 = vperm.xlu0 %4621, %v4527
          %v4623 = vpop.permute.xlu0 %4622
          %4624 = vset.pattern.permute.xlu0 0
          %4625 = vperm.xlu0 %4624, %v4528
          %v4626 = vpop.permute.xlu0 %4625
          %4627 = vset.pattern.permute.xlu0 0
          %4628 = vperm.xlu0 %4627, %v4529
          %v4629 = vpop.permute.xlu0 %4628
          %4630 = vset.pattern.permute.xlu0 0
          %4631 = vperm.xlu0 %4630, %v4530
          %v4632 = vpop.permute.xlu0 %4631
          %4633 = vset.pattern.permute.xlu0 0
          %4634 = vperm.xlu0 %4633, %v4531
          %v4635 = vpop.permute.xlu0 %4634
          %4636 = vset.pattern.permute.xlu0 0
          %4637 = vperm.xlu0 %4636, %v4532
          %v4638 = vpop.permute.xlu0 %4637
          %4639 = vset.pattern.permute.xlu0 0
          %4640 = vperm.xlu0 %4639, %v4533
          %v4641 = vpop.permute.xlu0 %4640
          %4642 = vset.pattern.permute.xlu0 0
          %4643 = vperm.xlu0 %4642, %v4534
          %v4644 = vpop.permute.xlu0 %4643
          %4645 = vset.pattern.permute.xlu0 0
          %4646 = vperm.xlu0 %4645, %v4535
          %v4647 = vpop.permute.xlu0 %4646
          %4648 = vset.pattern.permute.xlu0 0
          %4649 = vperm.xlu0 %4648, %v4536
          %v4650 = vpop.permute.xlu0 %4649
          %4651 = vset.pattern.permute.xlu0 0
          %4652 = vperm.xlu0 %4651, %v4537
          %v4653 = vpop.permute.xlu0 %4652
          %4654 = vset.pattern.permute.xlu0 0
          %4655 = vperm.xlu0 %4654, %v4538
          %v4656 = vpop.permute.xlu0 %4655
          %4657 = vset.pattern.permute.xlu0 0
          %4658 = vperm.xlu0 %4657, %v4539
          %v4659 = vpop.permute.xlu0 %4658
          %4660 = vset.pattern.permute.xlu0 0
          %4661 = vperm.xlu0 %4660, %v4540
          %v4662 = vpop.permute.xlu0 %4661
          %4663 = vset.pattern.permute.xlu0 0
          %4664 = vperm.xlu0 %4663, %v4541
          %v4665 = vpop.permute.xlu0 %4664
          %4666 = vset.pattern.permute.xlu0 0
          %4667 = vperm.xlu0 %4666, %v4542
          %v4668 = vpop.permute.xlu0 %4667
          %4669 = vset.pattern.permute.xlu0 0
          %4670 = vperm.xlu0 %4669, %v4543
          %v4671 = vpop.permute.xlu0 %4670
          %4672 = vset.pattern.permute.xlu0 0
          %4673 = vperm.xlu0 %4672, %v4544
          %v4674 = vpop.permute.xlu0 %4673
          %4675 = vset.pattern.permute.xlu0 0
          %4676 = vperm.xlu0 %4675, %v4545
          %v4677 = vpop.permute.xlu0 %4676
          %4678 = vset.pattern.permute.xlu0 0
          %4679 = vperm.xlu0 %4678, %v4546
          %v4680 = vpop.permute.xlu0 %4679
          %4681 = vset.pattern.permute.xlu0 0
          %4682 = vperm.xlu0 %4681, %v4547
          %v4683 = vpop.permute.xlu0 %4682
          %4684 = vset.pattern.permute.xlu0 0
          %4685 = vperm.xlu0 %4684, %v4548
          %v4686 = vpop.permute.xlu0 %4685
          %4687 = vset.pattern.permute.xlu0 0
          %4688 = vperm.xlu0 %4687, %v4549
          %v4689 = vpop.permute.xlu0 %4688
          %4690 = vset.pattern.permute.xlu0 0
          %4691 = vperm.xlu0 %4690, %v4550
          %v4692 = vpop.permute.xlu0 %4691
          %4693 = vset.pattern.permute.xlu0 0
          %4694 = vperm.xlu0 %4693, %v4551
          %v4695 = vpop.permute.xlu0 %4694
          %4696 = vset.pattern.permute.xlu0 0
          %4697 = vperm.xlu0 %4696, %v4552
          %v4698 = vpop.permute.xlu0 %4697
          %4699 = vset.pattern.permute.xlu0 0
          %4700 = vperm.xlu0 %4699, %v4553
          %v4701 = vpop.permute.xlu0 %4700
          %4702 = vset.pattern.permute.xlu0 0
          %4703 = vperm.xlu0 %4702, %v4554
          %v4704 = vpop.permute.xlu0 %4703
          %4705 = vset.pattern.permute.xlu0 0
          %4706 = vperm.xlu0 %4705, %v4555
          %v4707 = vpop.permute.xlu0 %4706
          %4708 = vset.pattern.permute.xlu0 0
          %4709 = vperm.xlu0 %4708, %v4556
          %v4710 = vpop.permute.xlu0 %4709
          %4711 = vset.pattern.permute.xlu0 0
          %4712 = vperm.xlu0 %4711, %v4557
          %v4713 = vpop.permute.xlu0 %4712
          %4714 = vset.pattern.permute.xlu0 0
          %4715 = vperm.xlu0 %4714, %v4558
          %v4716 = vpop.permute.xlu0 %4715
          %4717 = vset.pattern.permute.xlu0 0
          %4718 = vperm.xlu0 %4717, %v4559
          %v4719 = vpop.permute.xlu0 %4718
          %4720 = vset.pattern.permute.xlu0 0
          %4721 = vperm.xlu0 %4720, %v4560
          %v4722 = vpop.permute.xlu0 %4721
          %4723 = vset.pattern.permute.xlu0 0
          %4724 = vperm.xlu0 %4723, %v4561
          %v4725 = vpop.permute.xlu0 %4724
          %4726 = vset.pattern.permute.xlu0 0
          %4727 = vperm.xlu0 %4726, %v4562
          %v4728 = vpop.permute.xlu0 %4727
          %4729 = vset.pattern.permute.xlu0 0
          %4730 = vperm.xlu0 %4729, %v4563
          %v4731 = vpop.permute.xlu0 %4730
          %4732 = vset.pattern.permute.xlu0 0
          %4733 = vperm.xlu0 %4732, %v4564
          %v4734 = vpop.permute.xlu0 %4733
          %4735 = vset.pattern.permute.xlu0 0
          %4736 = vperm.xlu0 %4735, %v4565
          %v4737 = vpop.permute.xlu0 %4736
          %4738 = vset.pattern.permute.xlu0 0
          %4739 = vperm.xlu0 %4738, %v4566
          %v4740 = vpop.permute.xlu0 %4739
          %4741 = vset.pattern.permute.xlu0 0
          %4742 = vperm.xlu0 %4741, %v4567
          %v4743 = vpop.permute.xlu0 %4742
          %4744 = vset.pattern.permute.xlu0 0
          %4745 = vperm.xlu0 %4744, %v4568
          %v4746 = vpop.permute.xlu0 %4745
          %4747 = vset.pattern.permute.xlu0 0
          %4748 = vperm.xlu0 %4747, %v4569
          %v4749 = vpop.permute.xlu0 %4748
          %4750 = vset.pattern.permute.xlu0 0
          %4751 = vperm.xlu0 %4750, %v4570
          %v4752 = vpop.permute.xlu0 %4751
          %4753 = vset.pattern.permute.xlu0 0
          %4754 = vperm.xlu0 %4753, %v4571
          %v4755 = vpop.permute.xlu0 %4754
          %4756 = vset.pattern.permute.xlu0 0
          %4757 = vperm.xlu0 %4756, %v4572
          %v4758 = vpop.permute.xlu0 %4757
          %4759 = vset.pattern.permute.xlu0 0
          %4760 = vperm.xlu0 %4759, %v4573
          %v4761 = vpop.permute.xlu0 %4760
          %4762 = vset.pattern.permute.xlu0 0
          %4763 = vperm.xlu0 %4762, %v4574
          %v4764 = vpop.permute.xlu0 %4763
          %4765 = vset.pattern.permute.xlu0 0
          %4766 = vperm.xlu0 %4765, %v4575
          %v4767 = vpop.permute.xlu0 %4766
          %vm4768 = vcmp.eq.s32.totalorder %v4578, 1
          %vm4769 = vcmp.eq.s32.totalorder %v4581, 1
          %vm4770 = vcmp.eq.s32.totalorder %v4584, 1
          %vm4771 = vcmp.eq.s32.totalorder %v4587, 1
          %vm4772 = vcmp.eq.s32.totalorder %v4590, 1
          %vm4773 = vcmp.eq.s32.totalorder %v4593, 1
          %vm4774 = vcmp.eq.s32.totalorder %v4596, 1
          %vm4775 = vcmp.eq.s32.totalorder %v4599, 1
          %vm4776 = vcmp.eq.s32.totalorder %v4602, 1
          %vm4777 = vcmp.eq.s32.totalorder %v4605, 1
          %vm4778 = vcmp.eq.s32.totalorder %v4608, 1
          %vm4779 = vcmp.eq.s32.totalorder %v4611, 1
          %vm4780 = vcmp.eq.s32.totalorder %v4614, 1
          %vm4781 = vcmp.eq.s32.totalorder %v4617, 1
          %vm4782 = vcmp.eq.s32.totalorder %v4620, 1
          %vm4783 = vcmp.eq.s32.totalorder %v4623, 1
          %vm4784 = vcmp.eq.s32.totalorder %v4626, 1
          %vm4785 = vcmp.eq.s32.totalorder %v4629, 1
          %vm4786 = vcmp.eq.s32.totalorder %v4632, 1
          %vm4787 = vcmp.eq.s32.totalorder %v4635, 1
          %vm4788 = vcmp.eq.s32.totalorder %v4638, 1
          %vm4789 = vcmp.eq.s32.totalorder %v4641, 1
          %vm4790 = vcmp.eq.s32.totalorder %v4644, 1
          %vm4791 = vcmp.eq.s32.totalorder %v4647, 1
          %vm4792 = vcmp.eq.s32.totalorder %v4650, 1
          %vm4793 = vcmp.eq.s32.totalorder %v4653, 1
          %vm4794 = vcmp.eq.s32.totalorder %v4656, 1
          %vm4795 = vcmp.eq.s32.totalorder %v4659, 1
          %vm4796 = vcmp.eq.s32.totalorder %v4662, 1
          %vm4797 = vcmp.eq.s32.totalorder %v4665, 1
          %vm4798 = vcmp.eq.s32.totalorder %v4668, 1
          %vm4799 = vcmp.eq.s32.totalorder %v4671, 1
          %vm4800 = vcmp.eq.s32.totalorder %v4674, 1
          %vm4801 = vcmp.eq.s32.totalorder %v4677, 1
          %vm4802 = vcmp.eq.s32.totalorder %v4680, 1
          %vm4803 = vcmp.eq.s32.totalorder %v4683, 1
          %vm4804 = vcmp.eq.s32.totalorder %v4686, 1
          %vm4805 = vcmp.eq.s32.totalorder %v4689, 1
          %vm4806 = vcmp.eq.s32.totalorder %v4692, 1
          %vm4807 = vcmp.eq.s32.totalorder %v4695, 1
          %vm4808 = vcmp.eq.s32.totalorder %v4698, 1
          %vm4809 = vcmp.eq.s32.totalorder %v4701, 1
          %vm4810 = vcmp.eq.s32.totalorder %v4704, 1
          %vm4811 = vcmp.eq.s32.totalorder %v4707, 1
          %vm4812 = vcmp.eq.s32.totalorder %v4710, 1
          %vm4813 = vcmp.eq.s32.totalorder %v4713, 1
          %vm4814 = vcmp.eq.s32.totalorder %v4716, 1
          %vm4815 = vcmp.eq.s32.totalorder %v4719, 1
          %vm4816 = vcmp.eq.s32.totalorder %v4722, 1
          %vm4817 = vcmp.eq.s32.totalorder %v4725, 1
          %vm4818 = vcmp.eq.s32.totalorder %v4728, 1
          %vm4819 = vcmp.eq.s32.totalorder %v4731, 1
          %vm4820 = vcmp.eq.s32.totalorder %v4734, 1
          %vm4821 = vcmp.eq.s32.totalorder %v4737, 1
          %vm4822 = vcmp.eq.s32.totalorder %v4740, 1
          %vm4823 = vcmp.eq.s32.totalorder %v4743, 1
          %vm4824 = vcmp.eq.s32.totalorder %v4746, 1
          %vm4825 = vcmp.eq.s32.totalorder %v4749, 1
          %vm4826 = vcmp.eq.s32.totalorder %v4752, 1
          %vm4827 = vcmp.eq.s32.totalorder %v4755, 1
          %vm4828 = vcmp.eq.s32.totalorder %v4758, 1
          %vm4829 = vcmp.eq.s32.totalorder %v4761, 1
          %vm4830 = vcmp.eq.s32.totalorder %v4764, 1
          %vm4831 = vcmp.eq.s32.totalorder %v4767, 1
          %v4832 = vsel %vm4768, %v4448, %v4320
          %v4833 = vsel %vm4769, %v4449, %v4321
          %v4834 = vsel %vm4770, %v4450, %v4322
          %v4835 = vsel %vm4771, %v4451, %v4323
          %v4836 = vsel %vm4772, %v4452, %v4324
          %v4837 = vsel %vm4773, %v4453, %v4325
          %v4838 = vsel %vm4774, %v4454, %v4326
          %v4839 = vsel %vm4775, %v4455, %v4327
          %v4840 = vsel %vm4776, %v4456, %v4328
          %v4841 = vsel %vm4777, %v4457, %v4329
          %v4842 = vsel %vm4778, %v4458, %v4330
          %v4843 = vsel %vm4779, %v4459, %v4331
          %v4844 = vsel %vm4780, %v4460, %v4332
          %v4845 = vsel %vm4781, %v4461, %v4333
          %v4846 = vsel %vm4782, %v4462, %v4334
          %v4847 = vsel %vm4783, %v4463, %v4335
          %v4848 = vsel %vm4784, %v4464, %v4336
          %v4849 = vsel %vm4785, %v4465, %v4337
          %v4850 = vsel %vm4786, %v4466, %v4338
          %v4851 = vsel %vm4787, %v4467, %v4339
          %v4852 = vsel %vm4788, %v4468, %v4340
          %v4853 = vsel %vm4789, %v4469, %v4341
          %v4854 = vsel %vm4790, %v4470, %v4342
          %v4855 = vsel %vm4791, %v4471, %v4343
          %v4856 = vsel %vm4792, %v4472, %v4344
          %v4857 = vsel %vm4793, %v4473, %v4345
          %v4858 = vsel %vm4794, %v4474, %v4346
          %v4859 = vsel %vm4795, %v4475, %v4347
          %v4860 = vsel %vm4796, %v4476, %v4348
          %v4861 = vsel %vm4797, %v4477, %v4349
          %v4862 = vsel %vm4798, %v4478, %v4350
          %v4863 = vsel %vm4799, %v4479, %v4351
          %v4864 = vsel %vm4800, %v4480, %v4352
          %v4865 = vsel %vm4801, %v4481, %v4353
          %v4866 = vsel %vm4802, %v4482, %v4354
          %v4867 = vsel %vm4803, %v4483, %v4355
          %v4868 = vsel %vm4804, %v4484, %v4356
          %v4869 = vsel %vm4805, %v4485, %v4357
          %v4870 = vsel %vm4806, %v4486, %v4358
          %v4871 = vsel %vm4807, %v4487, %v4359
          %v4872 = vsel %vm4808, %v4488, %v4360
          %v4873 = vsel %vm4809, %v4489, %v4361
          %v4874 = vsel %vm4810, %v4490, %v4362
          %v4875 = vsel %vm4811, %v4491, %v4363
          %v4876 = vsel %vm4812, %v4492, %v4364
          %v4877 = vsel %vm4813, %v4493, %v4365
          %v4878 = vsel %vm4814, %v4494, %v4366
          %v4879 = vsel %vm4815, %v4495, %v4367
          %v4880 = vsel %vm4816, %v4496, %v4368
          %v4881 = vsel %vm4817, %v4497, %v4369
          %v4882 = vsel %vm4818, %v4498, %v4370
          %v4883 = vsel %vm4819, %v4499, %v4371
          %v4884 = vsel %vm4820, %v4500, %v4372
          %v4885 = vsel %vm4821, %v4501, %v4373
          %v4886 = vsel %vm4822, %v4502, %v4374
          %v4887 = vsel %vm4823, %v4503, %v4375
          %v4888 = vsel %vm4824, %v4504, %v4376
          %v4889 = vsel %vm4825, %v4505, %v4377
          %v4890 = vsel %vm4826, %v4506, %v4378
          %v4891 = vsel %vm4827, %v4507, %v4379
          %v4892 = vsel %vm4828, %v4508, %v4380
          %v4893 = vsel %vm4829, %v4509, %v4381
          %v4894 = vsel %vm4830, %v4510, %v4382
          %v4895 = vsel %vm4831, %v4511, %v4383
          %vm4896 = vcmp.eq.s32.totalorder %v457, %v409
          %vm4897 = vcmp.eq.s32.totalorder %v458, %v410
          %vm4898 = vcmp.eq.s32.totalorder %v459, %v411
          %vm4899 = vcmp.eq.s32.totalorder %v460, %v412
          %vm4900 = vcmp.eq.s32.totalorder %v461, %v413
          %vm4901 = vcmp.eq.s32.totalorder %v462, %v414
          %vm4902 = vcmp.eq.s32.totalorder %v463, %v415
          %vm4903 = vcmp.eq.s32.totalorder %v464, %v416
          %vm4904 = vcmp.eq.s32.totalorder %v465, %v417
          %vm4905 = vcmp.eq.s32.totalorder %v466, %v418
          %vm4906 = vcmp.eq.s32.totalorder %v467, %v419
          %vm4907 = vcmp.eq.s32.totalorder %v468, %v420
          %vm4908 = vcmp.eq.s32.totalorder %v469, %v421
          %vm4909 = vcmp.eq.s32.totalorder %v470, %v422
          %vm4910 = vcmp.eq.s32.totalorder %v471, %v423
          %vm4911 = vcmp.eq.s32.totalorder %v472, %v424
          %vm4912 = vcmp.eq.s32.totalorder %v409, %v425
          %vm4913 = vcmp.eq.s32.totalorder %v410, %v426
          %vm4914 = vcmp.eq.s32.totalorder %v411, %v427
          %vm4915 = vcmp.eq.s32.totalorder %v412, %v428
          %vm4916 = vcmp.eq.s32.totalorder %v413, %v429
          %vm4917 = vcmp.eq.s32.totalorder %v414, %v430
          %vm4918 = vcmp.eq.s32.totalorder %v415, %v431
          %vm4919 = vcmp.eq.s32.totalorder %v416, %v432
          %vm4920 = vcmp.eq.s32.totalorder %v417, %v433
          %vm4921 = vcmp.eq.s32.totalorder %v418, %v434
          %vm4922 = vcmp.eq.s32.totalorder %v419, %v435
          %vm4923 = vcmp.eq.s32.totalorder %v420, %v436
          %vm4924 = vcmp.eq.s32.totalorder %v421, %v437
          %vm4925 = vcmp.eq.s32.totalorder %v422, %v438
          %vm4926 = vcmp.eq.s32.totalorder %v423, %v439
          %vm4927 = vcmp.eq.s32.totalorder %v424, %v440
          %vm4928 = vcmp.eq.s32.totalorder %v425, %v441
          %vm4929 = vcmp.eq.s32.totalorder %v426, %v442
          %vm4930 = vcmp.eq.s32.totalorder %v427, %v443
          %vm4931 = vcmp.eq.s32.totalorder %v428, %v444
          %vm4932 = vcmp.eq.s32.totalorder %v429, %v445
          %vm4933 = vcmp.eq.s32.totalorder %v430, %v446
          %vm4934 = vcmp.eq.s32.totalorder %v431, %v447
          %vm4935 = vcmp.eq.s32.totalorder %v432, %v448
          %vm4936 = vcmp.eq.s32.totalorder %v433, %v449
          %vm4937 = vcmp.eq.s32.totalorder %v434, %v450
          %vm4938 = vcmp.eq.s32.totalorder %v435, %v451
          %vm4939 = vcmp.eq.s32.totalorder %v436, %v452
          %vm4940 = vcmp.eq.s32.totalorder %v437, %v453
          %vm4941 = vcmp.eq.s32.totalorder %v438, %v454
          %vm4942 = vcmp.eq.s32.totalorder %v439, %v455
          %vm4943 = vcmp.eq.s32.totalorder %v440, %v456
          %vm4944 = vcmp.eq.s32.totalorder %v441, %v457
          %vm4945 = vcmp.eq.s32.totalorder %v442, %v458
          %vm4946 = vcmp.eq.s32.totalorder %v443, %v459
          %vm4947 = vcmp.eq.s32.totalorder %v444, %v460
          %vm4948 = vcmp.eq.s32.totalorder %v445, %v461
          %vm4949 = vcmp.eq.s32.totalorder %v446, %v462
          %vm4950 = vcmp.eq.s32.totalorder %v447, %v463
          %vm4951 = vcmp.eq.s32.totalorder %v448, %v464
          %vm4952 = vcmp.eq.s32.totalorder %v449, %v465
          %vm4953 = vcmp.eq.s32.totalorder %v450, %v466
          %vm4954 = vcmp.eq.s32.totalorder %v451, %v467
          %vm4955 = vcmp.eq.s32.totalorder %v452, %v468
          %vm4956 = vcmp.eq.s32.totalorder %v453, %v469
          %vm4957 = vcmp.eq.s32.totalorder %v454, %v470
          %vm4958 = vcmp.eq.s32.totalorder %v455, %v471
          %vm4959 = vcmp.eq.s32.totalorder %v456, %v472
          %v4960 = vmax.f32 %v4832, %v4880
          %v4961 = vmax.f32 %v4833, %v4881
          %v4962 = vmax.f32 %v4834, %v4882
          %v4963 = vmax.f32 %v4835, %v4883
          %v4964 = vmax.f32 %v4836, %v4884
          %v4965 = vmax.f32 %v4837, %v4885
          %v4966 = vmax.f32 %v4838, %v4886
          %v4967 = vmax.f32 %v4839, %v4887
          %v4968 = vmax.f32 %v4840, %v4888
          %v4969 = vmax.f32 %v4841, %v4889
          %v4970 = vmax.f32 %v4842, %v4890
          %v4971 = vmax.f32 %v4843, %v4891
          %v4972 = vmax.f32 %v4844, %v4892
          %v4973 = vmax.f32 %v4845, %v4893
          %v4974 = vmax.f32 %v4846, %v4894
          %v4975 = vmax.f32 %v4847, %v4895
          %v4976 = vmax.f32 %v4848, %v4832
          %v4977 = vmax.f32 %v4849, %v4833
          %v4978 = vmax.f32 %v4850, %v4834
          %v4979 = vmax.f32 %v4851, %v4835
          %v4980 = vmax.f32 %v4852, %v4836
          %v4981 = vmax.f32 %v4853, %v4837
          %v4982 = vmax.f32 %v4854, %v4838
          %v4983 = vmax.f32 %v4855, %v4839
          %v4984 = vmax.f32 %v4856, %v4840
          %v4985 = vmax.f32 %v4857, %v4841
          %v4986 = vmax.f32 %v4858, %v4842
          %v4987 = vmax.f32 %v4859, %v4843
          %v4988 = vmax.f32 %v4860, %v4844
          %v4989 = vmax.f32 %v4861, %v4845
          %v4990 = vmax.f32 %v4862, %v4846
          %v4991 = vmax.f32 %v4863, %v4847
          %v4992 = vmax.f32 %v4864, %v4848
          %v4993 = vmax.f32 %v4865, %v4849
          %v4994 = vmax.f32 %v4866, %v4850
          %v4995 = vmax.f32 %v4867, %v4851
          %v4996 = vmax.f32 %v4868, %v4852
          %v4997 = vmax.f32 %v4869, %v4853
          %v4998 = vmax.f32 %v4870, %v4854
          %v4999 = vmax.f32 %v4871, %v4855
          %v5000 = vmax.f32 %v4872, %v4856
          %v5001 = vmax.f32 %v4873, %v4857
          %v5002 = vmax.f32 %v4874, %v4858
          %v5003 = vmax.f32 %v4875, %v4859
          %v5004 = vmax.f32 %v4876, %v4860
          %v5005 = vmax.f32 %v4877, %v4861
          %v5006 = vmax.f32 %v4878, %v4862
          %v5007 = vmax.f32 %v4879, %v4863
          %v5008 = vmax.f32 %v4880, %v4864
          %v5009 = vmax.f32 %v4881, %v4865
          %v5010 = vmax.f32 %v4882, %v4866
          %v5011 = vmax.f32 %v4883, %v4867
          %v5012 = vmax.f32 %v4884, %v4868
          %v5013 = vmax.f32 %v4885, %v4869
          %v5014 = vmax.f32 %v4886, %v4870
          %v5015 = vmax.f32 %v4887, %v4871
          %v5016 = vmax.f32 %v4888, %v4872
          %v5017 = vmax.f32 %v4889, %v4873
          %v5018 = vmax.f32 %v4890, %v4874
          %v5019 = vmax.f32 %v4891, %v4875
          %v5020 = vmax.f32 %v4892, %v4876
          %v5021 = vmax.f32 %v4893, %v4877
          %v5022 = vmax.f32 %v4894, %v4878
          %v5023 = vmax.f32 %v4895, %v4879
          %v5024 = vsel %vm4896, 1, 0
          %v5025 = vsel %vm4897, 1, 0
          %v5026 = vsel %vm4898, 1, 0
          %v5027 = vsel %vm4899, 1, 0
          %v5028 = vsel %vm4900, 1, 0
          %v5029 = vsel %vm4901, 1, 0
          %v5030 = vsel %vm4902, 1, 0
          %v5031 = vsel %vm4903, 1, 0
          %v5032 = vsel %vm4904, 1, 0
          %v5033 = vsel %vm4905, 1, 0
          %v5034 = vsel %vm4906, 1, 0
          %v5035 = vsel %vm4907, 1, 0
          %v5036 = vsel %vm4908, 1, 0
          %v5037 = vsel %vm4909, 1, 0
          %v5038 = vsel %vm4910, 1, 0
          %v5039 = vsel %vm4911, 1, 0
          %v5040 = vsel %vm4912, 1, 0
          %v5041 = vsel %vm4913, 1, 0
          %v5042 = vsel %vm4914, 1, 0
          %v5043 = vsel %vm4915, 1, 0
          %v5044 = vsel %vm4916, 1, 0
          %v5045 = vsel %vm4917, 1, 0
          %v5046 = vsel %vm4918, 1, 0
          %v5047 = vsel %vm4919, 1, 0
          %v5048 = vsel %vm4920, 1, 0
          %v5049 = vsel %vm4921, 1, 0
          %v5050 = vsel %vm4922, 1, 0
          %v5051 = vsel %vm4923, 1, 0
          %v5052 = vsel %vm4924, 1, 0
          %v5053 = vsel %vm4925, 1, 0
          %v5054 = vsel %vm4926, 1, 0
          %v5055 = vsel %vm4927, 1, 0
          %v5056 = vsel %vm4928, 1, 0
          %v5057 = vsel %vm4929, 1, 0
          %v5058 = vsel %vm4930, 1, 0
          %v5059 = vsel %vm4931, 1, 0
          %v5060 = vsel %vm4932, 1, 0
          %v5061 = vsel %vm4933, 1, 0
          %v5062 = vsel %vm4934, 1, 0
          %v5063 = vsel %vm4935, 1, 0
          %v5064 = vsel %vm4936, 1, 0
          %v5065 = vsel %vm4937, 1, 0
          %v5066 = vsel %vm4938, 1, 0
          %v5067 = vsel %vm4939, 1, 0
          %v5068 = vsel %vm4940, 1, 0
          %v5069 = vsel %vm4941, 1, 0
          %v5070 = vsel %vm4942, 1, 0
          %v5071 = vsel %vm4943, 1, 0
          %v5072 = vsel %vm4944, 1, 0
          %v5073 = vsel %vm4945, 1, 0
          %v5074 = vsel %vm4946, 1, 0
          %v5075 = vsel %vm4947, 1, 0
          %v5076 = vsel %vm4948, 1, 0
          %v5077 = vsel %vm4949, 1, 0
          %v5078 = vsel %vm4950, 1, 0
          %v5079 = vsel %vm4951, 1, 0
          %v5080 = vsel %vm4952, 1, 0
          %v5081 = vsel %vm4953, 1, 0
          %v5082 = vsel %vm4954, 1, 0
          %v5083 = vsel %vm4955, 1, 0
          %v5084 = vsel %vm4956, 1, 0
          %v5085 = vsel %vm4957, 1, 0
          %v5086 = vsel %vm4958, 1, 0
          %v5087 = vsel %vm4959, 1, 0
          %5088 = vset.pattern.permute.xlu0 0
          %5089 = vperm.xlu0 %5088, %v5024
          %v5090 = vpop.permute.xlu0 %5089
          %5091 = vset.pattern.permute.xlu0 0
          %5092 = vperm.xlu0 %5091, %v5025
          %v5093 = vpop.permute.xlu0 %5092
          %5094 = vset.pattern.permute.xlu0 0
          %5095 = vperm.xlu0 %5094, %v5026
          %v5096 = vpop.permute.xlu0 %5095
          %5097 = vset.pattern.permute.xlu0 0
          %5098 = vperm.xlu0 %5097, %v5027
          %v5099 = vpop.permute.xlu0 %5098
          %5100 = vset.pattern.permute.xlu0 0
          %5101 = vperm.xlu0 %5100, %v5028
          %v5102 = vpop.permute.xlu0 %5101
          %5103 = vset.pattern.permute.xlu0 0
          %5104 = vperm.xlu0 %5103, %v5029
          %v5105 = vpop.permute.xlu0 %5104
          %5106 = vset.pattern.permute.xlu0 0
          %5107 = vperm.xlu0 %5106, %v5030
          %v5108 = vpop.permute.xlu0 %5107
          %5109 = vset.pattern.permute.xlu0 0
          %5110 = vperm.xlu0 %5109, %v5031
          %v5111 = vpop.permute.xlu0 %5110
          %5112 = vset.pattern.permute.xlu0 0
          %5113 = vperm.xlu0 %5112, %v5032
          %v5114 = vpop.permute.xlu0 %5113
          %5115 = vset.pattern.permute.xlu0 0
          %5116 = vperm.xlu0 %5115, %v5033
          %v5117 = vpop.permute.xlu0 %5116
          %5118 = vset.pattern.permute.xlu0 0
          %5119 = vperm.xlu0 %5118, %v5034
          %v5120 = vpop.permute.xlu0 %5119
          %5121 = vset.pattern.permute.xlu0 0
          %5122 = vperm.xlu0 %5121, %v5035
          %v5123 = vpop.permute.xlu0 %5122
          %5124 = vset.pattern.permute.xlu0 0
          %5125 = vperm.xlu0 %5124, %v5036
          %v5126 = vpop.permute.xlu0 %5125
          %5127 = vset.pattern.permute.xlu0 0
          %5128 = vperm.xlu0 %5127, %v5037
          %v5129 = vpop.permute.xlu0 %5128
          %5130 = vset.pattern.permute.xlu0 0
          %5131 = vperm.xlu0 %5130, %v5038
          %v5132 = vpop.permute.xlu0 %5131
          %5133 = vset.pattern.permute.xlu0 0
          %5134 = vperm.xlu0 %5133, %v5039
          %v5135 = vpop.permute.xlu0 %5134
          %5136 = vset.pattern.permute.xlu0 0
          %5137 = vperm.xlu0 %5136, %v5040
          %v5138 = vpop.permute.xlu0 %5137
          %5139 = vset.pattern.permute.xlu0 0
          %5140 = vperm.xlu0 %5139, %v5041
          %v5141 = vpop.permute.xlu0 %5140
          %5142 = vset.pattern.permute.xlu0 0
          %5143 = vperm.xlu0 %5142, %v5042
          %v5144 = vpop.permute.xlu0 %5143
          %5145 = vset.pattern.permute.xlu0 0
          %5146 = vperm.xlu0 %5145, %v5043
          %v5147 = vpop.permute.xlu0 %5146
          %5148 = vset.pattern.permute.xlu0 0
          %5149 = vperm.xlu0 %5148, %v5044
          %v5150 = vpop.permute.xlu0 %5149
          %5151 = vset.pattern.permute.xlu0 0
          %5152 = vperm.xlu0 %5151, %v5045
          %v5153 = vpop.permute.xlu0 %5152
          %5154 = vset.pattern.permute.xlu0 0
          %5155 = vperm.xlu0 %5154, %v5046
          %v5156 = vpop.permute.xlu0 %5155
          %5157 = vset.pattern.permute.xlu0 0
          %5158 = vperm.xlu0 %5157, %v5047
          %v5159 = vpop.permute.xlu0 %5158
          %5160 = vset.pattern.permute.xlu0 0
          %5161 = vperm.xlu0 %5160, %v5048
          %v5162 = vpop.permute.xlu0 %5161
          %5163 = vset.pattern.permute.xlu0 0
          %5164 = vperm.xlu0 %5163, %v5049
          %v5165 = vpop.permute.xlu0 %5164
          %5166 = vset.pattern.permute.xlu0 0
          %5167 = vperm.xlu0 %5166, %v5050
          %v5168 = vpop.permute.xlu0 %5167
          %5169 = vset.pattern.permute.xlu0 0
          %5170 = vperm.xlu0 %5169, %v5051
          %v5171 = vpop.permute.xlu0 %5170
          %5172 = vset.pattern.permute.xlu0 0
          %5173 = vperm.xlu0 %5172, %v5052
          %v5174 = vpop.permute.xlu0 %5173
          %5175 = vset.pattern.permute.xlu0 0
          %5176 = vperm.xlu0 %5175, %v5053
          %v5177 = vpop.permute.xlu0 %5176
          %5178 = vset.pattern.permute.xlu0 0
          %5179 = vperm.xlu0 %5178, %v5054
          %v5180 = vpop.permute.xlu0 %5179
          %5181 = vset.pattern.permute.xlu0 0
          %5182 = vperm.xlu0 %5181, %v5055
          %v5183 = vpop.permute.xlu0 %5182
          %5184 = vset.pattern.permute.xlu0 0
          %5185 = vperm.xlu0 %5184, %v5056
          %v5186 = vpop.permute.xlu0 %5185
          %5187 = vset.pattern.permute.xlu0 0
          %5188 = vperm.xlu0 %5187, %v5057
          %v5189 = vpop.permute.xlu0 %5188
          %5190 = vset.pattern.permute.xlu0 0
          %5191 = vperm.xlu0 %5190, %v5058
          %v5192 = vpop.permute.xlu0 %5191
          %5193 = vset.pattern.permute.xlu0 0
          %5194 = vperm.xlu0 %5193, %v5059
          %v5195 = vpop.permute.xlu0 %5194
          %5196 = vset.pattern.permute.xlu0 0
          %5197 = vperm.xlu0 %5196, %v5060
          %v5198 = vpop.permute.xlu0 %5197
          %5199 = vset.pattern.permute.xlu0 0
          %5200 = vperm.xlu0 %5199, %v5061
          %v5201 = vpop.permute.xlu0 %5200
          %5202 = vset.pattern.permute.xlu0 0
          %5203 = vperm.xlu0 %5202, %v5062
          %v5204 = vpop.permute.xlu0 %5203
          %5205 = vset.pattern.permute.xlu0 0
          %5206 = vperm.xlu0 %5205, %v5063
          %v5207 = vpop.permute.xlu0 %5206
          %5208 = vset.pattern.permute.xlu0 0
          %5209 = vperm.xlu0 %5208, %v5064
          %v5210 = vpop.permute.xlu0 %5209
          %5211 = vset.pattern.permute.xlu0 0
          %5212 = vperm.xlu0 %5211, %v5065
          %v5213 = vpop.permute.xlu0 %5212
          %5214 = vset.pattern.permute.xlu0 0
          %5215 = vperm.xlu0 %5214, %v5066
          %v5216 = vpop.permute.xlu0 %5215
          %5217 = vset.pattern.permute.xlu0 0
          %5218 = vperm.xlu0 %5217, %v5067
          %v5219 = vpop.permute.xlu0 %5218
          %5220 = vset.pattern.permute.xlu0 0
          %5221 = vperm.xlu0 %5220, %v5068
          %v5222 = vpop.permute.xlu0 %5221
          %5223 = vset.pattern.permute.xlu0 0
          %5224 = vperm.xlu0 %5223, %v5069
          %v5225 = vpop.permute.xlu0 %5224
          %5226 = vset.pattern.permute.xlu0 0
          %5227 = vperm.xlu0 %5226, %v5070
          %v5228 = vpop.permute.xlu0 %5227
          %5229 = vset.pattern.permute.xlu0 0
          %5230 = vperm.xlu0 %5229, %v5071
          %v5231 = vpop.permute.xlu0 %5230
          %5232 = vset.pattern.permute.xlu0 0
          %5233 = vperm.xlu0 %5232, %v5072
          %v5234 = vpop.permute.xlu0 %5233
          %5235 = vset.pattern.permute.xlu0 0
          %5236 = vperm.xlu0 %5235, %v5073
          %v5237 = vpop.permute.xlu0 %5236
          %5238 = vset.pattern.permute.xlu0 0
          %5239 = vperm.xlu0 %5238, %v5074
          %v5240 = vpop.permute.xlu0 %5239
          %5241 = vset.pattern.permute.xlu0 0
          %5242 = vperm.xlu0 %5241, %v5075
          %v5243 = vpop.permute.xlu0 %5242
          %5244 = vset.pattern.permute.xlu0 0
          %5245 = vperm.xlu0 %5244, %v5076
          %v5246 = vpop.permute.xlu0 %5245
          %5247 = vset.pattern.permute.xlu0 0
          %5248 = vperm.xlu0 %5247, %v5077
          %v5249 = vpop.permute.xlu0 %5248
          %5250 = vset.pattern.permute.xlu0 0
          %5251 = vperm.xlu0 %5250, %v5078
          %v5252 = vpop.permute.xlu0 %5251
          %5253 = vset.pattern.permute.xlu0 0
          %5254 = vperm.xlu0 %5253, %v5079
          %v5255 = vpop.permute.xlu0 %5254
          %5256 = vset.pattern.permute.xlu0 0
          %5257 = vperm.xlu0 %5256, %v5080
          %v5258 = vpop.permute.xlu0 %5257
          %5259 = vset.pattern.permute.xlu0 0
          %5260 = vperm.xlu0 %5259, %v5081
          %v5261 = vpop.permute.xlu0 %5260
          %5262 = vset.pattern.permute.xlu0 0
          %5263 = vperm.xlu0 %5262, %v5082
          %v5264 = vpop.permute.xlu0 %5263
          %5265 = vset.pattern.permute.xlu0 0
          %5266 = vperm.xlu0 %5265, %v5083
          %v5267 = vpop.permute.xlu0 %5266
          %5268 = vset.pattern.permute.xlu0 0
          %5269 = vperm.xlu0 %5268, %v5084
          %v5270 = vpop.permute.xlu0 %5269
          %5271 = vset.pattern.permute.xlu0 0
          %5272 = vperm.xlu0 %5271, %v5085
          %v5273 = vpop.permute.xlu0 %5272
          %5274 = vset.pattern.permute.xlu0 0
          %5275 = vperm.xlu0 %5274, %v5086
          %v5276 = vpop.permute.xlu0 %5275
          %5277 = vset.pattern.permute.xlu0 0
          %5278 = vperm.xlu0 %5277, %v5087
          %v5279 = vpop.permute.xlu0 %5278
          %vm5280 = vcmp.eq.s32.totalorder %v5090, 1
          %vm5281 = vcmp.eq.s32.totalorder %v5093, 1
          %vm5282 = vcmp.eq.s32.totalorder %v5096, 1
          %vm5283 = vcmp.eq.s32.totalorder %v5099, 1
          %vm5284 = vcmp.eq.s32.totalorder %v5102, 1
          %vm5285 = vcmp.eq.s32.totalorder %v5105, 1
          %vm5286 = vcmp.eq.s32.totalorder %v5108, 1
          %vm5287 = vcmp.eq.s32.totalorder %v5111, 1
          %vm5288 = vcmp.eq.s32.totalorder %v5114, 1
          %vm5289 = vcmp.eq.s32.totalorder %v5117, 1
          %vm5290 = vcmp.eq.s32.totalorder %v5120, 1
          %vm5291 = vcmp.eq.s32.totalorder %v5123, 1
          %vm5292 = vcmp.eq.s32.totalorder %v5126, 1
          %vm5293 = vcmp.eq.s32.totalorder %v5129, 1
          %vm5294 = vcmp.eq.s32.totalorder %v5132, 1
          %vm5295 = vcmp.eq.s32.totalorder %v5135, 1
          %vm5296 = vcmp.eq.s32.totalorder %v5138, 1
          %vm5297 = vcmp.eq.s32.totalorder %v5141, 1
          %vm5298 = vcmp.eq.s32.totalorder %v5144, 1
          %vm5299 = vcmp.eq.s32.totalorder %v5147, 1
          %vm5300 = vcmp.eq.s32.totalorder %v5150, 1
          %vm5301 = vcmp.eq.s32.totalorder %v5153, 1
          %vm5302 = vcmp.eq.s32.totalorder %v5156, 1
          %vm5303 = vcmp.eq.s32.totalorder %v5159, 1
          %vm5304 = vcmp.eq.s32.totalorder %v5162, 1
          %vm5305 = vcmp.eq.s32.totalorder %v5165, 1
          %vm5306 = vcmp.eq.s32.totalorder %v5168, 1
          %vm5307 = vcmp.eq.s32.totalorder %v5171, 1
          %vm5308 = vcmp.eq.s32.totalorder %v5174, 1
          %vm5309 = vcmp.eq.s32.totalorder %v5177, 1
          %vm5310 = vcmp.eq.s32.totalorder %v5180, 1
          %vm5311 = vcmp.eq.s32.totalorder %v5183, 1
          %vm5312 = vcmp.eq.s32.totalorder %v5186, 1
          %vm5313 = vcmp.eq.s32.totalorder %v5189, 1
          %vm5314 = vcmp.eq.s32.totalorder %v5192, 1
          %vm5315 = vcmp.eq.s32.totalorder %v5195, 1
          %vm5316 = vcmp.eq.s32.totalorder %v5198, 1
          %vm5317 = vcmp.eq.s32.totalorder %v5201, 1
          %vm5318 = vcmp.eq.s32.totalorder %v5204, 1
          %vm5319 = vcmp.eq.s32.totalorder %v5207, 1
          %vm5320 = vcmp.eq.s32.totalorder %v5210, 1
          %vm5321 = vcmp.eq.s32.totalorder %v5213, 1
          %vm5322 = vcmp.eq.s32.totalorder %v5216, 1
          %vm5323 = vcmp.eq.s32.totalorder %v5219, 1
          %vm5324 = vcmp.eq.s32.totalorder %v5222, 1
          %vm5325 = vcmp.eq.s32.totalorder %v5225, 1
          %vm5326 = vcmp.eq.s32.totalorder %v5228, 1
          %vm5327 = vcmp.eq.s32.totalorder %v5231, 1
          %vm5328 = vcmp.eq.s32.totalorder %v5234, 1
          %vm5329 = vcmp.eq.s32.totalorder %v5237, 1
          %vm5330 = vcmp.eq.s32.totalorder %v5240, 1
          %vm5331 = vcmp.eq.s32.totalorder %v5243, 1
          %vm5332 = vcmp.eq.s32.totalorder %v5246, 1
          %vm5333 = vcmp.eq.s32.totalorder %v5249, 1
          %vm5334 = vcmp.eq.s32.totalorder %v5252, 1
          %vm5335 = vcmp.eq.s32.totalorder %v5255, 1
          %vm5336 = vcmp.eq.s32.totalorder %v5258, 1
          %vm5337 = vcmp.eq.s32.totalorder %v5261, 1
          %vm5338 = vcmp.eq.s32.totalorder %v5264, 1
          %vm5339 = vcmp.eq.s32.totalorder %v5267, 1
          %vm5340 = vcmp.eq.s32.totalorder %v5270, 1
          %vm5341 = vcmp.eq.s32.totalorder %v5273, 1
          %vm5342 = vcmp.eq.s32.totalorder %v5276, 1
          %vm5343 = vcmp.eq.s32.totalorder %v5279, 1
          %v5344 = vsel %vm5280, %v4960, %v4832
          %v5345 = vsel %vm5281, %v4961, %v4833
          %v5346 = vsel %vm5282, %v4962, %v4834
          %v5347 = vsel %vm5283, %v4963, %v4835
          %v5348 = vsel %vm5284, %v4964, %v4836
          %v5349 = vsel %vm5285, %v4965, %v4837
          %v5350 = vsel %vm5286, %v4966, %v4838
          %v5351 = vsel %vm5287, %v4967, %v4839
          %v5352 = vsel %vm5288, %v4968, %v4840
          %v5353 = vsel %vm5289, %v4969, %v4841
          %v5354 = vsel %vm5290, %v4970, %v4842
          %v5355 = vsel %vm5291, %v4971, %v4843
          %v5356 = vsel %vm5292, %v4972, %v4844
          %v5357 = vsel %vm5293, %v4973, %v4845
          %v5358 = vsel %vm5294, %v4974, %v4846
          %v5359 = vsel %vm5295, %v4975, %v4847
          %v5360 = vsel %vm5296, %v4976, %v4848
          %v5361 = vsel %vm5297, %v4977, %v4849
          %v5362 = vsel %vm5298, %v4978, %v4850
          %v5363 = vsel %vm5299, %v4979, %v4851
          %v5364 = vsel %vm5300, %v4980, %v4852
          %v5365 = vsel %vm5301, %v4981, %v4853
          %v5366 = vsel %vm5302, %v4982, %v4854
          %v5367 = vsel %vm5303, %v4983, %v4855
          %v5368 = vsel %vm5304, %v4984, %v4856
          %v5369 = vsel %vm5305, %v4985, %v4857
          %v5370 = vsel %vm5306, %v4986, %v4858
          %v5371 = vsel %vm5307, %v4987, %v4859
          %v5372 = vsel %vm5308, %v4988, %v4860
          %v5373 = vsel %vm5309, %v4989, %v4861
          %v5374 = vsel %vm5310, %v4990, %v4862
          %v5375 = vsel %vm5311, %v4991, %v4863
          %v5376 = vsel %vm5312, %v4992, %v4864
          %v5377 = vsel %vm5313, %v4993, %v4865
          %v5378 = vsel %vm5314, %v4994, %v4866
          %v5379 = vsel %vm5315, %v4995, %v4867
          %v5380 = vsel %vm5316, %v4996, %v4868
          %v5381 = vsel %vm5317, %v4997, %v4869
          %v5382 = vsel %vm5318, %v4998, %v4870
          %v5383 = vsel %vm5319, %v4999, %v4871
          %v5384 = vsel %vm5320, %v5000, %v4872
          %v5385 = vsel %vm5321, %v5001, %v4873
          %v5386 = vsel %vm5322, %v5002, %v4874
          %v5387 = vsel %vm5323, %v5003, %v4875
          %v5388 = vsel %vm5324, %v5004, %v4876
          %v5389 = vsel %vm5325, %v5005, %v4877
          %v5390 = vsel %vm5326, %v5006, %v4878
          %v5391 = vsel %vm5327, %v5007, %v4879
          %v5392 = vsel %vm5328, %v5008, %v4880
          %v5393 = vsel %vm5329, %v5009, %v4881
          %v5394 = vsel %vm5330, %v5010, %v4882
          %v5395 = vsel %vm5331, %v5011, %v4883
          %v5396 = vsel %vm5332, %v5012, %v4884
          %v5397 = vsel %vm5333, %v5013, %v4885
          %v5398 = vsel %vm5334, %v5014, %v4886
          %v5399 = vsel %vm5335, %v5015, %v4887
          %v5400 = vsel %vm5336, %v5016, %v4888
          %v5401 = vsel %vm5337, %v5017, %v4889
          %v5402 = vsel %vm5338, %v5018, %v4890
          %v5403 = vsel %vm5339, %v5019, %v4891
          %v5404 = vsel %vm5340, %v5020, %v4892
          %v5405 = vsel %vm5341, %v5021, %v4893
          %v5406 = vsel %vm5342, %v5022, %v4894
          %v5407 = vsel %vm5343, %v5023, %v4895
          %vm5408 = vcmp.eq.s32.totalorder %v441, %v409
          %vm5409 = vcmp.eq.s32.totalorder %v442, %v410
          %vm5410 = vcmp.eq.s32.totalorder %v443, %v411
          %vm5411 = vcmp.eq.s32.totalorder %v444, %v412
          %vm5412 = vcmp.eq.s32.totalorder %v445, %v413
          %vm5413 = vcmp.eq.s32.totalorder %v446, %v414
          %vm5414 = vcmp.eq.s32.totalorder %v447, %v415
          %vm5415 = vcmp.eq.s32.totalorder %v448, %v416
          %vm5416 = vcmp.eq.s32.totalorder %v449, %v417
          %vm5417 = vcmp.eq.s32.totalorder %v450, %v418
          %vm5418 = vcmp.eq.s32.totalorder %v451, %v419
          %vm5419 = vcmp.eq.s32.totalorder %v452, %v420
          %vm5420 = vcmp.eq.s32.totalorder %v453, %v421
          %vm5421 = vcmp.eq.s32.totalorder %v454, %v422
          %vm5422 = vcmp.eq.s32.totalorder %v455, %v423
          %vm5423 = vcmp.eq.s32.totalorder %v456, %v424
          %vm5424 = vcmp.eq.s32.totalorder %v457, %v425
          %vm5425 = vcmp.eq.s32.totalorder %v458, %v426
          %vm5426 = vcmp.eq.s32.totalorder %v459, %v427
          %vm5427 = vcmp.eq.s32.totalorder %v460, %v428
          %vm5428 = vcmp.eq.s32.totalorder %v461, %v429
          %vm5429 = vcmp.eq.s32.totalorder %v462, %v430
          %vm5430 = vcmp.eq.s32.totalorder %v463, %v431
          %vm5431 = vcmp.eq.s32.totalorder %v464, %v432
          %vm5432 = vcmp.eq.s32.totalorder %v465, %v433
          %vm5433 = vcmp.eq.s32.totalorder %v466, %v434
          %vm5434 = vcmp.eq.s32.totalorder %v467, %v435
          %vm5435 = vcmp.eq.s32.totalorder %v468, %v436
          %vm5436 = vcmp.eq.s32.totalorder %v469, %v437
          %vm5437 = vcmp.eq.s32.totalorder %v470, %v438
          %vm5438 = vcmp.eq.s32.totalorder %v471, %v439
          %vm5439 = vcmp.eq.s32.totalorder %v472, %v440
          %vm5440 = vcmp.eq.s32.totalorder %v409, %v441
          %vm5441 = vcmp.eq.s32.totalorder %v410, %v442
          %vm5442 = vcmp.eq.s32.totalorder %v411, %v443
          %vm5443 = vcmp.eq.s32.totalorder %v412, %v444
          %vm5444 = vcmp.eq.s32.totalorder %v413, %v445
          %vm5445 = vcmp.eq.s32.totalorder %v414, %v446
          %vm5446 = vcmp.eq.s32.totalorder %v415, %v447
          %vm5447 = vcmp.eq.s32.totalorder %v416, %v448
          %vm5448 = vcmp.eq.s32.totalorder %v417, %v449
          %vm5449 = vcmp.eq.s32.totalorder %v418, %v450
          %vm5450 = vcmp.eq.s32.totalorder %v419, %v451
          %vm5451 = vcmp.eq.s32.totalorder %v420, %v452
          %vm5452 = vcmp.eq.s32.totalorder %v421, %v453
          %vm5453 = vcmp.eq.s32.totalorder %v422, %v454
          %vm5454 = vcmp.eq.s32.totalorder %v423, %v455
          %vm5455 = vcmp.eq.s32.totalorder %v424, %v456
          %vm5456 = vcmp.eq.s32.totalorder %v425, %v457
          %vm5457 = vcmp.eq.s32.totalorder %v426, %v458
          %vm5458 = vcmp.eq.s32.totalorder %v427, %v459
          %vm5459 = vcmp.eq.s32.totalorder %v428, %v460
          %vm5460 = vcmp.eq.s32.totalorder %v429, %v461
          %vm5461 = vcmp.eq.s32.totalorder %v430, %v462
          %vm5462 = vcmp.eq.s32.totalorder %v431, %v463
          %vm5463 = vcmp.eq.s32.totalorder %v432, %v464
          %vm5464 = vcmp.eq.s32.totalorder %v433, %v465
          %vm5465 = vcmp.eq.s32.totalorder %v434, %v466
          %vm5466 = vcmp.eq.s32.totalorder %v435, %v467
          %vm5467 = vcmp.eq.s32.totalorder %v436, %v468
          %vm5468 = vcmp.eq.s32.totalorder %v437, %v469
          %vm5469 = vcmp.eq.s32.totalorder %v438, %v470
          %vm5470 = vcmp.eq.s32.totalorder %v439, %v471
          %vm5471 = vcmp.eq.s32.totalorder %v440, %v472
          %v5472 = vmax.f32 %v5344, %v5376
          %v5473 = vmax.f32 %v5345, %v5377
          %v5474 = vmax.f32 %v5346, %v5378
          %v5475 = vmax.f32 %v5347, %v5379
          %v5476 = vmax.f32 %v5348, %v5380
          %v5477 = vmax.f32 %v5349, %v5381
          %v5478 = vmax.f32 %v5350, %v5382
          %v5479 = vmax.f32 %v5351, %v5383
          %v5480 = vmax.f32 %v5352, %v5384
          %v5481 = vmax.f32 %v5353, %v5385
          %v5482 = vmax.f32 %v5354, %v5386
          %v5483 = vmax.f32 %v5355, %v5387
          %v5484 = vmax.f32 %v5356, %v5388
          %v5485 = vmax.f32 %v5357, %v5389
          %v5486 = vmax.f32 %v5358, %v5390
          %v5487 = vmax.f32 %v5359, %v5391
          %v5488 = vmax.f32 %v5360, %v5392
          %v5489 = vmax.f32 %v5361, %v5393
          %v5490 = vmax.f32 %v5362, %v5394
          %v5491 = vmax.f32 %v5363, %v5395
          %v5492 = vmax.f32 %v5364, %v5396
          %v5493 = vmax.f32 %v5365, %v5397
          %v5494 = vmax.f32 %v5366, %v5398
          %v5495 = vmax.f32 %v5367, %v5399
          %v5496 = vmax.f32 %v5368, %v5400
          %v5497 = vmax.f32 %v5369, %v5401
          %v5498 = vmax.f32 %v5370, %v5402
          %v5499 = vmax.f32 %v5371, %v5403
          %v5500 = vmax.f32 %v5372, %v5404
          %v5501 = vmax.f32 %v5373, %v5405
          %v5502 = vmax.f32 %v5374, %v5406
          %v5503 = vmax.f32 %v5375, %v5407
          %v5504 = vsel %vm5408, 1, 0
          %v5505 = vsel %vm5409, 1, 0
          %v5506 = vsel %vm5410, 1, 0
          %v5507 = vsel %vm5411, 1, 0
          %v5508 = vsel %vm5412, 1, 0
          %v5509 = vsel %vm5413, 1, 0
          %v5510 = vsel %vm5414, 1, 0
          %v5511 = vsel %vm5415, 1, 0
          %v5512 = vsel %vm5416, 1, 0
          %v5513 = vsel %vm5417, 1, 0
          %v5514 = vsel %vm5418, 1, 0
          %v5515 = vsel %vm5419, 1, 0
          %v5516 = vsel %vm5420, 1, 0
          %v5517 = vsel %vm5421, 1, 0
          %v5518 = vsel %vm5422, 1, 0
          %v5519 = vsel %vm5423, 1, 0
          %v5520 = vsel %vm5424, 1, 0
          %v5521 = vsel %vm5425, 1, 0
          %v5522 = vsel %vm5426, 1, 0
          %v5523 = vsel %vm5427, 1, 0
          %v5524 = vsel %vm5428, 1, 0
          %v5525 = vsel %vm5429, 1, 0
          %v5526 = vsel %vm5430, 1, 0
          %v5527 = vsel %vm5431, 1, 0
          %v5528 = vsel %vm5432, 1, 0
          %v5529 = vsel %vm5433, 1, 0
          %v5530 = vsel %vm5434, 1, 0
          %v5531 = vsel %vm5435, 1, 0
          %v5532 = vsel %vm5436, 1, 0
          %v5533 = vsel %vm5437, 1, 0
          %v5534 = vsel %vm5438, 1, 0
          %v5535 = vsel %vm5439, 1, 0
          %v5536 = vsel %vm5440, 1, 0
          %v5537 = vsel %vm5441, 1, 0
          %v5538 = vsel %vm5442, 1, 0
          %v5539 = vsel %vm5443, 1, 0
          %v5540 = vsel %vm5444, 1, 0
          %v5541 = vsel %vm5445, 1, 0
          %v5542 = vsel %vm5446, 1, 0
          %v5543 = vsel %vm5447, 1, 0
          %v5544 = vsel %vm5448, 1, 0
          %v5545 = vsel %vm5449, 1, 0
          %v5546 = vsel %vm5450, 1, 0
          %v5547 = vsel %vm5451, 1, 0
          %v5548 = vsel %vm5452, 1, 0
          %v5549 = vsel %vm5453, 1, 0
          %v5550 = vsel %vm5454, 1, 0
          %v5551 = vsel %vm5455, 1, 0
          %v5552 = vsel %vm5456, 1, 0
          %v5553 = vsel %vm5457, 1, 0
          %v5554 = vsel %vm5458, 1, 0
          %v5555 = vsel %vm5459, 1, 0
          %v5556 = vsel %vm5460, 1, 0
          %v5557 = vsel %vm5461, 1, 0
          %v5558 = vsel %vm5462, 1, 0
          %v5559 = vsel %vm5463, 1, 0
          %v5560 = vsel %vm5464, 1, 0
          %v5561 = vsel %vm5465, 1, 0
          %v5562 = vsel %vm5466, 1, 0
          %v5563 = vsel %vm5467, 1, 0
          %v5564 = vsel %vm5468, 1, 0
          %v5565 = vsel %vm5469, 1, 0
          %v5566 = vsel %vm5470, 1, 0
          %v5567 = vsel %vm5471, 1, 0
          %5568 = vset.pattern.permute.xlu0 0
          %5569 = vperm.xlu0 %5568, %v5504
          %v5570 = vpop.permute.xlu0 %5569
          %5571 = vset.pattern.permute.xlu0 0
          %5572 = vperm.xlu0 %5571, %v5505
          %v5573 = vpop.permute.xlu0 %5572
          %5574 = vset.pattern.permute.xlu0 0
          %5575 = vperm.xlu0 %5574, %v5506
          %v5576 = vpop.permute.xlu0 %5575
          %5577 = vset.pattern.permute.xlu0 0
          %5578 = vperm.xlu0 %5577, %v5507
          %v5579 = vpop.permute.xlu0 %5578
          %5580 = vset.pattern.permute.xlu0 0
          %5581 = vperm.xlu0 %5580, %v5508
          %v5582 = vpop.permute.xlu0 %5581
          %5583 = vset.pattern.permute.xlu0 0
          %5584 = vperm.xlu0 %5583, %v5509
          %v5585 = vpop.permute.xlu0 %5584
          %5586 = vset.pattern.permute.xlu0 0
          %5587 = vperm.xlu0 %5586, %v5510
          %v5588 = vpop.permute.xlu0 %5587
          %5589 = vset.pattern.permute.xlu0 0
          %5590 = vperm.xlu0 %5589, %v5511
          %v5591 = vpop.permute.xlu0 %5590
          %5592 = vset.pattern.permute.xlu0 0
          %5593 = vperm.xlu0 %5592, %v5512
          %v5594 = vpop.permute.xlu0 %5593
          %5595 = vset.pattern.permute.xlu0 0
          %5596 = vperm.xlu0 %5595, %v5513
          %v5597 = vpop.permute.xlu0 %5596
          %5598 = vset.pattern.permute.xlu0 0
          %5599 = vperm.xlu0 %5598, %v5514
          %v5600 = vpop.permute.xlu0 %5599
          %5601 = vset.pattern.permute.xlu0 0
          %5602 = vperm.xlu0 %5601, %v5515
          %v5603 = vpop.permute.xlu0 %5602
          %5604 = vset.pattern.permute.xlu0 0
          %5605 = vperm.xlu0 %5604, %v5516
          %v5606 = vpop.permute.xlu0 %5605
          %5607 = vset.pattern.permute.xlu0 0
          %5608 = vperm.xlu0 %5607, %v5517
          %v5609 = vpop.permute.xlu0 %5608
          %5610 = vset.pattern.permute.xlu0 0
          %5611 = vperm.xlu0 %5610, %v5518
          %v5612 = vpop.permute.xlu0 %5611
          %5613 = vset.pattern.permute.xlu0 0
          %5614 = vperm.xlu0 %5613, %v5519
          %v5615 = vpop.permute.xlu0 %5614
          %5616 = vset.pattern.permute.xlu0 0
          %5617 = vperm.xlu0 %5616, %v5520
          %v5618 = vpop.permute.xlu0 %5617
          %5619 = vset.pattern.permute.xlu0 0
          %5620 = vperm.xlu0 %5619, %v5521
          %v5621 = vpop.permute.xlu0 %5620
          %5622 = vset.pattern.permute.xlu0 0
          %5623 = vperm.xlu0 %5622, %v5522
          %v5624 = vpop.permute.xlu0 %5623
          %5625 = vset.pattern.permute.xlu0 0
          %5626 = vperm.xlu0 %5625, %v5523
          %v5627 = vpop.permute.xlu0 %5626
          %5628 = vset.pattern.permute.xlu0 0
          %5629 = vperm.xlu0 %5628, %v5524
          %v5630 = vpop.permute.xlu0 %5629
          %5631 = vset.pattern.permute.xlu0 0
          %5632 = vperm.xlu0 %5631, %v5525
          %v5633 = vpop.permute.xlu0 %5632
          %5634 = vset.pattern.permute.xlu0 0
          %5635 = vperm.xlu0 %5634, %v5526
          %v5636 = vpop.permute.xlu0 %5635
          %5637 = vset.pattern.permute.xlu0 0
          %5638 = vperm.xlu0 %5637, %v5527
          %v5639 = vpop.permute.xlu0 %5638
          %5640 = vset.pattern.permute.xlu0 0
          %5641 = vperm.xlu0 %5640, %v5528
          %v5642 = vpop.permute.xlu0 %5641
          %5643 = vset.pattern.permute.xlu0 0
          %5644 = vperm.xlu0 %5643, %v5529
          %v5645 = vpop.permute.xlu0 %5644
          %5646 = vset.pattern.permute.xlu0 0
          %5647 = vperm.xlu0 %5646, %v5530
          %v5648 = vpop.permute.xlu0 %5647
          %5649 = vset.pattern.permute.xlu0 0
          %5650 = vperm.xlu0 %5649, %v5531
          %v5651 = vpop.permute.xlu0 %5650
          %5652 = vset.pattern.permute.xlu0 0
          %5653 = vperm.xlu0 %5652, %v5532
          %v5654 = vpop.permute.xlu0 %5653
          %5655 = vset.pattern.permute.xlu0 0
          %5656 = vperm.xlu0 %5655, %v5533
          %v5657 = vpop.permute.xlu0 %5656
          %5658 = vset.pattern.permute.xlu0 0
          %5659 = vperm.xlu0 %5658, %v5534
          %v5660 = vpop.permute.xlu0 %5659
          %5661 = vset.pattern.permute.xlu0 0
          %5662 = vperm.xlu0 %5661, %v5535
          %v5663 = vpop.permute.xlu0 %5662
          %5664 = vset.pattern.permute.xlu0 0
          %5665 = vperm.xlu0 %5664, %v5536
          %v5666 = vpop.permute.xlu0 %5665
          %5667 = vset.pattern.permute.xlu0 0
          %5668 = vperm.xlu0 %5667, %v5537
          %v5669 = vpop.permute.xlu0 %5668
          %5670 = vset.pattern.permute.xlu0 0
          %5671 = vperm.xlu0 %5670, %v5538
          %v5672 = vpop.permute.xlu0 %5671
          %5673 = vset.pattern.permute.xlu0 0
          %5674 = vperm.xlu0 %5673, %v5539
          %v5675 = vpop.permute.xlu0 %5674
          %5676 = vset.pattern.permute.xlu0 0
          %5677 = vperm.xlu0 %5676, %v5540
          %v5678 = vpop.permute.xlu0 %5677
          %5679 = vset.pattern.permute.xlu0 0
          %5680 = vperm.xlu0 %5679, %v5541
          %v5681 = vpop.permute.xlu0 %5680
          %5682 = vset.pattern.permute.xlu0 0
          %5683 = vperm.xlu0 %5682, %v5542
          %v5684 = vpop.permute.xlu0 %5683
          %5685 = vset.pattern.permute.xlu0 0
          %5686 = vperm.xlu0 %5685, %v5543
          %v5687 = vpop.permute.xlu0 %5686
          %5688 = vset.pattern.permute.xlu0 0
          %5689 = vperm.xlu0 %5688, %v5544
          %v5690 = vpop.permute.xlu0 %5689
          %5691 = vset.pattern.permute.xlu0 0
          %5692 = vperm.xlu0 %5691, %v5545
          %v5693 = vpop.permute.xlu0 %5692
          %5694 = vset.pattern.permute.xlu0 0
          %5695 = vperm.xlu0 %5694, %v5546
          %v5696 = vpop.permute.xlu0 %5695
          %5697 = vset.pattern.permute.xlu0 0
          %5698 = vperm.xlu0 %5697, %v5547
          %v5699 = vpop.permute.xlu0 %5698
          %5700 = vset.pattern.permute.xlu0 0
          %5701 = vperm.xlu0 %5700, %v5548
          %v5702 = vpop.permute.xlu0 %5701
          %5703 = vset.pattern.permute.xlu0 0
          %5704 = vperm.xlu0 %5703, %v5549
          %v5705 = vpop.permute.xlu0 %5704
          %5706 = vset.pattern.permute.xlu0 0
          %5707 = vperm.xlu0 %5706, %v5550
          %v5708 = vpop.permute.xlu0 %5707
          %5709 = vset.pattern.permute.xlu0 0
          %5710 = vperm.xlu0 %5709, %v5551
          %v5711 = vpop.permute.xlu0 %5710
          %5712 = vset.pattern.permute.xlu0 0
          %5713 = vperm.xlu0 %5712, %v5552
          %v5714 = vpop.permute.xlu0 %5713
          %5715 = vset.pattern.permute.xlu0 0
          %5716 = vperm.xlu0 %5715, %v5553
          %v5717 = vpop.permute.xlu0 %5716
          %5718 = vset.pattern.permute.xlu0 0
          %5719 = vperm.xlu0 %5718, %v5554
          %v5720 = vpop.permute.xlu0 %5719
          %5721 = vset.pattern.permute.xlu0 0
          %5722 = vperm.xlu0 %5721, %v5555
          %v5723 = vpop.permute.xlu0 %5722
          %5724 = vset.pattern.permute.xlu0 0
          %5725 = vperm.xlu0 %5724, %v5556
          %v5726 = vpop.permute.xlu0 %5725
          %5727 = vset.pattern.permute.xlu0 0
          %5728 = vperm.xlu0 %5727, %v5557
          %v5729 = vpop.permute.xlu0 %5728
          %5730 = vset.pattern.permute.xlu0 0
          %5731 = vperm.xlu0 %5730, %v5558
          %v5732 = vpop.permute.xlu0 %5731
          %5733 = vset.pattern.permute.xlu0 0
          %5734 = vperm.xlu0 %5733, %v5559
          %v5735 = vpop.permute.xlu0 %5734
          %5736 = vset.pattern.permute.xlu0 0
          %5737 = vperm.xlu0 %5736, %v5560
          %v5738 = vpop.permute.xlu0 %5737
          %5739 = vset.pattern.permute.xlu0 0
          %5740 = vperm.xlu0 %5739, %v5561
          %v5741 = vpop.permute.xlu0 %5740
          %5742 = vset.pattern.permute.xlu0 0
          %5743 = vperm.xlu0 %5742, %v5562
          %v5744 = vpop.permute.xlu0 %5743
          %5745 = vset.pattern.permute.xlu0 0
          %5746 = vperm.xlu0 %5745, %v5563
          %v5747 = vpop.permute.xlu0 %5746
          %5748 = vset.pattern.permute.xlu0 0
          %5749 = vperm.xlu0 %5748, %v5564
          %v5750 = vpop.permute.xlu0 %5749
          %5751 = vset.pattern.permute.xlu0 0
          %5752 = vperm.xlu0 %5751, %v5565
          %v5753 = vpop.permute.xlu0 %5752
          %5754 = vset.pattern.permute.xlu0 0
          %5755 = vperm.xlu0 %5754, %v5566
          %v5756 = vpop.permute.xlu0 %5755
          %5757 = vset.pattern.permute.xlu0 0
          %5758 = vperm.xlu0 %5757, %v5567
          %v5759 = vpop.permute.xlu0 %5758
          %vm5760 = vcmp.eq.s32.totalorder %v5570, 1
          %vm5761 = vcmp.eq.s32.totalorder %v5573, 1
          %vm5762 = vcmp.eq.s32.totalorder %v5576, 1
          %vm5763 = vcmp.eq.s32.totalorder %v5579, 1
          %vm5764 = vcmp.eq.s32.totalorder %v5582, 1
          %vm5765 = vcmp.eq.s32.totalorder %v5585, 1
          %vm5766 = vcmp.eq.s32.totalorder %v5588, 1
          %vm5767 = vcmp.eq.s32.totalorder %v5591, 1
          %vm5768 = vcmp.eq.s32.totalorder %v5594, 1
          %vm5769 = vcmp.eq.s32.totalorder %v5597, 1
          %vm5770 = vcmp.eq.s32.totalorder %v5600, 1
          %vm5771 = vcmp.eq.s32.totalorder %v5603, 1
          %vm5772 = vcmp.eq.s32.totalorder %v5606, 1
          %vm5773 = vcmp.eq.s32.totalorder %v5609, 1
          %vm5774 = vcmp.eq.s32.totalorder %v5612, 1
          %vm5775 = vcmp.eq.s32.totalorder %v5615, 1
          %vm5776 = vcmp.eq.s32.totalorder %v5618, 1
          %vm5777 = vcmp.eq.s32.totalorder %v5621, 1
          %vm5778 = vcmp.eq.s32.totalorder %v5624, 1
          %vm5779 = vcmp.eq.s32.totalorder %v5627, 1
          %vm5780 = vcmp.eq.s32.totalorder %v5630, 1
          %vm5781 = vcmp.eq.s32.totalorder %v5633, 1
          %vm5782 = vcmp.eq.s32.totalorder %v5636, 1
          %vm5783 = vcmp.eq.s32.totalorder %v5639, 1
          %vm5784 = vcmp.eq.s32.totalorder %v5642, 1
          %vm5785 = vcmp.eq.s32.totalorder %v5645, 1
          %vm5786 = vcmp.eq.s32.totalorder %v5648, 1
          %vm5787 = vcmp.eq.s32.totalorder %v5651, 1
          %vm5788 = vcmp.eq.s32.totalorder %v5654, 1
          %vm5789 = vcmp.eq.s32.totalorder %v5657, 1
          %vm5790 = vcmp.eq.s32.totalorder %v5660, 1
          %vm5791 = vcmp.eq.s32.totalorder %v5663, 1
          %vm5792 = vcmp.eq.s32.totalorder %v5666, 1
          %vm5793 = vcmp.eq.s32.totalorder %v5669, 1
          %vm5794 = vcmp.eq.s32.totalorder %v5672, 1
          %vm5795 = vcmp.eq.s32.totalorder %v5675, 1
          %vm5796 = vcmp.eq.s32.totalorder %v5678, 1
          %vm5797 = vcmp.eq.s32.totalorder %v5681, 1
          %vm5798 = vcmp.eq.s32.totalorder %v5684, 1
          %vm5799 = vcmp.eq.s32.totalorder %v5687, 1
          %vm5800 = vcmp.eq.s32.totalorder %v5690, 1
          %vm5801 = vcmp.eq.s32.totalorder %v5693, 1
          %vm5802 = vcmp.eq.s32.totalorder %v5696, 1
          %vm5803 = vcmp.eq.s32.totalorder %v5699, 1
          %vm5804 = vcmp.eq.s32.totalorder %v5702, 1
          %vm5805 = vcmp.eq.s32.totalorder %v5705, 1
          %vm5806 = vcmp.eq.s32.totalorder %v5708, 1
          %vm5807 = vcmp.eq.s32.totalorder %v5711, 1
          %vm5808 = vcmp.eq.s32.totalorder %v5714, 1
          %vm5809 = vcmp.eq.s32.totalorder %v5717, 1
          %vm5810 = vcmp.eq.s32.totalorder %v5720, 1
          %vm5811 = vcmp.eq.s32.totalorder %v5723, 1
          %vm5812 = vcmp.eq.s32.totalorder %v5726, 1
          %vm5813 = vcmp.eq.s32.totalorder %v5729, 1
          %vm5814 = vcmp.eq.s32.totalorder %v5732, 1
          %vm5815 = vcmp.eq.s32.totalorder %v5735, 1
          %vm5816 = vcmp.eq.s32.totalorder %v5738, 1
          %vm5817 = vcmp.eq.s32.totalorder %v5741, 1
          %vm5818 = vcmp.eq.s32.totalorder %v5744, 1
          %vm5819 = vcmp.eq.s32.totalorder %v5747, 1
          %vm5820 = vcmp.eq.s32.totalorder %v5750, 1
          %vm5821 = vcmp.eq.s32.totalorder %v5753, 1
          %vm5822 = vcmp.eq.s32.totalorder %v5756, 1
          %vm5823 = vcmp.eq.s32.totalorder %v5759, 1
          %v5824 = vsel %vm5760, %v5472, %v5344
          %v5825 = vsel %vm5761, %v5473, %v5345
          %v5826 = vsel %vm5762, %v5474, %v5346
          %v5827 = vsel %vm5763, %v5475, %v5347
          %v5828 = vsel %vm5764, %v5476, %v5348
          %v5829 = vsel %vm5765, %v5477, %v5349
          %v5830 = vsel %vm5766, %v5478, %v5350
          %v5831 = vsel %vm5767, %v5479, %v5351
          %v5832 = vsel %vm5768, %v5480, %v5352
          %v5833 = vsel %vm5769, %v5481, %v5353
          %v5834 = vsel %vm5770, %v5482, %v5354
          %v5835 = vsel %vm5771, %v5483, %v5355
          %v5836 = vsel %vm5772, %v5484, %v5356
          %v5837 = vsel %vm5773, %v5485, %v5357
          %v5838 = vsel %vm5774, %v5486, %v5358
          %v5839 = vsel %vm5775, %v5487, %v5359
          %v5840 = vsel %vm5776, %v5488, %v5360
          %v5841 = vsel %vm5777, %v5489, %v5361
          %v5842 = vsel %vm5778, %v5490, %v5362
          %v5843 = vsel %vm5779, %v5491, %v5363
          %v5844 = vsel %vm5780, %v5492, %v5364
          %v5845 = vsel %vm5781, %v5493, %v5365
          %v5846 = vsel %vm5782, %v5494, %v5366
          %v5847 = vsel %vm5783, %v5495, %v5367
          %v5848 = vsel %vm5784, %v5496, %v5368
          %v5849 = vsel %vm5785, %v5497, %v5369
          %v5850 = vsel %vm5786, %v5498, %v5370
          %v5851 = vsel %vm5787, %v5499, %v5371
          %v5852 = vsel %vm5788, %v5500, %v5372
          %v5853 = vsel %vm5789, %v5501, %v5373
          %v5854 = vsel %vm5790, %v5502, %v5374
          %v5855 = vsel %vm5791, %v5503, %v5375
          %v5856 = vsel %vm5792, %v5472, %v5376
          %v5857 = vsel %vm5793, %v5473, %v5377
          %v5858 = vsel %vm5794, %v5474, %v5378
          %v5859 = vsel %vm5795, %v5475, %v5379
          %v5860 = vsel %vm5796, %v5476, %v5380
          %v5861 = vsel %vm5797, %v5477, %v5381
          %v5862 = vsel %vm5798, %v5478, %v5382
          %v5863 = vsel %vm5799, %v5479, %v5383
          %v5864 = vsel %vm5800, %v5480, %v5384
          %v5865 = vsel %vm5801, %v5481, %v5385
          %v5866 = vsel %vm5802, %v5482, %v5386
          %v5867 = vsel %vm5803, %v5483, %v5387
          %v5868 = vsel %vm5804, %v5484, %v5388
          %v5869 = vsel %vm5805, %v5485, %v5389
          %v5870 = vsel %vm5806, %v5486, %v5390
          %v5871 = vsel %vm5807, %v5487, %v5391
          %v5872 = vsel %vm5808, %v5488, %v5392
          %v5873 = vsel %vm5809, %v5489, %v5393
          %v5874 = vsel %vm5810, %v5490, %v5394
          %v5875 = vsel %vm5811, %v5491, %v5395
          %v5876 = vsel %vm5812, %v5492, %v5396
          %v5877 = vsel %vm5813, %v5493, %v5397
          %v5878 = vsel %vm5814, %v5494, %v5398
          %v5879 = vsel %vm5815, %v5495, %v5399
          %v5880 = vsel %vm5816, %v5496, %v5400
          %v5881 = vsel %vm5817, %v5497, %v5401
          %v5882 = vsel %vm5818, %v5498, %v5402
          %v5883 = vsel %vm5819, %v5499, %v5403
          %v5884 = vsel %vm5820, %v5500, %v5404
          %v5885 = vsel %vm5821, %v5501, %v5405
          %v5886 = vsel %vm5822, %v5502, %v5406
          %v5887 = vsel %vm5823, %v5503, %v5407
          %v5888 = vand.u32 %v474, 1
          %vm5889 = vcmp.ne.s32.totalorder %v5888, 0
          %v5890 = vand.u32 %v474, 2
          %vm5891 = vcmp.ne.s32.totalorder %v5890, 0
          %v5892 = vadd.s32 %v604, 8
          %v5893 = vadd.s32 %v604, 16
          %v5894 = vadd.s32 %v604, 24
          %v5895 = vadd.s32 %v604, 32
          %v5896 = vadd.s32 %v604, 40
          %v5897 = vadd.s32 %v604, 48
          %v5898 = vadd.s32 %v604, 56
          %v5899 = vstv %s408
          %v5900 = vadd.s32 %v5899, %v604
          %v5901 = vadd.s32 %v5899, %v5892
          %v5902 = vadd.s32 %v5899, %v5893
          %v5903 = vadd.s32 %v5899, %v5894
          %v5904 = vadd.s32 %v5899, %v5895
          %v5905 = vadd.s32 %v5899, %v5896
          %v5906 = vadd.s32 %v5899, %v5897
          %v5907 = vadd.s32 %v5899, %v5898
          %v5908 = vperm.slane %v473, 0
          %v5909 = vperm.slane %v473, 1
          %v5910 = vperm.slane %v473, 2
          %v5911 = vperm.slane %v473, 3
          %vm5912 = vcmp.eq.s32.totalorder %v5908, %v5900
          %vm5913 = vcmp.eq.s32.totalorder %v5909, %v5900
          %vm5914 = vcmp.eq.s32.totalorder %v5910, %v5900
          %vm5915 = vcmp.eq.s32.totalorder %v5911, %v5900
          %vm5916 = vcmp.eq.s32.totalorder %v5908, %v5901
          %vm5917 = vcmp.eq.s32.totalorder %v5909, %v5901
          %vm5918 = vcmp.eq.s32.totalorder %v5910, %v5901
          %vm5919 = vcmp.eq.s32.totalorder %v5911, %v5901
          %vm5920 = vcmp.eq.s32.totalorder %v5908, %v5902
          %vm5921 = vcmp.eq.s32.totalorder %v5909, %v5902
          %vm5922 = vcmp.eq.s32.totalorder %v5910, %v5902
          %vm5923 = vcmp.eq.s32.totalorder %v5911, %v5902
          %vm5924 = vcmp.eq.s32.totalorder %v5908, %v5903
          %vm5925 = vcmp.eq.s32.totalorder %v5909, %v5903
          %vm5926 = vcmp.eq.s32.totalorder %v5910, %v5903
          %vm5927 = vcmp.eq.s32.totalorder %v5911, %v5903
          %vm5928 = vcmp.eq.s32.totalorder %v5908, %v5904
          %vm5929 = vcmp.eq.s32.totalorder %v5909, %v5904
          %vm5930 = vcmp.eq.s32.totalorder %v5910, %v5904
          %vm5931 = vcmp.eq.s32.totalorder %v5911, %v5904
          %vm5932 = vcmp.eq.s32.totalorder %v5908, %v5905
          %vm5933 = vcmp.eq.s32.totalorder %v5909, %v5905
          %vm5934 = vcmp.eq.s32.totalorder %v5910, %v5905
          %vm5935 = vcmp.eq.s32.totalorder %v5911, %v5905
          %vm5936 = vcmp.eq.s32.totalorder %v5908, %v5906
          %vm5937 = vcmp.eq.s32.totalorder %v5909, %v5906
          %vm5938 = vcmp.eq.s32.totalorder %v5910, %v5906
          %vm5939 = vcmp.eq.s32.totalorder %v5911, %v5906
          %vm5940 = vcmp.eq.s32.totalorder %v5908, %v5907
          %vm5941 = vcmp.eq.s32.totalorder %v5909, %v5907
          %vm5942 = vcmp.eq.s32.totalorder %v5910, %v5907
          %vm5943 = vcmp.eq.s32.totalorder %v5911, %v5907
          %v5944 = vsel %vm5891, 1, 0
          %v5945 = vperm.slane %v5944, 0
          %v5946 = vperm.slane %v5944, 1
          %v5947 = vperm.slane %v5944, 2
          %v5948 = vperm.slane %v5944, 3
          %vm5949 = vcmp.eq.s32.totalorder %v5945, 1
          %vm5950 = vcmp.eq.s32.totalorder %v5946, 1
          %vm5951 = vcmp.eq.s32.totalorder %v5947, 1
          %vm5952 = vcmp.eq.s32.totalorder %v5948, 1
          %vm5953 = vmand %vm5912, %vm5949
          %vm5954 = vmand %vm5913, %vm5950
          %vm5955 = vmand %vm5914, %vm5951
          %vm5956 = vmand %vm5915, %vm5952
          %vm5957 = vmand %vm5916, %vm5949
          %vm5958 = vmand %vm5917, %vm5950
          %vm5959 = vmand %vm5918, %vm5951
          %vm5960 = vmand %vm5919, %vm5952
          %vm5961 = vmand %vm5920, %vm5949
          %vm5962 = vmand %vm5921, %vm5950
          %vm5963 = vmand %vm5922, %vm5951
          %vm5964 = vmand %vm5923, %vm5952
          %vm5965 = vmand %vm5924, %vm5949
          %vm5966 = vmand %vm5925, %vm5950
          %vm5967 = vmand %vm5926, %vm5951
          %vm5968 = vmand %vm5927, %vm5952
          %vm5969 = vmand %vm5928, %vm5949
          %vm5970 = vmand %vm5929, %vm5950
          %vm5971 = vmand %vm5930, %vm5951
          %vm5972 = vmand %vm5931, %vm5952
          %vm5973 = vmand %vm5932, %vm5949
          %vm5974 = vmand %vm5933, %vm5950
          %vm5975 = vmand %vm5934, %vm5951
          %vm5976 = vmand %vm5935, %vm5952
          %vm5977 = vmand %vm5936, %vm5949
          %vm5978 = vmand %vm5937, %vm5950
          %vm5979 = vmand %vm5938, %vm5951
          %vm5980 = vmand %vm5939, %vm5952
          %vm5981 = vmand %vm5940, %vm5949
          %vm5982 = vmand %vm5941, %vm5950
          %vm5983 = vmand %vm5942, %vm5951
          %vm5984 = vmand %vm5943, %vm5952
          %v5985 = vsel %vm5889, 1, 0
          %v5986 = vperm.slane %v5985, 0
          %v5987 = vperm.slane %v5985, 1
          %v5988 = vperm.slane %v5985, 2
          %v5989 = vperm.slane %v5985, 3
          %vm5990 = vcmp.eq.s32.totalorder %v5986, 1
          %vm5991 = vcmp.eq.s32.totalorder %v5987, 1
          %vm5992 = vcmp.eq.s32.totalorder %v5988, 1
          %vm5993 = vcmp.eq.s32.totalorder %v5989, 1
          %vm5994 = vmand %vm5912, %vm5990
          %vm5995 = vmand %vm5913, %vm5991
          %vm5996 = vmand %vm5914, %vm5992
          %vm5997 = vmand %vm5915, %vm5993
          %vm5998 = vmand %vm5916, %vm5990
          %vm5999 = vmand %vm5917, %vm5991
          %vm6000 = vmand %vm5918, %vm5992
          %vm6001 = vmand %vm5919, %vm5993
          %vm6002 = vmand %vm5920, %vm5990
          %vm6003 = vmand %vm5921, %vm5991
          %vm6004 = vmand %vm5922, %vm5992
          %vm6005 = vmand %vm5923, %vm5993
          %vm6006 = vmand %vm5924, %vm5990
          %vm6007 = vmand %vm5925, %vm5991
          %vm6008 = vmand %vm5926, %vm5992
          %vm6009 = vmand %vm5927, %vm5993
          %vm6010 = vmand %vm5928, %vm5990
          %vm6011 = vmand %vm5929, %vm5991
          %vm6012 = vmand %vm5930, %vm5992
          %vm6013 = vmand %vm5931, %vm5993
          %vm6014 = vmand %vm5932, %vm5990
          %vm6015 = vmand %vm5933, %vm5991
          %vm6016 = vmand %vm5934, %vm5992
          %vm6017 = vmand %vm5935, %vm5993
          %vm6018 = vmand %vm5936, %vm5990
          %vm6019 = vmand %vm5937, %vm5991
          %vm6020 = vmand %vm5938, %vm5992
          %vm6021 = vmand %vm5939, %vm5993
          %vm6022 = vmand %vm5940, %vm5990
          %vm6023 = vmand %vm5941, %vm5991
          %vm6024 = vmand %vm5942, %vm5992
          %vm6025 = vmand %vm5943, %vm5993
          %v6026 = vsel %vm5994, 1, 0
          %v6027 = vsel %vm5995, 1, 0
          %v6028 = vsel %vm5996, 1, 0
          %v6029 = vsel %vm5997, 1, 0
          %v6030 = vsel %vm5998, 1, 0
          %v6031 = vsel %vm5999, 1, 0
          %v6032 = vsel %vm6000, 1, 0
          %v6033 = vsel %vm6001, 1, 0
          %v6034 = vsel %vm6002, 1, 0
          %v6035 = vsel %vm6003, 1, 0
          %v6036 = vsel %vm6004, 1, 0
          %v6037 = vsel %vm6005, 1, 0
          %v6038 = vsel %vm6006, 1, 0
          %v6039 = vsel %vm6007, 1, 0
          %v6040 = vsel %vm6008, 1, 0
          %v6041 = vsel %vm6009, 1, 0
          %v6042 = vsel %vm6010, 1, 0
          %v6043 = vsel %vm6011, 1, 0
          %v6044 = vsel %vm6012, 1, 0
          %v6045 = vsel %vm6013, 1, 0
          %v6046 = vsel %vm6014, 1, 0
          %v6047 = vsel %vm6015, 1, 0
          %v6048 = vsel %vm6016, 1, 0
          %v6049 = vsel %vm6017, 1, 0
          %v6050 = vsel %vm6018, 1, 0
          %v6051 = vsel %vm6019, 1, 0
          %v6052 = vsel %vm6020, 1, 0
          %v6053 = vsel %vm6021, 1, 0
          %v6054 = vsel %vm6022, 1, 0
          %v6055 = vsel %vm6023, 1, 0
          %v6056 = vsel %vm6024, 1, 0
          %v6057 = vsel %vm6025, 1, 0
          %v6058 = vcvt.s32.f32 %v6026
          %v6059 = vcvt.s32.f32 %v6027
          %v6060 = vcvt.s32.f32 %v6028
          %v6061 = vcvt.s32.f32 %v6029
          %v6062 = vcvt.s32.f32 %v6030
          %v6063 = vcvt.s32.f32 %v6031
          %v6064 = vcvt.s32.f32 %v6032
          %v6065 = vcvt.s32.f32 %v6033
          %v6066 = vcvt.s32.f32 %v6034
          %v6067 = vcvt.s32.f32 %v6035
          %v6068 = vcvt.s32.f32 %v6036
          %v6069 = vcvt.s32.f32 %v6037
          %v6070 = vcvt.s32.f32 %v6038
          %v6071 = vcvt.s32.f32 %v6039
          %v6072 = vcvt.s32.f32 %v6040
          %v6073 = vcvt.s32.f32 %v6041
          %v6074 = vcvt.s32.f32 %v6042
          %v6075 = vcvt.s32.f32 %v6043
          %v6076 = vcvt.s32.f32 %v6044
          %v6077 = vcvt.s32.f32 %v6045
          %v6078 = vcvt.s32.f32 %v6046
          %v6079 = vcvt.s32.f32 %v6047
          %v6080 = vcvt.s32.f32 %v6048
          %v6081 = vcvt.s32.f32 %v6049
          %v6082 = vcvt.s32.f32 %v6050
          %v6083 = vcvt.s32.f32 %v6051
          %v6084 = vcvt.s32.f32 %v6052
          %v6085 = vcvt.s32.f32 %v6053
          %v6086 = vcvt.s32.f32 %v6054
          %v6087 = vcvt.s32.f32 %v6055
          %v6088 = vcvt.s32.f32 %v6056
          %v6089 = vcvt.s32.f32 %v6057
          %v6090 = vmax.f32 %v6058, %v6059
          %v6091 = vmax.f32 %v6090, %v6060
          %v6092 = vmax.f32 %v6091, %v6061
          %6093 = vmax.xlane.f32.xlu0 %v6092
          %v6094 = vpop.xlane.xlu0 %6093
          %v6095 = vmax.f32 %v6062, %v6063
          %v6096 = vmax.f32 %v6095, %v6064
          %v6097 = vmax.f32 %v6096, %v6065
          %6098 = vmax.xlane.f32.xlu0 %v6097
          %v6099 = vpop.xlane.xlu0 %6098
          %v6100 = vmax.f32 %v6066, %v6067
          %v6101 = vmax.f32 %v6100, %v6068
          %v6102 = vmax.f32 %v6101, %v6069
          %6103 = vmax.xlane.f32.xlu0 %v6102
          %v6104 = vpop.xlane.xlu0 %6103
          %v6105 = vmax.f32 %v6070, %v6071
          %v6106 = vmax.f32 %v6105, %v6072
          %v6107 = vmax.f32 %v6106, %v6073
          %6108 = vmax.xlane.f32.xlu0 %v6107
          %v6109 = vpop.xlane.xlu0 %6108
          %v6110 = vmax.f32 %v6074, %v6075
          %v6111 = vmax.f32 %v6110, %v6076
          %v6112 = vmax.f32 %v6111, %v6077
          %6113 = vmax.xlane.f32.xlu0 %v6112
          %v6114 = vpop.xlane.xlu0 %6113
          %v6115 = vmax.f32 %v6078, %v6079
          %v6116 = vmax.f32 %v6115, %v6080
          %v6117 = vmax.f32 %v6116, %v6081
          %6118 = vmax.xlane.f32.xlu0 %v6117
          %v6119 = vpop.xlane.xlu0 %6118
          %v6120 = vmax.f32 %v6082, %v6083
          %v6121 = vmax.f32 %v6120, %v6084
          %v6122 = vmax.f32 %v6121, %v6085
          %6123 = vmax.xlane.f32.xlu0 %v6122
          %v6124 = vpop.xlane.xlu0 %6123
          %v6125 = vmax.f32 %v6086, %v6087
          %v6126 = vmax.f32 %v6125, %v6088
          %v6127 = vmax.f32 %v6126, %v6089
          %6128 = vmax.xlane.f32.xlu0 %v6127
          %v6129 = vpop.xlane.xlu0 %6128
          %vm6130 = vcmp.gt.f32.partialorder %v6094, 0.5
          %vm6131 = vcmp.gt.f32.partialorder %v6099, 0.5
          %vm6132 = vcmp.gt.f32.partialorder %v6104, 0.5
          %vm6133 = vcmp.gt.f32.partialorder %v6109, 0.5
          %vm6134 = vcmp.gt.f32.partialorder %v6114, 0.5
          %vm6135 = vcmp.gt.f32.partialorder %v6119, 0.5
          %vm6136 = vcmp.gt.f32.partialorder %v6124, 0.5
          %vm6137 = vcmp.gt.f32.partialorder %v6129, 0.5
          %v6138 = vpack.c.bf16 %v5824, %v5824
          %v6139 = vpack.c.bf16 %v5825, %v5825
          %v6140 = vpack.c.bf16 %v5826, %v5826
          %v6141 = vpack.c.bf16 %v5827, %v5827
          %v6142 = vpack.c.bf16 %v5828, %v5828
          %v6143 = vpack.c.bf16 %v5829, %v5829
          %v6144 = vpack.c.bf16 %v5830, %v5830
          %v6145 = vpack.c.bf16 %v5831, %v5831
          %v6146 = vpack.c.bf16 %v5832, %v5832
          %v6147 = vpack.c.bf16 %v5833, %v5833
          %v6148 = vpack.c.bf16 %v5834, %v5834
          %v6149 = vpack.c.bf16 %v5835, %v5835
          %v6150 = vpack.c.bf16 %v5836, %v5836
          %v6151 = vpack.c.bf16 %v5837, %v5837
          %v6152 = vpack.c.bf16 %v5838, %v5838
          %v6153 = vpack.c.bf16 %v5839, %v5839
          %v6154 = vpack.c.bf16 %v5840, %v5840
          %v6155 = vpack.c.bf16 %v5841, %v5841
          %v6156 = vpack.c.bf16 %v5842, %v5842
          %v6157 = vpack.c.bf16 %v5843, %v5843
          %v6158 = vpack.c.bf16 %v5844, %v5844
          %v6159 = vpack.c.bf16 %v5845, %v5845
          %v6160 = vpack.c.bf16 %v5846, %v5846
          %v6161 = vpack.c.bf16 %v5847, %v5847
          %v6162 = vpack.c.bf16 %v5848, %v5848
          %v6163 = vpack.c.bf16 %v5849, %v5849
          %v6164 = vpack.c.bf16 %v5850, %v5850
          %v6165 = vpack.c.bf16 %v5851, %v5851
          %v6166 = vpack.c.bf16 %v5852, %v5852
          %v6167 = vpack.c.bf16 %v5853, %v5853
          %v6168 = vpack.c.bf16 %v5854, %v5854
          %v6169 = vpack.c.bf16 %v5855, %v5855
          %v6170 = vpack.c.bf16 %v5856, %v5856
          %v6171 = vpack.c.bf16 %v5857, %v5857
          %v6172 = vpack.c.bf16 %v5858, %v5858
          %v6173 = vpack.c.bf16 %v5859, %v5859
          %v6174 = vpack.c.bf16 %v5860, %v5860
          %v6175 = vpack.c.bf16 %v5861, %v5861
          %v6176 = vpack.c.bf16 %v5862, %v5862
          %v6177 = vpack.c.bf16 %v5863, %v5863
          %v6178 = vpack.c.bf16 %v5864, %v5864
          %v6179 = vpack.c.bf16 %v5865, %v5865
          %v6180 = vpack.c.bf16 %v5866, %v5866
          %v6181 = vpack.c.bf16 %v5867, %v5867
          %v6182 = vpack.c.bf16 %v5868, %v5868
          %v6183 = vpack.c.bf16 %v5869, %v5869
          %v6184 = vpack.c.bf16 %v5870, %v5870
          %v6185 = vpack.c.bf16 %v5871, %v5871
          %v6186 = vpack.c.bf16 %v5872, %v5872
          %v6187 = vpack.c.bf16 %v5873, %v5873
          %v6188 = vpack.c.bf16 %v5874, %v5874
          %v6189 = vpack.c.bf16 %v5875, %v5875
          %v6190 = vpack.c.bf16 %v5876, %v5876
          %v6191 = vpack.c.bf16 %v5877, %v5877
          %v6192 = vpack.c.bf16 %v5878, %v5878
          %v6193 = vpack.c.bf16 %v5879, %v5879
          %v6194 = vpack.c.bf16 %v5880, %v5880
          %v6195 = vpack.c.bf16 %v5881, %v5881
          %v6196 = vpack.c.bf16 %v5882, %v5882
          %v6197 = vpack.c.bf16 %v5883, %v5883
          %v6198 = vpack.c.bf16 %v5884, %v5884
          %v6199 = vpack.c.bf16 %v5885, %v5885
          %v6200 = vpack.c.bf16 %v5886, %v5886
          %v6201 = vpack.c.bf16 %v5887, %v5887
          %v6202 = vunpack.c.l.bf16 %v6138
          %v6203 = vunpack.c.l.bf16 %v6139
          %v6204 = vunpack.c.l.bf16 %v6140
          %v6205 = vunpack.c.l.bf16 %v6141
          %v6206 = vunpack.c.l.bf16 %v6142
          %v6207 = vunpack.c.l.bf16 %v6143
          %v6208 = vunpack.c.l.bf16 %v6144
          %v6209 = vunpack.c.l.bf16 %v6145
          %v6210 = vunpack.c.l.bf16 %v6146
          %v6211 = vunpack.c.l.bf16 %v6147
          %v6212 = vunpack.c.l.bf16 %v6148
          %v6213 = vunpack.c.l.bf16 %v6149
          %v6214 = vunpack.c.l.bf16 %v6150
          %v6215 = vunpack.c.l.bf16 %v6151
          %v6216 = vunpack.c.l.bf16 %v6152
          %v6217 = vunpack.c.l.bf16 %v6153
          %v6218 = vunpack.c.l.bf16 %v6154
          %v6219 = vunpack.c.l.bf16 %v6155
          %v6220 = vunpack.c.l.bf16 %v6156
          %v6221 = vunpack.c.l.bf16 %v6157
          %v6222 = vunpack.c.l.bf16 %v6158
          %v6223 = vunpack.c.l.bf16 %v6159
          %v6224 = vunpack.c.l.bf16 %v6160
          %v6225 = vunpack.c.l.bf16 %v6161
          %v6226 = vunpack.c.l.bf16 %v6162
          %v6227 = vunpack.c.l.bf16 %v6163
          %v6228 = vunpack.c.l.bf16 %v6164
          %v6229 = vunpack.c.l.bf16 %v6165
          %v6230 = vunpack.c.l.bf16 %v6166
          %v6231 = vunpack.c.l.bf16 %v6167
          %v6232 = vunpack.c.l.bf16 %v6168
          %v6233 = vunpack.c.l.bf16 %v6169
          %v6234 = vunpack.c.l.bf16 %v6170
          %v6235 = vunpack.c.l.bf16 %v6171
          %v6236 = vunpack.c.l.bf16 %v6172
          %v6237 = vunpack.c.l.bf16 %v6173
          %v6238 = vunpack.c.l.bf16 %v6174
          %v6239 = vunpack.c.l.bf16 %v6175
          %v6240 = vunpack.c.l.bf16 %v6176
          %v6241 = vunpack.c.l.bf16 %v6177
          %v6242 = vunpack.c.l.bf16 %v6178
          %v6243 = vunpack.c.l.bf16 %v6179
          %v6244 = vunpack.c.l.bf16 %v6180
          %v6245 = vunpack.c.l.bf16 %v6181
          %v6246 = vunpack.c.l.bf16 %v6182
          %v6247 = vunpack.c.l.bf16 %v6183
          %v6248 = vunpack.c.l.bf16 %v6184
          %v6249 = vunpack.c.l.bf16 %v6185
          %v6250 = vunpack.c.l.bf16 %v6186
          %v6251 = vunpack.c.l.bf16 %v6187
          %v6252 = vunpack.c.l.bf16 %v6188
          %v6253 = vunpack.c.l.bf16 %v6189
          %v6254 = vunpack.c.l.bf16 %v6190
          %v6255 = vunpack.c.l.bf16 %v6191
          %v6256 = vunpack.c.l.bf16 %v6192
          %v6257 = vunpack.c.l.bf16 %v6193
          %v6258 = vunpack.c.l.bf16 %v6194
          %v6259 = vunpack.c.l.bf16 %v6195
          %v6260 = vunpack.c.l.bf16 %v6196
          %v6261 = vunpack.c.l.bf16 %v6197
          %v6262 = vunpack.c.l.bf16 %v6198
          %v6263 = vunpack.c.l.bf16 %v6199
          %v6264 = vunpack.c.l.bf16 %v6200
          %v6265 = vunpack.c.l.bf16 %v6201
          %v6266 = vsub.f32 %v5824, %v6202
          %v6267 = vsub.f32 %v5825, %v6203
          %v6268 = vsub.f32 %v5826, %v6204
          %v6269 = vsub.f32 %v5827, %v6205
          %v6270 = vsub.f32 %v5828, %v6206
          %v6271 = vsub.f32 %v5829, %v6207
          %v6272 = vsub.f32 %v5830, %v6208
          %v6273 = vsub.f32 %v5831, %v6209
          %v6274 = vsub.f32 %v5832, %v6210
          %v6275 = vsub.f32 %v5833, %v6211
          %v6276 = vsub.f32 %v5834, %v6212
          %v6277 = vsub.f32 %v5835, %v6213
          %v6278 = vsub.f32 %v5836, %v6214
          %v6279 = vsub.f32 %v5837, %v6215
          %v6280 = vsub.f32 %v5838, %v6216
          %v6281 = vsub.f32 %v5839, %v6217
          %v6282 = vsub.f32 %v5840, %v6218
          %v6283 = vsub.f32 %v5841, %v6219
          %v6284 = vsub.f32 %v5842, %v6220
          %v6285 = vsub.f32 %v5843, %v6221
          %v6286 = vsub.f32 %v5844, %v6222
          %v6287 = vsub.f32 %v5845, %v6223
          %v6288 = vsub.f32 %v5846, %v6224
          %v6289 = vsub.f32 %v5847, %v6225
          %v6290 = vsub.f32 %v5848, %v6226
          %v6291 = vsub.f32 %v5849, %v6227
          %v6292 = vsub.f32 %v5850, %v6228
          %v6293 = vsub.f32 %v5851, %v6229
          %v6294 = vsub.f32 %v5852, %v6230
          %v6295 = vsub.f32 %v5853, %v6231
          %v6296 = vsub.f32 %v5854, %v6232
          %v6297 = vsub.f32 %v5855, %v6233
          %v6298 = vsub.f32 %v5856, %v6234
          %v6299 = vsub.f32 %v5857, %v6235
          %v6300 = vsub.f32 %v5858, %v6236
          %v6301 = vsub.f32 %v5859, %v6237
          %v6302 = vsub.f32 %v5860, %v6238
          %v6303 = vsub.f32 %v5861, %v6239
          %v6304 = vsub.f32 %v5862, %v6240
          %v6305 = vsub.f32 %v5863, %v6241
          %v6306 = vsub.f32 %v5864, %v6242
          %v6307 = vsub.f32 %v5865, %v6243
          %v6308 = vsub.f32 %v5866, %v6244
          %v6309 = vsub.f32 %v5867, %v6245
          %v6310 = vsub.f32 %v5868, %v6246
          %v6311 = vsub.f32 %v5869, %v6247
          %v6312 = vsub.f32 %v5870, %v6248
          %v6313 = vsub.f32 %v5871, %v6249
          %v6314 = vsub.f32 %v5872, %v6250
          %v6315 = vsub.f32 %v5873, %v6251
          %v6316 = vsub.f32 %v5874, %v6252
          %v6317 = vsub.f32 %v5875, %v6253
          %v6318 = vsub.f32 %v5876, %v6254
          %v6319 = vsub.f32 %v5877, %v6255
          %v6320 = vsub.f32 %v5878, %v6256
          %v6321 = vsub.f32 %v5879, %v6257
          %v6322 = vsub.f32 %v5880, %v6258
          %v6323 = vsub.f32 %v5881, %v6259
          %v6324 = vsub.f32 %v5882, %v6260
          %v6325 = vsub.f32 %v5883, %v6261
          %v6326 = vsub.f32 %v5884, %v6262
          %v6327 = vsub.f32 %v5885, %v6263
          %v6328 = vsub.f32 %v5886, %v6264
          %v6329 = vsub.f32 %v5887, %v6265
          %v6330 = vpack.c.bf16 %v6266, %v6266
          %v6331 = vpack.c.bf16 %v6267, %v6267
          %v6332 = vpack.c.bf16 %v6268, %v6268
          %v6333 = vpack.c.bf16 %v6269, %v6269
          %v6334 = vpack.c.bf16 %v6270, %v6270
          %v6335 = vpack.c.bf16 %v6271, %v6271
          %v6336 = vpack.c.bf16 %v6272, %v6272
          %v6337 = vpack.c.bf16 %v6273, %v6273
          %v6338 = vpack.c.bf16 %v6274, %v6274
          %v6339 = vpack.c.bf16 %v6275, %v6275
          %v6340 = vpack.c.bf16 %v6276, %v6276
          %v6341 = vpack.c.bf16 %v6277, %v6277
          %v6342 = vpack.c.bf16 %v6278, %v6278
          %v6343 = vpack.c.bf16 %v6279, %v6279
          %v6344 = vpack.c.bf16 %v6280, %v6280
          %v6345 = vpack.c.bf16 %v6281, %v6281
          %v6346 = vpack.c.bf16 %v6282, %v6282
          %v6347 = vpack.c.bf16 %v6283, %v6283
          %v6348 = vpack.c.bf16 %v6284, %v6284
          %v6349 = vpack.c.bf16 %v6285, %v6285
          %v6350 = vpack.c.bf16 %v6286, %v6286
          %v6351 = vpack.c.bf16 %v6287, %v6287
          %v6352 = vpack.c.bf16 %v6288, %v6288
          %v6353 = vpack.c.bf16 %v6289, %v6289
          %v6354 = vpack.c.bf16 %v6290, %v6290
          %v6355 = vpack.c.bf16 %v6291, %v6291
          %v6356 = vpack.c.bf16 %v6292, %v6292
          %v6357 = vpack.c.bf16 %v6293, %v6293
          %v6358 = vpack.c.bf16 %v6294, %v6294
          %v6359 = vpack.c.bf16 %v6295, %v6295
          %v6360 = vpack.c.bf16 %v6296, %v6296
          %v6361 = vpack.c.bf16 %v6297, %v6297
          %v6362 = vpack.c.bf16 %v6298, %v6298
          %v6363 = vpack.c.bf16 %v6299, %v6299
          %v6364 = vpack.c.bf16 %v6300, %v6300
          %v6365 = vpack.c.bf16 %v6301, %v6301
          %v6366 = vpack.c.bf16 %v6302, %v6302
          %v6367 = vpack.c.bf16 %v6303, %v6303
          %v6368 = vpack.c.bf16 %v6304, %v6304
          %v6369 = vpack.c.bf16 %v6305, %v6305
          %v6370 = vpack.c.bf16 %v6306, %v6306
          %v6371 = vpack.c.bf16 %v6307, %v6307
          %v6372 = vpack.c.bf16 %v6308, %v6308
          %v6373 = vpack.c.bf16 %v6309, %v6309
          %v6374 = vpack.c.bf16 %v6310, %v6310
          %v6375 = vpack.c.bf16 %v6311, %v6311
          %v6376 = vpack.c.bf16 %v6312, %v6312
          %v6377 = vpack.c.bf16 %v6313, %v6313
          %v6378 = vpack.c.bf16 %v6314, %v6314
          %v6379 = vpack.c.bf16 %v6315, %v6315
          %v6380 = vpack.c.bf16 %v6316, %v6316
          %v6381 = vpack.c.bf16 %v6317, %v6317
          %v6382 = vpack.c.bf16 %v6318, %v6318
          %v6383 = vpack.c.bf16 %v6319, %v6319
          %v6384 = vpack.c.bf16 %v6320, %v6320
          %v6385 = vpack.c.bf16 %v6321, %v6321
          %v6386 = vpack.c.bf16 %v6322, %v6322
          %v6387 = vpack.c.bf16 %v6323, %v6323
          %v6388 = vpack.c.bf16 %v6324, %v6324
          %v6389 = vpack.c.bf16 %v6325, %v6325
          %v6390 = vpack.c.bf16 %v6326, %v6326
          %v6391 = vpack.c.bf16 %v6327, %v6327
          %v6392 = vpack.c.bf16 %v6328, %v6328
          %v6393 = vpack.c.bf16 %v6329, %v6329
          %v6394 = vunpack.c.l.bf16 %v6330
          %v6395 = vunpack.c.l.bf16 %v6331
          %v6396 = vunpack.c.l.bf16 %v6332
          %v6397 = vunpack.c.l.bf16 %v6333
          %v6398 = vunpack.c.l.bf16 %v6334
          %v6399 = vunpack.c.l.bf16 %v6335
          %v6400 = vunpack.c.l.bf16 %v6336
          %v6401 = vunpack.c.l.bf16 %v6337
          %v6402 = vunpack.c.l.bf16 %v6338
          %v6403 = vunpack.c.l.bf16 %v6339
          %v6404 = vunpack.c.l.bf16 %v6340
          %v6405 = vunpack.c.l.bf16 %v6341
          %v6406 = vunpack.c.l.bf16 %v6342
          %v6407 = vunpack.c.l.bf16 %v6343
          %v6408 = vunpack.c.l.bf16 %v6344
          %v6409 = vunpack.c.l.bf16 %v6345
          %v6410 = vunpack.c.l.bf16 %v6346
          %v6411 = vunpack.c.l.bf16 %v6347
          %v6412 = vunpack.c.l.bf16 %v6348
          %v6413 = vunpack.c.l.bf16 %v6349
          %v6414 = vunpack.c.l.bf16 %v6350
          %v6415 = vunpack.c.l.bf16 %v6351
          %v6416 = vunpack.c.l.bf16 %v6352
          %v6417 = vunpack.c.l.bf16 %v6353
          %v6418 = vunpack.c.l.bf16 %v6354
          %v6419 = vunpack.c.l.bf16 %v6355
          %v6420 = vunpack.c.l.bf16 %v6356
          %v6421 = vunpack.c.l.bf16 %v6357
          %v6422 = vunpack.c.l.bf16 %v6358
          %v6423 = vunpack.c.l.bf16 %v6359
          %v6424 = vunpack.c.l.bf16 %v6360
          %v6425 = vunpack.c.l.bf16 %v6361
          %v6426 = vunpack.c.l.bf16 %v6362
          %v6427 = vunpack.c.l.bf16 %v6363
          %v6428 = vunpack.c.l.bf16 %v6364
          %v6429 = vunpack.c.l.bf16 %v6365
          %v6430 = vunpack.c.l.bf16 %v6366
          %v6431 = vunpack.c.l.bf16 %v6367
          %v6432 = vunpack.c.l.bf16 %v6368
          %v6433 = vunpack.c.l.bf16 %v6369
          %v6434 = vunpack.c.l.bf16 %v6370
          %v6435 = vunpack.c.l.bf16 %v6371
          %v6436 = vunpack.c.l.bf16 %v6372
          %v6437 = vunpack.c.l.bf16 %v6373
          %v6438 = vunpack.c.l.bf16 %v6374
          %v6439 = vunpack.c.l.bf16 %v6375
          %v6440 = vunpack.c.l.bf16 %v6376
          %v6441 = vunpack.c.l.bf16 %v6377
          %v6442 = vunpack.c.l.bf16 %v6378
          %v6443 = vunpack.c.l.bf16 %v6379
          %v6444 = vunpack.c.l.bf16 %v6380
          %v6445 = vunpack.c.l.bf16 %v6381
          %v6446 = vunpack.c.l.bf16 %v6382
          %v6447 = vunpack.c.l.bf16 %v6383
          %v6448 = vunpack.c.l.bf16 %v6384
          %v6449 = vunpack.c.l.bf16 %v6385
          %v6450 = vunpack.c.l.bf16 %v6386
          %v6451 = vunpack.c.l.bf16 %v6387
          %v6452 = vunpack.c.l.bf16 %v6388
          %v6453 = vunpack.c.l.bf16 %v6389
          %v6454 = vunpack.c.l.bf16 %v6390
          %v6455 = vunpack.c.l.bf16 %v6391
          %v6456 = vunpack.c.l.bf16 %v6392
          %v6457 = vunpack.c.l.bf16 %v6393
          %v6458 = vsub.f32 %v6266, %v6394
          %v6459 = vsub.f32 %v6267, %v6395
          %v6460 = vsub.f32 %v6268, %v6396
          %v6461 = vsub.f32 %v6269, %v6397
          %v6462 = vsub.f32 %v6270, %v6398
          %v6463 = vsub.f32 %v6271, %v6399
          %v6464 = vsub.f32 %v6272, %v6400
          %v6465 = vsub.f32 %v6273, %v6401
          %v6466 = vsub.f32 %v6274, %v6402
          %v6467 = vsub.f32 %v6275, %v6403
          %v6468 = vsub.f32 %v6276, %v6404
          %v6469 = vsub.f32 %v6277, %v6405
          %v6470 = vsub.f32 %v6278, %v6406
          %v6471 = vsub.f32 %v6279, %v6407
          %v6472 = vsub.f32 %v6280, %v6408
          %v6473 = vsub.f32 %v6281, %v6409
          %v6474 = vsub.f32 %v6282, %v6410
          %v6475 = vsub.f32 %v6283, %v6411
          %v6476 = vsub.f32 %v6284, %v6412
          %v6477 = vsub.f32 %v6285, %v6413
          %v6478 = vsub.f32 %v6286, %v6414
          %v6479 = vsub.f32 %v6287, %v6415
          %v6480 = vsub.f32 %v6288, %v6416
          %v6481 = vsub.f32 %v6289, %v6417
          %v6482 = vsub.f32 %v6290, %v6418
          %v6483 = vsub.f32 %v6291, %v6419
          %v6484 = vsub.f32 %v6292, %v6420
          %v6485 = vsub.f32 %v6293, %v6421
          %v6486 = vsub.f32 %v6294, %v6422
          %v6487 = vsub.f32 %v6295, %v6423
          %v6488 = vsub.f32 %v6296, %v6424
          %v6489 = vsub.f32 %v6297, %v6425
          %v6490 = vsub.f32 %v6298, %v6426
          %v6491 = vsub.f32 %v6299, %v6427
          %v6492 = vsub.f32 %v6300, %v6428
          %v6493 = vsub.f32 %v6301, %v6429
          %v6494 = vsub.f32 %v6302, %v6430
          %v6495 = vsub.f32 %v6303, %v6431
          %v6496 = vsub.f32 %v6304, %v6432
          %v6497 = vsub.f32 %v6305, %v6433
          %v6498 = vsub.f32 %v6306, %v6434
          %v6499 = vsub.f32 %v6307, %v6435
          %v6500 = vsub.f32 %v6308, %v6436
          %v6501 = vsub.f32 %v6309, %v6437
          %v6502 = vsub.f32 %v6310, %v6438
          %v6503 = vsub.f32 %v6311, %v6439
          %v6504 = vsub.f32 %v6312, %v6440
          %v6505 = vsub.f32 %v6313, %v6441
          %v6506 = vsub.f32 %v6314, %v6442
          %v6507 = vsub.f32 %v6315, %v6443
          %v6508 = vsub.f32 %v6316, %v6444
          %v6509 = vsub.f32 %v6317, %v6445
          %v6510 = vsub.f32 %v6318, %v6446
          %v6511 = vsub.f32 %v6319, %v6447
          %v6512 = vsub.f32 %v6320, %v6448
          %v6513 = vsub.f32 %v6321, %v6449
          %v6514 = vsub.f32 %v6322, %v6450
          %v6515 = vsub.f32 %v6323, %v6451
          %v6516 = vsub.f32 %v6324, %v6452
          %v6517 = vsub.f32 %v6325, %v6453
          %v6518 = vsub.f32 %v6326, %v6454
          %v6519 = vsub.f32 %v6327, %v6455
          %v6520 = vsub.f32 %v6328, %v6456
          %v6521 = vsub.f32 %v6329, %v6457
          %v6522 = vpack.c.bf16 %v6459, %v6458
          %v6523 = vpack.c.bf16 %v6461, %v6460
          %v6524 = vpack.c.bf16 %v6463, %v6462
          %v6525 = vpack.c.bf16 %v6465, %v6464
          %v6526 = vpack.c.bf16 %v6467, %v6466
          %v6527 = vpack.c.bf16 %v6469, %v6468
          %v6528 = vpack.c.bf16 %v6471, %v6470
          %v6529 = vpack.c.bf16 %v6473, %v6472
          %v6530 = vpack.c.bf16 %v6475, %v6474
          %v6531 = vpack.c.bf16 %v6477, %v6476
          %v6532 = vpack.c.bf16 %v6479, %v6478
          %v6533 = vpack.c.bf16 %v6481, %v6480
          %v6534 = vpack.c.bf16 %v6483, %v6482
          %v6535 = vpack.c.bf16 %v6485, %v6484
          %v6536 = vpack.c.bf16 %v6487, %v6486
          %v6537 = vpack.c.bf16 %v6489, %v6488
          %v6538 = vpack.c.bf16 %v6491, %v6490
          %v6539 = vpack.c.bf16 %v6493, %v6492
          %v6540 = vpack.c.bf16 %v6495, %v6494
          %v6541 = vpack.c.bf16 %v6497, %v6496
          %v6542 = vpack.c.bf16 %v6499, %v6498
          %v6543 = vpack.c.bf16 %v6501, %v6500
          %v6544 = vpack.c.bf16 %v6503, %v6502
          %v6545 = vpack.c.bf16 %v6505, %v6504
          %v6546 = vpack.c.bf16 %v6507, %v6506
          %v6547 = vpack.c.bf16 %v6509, %v6508
          %v6548 = vpack.c.bf16 %v6511, %v6510
          %v6549 = vpack.c.bf16 %v6513, %v6512
          %v6550 = vpack.c.bf16 %v6515, %v6514
          %v6551 = vpack.c.bf16 %v6517, %v6516
          %v6552 = vpack.c.bf16 %v6519, %v6518
          %v6553 = vpack.c.bf16 %v6521, %v6520
          %v6554 = vsel %vm5953, 1, 0
          %v6555 = vsel %vm5954, 1, 0
          %v6556 = vsel %vm5955, 1, 0
          %v6557 = vsel %vm5956, 1, 0
          %v6558 = vsel %vm5957, 1, 0
          %v6559 = vsel %vm5958, 1, 0
          %v6560 = vsel %vm5959, 1, 0
          %v6561 = vsel %vm5960, 1, 0
          %v6562 = vsel %vm5961, 1, 0
          %v6563 = vsel %vm5962, 1, 0
          %v6564 = vsel %vm5963, 1, 0
          %v6565 = vsel %vm5964, 1, 0
          %v6566 = vsel %vm5965, 1, 0
          %v6567 = vsel %vm5966, 1, 0
          %v6568 = vsel %vm5967, 1, 0
          %v6569 = vsel %vm5968, 1, 0
          %v6570 = vsel %vm5969, 1, 0
          %v6571 = vsel %vm5970, 1, 0
          %v6572 = vsel %vm5971, 1, 0
          %v6573 = vsel %vm5972, 1, 0
          %v6574 = vsel %vm5973, 1, 0
          %v6575 = vsel %vm5974, 1, 0
          %v6576 = vsel %vm5975, 1, 0
          %v6577 = vsel %vm5976, 1, 0
          %v6578 = vsel %vm5977, 1, 0
          %v6579 = vsel %vm5978, 1, 0
          %v6580 = vsel %vm5979, 1, 0
          %v6581 = vsel %vm5980, 1, 0
          %v6582 = vsel %vm5981, 1, 0
          %v6583 = vsel %vm5982, 1, 0
          %v6584 = vsel %vm5983, 1, 0
          %v6585 = vsel %vm5984, 1, 0
          %v6586 = vcvt.s32.f32 %v6554
          %v6587 = vcvt.s32.f32 %v6555
          %v6588 = vcvt.s32.f32 %v6556
          %v6589 = vcvt.s32.f32 %v6557
          %v6590 = vcvt.s32.f32 %v6558
          %v6591 = vcvt.s32.f32 %v6559
          %v6592 = vcvt.s32.f32 %v6560
          %v6593 = vcvt.s32.f32 %v6561
          %v6594 = vcvt.s32.f32 %v6562
          %v6595 = vcvt.s32.f32 %v6563
          %v6596 = vcvt.s32.f32 %v6564
          %v6597 = vcvt.s32.f32 %v6565
          %v6598 = vcvt.s32.f32 %v6566
          %v6599 = vcvt.s32.f32 %v6567
          %v6600 = vcvt.s32.f32 %v6568
          %v6601 = vcvt.s32.f32 %v6569
          %v6602 = vcvt.s32.f32 %v6570
          %v6603 = vcvt.s32.f32 %v6571
          %v6604 = vcvt.s32.f32 %v6572
          %v6605 = vcvt.s32.f32 %v6573
          %v6606 = vcvt.s32.f32 %v6574
          %v6607 = vcvt.s32.f32 %v6575
          %v6608 = vcvt.s32.f32 %v6576
          %v6609 = vcvt.s32.f32 %v6577
          %v6610 = vcvt.s32.f32 %v6578
          %v6611 = vcvt.s32.f32 %v6579
          %v6612 = vcvt.s32.f32 %v6580
          %v6613 = vcvt.s32.f32 %v6581
          %v6614 = vcvt.s32.f32 %v6582
          %v6615 = vcvt.s32.f32 %v6583
          %v6616 = vcvt.s32.f32 %v6584
          %v6617 = vcvt.s32.f32 %v6585
          %v6618 = vpack.c.bf16 %v6590, %v6586
          %v6619 = vpack.c.bf16 %v6591, %v6587
          %v6620 = vpack.c.bf16 %v6592, %v6588
          %v6621 = vpack.c.bf16 %v6593, %v6589
          %v6622 = vpack.c.bf16 %v6598, %v6594
          %v6623 = vpack.c.bf16 %v6599, %v6595
          %v6624 = vpack.c.bf16 %v6600, %v6596
          %v6625 = vpack.c.bf16 %v6601, %v6597
          %v6626 = vpack.c.bf16 %v6606, %v6602
          %v6627 = vpack.c.bf16 %v6607, %v6603
          %v6628 = vpack.c.bf16 %v6608, %v6604
          %v6629 = vpack.c.bf16 %v6609, %v6605
          %v6630 = vpack.c.bf16 %v6614, %v6610
          %v6631 = vpack.c.bf16 %v6615, %v6611
          %v6632 = vpack.c.bf16 %v6616, %v6612
          %v6633 = vpack.c.bf16 %v6617, %v6613
          %v6698 = vunpack.c.l.b16 %v6330
          %v6699 = vunpack.c.l.b16 %v6331
          %v6700 = vunpack.c.l.b16 %v6332
          %v6701 = vunpack.c.l.b16 %v6333
          %v6702 = vunpack.c.l.b16 %v6334
          %v6703 = vunpack.c.l.b16 %v6335
          %v6704 = vunpack.c.l.b16 %v6336
          %v6705 = vunpack.c.l.b16 %v6337
          %v6706 = vunpack.c.l.b16 %v6338
          %v6707 = vunpack.c.l.b16 %v6339
          %v6708 = vunpack.c.l.b16 %v6340
          %v6709 = vunpack.c.l.b16 %v6341
          %v6710 = vunpack.c.l.b16 %v6342
          %v6711 = vunpack.c.l.b16 %v6343
          %v6712 = vunpack.c.l.b16 %v6344
          %v6713 = vunpack.c.l.b16 %v6345
          %v6714 = vunpack.c.l.b16 %v6346
          %v6715 = vunpack.c.l.b16 %v6347
          %v6716 = vunpack.c.l.b16 %v6348
          %v6717 = vunpack.c.l.b16 %v6349
          %v6718 = vunpack.c.l.b16 %v6350
          %v6719 = vunpack.c.l.b16 %v6351
          %v6720 = vunpack.c.l.b16 %v6352
          %v6721 = vunpack.c.l.b16 %v6353
          %v6722 = vunpack.c.l.b16 %v6354
          %v6723 = vunpack.c.l.b16 %v6355
          %v6724 = vunpack.c.l.b16 %v6356
          %v6725 = vunpack.c.l.b16 %v6357
          %v6726 = vunpack.c.l.b16 %v6358
          %v6727 = vunpack.c.l.b16 %v6359
          %v6728 = vunpack.c.l.b16 %v6360
          %v6729 = vunpack.c.l.b16 %v6361
          %v6730 = vunpack.c.l.b16 %v6362
          %v6731 = vunpack.c.l.b16 %v6363
          %v6732 = vunpack.c.l.b16 %v6364
          %v6733 = vunpack.c.l.b16 %v6365
          %v6734 = vunpack.c.l.b16 %v6366
          %v6735 = vunpack.c.l.b16 %v6367
          %v6736 = vunpack.c.l.b16 %v6368
          %v6737 = vunpack.c.l.b16 %v6369
          %v6738 = vunpack.c.l.b16 %v6370
          %v6739 = vunpack.c.l.b16 %v6371
          %v6740 = vunpack.c.l.b16 %v6372
          %v6741 = vunpack.c.l.b16 %v6373
          %v6742 = vunpack.c.l.b16 %v6374
          %v6743 = vunpack.c.l.b16 %v6375
          %v6744 = vunpack.c.l.b16 %v6376
          %v6745 = vunpack.c.l.b16 %v6377
          %v6746 = vunpack.c.l.b16 %v6378
          %v6747 = vunpack.c.l.b16 %v6379
          %v6748 = vunpack.c.l.b16 %v6380
          %v6749 = vunpack.c.l.b16 %v6381
          %v6750 = vunpack.c.l.b16 %v6382
          %v6751 = vunpack.c.l.b16 %v6383
          %v6752 = vunpack.c.l.b16 %v6384
          %v6753 = vunpack.c.l.b16 %v6385
          %v6754 = vunpack.c.l.b16 %v6386
          %v6755 = vunpack.c.l.b16 %v6387
          %v6756 = vunpack.c.l.b16 %v6388
          %v6757 = vunpack.c.l.b16 %v6389
          %v6758 = vunpack.c.l.b16 %v6390
          %v6759 = vunpack.c.l.b16 %v6391
          %v6760 = vunpack.c.l.b16 %v6392
          %v6761 = vunpack.c.l.b16 %v6393
          %v6762 = vpack.c.b16 %v6699, %v6698
          %v6763 = vpack.c.b16 %v6701, %v6700
          %v6764 = vpack.c.b16 %v6703, %v6702
          %v6765 = vpack.c.b16 %v6705, %v6704
          %v6766 = vpack.c.b16 %v6707, %v6706
          %v6767 = vpack.c.b16 %v6709, %v6708
          %v6768 = vpack.c.b16 %v6711, %v6710
          %v6769 = vpack.c.b16 %v6713, %v6712
          %v6770 = vpack.c.b16 %v6715, %v6714
          %v6771 = vpack.c.b16 %v6717, %v6716
          %v6772 = vpack.c.b16 %v6719, %v6718
          %v6773 = vpack.c.b16 %v6721, %v6720
          %v6774 = vpack.c.b16 %v6723, %v6722
          %v6775 = vpack.c.b16 %v6725, %v6724
          %v6776 = vpack.c.b16 %v6727, %v6726
          %v6777 = vpack.c.b16 %v6729, %v6728
          %v6778 = vpack.c.b16 %v6731, %v6730
          %v6779 = vpack.c.b16 %v6733, %v6732
          %v6780 = vpack.c.b16 %v6735, %v6734
          %v6781 = vpack.c.b16 %v6737, %v6736
          %v6782 = vpack.c.b16 %v6739, %v6738
          %v6783 = vpack.c.b16 %v6741, %v6740
          %v6784 = vpack.c.b16 %v6743, %v6742
          %v6785 = vpack.c.b16 %v6745, %v6744
          %v6786 = vpack.c.b16 %v6747, %v6746
          %v6787 = vpack.c.b16 %v6749, %v6748
          %v6788 = vpack.c.b16 %v6751, %v6750
          %v6789 = vpack.c.b16 %v6753, %v6752
          %v6790 = vpack.c.b16 %v6755, %v6754
          %v6791 = vpack.c.b16 %v6757, %v6756
          %v6792 = vpack.c.b16 %v6759, %v6758
          %v6793 = vpack.c.b16 %v6761, %v6760
          %6826 = vmatpush.bf16.msra.mxu0 %v6769
          %6827 = vmatpush.bf16.msra.mxu0 %v6768
          %6828 = vmatpush.bf16.msra.mxu0 %v6767
          %6829 = vmatpush.bf16.msra.mxu0 %v6766
          %6830 = vmatpush.bf16.msra.mxu0 %v6765
          %6831 = vmatpush.bf16.msra.mxu0 %v6764
          %6832 = vmatpush.bf16.msra.mxu0 %v6763
          %6833 = vmatpush.bf16.msra.mxu0 %v6762
          %6834 = vmatmul.bf16.gmra.mxu0 %v6618
          %v6835 = vpop.f32.mrf.mxu0
          %v6836 = vadd.f32 0.0, %v6835
          %v6837 = vpop.f32.mrf.mxu0
          %v6838 = vadd.f32 0.0, %v6837
          %6839 = vmatmul.bf16.gmra.mxu0 %v6622
          %v6840 = vpop.f32.mrf.mxu0
          %v6841 = vadd.f32 0.0, %v6840
          %v6842 = vpop.f32.mrf.mxu0
          %v6843 = vadd.f32 0.0, %v6842
          %6844 = vmatmul.bf16.gmra.mxu0 %v6626
          %v6845 = vpop.f32.mrf.mxu0
          %v6846 = vadd.f32 0.0, %v6845
          %v6847 = vpop.f32.mrf.mxu0
          %v6848 = vadd.f32 0.0, %v6847
          %6849 = vmatmul.bf16.gmra.mxu0 %v6630
          %v6850 = vpop.f32.mrf.mxu0
          %v6851 = vadd.f32 0.0, %v6850
          %v6852 = vpop.f32.mrf.mxu0
          %v6853 = vadd.f32 0.0, %v6852
          %6854 = vdwg.mxu0
          %6855 = vmatpush.bf16.msra.mxu0 %v6777
          %6856 = vmatpush.bf16.msra.mxu0 %v6776
          %6857 = vmatpush.bf16.msra.mxu0 %v6775
          %6858 = vmatpush.bf16.msra.mxu0 %v6774
          %6859 = vmatpush.bf16.msra.mxu0 %v6773
          %6860 = vmatpush.bf16.msra.mxu0 %v6772
          %6861 = vmatpush.bf16.msra.mxu0 %v6771
          %6862 = vmatpush.bf16.msra.mxu0 %v6770
          %6863 = vmatmul.bf16.gmra.mxu0 %v6619
          %v6864 = vpop.f32.mrf.mxu0
          %v6865 = vadd.f32 %v6836, %v6864
          %v6866 = vpop.f32.mrf.mxu0
          %v6867 = vadd.f32 %v6838, %v6866
          %6868 = vmatmul.bf16.gmra.mxu0 %v6623
          %v6869 = vpop.f32.mrf.mxu0
          %v6870 = vadd.f32 %v6841, %v6869
          %v6871 = vpop.f32.mrf.mxu0
          %v6872 = vadd.f32 %v6843, %v6871
          %6873 = vmatmul.bf16.gmra.mxu0 %v6627
          %v6874 = vpop.f32.mrf.mxu0
          %v6875 = vadd.f32 %v6846, %v6874
          %v6876 = vpop.f32.mrf.mxu0
          %v6877 = vadd.f32 %v6848, %v6876
          %6878 = vmatmul.bf16.gmra.mxu0 %v6631
          %v6879 = vpop.f32.mrf.mxu0
          %v6880 = vadd.f32 %v6851, %v6879
          %v6881 = vpop.f32.mrf.mxu0
          %v6882 = vadd.f32 %v6853, %v6881
          %6883 = vdwg.mxu0
          %6884 = vmatpush.bf16.msra.mxu0 %v6785
          %6885 = vmatpush.bf16.msra.mxu0 %v6784
          %6886 = vmatpush.bf16.msra.mxu0 %v6783
          %6887 = vmatpush.bf16.msra.mxu0 %v6782
          %6888 = vmatpush.bf16.msra.mxu0 %v6781
          %6889 = vmatpush.bf16.msra.mxu0 %v6780
          %6890 = vmatpush.bf16.msra.mxu0 %v6779
          %6891 = vmatpush.bf16.msra.mxu0 %v6778
          %6892 = vmatmul.bf16.gmra.mxu0 %v6620
          %v6893 = vpop.f32.mrf.mxu0
          %v6894 = vadd.f32 %v6865, %v6893
          %v6895 = vpop.f32.mrf.mxu0
          %v6896 = vadd.f32 %v6867, %v6895
          %6897 = vmatmul.bf16.gmra.mxu0 %v6624
          %v6898 = vpop.f32.mrf.mxu0
          %v6899 = vadd.f32 %v6870, %v6898
          %v6900 = vpop.f32.mrf.mxu0
          %v6901 = vadd.f32 %v6872, %v6900
          %6902 = vmatmul.bf16.gmra.mxu0 %v6628
          %v6903 = vpop.f32.mrf.mxu0
          %v6904 = vadd.f32 %v6875, %v6903
          %v6905 = vpop.f32.mrf.mxu0
          %v6906 = vadd.f32 %v6877, %v6905
          %6907 = vmatmul.bf16.gmra.mxu0 %v6632
          %v6908 = vpop.f32.mrf.mxu0
          %v6909 = vadd.f32 %v6880, %v6908
          %v6910 = vpop.f32.mrf.mxu0
          %v6911 = vadd.f32 %v6882, %v6910
          %6912 = vdwg.mxu0
          %6913 = vmatpush.bf16.msra.mxu0 %v6793
          %6914 = vmatpush.bf16.msra.mxu0 %v6792
          %6915 = vmatpush.bf16.msra.mxu0 %v6791
          %6916 = vmatpush.bf16.msra.mxu0 %v6790
          %6917 = vmatpush.bf16.msra.mxu0 %v6789
          %6918 = vmatpush.bf16.msra.mxu0 %v6788
          %6919 = vmatpush.bf16.msra.mxu0 %v6787
          %6920 = vmatpush.bf16.msra.mxu0 %v6786
          %6921 = vmatmul.bf16.gmra.mxu0 %v6621
          %v6922 = vpop.f32.mrf.mxu0
          %v6923 = vadd.f32 %v6894, %v6922
          %v6924 = vpop.f32.mrf.mxu0
          %v6925 = vadd.f32 %v6896, %v6924
          %6926 = vmatmul.bf16.gmra.mxu0 %v6625
          %v6927 = vpop.f32.mrf.mxu0
          %v6928 = vadd.f32 %v6899, %v6927
          %v6929 = vpop.f32.mrf.mxu0
          %v6930 = vadd.f32 %v6901, %v6929
          %6931 = vmatmul.bf16.gmra.mxu0 %v6629
          %v6932 = vpop.f32.mrf.mxu0
          %v6933 = vadd.f32 %v6904, %v6932
          %v6934 = vpop.f32.mrf.mxu0
          %v6935 = vadd.f32 %v6906, %v6934
          %6936 = vmatmul.bf16.gmra.mxu0 %v6633
          %v6937 = vpop.f32.mrf.mxu0
          %v6938 = vadd.f32 %v6909, %v6937
          %v6939 = vpop.f32.mrf.mxu0
          %v6940 = vadd.f32 %v6911, %v6939
          %6941 = vdwg.mxu0
          %v7006 = vunpack.c.l.b16 %v6138
          %v7007 = vunpack.c.l.b16 %v6139
          %v7008 = vunpack.c.l.b16 %v6140
          %v7009 = vunpack.c.l.b16 %v6141
          %v7010 = vunpack.c.l.b16 %v6142
          %v7011 = vunpack.c.l.b16 %v6143
          %v7012 = vunpack.c.l.b16 %v6144
          %v7013 = vunpack.c.l.b16 %v6145
          %v7014 = vunpack.c.l.b16 %v6146
          %v7015 = vunpack.c.l.b16 %v6147
          %v7016 = vunpack.c.l.b16 %v6148
          %v7017 = vunpack.c.l.b16 %v6149
          %v7018 = vunpack.c.l.b16 %v6150
          %v7019 = vunpack.c.l.b16 %v6151
          %v7020 = vunpack.c.l.b16 %v6152
          %v7021 = vunpack.c.l.b16 %v6153
          %v7022 = vunpack.c.l.b16 %v6154
          %v7023 = vunpack.c.l.b16 %v6155
          %v7024 = vunpack.c.l.b16 %v6156
          %v7025 = vunpack.c.l.b16 %v6157
          %v7026 = vunpack.c.l.b16 %v6158
          %v7027 = vunpack.c.l.b16 %v6159
          %v7028 = vunpack.c.l.b16 %v6160
          %v7029 = vunpack.c.l.b16 %v6161
          %v7030 = vunpack.c.l.b16 %v6162
          %v7031 = vunpack.c.l.b16 %v6163
          %v7032 = vunpack.c.l.b16 %v6164
          %v7033 = vunpack.c.l.b16 %v6165
          %v7034 = vunpack.c.l.b16 %v6166
          %v7035 = vunpack.c.l.b16 %v6167
          %v7036 = vunpack.c.l.b16 %v6168
          %v7037 = vunpack.c.l.b16 %v6169
          %v7038 = vunpack.c.l.b16 %v6170
          %v7039 = vunpack.c.l.b16 %v6171
          %v7040 = vunpack.c.l.b16 %v6172
          %v7041 = vunpack.c.l.b16 %v6173
          %v7042 = vunpack.c.l.b16 %v6174
          %v7043 = vunpack.c.l.b16 %v6175
          %v7044 = vunpack.c.l.b16 %v6176
          %v7045 = vunpack.c.l.b16 %v6177
          %v7046 = vunpack.c.l.b16 %v6178
          %v7047 = vunpack.c.l.b16 %v6179
          %v7048 = vunpack.c.l.b16 %v6180
          %v7049 = vunpack.c.l.b16 %v6181
          %v7050 = vunpack.c.l.b16 %v6182
          %v7051 = vunpack.c.l.b16 %v6183
          %v7052 = vunpack.c.l.b16 %v6184
          %v7053 = vunpack.c.l.b16 %v6185
          %v7054 = vunpack.c.l.b16 %v6186
          %v7055 = vunpack.c.l.b16 %v6187
          %v7056 = vunpack.c.l.b16 %v6188
          %v7057 = vunpack.c.l.b16 %v6189
          %v7058 = vunpack.c.l.b16 %v6190
          %v7059 = vunpack.c.l.b16 %v6191
          %v7060 = vunpack.c.l.b16 %v6192
          %v7061 = vunpack.c.l.b16 %v6193
          %v7062 = vunpack.c.l.b16 %v6194
          %v7063 = vunpack.c.l.b16 %v6195
          %v7064 = vunpack.c.l.b16 %v6196
          %v7065 = vunpack.c.l.b16 %v6197
          %v7066 = vunpack.c.l.b16 %v6198
          %v7067 = vunpack.c.l.b16 %v6199
          %v7068 = vunpack.c.l.b16 %v6200
          %v7069 = vunpack.c.l.b16 %v6201
          %v7070 = vpack.c.b16 %v7007, %v7006
          %v7071 = vpack.c.b16 %v7009, %v7008
          %v7072 = vpack.c.b16 %v7011, %v7010
          %v7073 = vpack.c.b16 %v7013, %v7012
          %v7074 = vpack.c.b16 %v7015, %v7014
          %v7075 = vpack.c.b16 %v7017, %v7016
          %v7076 = vpack.c.b16 %v7019, %v7018
          %v7077 = vpack.c.b16 %v7021, %v7020
          %v7078 = vpack.c.b16 %v7023, %v7022
          %v7079 = vpack.c.b16 %v7025, %v7024
          %v7080 = vpack.c.b16 %v7027, %v7026
          %v7081 = vpack.c.b16 %v7029, %v7028
          %v7082 = vpack.c.b16 %v7031, %v7030
          %v7083 = vpack.c.b16 %v7033, %v7032
          %v7084 = vpack.c.b16 %v7035, %v7034
          %v7085 = vpack.c.b16 %v7037, %v7036
          %v7086 = vpack.c.b16 %v7039, %v7038
          %v7087 = vpack.c.b16 %v7041, %v7040
          %v7088 = vpack.c.b16 %v7043, %v7042
          %v7089 = vpack.c.b16 %v7045, %v7044
          %v7090 = vpack.c.b16 %v7047, %v7046
          %v7091 = vpack.c.b16 %v7049, %v7048
          %v7092 = vpack.c.b16 %v7051, %v7050
          %v7093 = vpack.c.b16 %v7053, %v7052
          %v7094 = vpack.c.b16 %v7055, %v7054
          %v7095 = vpack.c.b16 %v7057, %v7056
          %v7096 = vpack.c.b16 %v7059, %v7058
          %v7097 = vpack.c.b16 %v7061, %v7060
          %v7098 = vpack.c.b16 %v7063, %v7062
          %v7099 = vpack.c.b16 %v7065, %v7064
          %v7100 = vpack.c.b16 %v7067, %v7066
          %v7101 = vpack.c.b16 %v7069, %v7068
          %7134 = vmatpush.bf16.msra.mxu0 %v7077
          %7135 = vmatpush.bf16.msra.mxu0 %v7076
          %7136 = vmatpush.bf16.msra.mxu0 %v7075
          %7137 = vmatpush.bf16.msra.mxu0 %v7074
          %7138 = vmatpush.bf16.msra.mxu0 %v7073
          %7139 = vmatpush.bf16.msra.mxu0 %v7072
          %7140 = vmatpush.bf16.msra.mxu0 %v7071
          %7141 = vmatpush.bf16.msra.mxu0 %v7070
          %7142 = vmatmul.bf16.gmra.mxu0 %v6618
          %v7143 = vpop.f32.mrf.mxu0
          %v7144 = vadd.f32 %v6923, %v7143
          %v7145 = vpop.f32.mrf.mxu0
          %v7146 = vadd.f32 %v6925, %v7145
          %7147 = vmatmul.bf16.gmra.mxu0 %v6622
          %v7148 = vpop.f32.mrf.mxu0
          %v7149 = vadd.f32 %v6928, %v7148
          %v7150 = vpop.f32.mrf.mxu0
          %v7151 = vadd.f32 %v6930, %v7150
          %7152 = vmatmul.bf16.gmra.mxu0 %v6626
          %v7153 = vpop.f32.mrf.mxu0
          %v7154 = vadd.f32 %v6933, %v7153
          %v7155 = vpop.f32.mrf.mxu0
          %v7156 = vadd.f32 %v6935, %v7155
          %7157 = vmatmul.bf16.gmra.mxu0 %v6630
          %v7158 = vpop.f32.mrf.mxu0
          %v7159 = vadd.f32 %v6938, %v7158
          %v7160 = vpop.f32.mrf.mxu0
          %v7161 = vadd.f32 %v6940, %v7160
          %7162 = vdwg.mxu0
          %7163 = vmatpush.bf16.msra.mxu0 %v7085
          %7164 = vmatpush.bf16.msra.mxu0 %v7084
          %7165 = vmatpush.bf16.msra.mxu0 %v7083
          %7166 = vmatpush.bf16.msra.mxu0 %v7082
          %7167 = vmatpush.bf16.msra.mxu0 %v7081
          %7168 = vmatpush.bf16.msra.mxu0 %v7080
          %7169 = vmatpush.bf16.msra.mxu0 %v7079
          %7170 = vmatpush.bf16.msra.mxu0 %v7078
          %7171 = vmatmul.bf16.gmra.mxu0 %v6619
          %v7172 = vpop.f32.mrf.mxu0
          %v7173 = vadd.f32 %v7144, %v7172
          %v7174 = vpop.f32.mrf.mxu0
          %v7175 = vadd.f32 %v7146, %v7174
          %7176 = vmatmul.bf16.gmra.mxu0 %v6623
          %v7177 = vpop.f32.mrf.mxu0
          %v7178 = vadd.f32 %v7149, %v7177
          %v7179 = vpop.f32.mrf.mxu0
          %v7180 = vadd.f32 %v7151, %v7179
          %7181 = vmatmul.bf16.gmra.mxu0 %v6627
          %v7182 = vpop.f32.mrf.mxu0
          %v7183 = vadd.f32 %v7154, %v7182
          %v7184 = vpop.f32.mrf.mxu0
          %v7185 = vadd.f32 %v7156, %v7184
          %7186 = vmatmul.bf16.gmra.mxu0 %v6631
          %v7187 = vpop.f32.mrf.mxu0
          %v7188 = vadd.f32 %v7159, %v7187
          %v7189 = vpop.f32.mrf.mxu0
          %v7190 = vadd.f32 %v7161, %v7189
          %7191 = vdwg.mxu0
          %7192 = vmatpush.bf16.msra.mxu0 %v7093
          %7193 = vmatpush.bf16.msra.mxu0 %v7092
          %7194 = vmatpush.bf16.msra.mxu0 %v7091
          %7195 = vmatpush.bf16.msra.mxu0 %v7090
          %7196 = vmatpush.bf16.msra.mxu0 %v7089
          %7197 = vmatpush.bf16.msra.mxu0 %v7088
          %7198 = vmatpush.bf16.msra.mxu0 %v7087
          %7199 = vmatpush.bf16.msra.mxu0 %v7086
          %7200 = vmatmul.bf16.gmra.mxu0 %v6620
          %v7201 = vpop.f32.mrf.mxu0
          %v7202 = vadd.f32 %v7173, %v7201
          %v7203 = vpop.f32.mrf.mxu0
          %v7204 = vadd.f32 %v7175, %v7203
          %7205 = vmatmul.bf16.gmra.mxu0 %v6624
          %v7206 = vpop.f32.mrf.mxu0
          %v7207 = vadd.f32 %v7178, %v7206
          %v7208 = vpop.f32.mrf.mxu0
          %v7209 = vadd.f32 %v7180, %v7208
          %7210 = vmatmul.bf16.gmra.mxu0 %v6628
          %v7211 = vpop.f32.mrf.mxu0
          %v7212 = vadd.f32 %v7183, %v7211
          %v7213 = vpop.f32.mrf.mxu0
          %v7214 = vadd.f32 %v7185, %v7213
          %7215 = vmatmul.bf16.gmra.mxu0 %v6632
          %v7216 = vpop.f32.mrf.mxu0
          %v7217 = vadd.f32 %v7188, %v7216
          %v7218 = vpop.f32.mrf.mxu0
          %v7219 = vadd.f32 %v7190, %v7218
          %7220 = vdwg.mxu0
          %7221 = vmatpush.bf16.msra.mxu0 %v7101
          %7222 = vmatpush.bf16.msra.mxu0 %v7100
          %7223 = vmatpush.bf16.msra.mxu0 %v7099
          %7224 = vmatpush.bf16.msra.mxu0 %v7098
          %7225 = vmatpush.bf16.msra.mxu0 %v7097
          %7226 = vmatpush.bf16.msra.mxu0 %v7096
          %7227 = vmatpush.bf16.msra.mxu0 %v7095
          %7228 = vmatpush.bf16.msra.mxu0 %v7094
          %7229 = vmatmul.bf16.gmra.mxu0 %v6621
          %v7230 = vpop.f32.mrf.mxu0
          %v7231 = vadd.f32 %v7202, %v7230
          %v7232 = vpop.f32.mrf.mxu0
          %v7233 = vadd.f32 %v7204, %v7232
          %7234 = vmatmul.bf16.gmra.mxu0 %v6625
          %v7235 = vpop.f32.mrf.mxu0
          %v7236 = vadd.f32 %v7207, %v7235
          %v7237 = vpop.f32.mrf.mxu0
          %v7238 = vadd.f32 %v7209, %v7237
          %7239 = vmatmul.bf16.gmra.mxu0 %v6629
          %v7240 = vpop.f32.mrf.mxu0
          %v7241 = vadd.f32 %v7212, %v7240
          %v7242 = vpop.f32.mrf.mxu0
          %v7243 = vadd.f32 %v7214, %v7242
          %7244 = vmatmul.bf16.gmra.mxu0 %v6633
          %v7245 = vpop.f32.mrf.mxu0
          %v7246 = vadd.f32 %v7217, %v7245
          %v7247 = vpop.f32.mrf.mxu0
          %v7248 = vadd.f32 %v7219, %v7247
          %7249 = vdwg.mxu0
          %7250 = vmatpush.bf16.msra.mxu0 %v6529
          %7251 = vmatpush.bf16.msra.mxu0 %v6528
          %7252 = vmatpush.bf16.msra.mxu0 %v6527
          %7253 = vmatpush.bf16.msra.mxu0 %v6526
          %7254 = vmatpush.bf16.msra.mxu0 %v6525
          %7255 = vmatpush.bf16.msra.mxu0 %v6524
          %7256 = vmatpush.bf16.msra.mxu0 %v6523
          %7257 = vmatpush.bf16.msra.mxu0 %v6522
          %7258 = vmatmul.bf16.gmra.mxu0 %v6618
          %v7259 = vpop.f32.mrf.mxu0
          %v7260 = vadd.f32 0.0, %v7259
          %v7261 = vpop.f32.mrf.mxu0
          %v7262 = vadd.f32 0.0, %v7261
          %7263 = vmatmul.bf16.gmra.mxu0 %v6622
          %v7264 = vpop.f32.mrf.mxu0
          %v7265 = vadd.f32 0.0, %v7264
          %v7266 = vpop.f32.mrf.mxu0
          %v7267 = vadd.f32 0.0, %v7266
          %7268 = vmatmul.bf16.gmra.mxu0 %v6626
          %v7269 = vpop.f32.mrf.mxu0
          %v7270 = vadd.f32 0.0, %v7269
          %v7271 = vpop.f32.mrf.mxu0
          %v7272 = vadd.f32 0.0, %v7271
          %7273 = vmatmul.bf16.gmra.mxu0 %v6630
          %v7274 = vpop.f32.mrf.mxu0
          %v7275 = vadd.f32 0.0, %v7274
          %v7276 = vpop.f32.mrf.mxu0
          %v7277 = vadd.f32 0.0, %v7276
          %7278 = vdwg.mxu0
          %7279 = vmatpush.bf16.msra.mxu0 %v6537
          %7280 = vmatpush.bf16.msra.mxu0 %v6536
          %7281 = vmatpush.bf16.msra.mxu0 %v6535
          %7282 = vmatpush.bf16.msra.mxu0 %v6534
          %7283 = vmatpush.bf16.msra.mxu0 %v6533
          %7284 = vmatpush.bf16.msra.mxu0 %v6532
          %7285 = vmatpush.bf16.msra.mxu0 %v6531
          %7286 = vmatpush.bf16.msra.mxu0 %v6530
          %7287 = vmatmul.bf16.gmra.mxu0 %v6619
          %v7288 = vpop.f32.mrf.mxu0
          %v7289 = vadd.f32 %v7260, %v7288
          %v7290 = vpop.f32.mrf.mxu0
          %v7291 = vadd.f32 %v7262, %v7290
          %7292 = vmatmul.bf16.gmra.mxu0 %v6623
          %v7293 = vpop.f32.mrf.mxu0
          %v7294 = vadd.f32 %v7265, %v7293
          %v7295 = vpop.f32.mrf.mxu0
          %v7296 = vadd.f32 %v7267, %v7295
          %7297 = vmatmul.bf16.gmra.mxu0 %v6627
          %v7298 = vpop.f32.mrf.mxu0
          %v7299 = vadd.f32 %v7270, %v7298
          %v7300 = vpop.f32.mrf.mxu0
          %v7301 = vadd.f32 %v7272, %v7300
          %7302 = vmatmul.bf16.gmra.mxu0 %v6631
          %v7303 = vpop.f32.mrf.mxu0
          %v7304 = vadd.f32 %v7275, %v7303
          %v7305 = vpop.f32.mrf.mxu0
          %v7306 = vadd.f32 %v7277, %v7305
          %7307 = vdwg.mxu0
          %7308 = vmatpush.bf16.msra.mxu0 %v6545
          %7309 = vmatpush.bf16.msra.mxu0 %v6544
          %7310 = vmatpush.bf16.msra.mxu0 %v6543
          %7311 = vmatpush.bf16.msra.mxu0 %v6542
          %7312 = vmatpush.bf16.msra.mxu0 %v6541
          %7313 = vmatpush.bf16.msra.mxu0 %v6540
          %7314 = vmatpush.bf16.msra.mxu0 %v6539
          %7315 = vmatpush.bf16.msra.mxu0 %v6538
          %7316 = vmatmul.bf16.gmra.mxu0 %v6620
          %v7317 = vpop.f32.mrf.mxu0
          %v7318 = vadd.f32 %v7289, %v7317
          %v7319 = vpop.f32.mrf.mxu0
          %v7320 = vadd.f32 %v7291, %v7319
          %7321 = vmatmul.bf16.gmra.mxu0 %v6624
          %v7322 = vpop.f32.mrf.mxu0
          %v7323 = vadd.f32 %v7294, %v7322
          %v7324 = vpop.f32.mrf.mxu0
          %v7325 = vadd.f32 %v7296, %v7324
          %7326 = vmatmul.bf16.gmra.mxu0 %v6628
          %v7327 = vpop.f32.mrf.mxu0
          %v7328 = vadd.f32 %v7299, %v7327
          %v7329 = vpop.f32.mrf.mxu0
          %v7330 = vadd.f32 %v7301, %v7329
          %7331 = vmatmul.bf16.gmra.mxu0 %v6632
          %v7332 = vpop.f32.mrf.mxu0
          %v7333 = vadd.f32 %v7304, %v7332
          %v7334 = vpop.f32.mrf.mxu0
          %v7335 = vadd.f32 %v7306, %v7334
          %7336 = vdwg.mxu0
          %7337 = vmatpush.bf16.msra.mxu0 %v6553
          %7338 = vmatpush.bf16.msra.mxu0 %v6552
          %7339 = vmatpush.bf16.msra.mxu0 %v6551
          %7340 = vmatpush.bf16.msra.mxu0 %v6550
          %7341 = vmatpush.bf16.msra.mxu0 %v6549
          %7342 = vmatpush.bf16.msra.mxu0 %v6548
          %7343 = vmatpush.bf16.msra.mxu0 %v6547
          %7344 = vmatpush.bf16.msra.mxu0 %v6546
          %7345 = vmatmul.bf16.gmra.mxu0 %v6621
          %v7346 = vpop.f32.mrf.mxu0
          %v7347 = vadd.f32 %v7318, %v7346
          %v7348 = vpop.f32.mrf.mxu0
          %v7349 = vadd.f32 %v7320, %v7348
          %7350 = vmatmul.bf16.gmra.mxu0 %v6625
          %v7351 = vpop.f32.mrf.mxu0
          %v7352 = vadd.f32 %v7323, %v7351
          %v7353 = vpop.f32.mrf.mxu0
          %v7354 = vadd.f32 %v7325, %v7353
          %7355 = vmatmul.bf16.gmra.mxu0 %v6629
          %v7356 = vpop.f32.mrf.mxu0
          %v7357 = vadd.f32 %v7328, %v7356
          %v7358 = vpop.f32.mrf.mxu0
          %v7359 = vadd.f32 %v7330, %v7358
          %7360 = vmatmul.bf16.gmra.mxu0 %v6633
          %v7361 = vpop.f32.mrf.mxu0
          %v7362 = vadd.f32 %v7333, %v7361
          %v7363 = vpop.f32.mrf.mxu0
          %v7364 = vadd.f32 %v7335, %v7363
          %7365 = vdwg.mxu0
          %v7366 = vadd.f32 %v7231, %v7347
          %v7367 = vadd.f32 %v7233, %v7349
          %v7368 = vadd.f32 %v7236, %v7352
          %v7369 = vadd.f32 %v7238, %v7354
          %v7370 = vadd.f32 %v7241, %v7357
          %v7371 = vadd.f32 %v7243, %v7359
          %v7372 = vadd.f32 %v7246, %v7362
          %v7373 = vadd.f32 %v7248, %v7364
          %v7374 = vpack.c.bf16 %v6062, %v6058
          %v7375 = vpack.c.bf16 %v6063, %v6059
          %v7376 = vpack.c.bf16 %v6064, %v6060
          %v7377 = vpack.c.bf16 %v6065, %v6061
          %v7378 = vpack.c.bf16 %v6070, %v6066
          %v7379 = vpack.c.bf16 %v6071, %v6067
          %v7380 = vpack.c.bf16 %v6072, %v6068
          %v7381 = vpack.c.bf16 %v6073, %v6069
          %v7382 = vpack.c.bf16 %v6078, %v6074
          %v7383 = vpack.c.bf16 %v6079, %v6075
          %v7384 = vpack.c.bf16 %v6080, %v6076
          %v7385 = vpack.c.bf16 %v6081, %v6077
          %v7386 = vpack.c.bf16 %v6086, %v6082
          %v7387 = vpack.c.bf16 %v6087, %v6083
          %v7388 = vpack.c.bf16 %v6088, %v6084
          %v7389 = vpack.c.bf16 %v6089, %v6085
          %7390 = vmatpush.bf16.msra.mxu0 %v6769
          %7391 = vmatpush.bf16.msra.mxu0 %v6768
          %7392 = vmatpush.bf16.msra.mxu0 %v6767
          %7393 = vmatpush.bf16.msra.mxu0 %v6766
          %7394 = vmatpush.bf16.msra.mxu0 %v6765
          %7395 = vmatpush.bf16.msra.mxu0 %v6764
          %7396 = vmatpush.bf16.msra.mxu0 %v6763
          %7397 = vmatpush.bf16.msra.mxu0 %v6762
          %7398 = vmatmul.bf16.gmra.mxu0 %v7374
          %v7399 = vpop.f32.mrf.mxu0
          %v7400 = vadd.f32 0.0, %v7399
          %v7401 = vpop.f32.mrf.mxu0
          %v7402 = vadd.f32 0.0, %v7401
          %7403 = vmatmul.bf16.gmra.mxu0 %v7378
          %v7404 = vpop.f32.mrf.mxu0
          %v7405 = vadd.f32 0.0, %v7404
          %v7406 = vpop.f32.mrf.mxu0
          %v7407 = vadd.f32 0.0, %v7406
          %7408 = vmatmul.bf16.gmra.mxu0 %v7382
          %v7409 = vpop.f32.mrf.mxu0
          %v7410 = vadd.f32 0.0, %v7409
          %v7411 = vpop.f32.mrf.mxu0
          %v7412 = vadd.f32 0.0, %v7411
          %7413 = vmatmul.bf16.gmra.mxu0 %v7386
          %v7414 = vpop.f32.mrf.mxu0
          %v7415 = vadd.f32 0.0, %v7414
          %v7416 = vpop.f32.mrf.mxu0
          %v7417 = vadd.f32 0.0, %v7416
          %7418 = vdwg.mxu0
          %7419 = vmatpush.bf16.msra.mxu0 %v6777
          %7420 = vmatpush.bf16.msra.mxu0 %v6776
          %7421 = vmatpush.bf16.msra.mxu0 %v6775
          %7422 = vmatpush.bf16.msra.mxu0 %v6774
          %7423 = vmatpush.bf16.msra.mxu0 %v6773
          %7424 = vmatpush.bf16.msra.mxu0 %v6772
          %7425 = vmatpush.bf16.msra.mxu0 %v6771
          %7426 = vmatpush.bf16.msra.mxu0 %v6770
          %7427 = vmatmul.bf16.gmra.mxu0 %v7375
          %v7428 = vpop.f32.mrf.mxu0
          %v7429 = vadd.f32 %v7400, %v7428
          %v7430 = vpop.f32.mrf.mxu0
          %v7431 = vadd.f32 %v7402, %v7430
          %7432 = vmatmul.bf16.gmra.mxu0 %v7379
          %v7433 = vpop.f32.mrf.mxu0
          %v7434 = vadd.f32 %v7405, %v7433
          %v7435 = vpop.f32.mrf.mxu0
          %v7436 = vadd.f32 %v7407, %v7435
          %7437 = vmatmul.bf16.gmra.mxu0 %v7383
          %v7438 = vpop.f32.mrf.mxu0
          %v7439 = vadd.f32 %v7410, %v7438
          %v7440 = vpop.f32.mrf.mxu0
          %v7441 = vadd.f32 %v7412, %v7440
          %7442 = vmatmul.bf16.gmra.mxu0 %v7387
          %v7443 = vpop.f32.mrf.mxu0
          %v7444 = vadd.f32 %v7415, %v7443
          %v7445 = vpop.f32.mrf.mxu0
          %v7446 = vadd.f32 %v7417, %v7445
          %7447 = vdwg.mxu0
          %7448 = vmatpush.bf16.msra.mxu0 %v6785
          %7449 = vmatpush.bf16.msra.mxu0 %v6784
          %7450 = vmatpush.bf16.msra.mxu0 %v6783
          %7451 = vmatpush.bf16.msra.mxu0 %v6782
          %7452 = vmatpush.bf16.msra.mxu0 %v6781
          %7453 = vmatpush.bf16.msra.mxu0 %v6780
          %7454 = vmatpush.bf16.msra.mxu0 %v6779
          %7455 = vmatpush.bf16.msra.mxu0 %v6778
          %7456 = vmatmul.bf16.gmra.mxu0 %v7376
          %v7457 = vpop.f32.mrf.mxu0
          %v7458 = vadd.f32 %v7429, %v7457
          %v7459 = vpop.f32.mrf.mxu0
          %v7460 = vadd.f32 %v7431, %v7459
          %7461 = vmatmul.bf16.gmra.mxu0 %v7380
          %v7462 = vpop.f32.mrf.mxu0
          %v7463 = vadd.f32 %v7434, %v7462
          %v7464 = vpop.f32.mrf.mxu0
          %v7465 = vadd.f32 %v7436, %v7464
          %7466 = vmatmul.bf16.gmra.mxu0 %v7384
          %v7467 = vpop.f32.mrf.mxu0
          %v7468 = vadd.f32 %v7439, %v7467
          %v7469 = vpop.f32.mrf.mxu0
          %v7470 = vadd.f32 %v7441, %v7469
          %7471 = vmatmul.bf16.gmra.mxu0 %v7388
          %v7472 = vpop.f32.mrf.mxu0
          %v7473 = vadd.f32 %v7444, %v7472
          %v7474 = vpop.f32.mrf.mxu0
          %v7475 = vadd.f32 %v7446, %v7474
          %7476 = vdwg.mxu0
          %7477 = vmatpush.bf16.msra.mxu0 %v6793
          %7478 = vmatpush.bf16.msra.mxu0 %v6792
          %7479 = vmatpush.bf16.msra.mxu0 %v6791
          %7480 = vmatpush.bf16.msra.mxu0 %v6790
          %7481 = vmatpush.bf16.msra.mxu0 %v6789
          %7482 = vmatpush.bf16.msra.mxu0 %v6788
          %7483 = vmatpush.bf16.msra.mxu0 %v6787
          %7484 = vmatpush.bf16.msra.mxu0 %v6786
          %7485 = vmatmul.bf16.gmra.mxu0 %v7377
          %v7486 = vpop.f32.mrf.mxu0
          %v7487 = vadd.f32 %v7458, %v7486
          %v7488 = vpop.f32.mrf.mxu0
          %v7489 = vadd.f32 %v7460, %v7488
          %7490 = vmatmul.bf16.gmra.mxu0 %v7381
          %v7491 = vpop.f32.mrf.mxu0
          %v7492 = vadd.f32 %v7463, %v7491
          %v7493 = vpop.f32.mrf.mxu0
          %v7494 = vadd.f32 %v7465, %v7493
          %7495 = vmatmul.bf16.gmra.mxu0 %v7385
          %v7496 = vpop.f32.mrf.mxu0
          %v7497 = vadd.f32 %v7468, %v7496
          %v7498 = vpop.f32.mrf.mxu0
          %v7499 = vadd.f32 %v7470, %v7498
          %7500 = vmatmul.bf16.gmra.mxu0 %v7389
          %v7501 = vpop.f32.mrf.mxu0
          %v7502 = vadd.f32 %v7473, %v7501
          %v7503 = vpop.f32.mrf.mxu0
          %v7504 = vadd.f32 %v7475, %v7503
          %7505 = vdwg.mxu0
          %7506 = vmatpush.bf16.msra.mxu0 %v7077
          %7507 = vmatpush.bf16.msra.mxu0 %v7076
          %7508 = vmatpush.bf16.msra.mxu0 %v7075
          %7509 = vmatpush.bf16.msra.mxu0 %v7074
          %7510 = vmatpush.bf16.msra.mxu0 %v7073
          %7511 = vmatpush.bf16.msra.mxu0 %v7072
          %7512 = vmatpush.bf16.msra.mxu0 %v7071
          %7513 = vmatpush.bf16.msra.mxu0 %v7070
          %7514 = vmatmul.bf16.gmra.mxu0 %v7374
          %v7515 = vpop.f32.mrf.mxu0
          %v7516 = vadd.f32 %v7487, %v7515
          %v7517 = vpop.f32.mrf.mxu0
          %v7518 = vadd.f32 %v7489, %v7517
          %7519 = vmatmul.bf16.gmra.mxu0 %v7378
          %v7520 = vpop.f32.mrf.mxu0
          %v7521 = vadd.f32 %v7492, %v7520
          %v7522 = vpop.f32.mrf.mxu0
          %v7523 = vadd.f32 %v7494, %v7522
          %7524 = vmatmul.bf16.gmra.mxu0 %v7382
          %v7525 = vpop.f32.mrf.mxu0
          %v7526 = vadd.f32 %v7497, %v7525
          %v7527 = vpop.f32.mrf.mxu0
          %v7528 = vadd.f32 %v7499, %v7527
          %7529 = vmatmul.bf16.gmra.mxu0 %v7386
          %v7530 = vpop.f32.mrf.mxu0
          %v7531 = vadd.f32 %v7502, %v7530
          %v7532 = vpop.f32.mrf.mxu0
          %v7533 = vadd.f32 %v7504, %v7532
          %7534 = vdwg.mxu0
          %7535 = vmatpush.bf16.msra.mxu0 %v7085
          %7536 = vmatpush.bf16.msra.mxu0 %v7084
          %7537 = vmatpush.bf16.msra.mxu0 %v7083
          %7538 = vmatpush.bf16.msra.mxu0 %v7082
          %7539 = vmatpush.bf16.msra.mxu0 %v7081
          %7540 = vmatpush.bf16.msra.mxu0 %v7080
          %7541 = vmatpush.bf16.msra.mxu0 %v7079
          %7542 = vmatpush.bf16.msra.mxu0 %v7078
          %7543 = vmatmul.bf16.gmra.mxu0 %v7375
          %v7544 = vpop.f32.mrf.mxu0
          %v7545 = vadd.f32 %v7516, %v7544
          %v7546 = vpop.f32.mrf.mxu0
          %v7547 = vadd.f32 %v7518, %v7546
          %7548 = vmatmul.bf16.gmra.mxu0 %v7379
          %v7549 = vpop.f32.mrf.mxu0
          %v7550 = vadd.f32 %v7521, %v7549
          %v7551 = vpop.f32.mrf.mxu0
          %v7552 = vadd.f32 %v7523, %v7551
          %7553 = vmatmul.bf16.gmra.mxu0 %v7383
          %v7554 = vpop.f32.mrf.mxu0
          %v7555 = vadd.f32 %v7526, %v7554
          %v7556 = vpop.f32.mrf.mxu0
          %v7557 = vadd.f32 %v7528, %v7556
          %7558 = vmatmul.bf16.gmra.mxu0 %v7387
          %v7559 = vpop.f32.mrf.mxu0
          %v7560 = vadd.f32 %v7531, %v7559
          %v7561 = vpop.f32.mrf.mxu0
          %v7562 = vadd.f32 %v7533, %v7561
          %7563 = vdwg.mxu0
          %7564 = vmatpush.bf16.msra.mxu0 %v7093
          %7565 = vmatpush.bf16.msra.mxu0 %v7092
          %7566 = vmatpush.bf16.msra.mxu0 %v7091
          %7567 = vmatpush.bf16.msra.mxu0 %v7090
          %7568 = vmatpush.bf16.msra.mxu0 %v7089
          %7569 = vmatpush.bf16.msra.mxu0 %v7088
          %7570 = vmatpush.bf16.msra.mxu0 %v7087
          %7571 = vmatpush.bf16.msra.mxu0 %v7086
          %7572 = vmatmul.bf16.gmra.mxu0 %v7376
          %v7573 = vpop.f32.mrf.mxu0
          %v7574 = vadd.f32 %v7545, %v7573
          %v7575 = vpop.f32.mrf.mxu0
          %v7576 = vadd.f32 %v7547, %v7575
          %7577 = vmatmul.bf16.gmra.mxu0 %v7380
          %v7578 = vpop.f32.mrf.mxu0
          %v7579 = vadd.f32 %v7550, %v7578
          %v7580 = vpop.f32.mrf.mxu0
          %v7581 = vadd.f32 %v7552, %v7580
          %7582 = vmatmul.bf16.gmra.mxu0 %v7384
          %v7583 = vpop.f32.mrf.mxu0
          %v7584 = vadd.f32 %v7555, %v7583
          %v7585 = vpop.f32.mrf.mxu0
          %v7586 = vadd.f32 %v7557, %v7585
          %7587 = vmatmul.bf16.gmra.mxu0 %v7388
          %v7588 = vpop.f32.mrf.mxu0
          %v7589 = vadd.f32 %v7560, %v7588
          %v7590 = vpop.f32.mrf.mxu0
          %v7591 = vadd.f32 %v7562, %v7590
          %7592 = vdwg.mxu0
          %7593 = vmatpush.bf16.msra.mxu0 %v7101
          %7594 = vmatpush.bf16.msra.mxu0 %v7100
          %7595 = vmatpush.bf16.msra.mxu0 %v7099
          %7596 = vmatpush.bf16.msra.mxu0 %v7098
          %7597 = vmatpush.bf16.msra.mxu0 %v7097
          %7598 = vmatpush.bf16.msra.mxu0 %v7096
          %7599 = vmatpush.bf16.msra.mxu0 %v7095
          %7600 = vmatpush.bf16.msra.mxu0 %v7094
          %7601 = vmatmul.bf16.gmra.mxu0 %v7377
          %v7602 = vpop.f32.mrf.mxu0
          %v7603 = vadd.f32 %v7574, %v7602
          %v7604 = vpop.f32.mrf.mxu0
          %v7605 = vadd.f32 %v7576, %v7604
          %7606 = vmatmul.bf16.gmra.mxu0 %v7381
          %v7607 = vpop.f32.mrf.mxu0
          %v7608 = vadd.f32 %v7579, %v7607
          %v7609 = vpop.f32.mrf.mxu0
          %v7610 = vadd.f32 %v7581, %v7609
          %7611 = vmatmul.bf16.gmra.mxu0 %v7385
          %v7612 = vpop.f32.mrf.mxu0
          %v7613 = vadd.f32 %v7584, %v7612
          %v7614 = vpop.f32.mrf.mxu0
          %v7615 = vadd.f32 %v7586, %v7614
          %7616 = vmatmul.bf16.gmra.mxu0 %v7389
          %v7617 = vpop.f32.mrf.mxu0
          %v7618 = vadd.f32 %v7589, %v7617
          %v7619 = vpop.f32.mrf.mxu0
          %v7620 = vadd.f32 %v7591, %v7619
          %7621 = vdwg.mxu0
          %7622 = vmatpush.bf16.msra.mxu0 %v6529
          %7623 = vmatpush.bf16.msra.mxu0 %v6528
          %7624 = vmatpush.bf16.msra.mxu0 %v6527
          %7625 = vmatpush.bf16.msra.mxu0 %v6526
          %7626 = vmatpush.bf16.msra.mxu0 %v6525
          %7627 = vmatpush.bf16.msra.mxu0 %v6524
          %7628 = vmatpush.bf16.msra.mxu0 %v6523
          %7629 = vmatpush.bf16.msra.mxu0 %v6522
          %7630 = vmatmul.bf16.gmra.mxu0 %v7374
          %v7631 = vpop.f32.mrf.mxu0
          %v7632 = vadd.f32 0.0, %v7631
          %v7633 = vpop.f32.mrf.mxu0
          %v7634 = vadd.f32 0.0, %v7633
          %7635 = vmatmul.bf16.gmra.mxu0 %v7378
          %v7636 = vpop.f32.mrf.mxu0
          %v7637 = vadd.f32 0.0, %v7636
          %v7638 = vpop.f32.mrf.mxu0
          %v7639 = vadd.f32 0.0, %v7638
          %7640 = vmatmul.bf16.gmra.mxu0 %v7382
          %v7641 = vpop.f32.mrf.mxu0
          %v7642 = vadd.f32 0.0, %v7641
          %v7643 = vpop.f32.mrf.mxu0
          %v7644 = vadd.f32 0.0, %v7643
          %7645 = vmatmul.bf16.gmra.mxu0 %v7386
          %v7646 = vpop.f32.mrf.mxu0
          %v7647 = vadd.f32 0.0, %v7646
          %v7648 = vpop.f32.mrf.mxu0
          %v7649 = vadd.f32 0.0, %v7648
          %7650 = vdwg.mxu0
          %7651 = vmatpush.bf16.msra.mxu0 %v6537
          %7652 = vmatpush.bf16.msra.mxu0 %v6536
          %7653 = vmatpush.bf16.msra.mxu0 %v6535
          %7654 = vmatpush.bf16.msra.mxu0 %v6534
          %7655 = vmatpush.bf16.msra.mxu0 %v6533
          %7656 = vmatpush.bf16.msra.mxu0 %v6532
          %7657 = vmatpush.bf16.msra.mxu0 %v6531
          %7658 = vmatpush.bf16.msra.mxu0 %v6530
          %7659 = vmatmul.bf16.gmra.mxu0 %v7375
          %v7660 = vpop.f32.mrf.mxu0
          %v7661 = vadd.f32 %v7632, %v7660
          %v7662 = vpop.f32.mrf.mxu0
          %v7663 = vadd.f32 %v7634, %v7662
          %7664 = vmatmul.bf16.gmra.mxu0 %v7379
          %v7665 = vpop.f32.mrf.mxu0
          %v7666 = vadd.f32 %v7637, %v7665
          %v7667 = vpop.f32.mrf.mxu0
          %v7668 = vadd.f32 %v7639, %v7667
          %7669 = vmatmul.bf16.gmra.mxu0 %v7383
          %v7670 = vpop.f32.mrf.mxu0
          %v7671 = vadd.f32 %v7642, %v7670
          %v7672 = vpop.f32.mrf.mxu0
          %v7673 = vadd.f32 %v7644, %v7672
          %7674 = vmatmul.bf16.gmra.mxu0 %v7387
          %v7675 = vpop.f32.mrf.mxu0
          %v7676 = vadd.f32 %v7647, %v7675
          %v7677 = vpop.f32.mrf.mxu0
          %v7678 = vadd.f32 %v7649, %v7677
          %7679 = vdwg.mxu0
          %7680 = vmatpush.bf16.msra.mxu0 %v6545
          %7681 = vmatpush.bf16.msra.mxu0 %v6544
          %7682 = vmatpush.bf16.msra.mxu0 %v6543
          %7683 = vmatpush.bf16.msra.mxu0 %v6542
          %7684 = vmatpush.bf16.msra.mxu0 %v6541
          %7685 = vmatpush.bf16.msra.mxu0 %v6540
          %7686 = vmatpush.bf16.msra.mxu0 %v6539
          %7687 = vmatpush.bf16.msra.mxu0 %v6538
          %7688 = vmatmul.bf16.gmra.mxu0 %v7376
          %v7689 = vpop.f32.mrf.mxu0
          %v7690 = vadd.f32 %v7661, %v7689
          %v7691 = vpop.f32.mrf.mxu0
          %v7692 = vadd.f32 %v7663, %v7691
          %7693 = vmatmul.bf16.gmra.mxu0 %v7380
          %v7694 = vpop.f32.mrf.mxu0
          %v7695 = vadd.f32 %v7666, %v7694
          %v7696 = vpop.f32.mrf.mxu0
          %v7697 = vadd.f32 %v7668, %v7696
          %7698 = vmatmul.bf16.gmra.mxu0 %v7384
          %v7699 = vpop.f32.mrf.mxu0
          %v7700 = vadd.f32 %v7671, %v7699
          %v7701 = vpop.f32.mrf.mxu0
          %v7702 = vadd.f32 %v7673, %v7701
          %7703 = vmatmul.bf16.gmra.mxu0 %v7388
          %v7704 = vpop.f32.mrf.mxu0
          %v7705 = vadd.f32 %v7676, %v7704
          %v7706 = vpop.f32.mrf.mxu0
          %v7707 = vadd.f32 %v7678, %v7706
          %7708 = vdwg.mxu0
          %7709 = vmatpush.bf16.msra.mxu0 %v6553
          %7710 = vmatpush.bf16.msra.mxu0 %v6552
          %7711 = vmatpush.bf16.msra.mxu0 %v6551
          %7712 = vmatpush.bf16.msra.mxu0 %v6550
          %7713 = vmatpush.bf16.msra.mxu0 %v6549
          %7714 = vmatpush.bf16.msra.mxu0 %v6548
          %7715 = vmatpush.bf16.msra.mxu0 %v6547
          %7716 = vmatpush.bf16.msra.mxu0 %v6546
          %7717 = vmatmul.bf16.gmra.mxu0 %v7377
          %v7718 = vpop.f32.mrf.mxu0
          %v7719 = vadd.f32 %v7690, %v7718
          %v7720 = vpop.f32.mrf.mxu0
          %v7721 = vadd.f32 %v7692, %v7720
          %7722 = vmatmul.bf16.gmra.mxu0 %v7381
          %v7723 = vpop.f32.mrf.mxu0
          %v7724 = vadd.f32 %v7695, %v7723
          %v7725 = vpop.f32.mrf.mxu0
          %v7726 = vadd.f32 %v7697, %v7725
          %7727 = vmatmul.bf16.gmra.mxu0 %v7385
          %v7728 = vpop.f32.mrf.mxu0
          %v7729 = vadd.f32 %v7700, %v7728
          %v7730 = vpop.f32.mrf.mxu0
          %v7731 = vadd.f32 %v7702, %v7730
          %7732 = vmatmul.bf16.gmra.mxu0 %v7389
          %v7733 = vpop.f32.mrf.mxu0
          %v7734 = vadd.f32 %v7705, %v7733
          %v7735 = vpop.f32.mrf.mxu0
          %v7736 = vadd.f32 %v7707, %v7735
          %7737 = vdwg.mxu0
          %v7738 = vadd.f32 %v7603, %v7719
          %v7739 = vadd.f32 %v7605, %v7721
          %v7740 = vadd.f32 %v7608, %v7724
          %v7741 = vadd.f32 %v7610, %v7726
          %v7742 = vadd.f32 %v7613, %v7729
          %v7743 = vadd.f32 %v7615, %v7731
          %v7744 = vadd.f32 %v7618, %v7734
          %v7745 = vadd.f32 %v7620, %v7736
          %v7746 = vmax.f32 %v7366, %v7738
          %v7747 = vmax.f32 %v7367, %v7739
          %v7748 = vmax.f32 %v7368, %v7740
          %v7749 = vmax.f32 %v7369, %v7741
          %v7750 = vmax.f32 %v7370, %v7742
          %v7751 = vmax.f32 %v7371, %v7743
          %v7752 = vmax.f32 %v7372, %v7744
          %v7753 = vmax.f32 %v7373, %v7745
          %v7754 = vsel %vm6130, 1, 0
          %v7755 = vsel %vm6131, 1, 0
          %v7756 = vsel %vm6132, 1, 0
          %v7757 = vsel %vm6133, 1, 0
          %v7758 = vsel %vm6134, 1, 0
          %v7759 = vsel %vm6135, 1, 0
          %v7760 = vsel %vm6136, 1, 0
          %v7761 = vsel %vm6137, 1, 0
          %vm7762 = vcmp.eq.s32.totalorder %v7754, 1
          %vm7763 = vcmp.eq.s32.totalorder %v7755, 1
          %vm7764 = vcmp.eq.s32.totalorder %v7756, 1
          %vm7765 = vcmp.eq.s32.totalorder %v7757, 1
          %vm7766 = vcmp.eq.s32.totalorder %v7758, 1
          %vm7767 = vcmp.eq.s32.totalorder %v7759, 1
          %vm7768 = vcmp.eq.s32.totalorder %v7760, 1
          %vm7769 = vcmp.eq.s32.totalorder %v7761, 1
          %v7770 = vsel %vm7762, %v7746, -3.4028235e+38
          %v7771 = vsel %vm7763, %v7747, -3.4028235e+38
          %v7772 = vsel %vm7764, %v7748, -3.4028235e+38
          %v7773 = vsel %vm7765, %v7749, -3.4028235e+38
          %v7774 = vsel %vm7766, %v7750, -3.4028235e+38
          %v7775 = vsel %vm7767, %v7751, -3.4028235e+38
          %v7776 = vsel %vm7768, %v7752, -3.4028235e+38
          %v7777 = vsel %vm7769, %v7753, -3.4028235e+38
          %v7778 = vld [vmem:[%s338] sm:$0xff]
          %v7779 = vld [vmem:[%s338 + $0x8] sm:$0xff]
          %v7780 = vld [vmem:[%s338 + $0x10] sm:$0xff]
          %v7781 = vld [vmem:[%s338 + $0x18] sm:$0xff]
          %v7782 = vld [vmem:[%s338 + $0x20] sm:$0xff]
          %v7783 = vld [vmem:[%s338 + $0x28] sm:$0xff]
          %v7784 = vld [vmem:[%s338 + $0x30] sm:$0xff]
          %v7785 = vld [vmem:[%s338 + $0x38] sm:$0xff]
          %v7786 = vmax.f32 %v7778, %v7770
          %v7787 = vmax.f32 %v7779, %v7771
          %v7788 = vmax.f32 %v7780, %v7772
          %v7789 = vmax.f32 %v7781, %v7773
          %v7790 = vmax.f32 %v7782, %v7774
          %v7791 = vmax.f32 %v7783, %v7775
          %v7792 = vmax.f32 %v7784, %v7776
          %v7793 = vmax.f32 %v7785, %v7777
          %7794 = vst [vmem:[%s338] sm:$0xff] %v7786
          %7795 = vst [vmem:[%s338 + $0x8] sm:$0xff] %v7787
          %7796 = vst [vmem:[%s338 + $0x10] sm:$0xff] %v7788
          %7797 = vst [vmem:[%s338 + $0x18] sm:$0xff] %v7789
          %7798 = vst [vmem:[%s338 + $0x20] sm:$0xff] %v7790
          %7799 = vst [vmem:[%s338 + $0x28] sm:$0xff] %v7791
          %7800 = vst [vmem:[%s338 + $0x30] sm:$0xff] %v7792
          %7801 = vst [vmem:[%s338 + $0x38] sm:$0xff] %v7793
        $region44: #{tpu_custom_call.1} parent=35 // pred_fallthru
          _
        %s7802 = sand.u32 %s199, 1
        %s7803 = scalar_lea.sflag [#allocation8], %s7802
        %s7804 = sand.u32 %s199, 1
        %s7805 = smul.addr %s7804, 64
        %s7806 = scalar_lea.vmem [#allocation7], %s7805
        // Predicated region
        $region45: #{tpu_custom_call.1} parent=35 // pred_check
          %p7807 = pneg %p209
        $region46: #{tpu_custom_call.1} parent=35 // pred_check_branch
          %7809 = sbr.rel (%p7807) target = $region48
        $region47: #{tpu_custom_call.1} parent=35 // pred_region
          %s7810 = smul.u32 %s49, 2
          %s7811 = sadd.s32 %s7810, %s50
          %s7812 = sld [smem:[#allocation3 + %s7811]]
          %s7813 = smul.u32 8, %s7812
          %7815 = vsyncadd %s7803, 0
          %s7816 = smul.addr %s7813, 8
          %s7817 = scalar_lea.hbm %s8, %s7816
          %s7818 = sshll.u32 %s7806, 4
          %s7819 = int_to_ptr.vmem [resolvable:$true] %s7818
          %s7820 = sshll.u32 %s7817, 4
          %s7821 = int_to_ptr.hbm [resolvable:$true] %s7820
          %7826 = dma.vmem_to_hbm [thread:$0]  %s7819, 1024, %s7821, %s7803, 128, 128, 8
        $region48: #{tpu_custom_call.1} parent=35 // pred_fallthru
          _
      $region36: #{tpu_custom_call.1} parent=5 // pred_fallthru
        _
      %p7827 = scmp.le.s32.totalorder 2, %s40
      // Predicated region
      $region49: #{tpu_custom_call.1} parent=5 // pred_check
        %p7828 = pneg %p7827
      $region50: #{tpu_custom_call.1} parent=5 // pred_check_branch
        %7830 = sbr.rel (%p7828) target = $region52
      $region51: #{tpu_custom_call.1} parent=5 // pred_region
        %s7831 = ssub.s32 %s40, 2
        // Predicated region
        $region53: #{tpu_custom_call.1} parent=51 // pred_check
          %p7832 = pneg %p215
        $region54: #{tpu_custom_call.1} parent=51 // pred_check_branch
          %7834 = sbr.rel (%p7832) target = $region56
        $region55: #{tpu_custom_call.1} parent=51 // pred_region
          %s7835 = sand.u32 %s200, 1
          %s7836 = scalar_lea.sflag [#allocation8], %s7835
          %s7837 = sand.u32 %s200, 1
          %s7838 = smul.addr %s7837, 64
          %s7839 = scalar_lea.vmem [#allocation7], %s7838
          %7841 = dma.done %s7836, 1024
        $region56: #{tpu_custom_call.1} parent=51 // pred_fallthru
          _
      $region52: #{tpu_custom_call.1} parent=5 // pred_fallthru
        _
    $region6: #{tpu_custom_call.1} parent=1 // loop_footer
      %s44 = sadd.s32 1, %s40
    $region7: #{tpu_custom_call.1} parent=1 // loop_footer_branch
      %39 = sbr.rel target = $region3
    $region8: #{tpu_custom_call.1} parent=1 // loop_exit
      _
    %7842 = vsyncpa [#allocation8], 1
    %s7843 = scalar_lea.sflag [#allocation8], 1
    %7844 = vsyncpa %s7843, 1

</llo_original>
